<compile_context>
chip_gen: v7x
topology: tpu7x:2x2x1
jax: 0.10.0
libtpu: 0.0.40
codegen_flags: <defaults>
</compile_context>

<pallas_src>
import functools

import jax
import jax.numpy as jnp
from jax.experimental import pallas as pl
from jax.experimental.pallas import tpu as pltpu


def _round_up(x, m):
    return ((x + m - 1) // m) * m


def _choose_tile(n_cols, tile_n):
    """Column tile: multiple of 256, <= padded N, and >=2 grid steps when possible."""
    tile_n = max(256, (tile_n // 256) * 256)
    tile_n = min(tile_n, _round_up(n_cols, 256))
    # Prefer at least 2 grid steps (v7x has 2 TensorCores; also gives the
    # pipeline something to overlap), but never drop below a 512-wide tile.
    while tile_n > 512 and -(-n_cols // tile_n) < 2:
        tile_n //= 2
    return tile_n


def bfnn_kernel(x_ref,
                w1_ref, b1_ref, w2_ref, b2_ref, w3_ref, b3_ref,
                w4_ref, b4_ref, w5_ref, b5_ref,
                tw_ref, tb_ref,
                y_ref):
    """One grid step: (d, tile_n) columns of X^T -> (n_pad, tile_n) slab of yhat."""

    def layer(h, w_ref, b_ref):
        # bf16 operands, f32 accumulation on the MXU; bias + ReLU in f32 on
        # the VPU; activation handed to the next layer in bf16 (halves
        # inter-layer spill traffic and activation VMEM).
        acc = jnp.dot(w_ref[...], h, preferred_element_type=jnp.float32)
        return jnp.maximum(acc + b_ref[...], 0.0).astype(jnp.bfloat16)

    h = x_ref[...].astype(jnp.bfloat16)          # (d, tile_n), cast once
    # Layer 1 has K = d (e.g. 8): the MXU pads K to its systolic depth, so
    # this pass costs about one hidden layer.  Accepted knowingly: a VPU
    # broadcast-MAC alternative is ~4x slower at d=8, and hoisting the layer
    # to XLA adds more HBM traffic than the MXU waste it would recover.
    h = layer(h, w1_ref, b1_ref)                 # (256, tile_n)
    h = layer(h, w2_ref, b2_ref)
    h = layer(h, w3_ref, b3_ref)
    h = layer(h, w4_ref, b4_ref)
    h = layer(h, w5_ref, b5_ref)

    # yhat tile = (theta @ wL^T) @ h + theta @ bL^T  -> (n_pad, tile_n).
    # Plain (M,K)x(K,N) MXU matmul; Psi is never materialized, no transpose
    # anywhere, and the output tile is lane-dense.
    y = jnp.dot(tw_ref[...], h, preferred_element_type=jnp.float32)
    y_ref[...] = y + tb_ref[...]


@functools.partial(jax.jit, static_argnames=("tile_n",))
def bfnn_forward(x, params, theta, *, tile_n=2048):
    """x: (N, d) f32; params: list of (W, b), W (in,out), b (1,out); theta: (n, L)."""
    N, d = x.shape
    n, L = theta.shape

    # ---- fold theta into the output layer (exact):
    #      yhat = theta @ (h @ wL + bL)^T = (theta @ wL^T) @ h^T + theta @ bL^T
    wl, bl = params[-1]                                   # (256, L), (1, L)
    theta_wl = theta @ wl.T                               # (n, 256) f32
    theta_b = theta @ bl.T                                # (n, 1)   f32

    # ---- pad theta rows to a multiple of 8 (full sublanes, unmasked stores)
    n_pad = _round_up(max(n, 8), 8)
    theta_wl = jnp.pad(theta_wl, ((0, n_pad - n), (0, 0))).astype(jnp.bfloat16)
    theta_b = jnp.pad(theta_b, ((0, n_pad - n), (0, 0)))

    # ---- column tiling of X^T; zero-pad N so every tile is full
    tile = _choose_tile(N, tile_n)
    n_pad_cols = _round_up(N, tile)
    xt = x.T                                              # (d, N) f32, lane-dense
    if n_pad_cols != N:
        xt = jnp.pad(xt, ((0, 0), (0, n_pad_cols - N)))

    def resident(arr):
        # Constant index_map -> fetched once, stays VMEM-resident across steps.
        return pl.BlockSpec(arr.shape, lambda i: (0, 0))

    flat = [xt]
    in_specs = [pl.BlockSpec((d, tile), lambda i: (0, i))]
    for (w, b) in params[:-1]:
        wt = w.T.astype(jnp.bfloat16)                     # (out, in) bf16 MXU operand
        bt = b.T                                          # (out, 1)  f32 column bias
        flat.extend([wt, bt])
        in_specs.extend([resident(wt), resident(bt)])
    flat.extend([theta_wl, theta_b])
    in_specs.extend([resident(theta_wl), resident(theta_b)])

    out_spec = pl.BlockSpec((n_pad, tile), lambda i: (0, i))

    yhat_pad = pl.pallas_call(
        bfnn_kernel,
        out_shape=jax.ShapeDtypeStruct((n_pad, n_pad_cols), jnp.float32),
        grid_spec=pltpu.PrefetchScalarGridSpec(
            num_scalar_prefetch=0,
            grid=(n_pad_cols // tile,),
            in_specs=in_specs,
            out_specs=out_spec,
        ),
        compiler_params=pltpu.CompilerParams(
            dimension_semantics=("parallel",)),
    )(*flat)

    return yhat_pad[:n, :N]


def bfnn_reference(x, params, theta):
    """Pure-JAX f32 reference matching the PyTorch module."""
    h = x
    for (w, b) in params[:-1]:
        h = jnp.maximum(h @ w + b, 0.0)
    wl, bl = params[-1]
    psi = h @ wl + bl
    return theta @ psi.T


def init_params(key, d, L, n, k=256):
    keys = jax.random.split(key, 13)
    dims = [(d, k), (k, k), (k, k), (k, k), (k, k), (k, L)]
    params = []
    for i, (din, dout) in enumerate(dims):
        w = jax.random.normal(keys[2 * i], (din, dout), jnp.float32) / jnp.sqrt(din)
        b = jax.random.normal(keys[2 * i + 1], (1, dout), jnp.float32) * 0.01
        params.append((w, b))
    theta = jax.random.normal(keys[12], (n, L), jnp.float32)
    return params, theta


if __name__ == "__main__":
    # d features, L basis functions, n "observation" rows in theta, N samples.
    # k=256 hidden width is fixed by the module; N=2048 gives a 2-step grid.
    d, L, n, N = 8, 16, 4, 2048

    key = jax.random.PRNGKey(0)
    kx, kp = jax.random.split(key)
    x = jax.random.normal(kx, (N, d), jnp.float32)
    params, theta = init_params(kp, d, L, n)

    yhat = bfnn_forward(x, params, theta)
    yhat = jax.block_until_ready(yhat)

    ref = bfnn_reference(x, params, theta)
    assert yhat.shape == (n, N)
    # bf16 operands through six chained matmuls with f32 accumulation:
    # compare with a magnitude-normalized tolerance.
    rel_err = float(jnp.max(jnp.abs(yhat - ref)) / (jnp.max(jnp.abs(ref)) + 1e-6))
    assert rel_err < 5e-2, f"mismatch vs reference: rel_err={rel_err:.3e}"
    print("KERNEL_OK")
</pallas_src>

<mosaic_0001>
module attributes {stable_mosaic.version = 11 : i64} {
  func.func @bfnn_kernel(%arg0: i32, %arg1: memref<8x1024xf32, #tpu.memory_space<vmem>>, %arg2: memref<256x8xbf16, #tpu.memory_space<vmem>>, %arg3: memref<256x1xf32, #tpu.memory_space<vmem>>, %arg4: memref<256x256xbf16, #tpu.memory_space<vmem>>, %arg5: memref<256x1xf32, #tpu.memory_space<vmem>>, %arg6: memref<256x256xbf16, #tpu.memory_space<vmem>>, %arg7: memref<256x1xf32, #tpu.memory_space<vmem>>, %arg8: memref<256x256xbf16, #tpu.memory_space<vmem>>, %arg9: memref<256x1xf32, #tpu.memory_space<vmem>>, %arg10: memref<256x256xbf16, #tpu.memory_space<vmem>>, %arg11: memref<256x1xf32, #tpu.memory_space<vmem>>, %arg12: memref<8x256xbf16, #tpu.memory_space<vmem>>, %arg13: memref<8x1xf32, #tpu.memory_space<vmem>>, %arg14: memref<8x1024xf32, #tpu.memory_space<vmem>>) attributes {dimension_semantics = [#tpu.dimension_semantics<parallel>], iteration_bounds = array<i64: 2>, scalar_prefetch = 0 : i64, scratch_operands = 0 : i64, tpu.core_type = #tpu.core_type<tc>, window_params = [{transform_indices = @transform_0, window_bounds = array<i64: 8, 1024>}, {pipeline_mode = #tpu.pipeline_mode<synchronous>, transform_indices = @transform_1, window_bounds = array<i64: 256, 8>}, {pipeline_mode = #tpu.pipeline_mode<synchronous>, transform_indices = @transform_2, window_bounds = array<i64: 256, 1>}, {pipeline_mode = #tpu.pipeline_mode<synchronous>, transform_indices = @transform_3, window_bounds = array<i64: 256, 256>}, {pipeline_mode = #tpu.pipeline_mode<synchronous>, transform_indices = @transform_4, window_bounds = array<i64: 256, 1>}, {pipeline_mode = #tpu.pipeline_mode<synchronous>, transform_indices = @transform_5, window_bounds = array<i64: 256, 256>}, {pipeline_mode = #tpu.pipeline_mode<synchronous>, transform_indices = @transform_6, window_bounds = array<i64: 256, 1>}, {pipeline_mode = #tpu.pipeline_mode<synchronous>, transform_indices = @transform_7, window_bounds = array<i64: 256, 256>}, {pipeline_mode = #tpu.pipeline_mode<synchronous>, transform_indices = @transform_8, window_bounds = array<i64: 256, 1>}, {pipeline_mode = #tpu.pipeline_mode<synchronous>, transform_indices = @transform_9, window_bounds = array<i64: 256, 256>}, {pipeline_mode = #tpu.pipeline_mode<synchronous>, transform_indices = @transform_10, window_bounds = array<i64: 256, 1>}, {pipeline_mode = #tpu.pipeline_mode<synchronous>, transform_indices = @transform_11, window_bounds = array<i64: 8, 256>}, {pipeline_mode = #tpu.pipeline_mode<synchronous>, transform_indices = @transform_12, window_bounds = array<i64: 8, 1>}, {transform_indices = @transform_13, window_bounds = array<i64: 8, 1024>}]} {
    %c0 = arith.constant 0 : index
    %c0_0 = arith.constant 0 : index
    %0 = vector.load %arg1[%c0, %c0_0] : memref<8x1024xf32, #tpu.memory_space<vmem>>, vector<8x1024xf32>
    %1 = arith.truncf %0 : vector<8x1024xf32> to vector<8x1024xbf16>
    %c0_1 = arith.constant 0 : index
    %c0_2 = arith.constant 0 : index
    %2 = vector.load %arg2[%c0_1, %c0_2] : memref<256x8xbf16, #tpu.memory_space<vmem>>, vector<256x8xbf16>
    %cst = arith.constant dense<0.000000e+00> : vector<256x1024xf32>
    %3 = tpu.matmul %2, %1, %cst {dimension_numbers = #tpu.dot_dimension_numbers<[1], [0], [0], [1], [0, 0, 1, 1], [], []>} : vector<256x8xbf16>, vector<8x1024xbf16>, vector<256x1024xf32> -> vector<256x1024xf32>
    %c0_3 = arith.constant 0 : index
    %c0_4 = arith.constant 0 : index
    %4 = vector.load %arg3[%c0_3, %c0_4] : memref<256x1xf32, #tpu.memory_space<vmem>>, vector<256x1xf32>
    %5 = vector.broadcast %4 : vector<256x1xf32> to vector<256x1024xf32>
    %6 = arith.addf %3, %5 : vector<256x1024xf32>
    %cst_5 = arith.constant 0.000000e+00 : f32
    %7 = vector.broadcast %cst_5 : f32 to vector<256x1024xf32>
    %8 = arith.maximumf %6, %7 : vector<256x1024xf32>
    %9 = arith.truncf %8 : vector<256x1024xf32> to vector<256x1024xbf16>
    %c0_6 = arith.constant 0 : index
    %c0_7 = arith.constant 0 : index
    %10 = vector.load %arg4[%c0_6, %c0_7] : memref<256x256xbf16, #tpu.memory_space<vmem>>, vector<256x256xbf16>
    %cst_8 = arith.constant dense<0.000000e+00> : vector<256x1024xf32>
    %11 = tpu.matmul %10, %9, %cst_8 {dimension_numbers = #tpu.dot_dimension_numbers<[1], [0], [0], [1], [0, 0, 1, 1], [], []>} : vector<256x256xbf16>, vector<256x1024xbf16>, vector<256x1024xf32> -> vector<256x1024xf32>
    %c0_9 = arith.constant 0 : index
    %c0_10 = arith.constant 0 : index
    %12 = vector.load %arg5[%c0_9, %c0_10] : memref<256x1xf32, #tpu.memory_space<vmem>>, vector<256x1xf32>
    %13 = vector.broadcast %12 : vector<256x1xf32> to vector<256x1024xf32>
    %14 = arith.addf %11, %13 : vector<256x1024xf32>
    %cst_11 = arith.constant 0.000000e+00 : f32
    %15 = vector.broadcast %cst_11 : f32 to vector<256x1024xf32>
    %16 = arith.maximumf %14, %15 : vector<256x1024xf32>
    %17 = arith.truncf %16 : vector<256x1024xf32> to vector<256x1024xbf16>
    %c0_12 = arith.constant 0 : index
    %c0_13 = arith.constant 0 : index
    %18 = vector.load %arg6[%c0_12, %c0_13] : memref<256x256xbf16, #tpu.memory_space<vmem>>, vector<256x256xbf16>
    %cst_14 = arith.constant dense<0.000000e+00> : vector<256x1024xf32>
    %19 = tpu.matmul %18, %17, %cst_14 {dimension_numbers = #tpu.dot_dimension_numbers<[1], [0], [0], [1], [0, 0, 1, 1], [], []>} : vector<256x256xbf16>, vector<256x1024xbf16>, vector<256x1024xf32> -> vector<256x1024xf32>
    %c0_15 = arith.constant 0 : index
    %c0_16 = arith.constant 0 : index
    %20 = vector.load %arg7[%c0_15, %c0_16] : memref<256x1xf32, #tpu.memory_space<vmem>>, vector<256x1xf32>
    %21 = vector.broadcast %20 : vector<256x1xf32> to vector<256x1024xf32>
    %22 = arith.addf %19, %21 : vector<256x1024xf32>
    %cst_17 = arith.constant 0.000000e+00 : f32
    %23 = vector.broadcast %cst_17 : f32 to vector<256x1024xf32>
    %24 = arith.maximumf %22, %23 : vector<256x1024xf32>
    %25 = arith.truncf %24 : vector<256x1024xf32> to vector<256x1024xbf16>
    %c0_18 = arith.constant 0 : index
    %c0_19 = arith.constant 0 : index
    %26 = vector.load %arg8[%c0_18, %c0_19] : memref<256x256xbf16, #tpu.memory_space<vmem>>, vector<256x256xbf16>
    %cst_20 = arith.constant dense<0.000000e+00> : vector<256x1024xf32>
    %27 = tpu.matmul %26, %25, %cst_20 {dimension_numbers = #tpu.dot_dimension_numbers<[1], [0], [0], [1], [0, 0, 1, 1], [], []>} : vector<256x256xbf16>, vector<256x1024xbf16>, vector<256x1024xf32> -> vector<256x1024xf32>
    %c0_21 = arith.constant 0 : index
    %c0_22 = arith.constant 0 : index
    %28 = vector.load %arg9[%c0_21, %c0_22] : memref<256x1xf32, #tpu.memory_space<vmem>>, vector<256x1xf32>
    %29 = vector.broadcast %28 : vector<256x1xf32> to vector<256x1024xf32>
    %30 = arith.addf %27, %29 : vector<256x1024xf32>
    %cst_23 = arith.constant 0.000000e+00 : f32
    %31 = vector.broadcast %cst_23 : f32 to vector<256x1024xf32>
    %32 = arith.maximumf %30, %31 : vector<256x1024xf32>
    %33 = arith.truncf %32 : vector<256x1024xf32> to vector<256x1024xbf16>
    %c0_24 = arith.constant 0 : index
    %c0_25 = arith.constant 0 : index
    %34 = vector.load %arg10[%c0_24, %c0_25] : memref<256x256xbf16, #tpu.memory_space<vmem>>, vector<256x256xbf16>
    %cst_26 = arith.constant dense<0.000000e+00> : vector<256x1024xf32>
    %35 = tpu.matmul %34, %33, %cst_26 {dimension_numbers = #tpu.dot_dimension_numbers<[1], [0], [0], [1], [0, 0, 1, 1], [], []>} : vector<256x256xbf16>, vector<256x1024xbf16>, vector<256x1024xf32> -> vector<256x1024xf32>
    %c0_27 = arith.constant 0 : index
    %c0_28 = arith.constant 0 : index
    %36 = vector.load %arg11[%c0_27, %c0_28] : memref<256x1xf32, #tpu.memory_space<vmem>>, vector<256x1xf32>
    %37 = vector.broadcast %36 : vector<256x1xf32> to vector<256x1024xf32>
    %38 = arith.addf %35, %37 : vector<256x1024xf32>
    %cst_29 = arith.constant 0.000000e+00 : f32
    %39 = vector.broadcast %cst_29 : f32 to vector<256x1024xf32>
    %40 = arith.maximumf %38, %39 : vector<256x1024xf32>
    %41 = arith.truncf %40 : vector<256x1024xf32> to vector<256x1024xbf16>
    %c0_30 = arith.constant 0 : index
    %c0_31 = arith.constant 0 : index
    %42 = vector.load %arg12[%c0_30, %c0_31] : memref<8x256xbf16, #tpu.memory_space<vmem>>, vector<8x256xbf16>
    %cst_32 = arith.constant dense<0.000000e+00> : vector<8x1024xf32>
    %43 = tpu.matmul %42, %41, %cst_32 {dimension_numbers = #tpu.dot_dimension_numbers<[1], [0], [0], [1], [0, 0, 1, 1], [], []>} : vector<8x256xbf16>, vector<256x1024xbf16>, vector<8x1024xf32> -> vector<8x1024xf32>
    %c0_33 = arith.constant 0 : index
    %c0_34 = arith.constant 0 : index
    %44 = vector.load %arg13[%c0_33, %c0_34] : memref<8x1xf32, #tpu.memory_space<vmem>>, vector<8x1xf32>
    %45 = vector.broadcast %44 : vector<8x1xf32> to vector<8x1024xf32>
    %46 = arith.addf %43, %45 : vector<8x1024xf32>
    %c0_35 = arith.constant 0 : index
    %c0_36 = arith.constant 0 : index
    %47 = vector.load %arg14[%c0_35, %c0_36] : memref<8x1024xf32, #tpu.memory_space<vmem>>, vector<8x1024xf32>
    tpu.vector_store %arg14[%c0_35, %c0_36], %46 {strides = array<i32>} : memref<8x1024xf32, #tpu.memory_space<vmem>>, vector<8x1024xf32>,
    return
  }
  func.func @transform_0(%arg0: i32) -> (i32, i32) {
    %c0_i32 = arith.constant 0 : i32
    %c0_i32_0 = arith.constant 0 : i32
    return %c0_i32, %arg0 : i32, i32
  }
  func.func @transform_1(%arg0: i32) -> (i32, i32) {
    %c0_i32 = arith.constant 0 : i32
    %c0_i32_0 = arith.constant 0 : i32
    %c0_i32_1 = arith.constant 0 : i32
    return %c0_i32, %c0_i32_0 : i32, i32
  }
  func.func @transform_2(%arg0: i32) -> (i32, i32) {
    %c0_i32 = arith.constant 0 : i32
    %c0_i32_0 = arith.constant 0 : i32
    %c0_i32_1 = arith.constant 0 : i32
    return %c0_i32, %c0_i32_0 : i32, i32
  }
  func.func @transform_3(%arg0: i32) -> (i32, i32) {
    %c0_i32 = arith.constant 0 : i32
    %c0_i32_0 = arith.constant 0 : i32
    %c0_i32_1 = arith.constant 0 : i32
    return %c0_i32, %c0_i32_0 : i32, i32
  }
  func.func @transform_4(%arg0: i32) -> (i32, i32) {
    %c0_i32 = arith.constant 0 : i32
    %c0_i32_0 = arith.constant 0 : i32
    %c0_i32_1 = arith.constant 0 : i32
    return %c0_i32, %c0_i32_0 : i32, i32
  }
  func.func @transform_5(%arg0: i32) -> (i32, i32) {
    %c0_i32 = arith.constant 0 : i32
    %c0_i32_0 = arith.constant 0 : i32
    %c0_i32_1 = arith.constant 0 : i32
    return %c0_i32, %c0_i32_0 : i32, i32
  }
  func.func @transform_6(%arg0: i32) -> (i32, i32) {
    %c0_i32 = arith.constant 0 : i32
    %c0_i32_0 = arith.constant 0 : i32
    %c0_i32_1 = arith.constant 0 : i32
    return %c0_i32, %c0_i32_0 : i32, i32
  }
  func.func @transform_7(%arg0: i32) -> (i32, i32) {
    %c0_i32 = arith.constant 0 : i32
    %c0_i32_0 = arith.constant 0 : i32
    %c0_i32_1 = arith.constant 0 : i32
    return %c0_i32, %c0_i32_0 : i32, i32
  }
  func.func @transform_8(%arg0: i32) -> (i32, i32) {
    %c0_i32 = arith.constant 0 : i32
    %c0_i32_0 = arith.constant 0 : i32
    %c0_i32_1 = arith.constant 0 : i32
    return %c0_i32, %c0_i32_0 : i32, i32
  }
  func.func @transform_9(%arg0: i32) -> (i32, i32) {
    %c0_i32 = arith.constant 0 : i32
    %c0_i32_0 = arith.constant 0 : i32
    %c0_i32_1 = arith.constant 0 : i32
    return %c0_i32, %c0_i32_0 : i32, i32
  }
  func.func @transform_10(%arg0: i32) -> (i32, i32) {
    %c0_i32 = arith.constant 0 : i32
    %c0_i32_0 = arith.constant 0 : i32
    %c0_i32_1 = arith.constant 0 : i32
    return %c0_i32, %c0_i32_0 : i32, i32
  }
  func.func @transform_11(%arg0: i32) -> (i32, i32) {
    %c0_i32 = arith.constant 0 : i32
    %c0_i32_0 = arith.constant 0 : i32
    %c0_i32_1 = arith.constant 0 : i32
    return %c0_i32, %c0_i32_0 : i32, i32
  }
  func.func @transform_12(%arg0: i32) -> (i32, i32) {
    %c0_i32 = arith.constant 0 : i32
    %c0_i32_0 = arith.constant 0 : i32
    %c0_i32_1 = arith.constant 0 : i32
    return %c0_i32, %c0_i32_0 : i32, i32
  }
  func.func @transform_13(%arg0: i32) -> (i32, i32) {
    %c0_i32 = arith.constant 0 : i32
    %c0_i32_0 = arith.constant 0 : i32
    return %c0_i32, %arg0 : i32, i32
  }
}

</mosaic_0001>

<llo_original>
// kernel: bfnn_forward.1
$region0: #{bfnn_forward.1}
  #allocation0 [shape = 'u32[]', space=smem, size = 0x4, offset = 0x4, fixed_abs, tag = 'smem constant byte address 0x4 - core index']
  #allocation1 [shape = 'u32[144,128]{1,0:T(1,128)}', space=vmem, size = 0x12000, scoped, tag = 'internal scratch']
  %s0 = inlined_call_operand.vmem [shape: f32[8,2048], index: 0, kind: input, shape index: {}]
  %s1 = inlined_call_operand.vmem [shape: bf16[256,8], index: 1, kind: input, shape index: {}]
  %s2 = inlined_call_operand.vmem [shape: f32[256,1], index: 2, kind: input, shape index: {}]
  %s3 = inlined_call_operand.vmem [shape: bf16[256,256], index: 3, kind: input, shape index: {}]
  %s4 = inlined_call_operand.vmem [shape: f32[256,1], index: 4, kind: input, shape index: {}]
  %s5 = inlined_call_operand.vmem [shape: bf16[256,256], index: 5, kind: input, shape index: {}]
  %s6 = inlined_call_operand.vmem [shape: f32[256,1], index: 6, kind: input, shape index: {}]
  %s7 = inlined_call_operand.vmem [shape: bf16[256,256], index: 7, kind: input, shape index: {}]
  %s8 = inlined_call_operand.vmem [shape: f32[256,1], index: 8, kind: input, shape index: {}]
  %s9 = inlined_call_operand.vmem [shape: bf16[256,256], index: 9, kind: input, shape index: {}]
  %s10 = inlined_call_operand.vmem [shape: f32[256,1], index: 10, kind: input, shape index: {}]
  %s11 = inlined_call_operand.vmem [shape: bf16[8,256], index: 11, kind: input, shape index: {}]
  %s12 = inlined_call_operand.vmem [shape: f32[8,1], index: 12, kind: input, shape index: {}]
  %s13 = inlined_call_operand.vmem [shape: f32[8,2048], index: 13, kind: output, shape index: {}]
  %s14 = sld [smem:[#allocation0]]
  $region85: #{bfnn_forward.1} parent=0
    _
  %s16 = ssub.s32 1, %s14
  %s17 = scalar_select 0, %s16, %s14
  loop: start=0, step=1, limit=4
  $region2: #{bfnn_forward.1} parent=0 // loop_pre_header
    _
  $region3: #{bfnn_forward.1} parent=0 // loop_header
    %s19 = sphi 0, %s23
    %p20 = scmp.ge.s32.totalorder %s19, 4
    %s29 = sphi 0, %s31
    %s32 = sphi 0, %s29
    %s33 = sphi 0, %s32
    %s49 = sphi 0, %s33
    %s53 = sphi 0, %s53
    %s55 = sphi 0, %s53
    %s56 = sphi 0, %s55
    %s70 = sphi 0, %s56
    %s74 = sphi 0, %s74
    %s76 = sphi 0, %s74
    %s77 = sphi 0, %s76
    %s91 = sphi 0, %s77
    %s95 = sphi 0, %s95
    %s97 = sphi 0, %s95
    %s98 = sphi 0, %s97
    %s112 = sphi 0, %s98
    %s116 = sphi 0, %s116
    %s118 = sphi 0, %s116
    %s119 = sphi 0, %s118
    %s133 = sphi 0, %s119
    %s137 = sphi 0, %s137
    %s139 = sphi 0, %s137
    %s140 = sphi 0, %s139
    %s154 = sphi 0, %s140
    %s158 = sphi 0, %s158
    %s160 = sphi 0, %s158
    %s161 = sphi 0, %s160
    %s175 = sphi 0, %s161
    %s179 = sphi 0, %s179
    %s181 = sphi 0, %s179
    %s182 = sphi 0, %s181
    %s196 = sphi 0, %s182
    %s200 = sphi 0, %s200
    %s202 = sphi 0, %s200
    %s203 = sphi 0, %s202
    %s217 = sphi 0, %s203
    %s221 = sphi 0, %s221
    %s223 = sphi 0, %s221
    %s224 = sphi 0, %s223
    %s238 = sphi 0, %s224
    %s242 = sphi 0, %s242
    %s244 = sphi 0, %s242
    %s245 = sphi 0, %s244
    %s259 = sphi 0, %s245
    %s263 = sphi 0, %s263
    %s265 = sphi 0, %s263
    %s266 = sphi 0, %s265
    %s280 = sphi 0, %s266
    %s284 = sphi 0, %s284
    %s286 = sphi 0, %s284
    %s287 = sphi 0, %s286
    %s301 = sphi 0, %s287
    %s307 = sphi 0, %s309
    %s310 = sphi 0, %s307
    %s311 = sphi 0, %s310
    %s327 = sphi 0, %s311
  $region4: #{bfnn_forward.1} parent=0 // loop_header_branch
    %22 = sbr.rel (%p20) target = $region8
  $region5: #{bfnn_forward.1} parent=0 // loop_body
    %s24 = ssub.s32 %s19, 1
    %s25 = ssub.s32 %s19, 2
    %s26 = sadd.s32 %s19, 1
    %s27 = ssub.s32 %s19, %s26
    %p28 = scmp.eq.s32.totalorder %s27, 0
    %s30 = sadd.s32 %s29, 1
    %s31 = scalar_select %p28, %s29, %s30
    %p34 = pneg %p28
    %p35 = scmp.eq.s32.totalorder %s19, 1
    %p36 = por %p34, %p35
    %p37 = scmp.ne.s32.totalorder %s29, %s32
    %p38 = scmp.eq.s32.totalorder %s19, 0
    %p39 = por %p37, %p38
    %p40 = scmp.ne.s32.totalorder %s29, %s32
    %p41 = scmp.eq.s32.totalorder %s24, 1
    %p42 = por %p40, %p41
    %p43 = scmp.ne.s32.totalorder %s32, %s33
    %p44 = scmp.eq.s32.totalorder %s24, 0
    %p45 = por %p43, %p44
    %p46 = scmp.ne.s32.totalorder %s32, %s33
    %p47 = scmp.eq.s32.totalorder %s25, 1
    %p48 = por %p46, %p47
    %p50 = scmp.ne.s32.totalorder %s33, %s49
    %p51 = scmp.eq.s32.totalorder %s25, 0
    %p52 = por %p50, %p51
    %s54 = sadd.s32 %s53, 1
    %p57 = scmp.eq.s32.totalorder %s19, 1
    %p58 = scmp.ne.s32.totalorder %s53, %s55
    %p59 = scmp.eq.s32.totalorder %s19, 0
    %p60 = por %p58, %p59
    %p61 = scmp.ne.s32.totalorder %s53, %s55
    %p62 = scmp.eq.s32.totalorder %s24, 1
    %p63 = por %p61, %p62
    %p64 = scmp.ne.s32.totalorder %s55, %s56
    %p65 = scmp.eq.s32.totalorder %s24, 0
    %p66 = por %p64, %p65
    %p67 = scmp.ne.s32.totalorder %s55, %s56
    %p68 = scmp.eq.s32.totalorder %s25, 1
    %p69 = por %p67, %p68
    %p71 = scmp.ne.s32.totalorder %s56, %s70
    %p72 = scmp.eq.s32.totalorder %s25, 0
    %p73 = por %p71, %p72
    %s75 = sadd.s32 %s74, 1
    %p78 = scmp.eq.s32.totalorder %s19, 1
    %p79 = scmp.ne.s32.totalorder %s74, %s76
    %p80 = scmp.eq.s32.totalorder %s19, 0
    %p81 = por %p79, %p80
    %p82 = scmp.ne.s32.totalorder %s74, %s76
    %p83 = scmp.eq.s32.totalorder %s24, 1
    %p84 = por %p82, %p83
    %p85 = scmp.ne.s32.totalorder %s76, %s77
    %p86 = scmp.eq.s32.totalorder %s24, 0
    %p87 = por %p85, %p86
    %p88 = scmp.ne.s32.totalorder %s76, %s77
    %p89 = scmp.eq.s32.totalorder %s25, 1
    %p90 = por %p88, %p89
    %p92 = scmp.ne.s32.totalorder %s77, %s91
    %p93 = scmp.eq.s32.totalorder %s25, 0
    %p94 = por %p92, %p93
    %s96 = sadd.s32 %s95, 1
    %p99 = scmp.eq.s32.totalorder %s19, 1
    %p100 = scmp.ne.s32.totalorder %s95, %s97
    %p101 = scmp.eq.s32.totalorder %s19, 0
    %p102 = por %p100, %p101
    %p103 = scmp.ne.s32.totalorder %s95, %s97
    %p104 = scmp.eq.s32.totalorder %s24, 1
    %p105 = por %p103, %p104
    %p106 = scmp.ne.s32.totalorder %s97, %s98
    %p107 = scmp.eq.s32.totalorder %s24, 0
    %p108 = por %p106, %p107
    %p109 = scmp.ne.s32.totalorder %s97, %s98
    %p110 = scmp.eq.s32.totalorder %s25, 1
    %p111 = por %p109, %p110
    %p113 = scmp.ne.s32.totalorder %s98, %s112
    %p114 = scmp.eq.s32.totalorder %s25, 0
    %p115 = por %p113, %p114
    %s117 = sadd.s32 %s116, 1
    %p120 = scmp.eq.s32.totalorder %s19, 1
    %p121 = scmp.ne.s32.totalorder %s116, %s118
    %p122 = scmp.eq.s32.totalorder %s19, 0
    %p123 = por %p121, %p122
    %p124 = scmp.ne.s32.totalorder %s116, %s118
    %p125 = scmp.eq.s32.totalorder %s24, 1
    %p126 = por %p124, %p125
    %p127 = scmp.ne.s32.totalorder %s118, %s119
    %p128 = scmp.eq.s32.totalorder %s24, 0
    %p129 = por %p127, %p128
    %p130 = scmp.ne.s32.totalorder %s118, %s119
    %p131 = scmp.eq.s32.totalorder %s25, 1
    %p132 = por %p130, %p131
    %p134 = scmp.ne.s32.totalorder %s119, %s133
    %p135 = scmp.eq.s32.totalorder %s25, 0
    %p136 = por %p134, %p135
    %s138 = sadd.s32 %s137, 1
    %p141 = scmp.eq.s32.totalorder %s19, 1
    %p142 = scmp.ne.s32.totalorder %s137, %s139
    %p143 = scmp.eq.s32.totalorder %s19, 0
    %p144 = por %p142, %p143
    %p145 = scmp.ne.s32.totalorder %s137, %s139
    %p146 = scmp.eq.s32.totalorder %s24, 1
    %p147 = por %p145, %p146
    %p148 = scmp.ne.s32.totalorder %s139, %s140
    %p149 = scmp.eq.s32.totalorder %s24, 0
    %p150 = por %p148, %p149
    %p151 = scmp.ne.s32.totalorder %s139, %s140
    %p152 = scmp.eq.s32.totalorder %s25, 1
    %p153 = por %p151, %p152
    %p155 = scmp.ne.s32.totalorder %s140, %s154
    %p156 = scmp.eq.s32.totalorder %s25, 0
    %p157 = por %p155, %p156
    %s159 = sadd.s32 %s158, 1
    %p162 = scmp.eq.s32.totalorder %s19, 1
    %p163 = scmp.ne.s32.totalorder %s158, %s160
    %p164 = scmp.eq.s32.totalorder %s19, 0
    %p165 = por %p163, %p164
    %p166 = scmp.ne.s32.totalorder %s158, %s160
    %p167 = scmp.eq.s32.totalorder %s24, 1
    %p168 = por %p166, %p167
    %p169 = scmp.ne.s32.totalorder %s160, %s161
    %p170 = scmp.eq.s32.totalorder %s24, 0
    %p171 = por %p169, %p170
    %p172 = scmp.ne.s32.totalorder %s160, %s161
    %p173 = scmp.eq.s32.totalorder %s25, 1
    %p174 = por %p172, %p173
    %p176 = scmp.ne.s32.totalorder %s161, %s175
    %p177 = scmp.eq.s32.totalorder %s25, 0
    %p178 = por %p176, %p177
    %s180 = sadd.s32 %s179, 1
    %p183 = scmp.eq.s32.totalorder %s19, 1
    %p184 = scmp.ne.s32.totalorder %s179, %s181
    %p185 = scmp.eq.s32.totalorder %s19, 0
    %p186 = por %p184, %p185
    %p187 = scmp.ne.s32.totalorder %s179, %s181
    %p188 = scmp.eq.s32.totalorder %s24, 1
    %p189 = por %p187, %p188
    %p190 = scmp.ne.s32.totalorder %s181, %s182
    %p191 = scmp.eq.s32.totalorder %s24, 0
    %p192 = por %p190, %p191
    %p193 = scmp.ne.s32.totalorder %s181, %s182
    %p194 = scmp.eq.s32.totalorder %s25, 1
    %p195 = por %p193, %p194
    %p197 = scmp.ne.s32.totalorder %s182, %s196
    %p198 = scmp.eq.s32.totalorder %s25, 0
    %p199 = por %p197, %p198
    %s201 = sadd.s32 %s200, 1
    %p204 = scmp.eq.s32.totalorder %s19, 1
    %p205 = scmp.ne.s32.totalorder %s200, %s202
    %p206 = scmp.eq.s32.totalorder %s19, 0
    %p207 = por %p205, %p206
    %p208 = scmp.ne.s32.totalorder %s200, %s202
    %p209 = scmp.eq.s32.totalorder %s24, 1
    %p210 = por %p208, %p209
    %p211 = scmp.ne.s32.totalorder %s202, %s203
    %p212 = scmp.eq.s32.totalorder %s24, 0
    %p213 = por %p211, %p212
    %p214 = scmp.ne.s32.totalorder %s202, %s203
    %p215 = scmp.eq.s32.totalorder %s25, 1
    %p216 = por %p214, %p215
    %p218 = scmp.ne.s32.totalorder %s203, %s217
    %p219 = scmp.eq.s32.totalorder %s25, 0
    %p220 = por %p218, %p219
    %s222 = sadd.s32 %s221, 1
    %p225 = scmp.eq.s32.totalorder %s19, 1
    %p226 = scmp.ne.s32.totalorder %s221, %s223
    %p227 = scmp.eq.s32.totalorder %s19, 0
    %p228 = por %p226, %p227
    %p229 = scmp.ne.s32.totalorder %s221, %s223
    %p230 = scmp.eq.s32.totalorder %s24, 1
    %p231 = por %p229, %p230
    %p232 = scmp.ne.s32.totalorder %s223, %s224
    %p233 = scmp.eq.s32.totalorder %s24, 0
    %p234 = por %p232, %p233
    %p235 = scmp.ne.s32.totalorder %s223, %s224
    %p236 = scmp.eq.s32.totalorder %s25, 1
    %p237 = por %p235, %p236
    %p239 = scmp.ne.s32.totalorder %s224, %s238
    %p240 = scmp.eq.s32.totalorder %s25, 0
    %p241 = por %p239, %p240
    %s243 = sadd.s32 %s242, 1
    %p246 = scmp.eq.s32.totalorder %s19, 1
    %p247 = scmp.ne.s32.totalorder %s242, %s244
    %p248 = scmp.eq.s32.totalorder %s19, 0
    %p249 = por %p247, %p248
    %p250 = scmp.ne.s32.totalorder %s242, %s244
    %p251 = scmp.eq.s32.totalorder %s24, 1
    %p252 = por %p250, %p251
    %p253 = scmp.ne.s32.totalorder %s244, %s245
    %p254 = scmp.eq.s32.totalorder %s24, 0
    %p255 = por %p253, %p254
    %p256 = scmp.ne.s32.totalorder %s244, %s245
    %p257 = scmp.eq.s32.totalorder %s25, 1
    %p258 = por %p256, %p257
    %p260 = scmp.ne.s32.totalorder %s245, %s259
    %p261 = scmp.eq.s32.totalorder %s25, 0
    %p262 = por %p260, %p261
    %s264 = sadd.s32 %s263, 1
    %p267 = scmp.eq.s32.totalorder %s19, 1
    %p268 = scmp.ne.s32.totalorder %s263, %s265
    %p269 = scmp.eq.s32.totalorder %s19, 0
    %p270 = por %p268, %p269
    %p271 = scmp.ne.s32.totalorder %s263, %s265
    %p272 = scmp.eq.s32.totalorder %s24, 1
    %p273 = por %p271, %p272
    %p274 = scmp.ne.s32.totalorder %s265, %s266
    %p275 = scmp.eq.s32.totalorder %s24, 0
    %p276 = por %p274, %p275
    %p277 = scmp.ne.s32.totalorder %s265, %s266
    %p278 = scmp.eq.s32.totalorder %s25, 1
    %p279 = por %p277, %p278
    %p281 = scmp.ne.s32.totalorder %s266, %s280
    %p282 = scmp.eq.s32.totalorder %s25, 0
    %p283 = por %p281, %p282
    %s285 = sadd.s32 %s284, 1
    %p288 = scmp.eq.s32.totalorder %s19, 1
    %p289 = scmp.ne.s32.totalorder %s284, %s286
    %p290 = scmp.eq.s32.totalorder %s19, 0
    %p291 = por %p289, %p290
    %p292 = scmp.ne.s32.totalorder %s284, %s286
    %p293 = scmp.eq.s32.totalorder %s24, 1
    %p294 = por %p292, %p293
    %p295 = scmp.ne.s32.totalorder %s286, %s287
    %p296 = scmp.eq.s32.totalorder %s24, 0
    %p297 = por %p295, %p296
    %p298 = scmp.ne.s32.totalorder %s286, %s287
    %p299 = scmp.eq.s32.totalorder %s25, 1
    %p300 = por %p298, %p299
    %p302 = scmp.ne.s32.totalorder %s287, %s301
    %p303 = scmp.eq.s32.totalorder %s25, 0
    %p304 = por %p302, %p303
    %s305 = ssub.s32 %s19, %s26
    %p306 = scmp.eq.s32.totalorder %s305, 0
    %s308 = sadd.s32 %s307, 1
    %s309 = scalar_select %p306, %s307, %s308
    %p312 = pneg %p306
    %p313 = scmp.eq.s32.totalorder %s19, 1
    %p314 = por %p312, %p313
    %p315 = scmp.ne.s32.totalorder %s307, %s310
    %p316 = scmp.eq.s32.totalorder %s19, 0
    %p317 = por %p315, %p316
    %p318 = scmp.ne.s32.totalorder %s307, %s310
    %p319 = scmp.eq.s32.totalorder %s24, 1
    %p320 = por %p318, %p319
    %p321 = scmp.ne.s32.totalorder %s310, %s311
    %p322 = scmp.eq.s32.totalorder %s24, 0
    %p323 = por %p321, %p322
    %p324 = scmp.ne.s32.totalorder %s310, %s311
    %p325 = scmp.eq.s32.totalorder %s25, 1
    %p326 = por %p324, %p325
    %p328 = scmp.ne.s32.totalorder %s311, %s327
    %p329 = scmp.eq.s32.totalorder %s25, 0
    %p330 = por %p328, %p329
    %p331 = scmp.le.s32.totalorder 1, %s19
    %p332 = scmp.lt.s32.totalorder %s19, 3
    %p333 = pnand %p331, %p332
    %p334 = pneg %p333
    // Predicated region
    $region9: #{bfnn_forward.1} parent=5 // pred_check
      _
    $region10: #{bfnn_forward.1} parent=5 // pred_check_branch
      %336 = sbr.rel (%p333) target = $region12
    $region11: #{bfnn_forward.1} parent=5 // pred_region
      %s337 = ssub.s32 %s19, 1
      // Predicated region
      $region13: #{bfnn_forward.1} parent=11 // pred_check
        %p338 = pneg %p66
      $region14: #{bfnn_forward.1} parent=11 // pred_check_branch
        %340 = sbr.rel (%p338) target = $region16
      $region15: #{bfnn_forward.1} parent=11 // pred_region
        _
      $region16: #{bfnn_forward.1} parent=11 // pred_fallthru
        _
      // Predicated region
      $region17: #{bfnn_forward.1} parent=11 // pred_check
        %p341 = pneg %p87
      $region18: #{bfnn_forward.1} parent=11 // pred_check_branch
        %343 = sbr.rel (%p341) target = $region20
      $region19: #{bfnn_forward.1} parent=11 // pred_region
        _
      $region20: #{bfnn_forward.1} parent=11 // pred_fallthru
        _
      // Predicated region
      $region21: #{bfnn_forward.1} parent=11 // pred_check
        %p344 = pneg %p108
      $region22: #{bfnn_forward.1} parent=11 // pred_check_branch
        %346 = sbr.rel (%p344) target = $region24
      $region23: #{bfnn_forward.1} parent=11 // pred_region
        _
      $region24: #{bfnn_forward.1} parent=11 // pred_fallthru
        _
      // Predicated region
      $region25: #{bfnn_forward.1} parent=11 // pred_check
        %p347 = pneg %p129
      $region26: #{bfnn_forward.1} parent=11 // pred_check_branch
        %349 = sbr.rel (%p347) target = $region28
      $region27: #{bfnn_forward.1} parent=11 // pred_region
        _
      $region28: #{bfnn_forward.1} parent=11 // pred_fallthru
        _
      // Predicated region
      $region29: #{bfnn_forward.1} parent=11 // pred_check
        %p350 = pneg %p150
      $region30: #{bfnn_forward.1} parent=11 // pred_check_branch
        %352 = sbr.rel (%p350) target = $region32
      $region31: #{bfnn_forward.1} parent=11 // pred_region
        _
      $region32: #{bfnn_forward.1} parent=11 // pred_fallthru
        _
      // Predicated region
      $region33: #{bfnn_forward.1} parent=11 // pred_check
        %p353 = pneg %p171
      $region34: #{bfnn_forward.1} parent=11 // pred_check_branch
        %355 = sbr.rel (%p353) target = $region36
      $region35: #{bfnn_forward.1} parent=11 // pred_region
        _
      $region36: #{bfnn_forward.1} parent=11 // pred_fallthru
        _
      // Predicated region
      $region37: #{bfnn_forward.1} parent=11 // pred_check
        %p356 = pneg %p192
      $region38: #{bfnn_forward.1} parent=11 // pred_check_branch
        %358 = sbr.rel (%p356) target = $region40
      $region39: #{bfnn_forward.1} parent=11 // pred_region
        _
      $region40: #{bfnn_forward.1} parent=11 // pred_fallthru
        _
      // Predicated region
      $region41: #{bfnn_forward.1} parent=11 // pred_check
        %p359 = pneg %p213
      $region42: #{bfnn_forward.1} parent=11 // pred_check_branch
        %361 = sbr.rel (%p359) target = $region44
      $region43: #{bfnn_forward.1} parent=11 // pred_region
        _
      $region44: #{bfnn_forward.1} parent=11 // pred_fallthru
        _
      // Predicated region
      $region45: #{bfnn_forward.1} parent=11 // pred_check
        %p362 = pneg %p234
      $region46: #{bfnn_forward.1} parent=11 // pred_check_branch
        %364 = sbr.rel (%p362) target = $region48
      $region47: #{bfnn_forward.1} parent=11 // pred_region
        _
      $region48: #{bfnn_forward.1} parent=11 // pred_fallthru
        _
      // Predicated region
      $region49: #{bfnn_forward.1} parent=11 // pred_check
        %p365 = pneg %p255
      $region50: #{bfnn_forward.1} parent=11 // pred_check_branch
        %367 = sbr.rel (%p365) target = $region52
      $region51: #{bfnn_forward.1} parent=11 // pred_region
        _
      $region52: #{bfnn_forward.1} parent=11 // pred_fallthru
        _
      // Predicated region
      $region53: #{bfnn_forward.1} parent=11 // pred_check
        %p368 = pneg %p276
      $region54: #{bfnn_forward.1} parent=11 // pred_check_branch
        %370 = sbr.rel (%p368) target = $region56
      $region55: #{bfnn_forward.1} parent=11 // pred_region
        _
      $region56: #{bfnn_forward.1} parent=11 // pred_fallthru
        _
      // Predicated region
      $region57: #{bfnn_forward.1} parent=11 // pred_check
        %p371 = pneg %p297
      $region58: #{bfnn_forward.1} parent=11 // pred_check_branch
        %373 = sbr.rel (%p371) target = $region60
      $region59: #{bfnn_forward.1} parent=11 // pred_region
        _
      $region60: #{bfnn_forward.1} parent=11 // pred_fallthru
        _
    $region12: #{bfnn_forward.1} parent=5 // pred_fallthru
      _
    %p374 = scmp.lt.s32.totalorder %s19, 2
    // Predicated region
    $region61: #{bfnn_forward.1} parent=5 // pred_check
      %p375 = pneg %p374
    $region62: #{bfnn_forward.1} parent=5 // pred_check_branch
      %377 = sbr.rel (%p375) target = $region64
    $region63: #{bfnn_forward.1} parent=5 // pred_region
      // Predicated region
      $region65: #{bfnn_forward.1} parent=63 // pred_check
        %p378 = pneg %p39
      $region66: #{bfnn_forward.1} parent=63 // pred_check_branch
        %380 = sbr.rel (%p378) target = $region68
      $region67: #{bfnn_forward.1} parent=63 // pred_region
        %s381 = smul.u32 8, %s19
        %p382 = scmp.lt.s32.totalorder %s381, 15
        %s383 = scalar_select %p382, %s381, 15
        %s384 = smul.addr %s383, 8
        %s385 = scalar_lea.vmem %s0, %s384
        %s386 = smul.u32 8, %s19
      $region68: #{bfnn_forward.1} parent=63 // pred_fallthru
        _
    $region64: #{bfnn_forward.1} parent=5 // pred_fallthru
      _
    %p387 = scmp.le.s32.totalorder 1, %s19
    %p388 = scmp.lt.s32.totalorder %s19, 3
    %p389 = pnand %p387, %p388
    %p390 = pneg %p389
    // Predicated region
    $region69: #{bfnn_forward.1} parent=5 // pred_check
      _
    $region70: #{bfnn_forward.1} parent=5 // pred_check_branch
      %392 = sbr.rel (%p389) target = $region72
    $region71: #{bfnn_forward.1} parent=5 // pred_region
      %s393 = ssub.s32 %s19, 1
      %s394 = smul.u32 8, %s24
      %p395 = scmp.lt.s32.totalorder %s394, 15
      %s396 = scalar_select %p395, %s394, 15
      %s397 = smul.addr %s396, 8
      %s398 = scalar_lea.vmem %s0, %s397
      %p399 = pneg %p45
      %p400 = pneg %p42
      %p401 = pneg %p66
      %p402 = pneg %p63
      %p403 = pneg %p87
      %p404 = pneg %p84
      %p405 = pneg %p108
      %p406 = pneg %p105
      %p407 = pneg %p129
      %p408 = pneg %p126
      %p409 = pneg %p150
      %p410 = pneg %p147
      %p411 = pneg %p171
      %p412 = pneg %p168
      %p413 = pneg %p192
      %p414 = pneg %p189
      %p415 = pneg %p213
      %p416 = pneg %p210
      %p417 = pneg %p234
      %p418 = pneg %p231
      %p419 = pneg %p255
      %p420 = pneg %p252
      %p421 = pneg %p276
      %p422 = pneg %p273
      %p423 = pneg %p297
      %p424 = pneg %p294
      %p425 = pneg %p323
      %p426 = pneg %p320
      %s427 = smul.u32 8, %s24
      %p428 = scmp.lt.s32.totalorder %s427, 15
      %s429 = scalar_select %p428, %s427, 15
      %s430 = smul.addr %s429, 8
      %s431 = scalar_lea.vmem %s13, %s430
      %s432 = smul.u32 8, %s24
      %p433 = scmp.lt.s32.totalorder %s432, 15
      %s434 = scalar_select %p433, %s432, 15
      %s435 = smul.addr %s434, 8
      %s436 = scalar_lea.vmem %s0, %s435
      %s437 = smul.u32 8, %s24
      %s438 = smul.u32 8, %s24
      %p439 = scmp.lt.s32.totalorder %s438, 15
      %s440 = scalar_select %p439, %s438, 15
      %s441 = smul.addr %s440, 8
      %s442 = scalar_lea.vmem %s13, %s441
      %s443 = smul.u32 8, %s24
      %v445 = vld [vmem:[%s436] sm:$0xff]
      %v446 = vld [vmem:[%s436 + $0x8] sm:$0xff]
      %v447 = vld [vmem:[%s436 + $0x10] sm:$0xff]
      %v448 = vld [vmem:[%s436 + $0x18] sm:$0xff]
      %v449 = vld [vmem:[%s436 + $0x20] sm:$0xff]
      %v450 = vld [vmem:[%s436 + $0x28] sm:$0xff]
      %v451 = vld [vmem:[%s436 + $0x30] sm:$0xff]
      %v452 = vld [vmem:[%s436 + $0x38] sm:$0xff]
      %v453 = vpack.c.bf16 %v445, %v445
      %v454 = vpack.c.bf16 %v446, %v446
      %v455 = vpack.c.bf16 %v447, %v447
      %v456 = vpack.c.bf16 %v448, %v448
      %v457 = vpack.c.bf16 %v449, %v449
      %v458 = vpack.c.bf16 %v450, %v450
      %v459 = vpack.c.bf16 %v451, %v451
      %v460 = vpack.c.bf16 %v452, %v452
      %v461 = vld [vmem:[%s1] sm:$0xf]
      %v462 = vld [vmem:[%s1 + $0x4] sm:$0xf]
      %v463 = vld [vmem:[%s1 + $0x8] sm:$0xf]
      %v464 = vld [vmem:[%s1 + $0xc] sm:$0xf]
      %v465 = vld [vmem:[%s1 + $0x10] sm:$0xf]
      %v466 = vld [vmem:[%s1 + $0x14] sm:$0xf]
      %v467 = vld [vmem:[%s1 + $0x18] sm:$0xf]
      %v468 = vld [vmem:[%s1 + $0x1c] sm:$0xf]
      %v469 = vld [vmem:[%s1 + $0x20] sm:$0xf]
      %v470 = vld [vmem:[%s1 + $0x24] sm:$0xf]
      %v471 = vld [vmem:[%s1 + $0x28] sm:$0xf]
      %v472 = vld [vmem:[%s1 + $0x2c] sm:$0xf]
      %v473 = vld [vmem:[%s1 + $0x30] sm:$0xf]
      %v474 = vld [vmem:[%s1 + $0x34] sm:$0xf]
      %v475 = vld [vmem:[%s1 + $0x38] sm:$0xf]
      %v476 = vld [vmem:[%s1 + $0x3c] sm:$0xf]
      %v477 = vld [vmem:[%s1 + $0x40] sm:$0xf]
      %v478 = vld [vmem:[%s1 + $0x44] sm:$0xf]
      %v479 = vld [vmem:[%s1 + $0x48] sm:$0xf]
      %v480 = vld [vmem:[%s1 + $0x4c] sm:$0xf]
      %v481 = vld [vmem:[%s1 + $0x50] sm:$0xf]
      %v482 = vld [vmem:[%s1 + $0x54] sm:$0xf]
      %v483 = vld [vmem:[%s1 + $0x58] sm:$0xf]
      %v484 = vld [vmem:[%s1 + $0x5c] sm:$0xf]
      %v485 = vld [vmem:[%s1 + $0x60] sm:$0xf]
      %v486 = vld [vmem:[%s1 + $0x64] sm:$0xf]
      %v487 = vld [vmem:[%s1 + $0x68] sm:$0xf]
      %v488 = vld [vmem:[%s1 + $0x6c] sm:$0xf]
      %v489 = vld [vmem:[%s1 + $0x70] sm:$0xf]
      %v490 = vld [vmem:[%s1 + $0x74] sm:$0xf]
      %v491 = vld [vmem:[%s1 + $0x78] sm:$0xf]
      %v492 = vld [vmem:[%s1 + $0x7c] sm:$0xf]
      %v493 = vld [vmem:[%s2] sm:$0xff]
      %v494 = vld [vmem:[%s2 + $0x8] sm:$0xff]
      %v495 = vld [vmem:[%s2 + $0x10] sm:$0xff]
      %v496 = vld [vmem:[%s2 + $0x18] sm:$0xff]
      %v497 = vld [vmem:[%s2 + $0x20] sm:$0xff]
      %v498 = vld [vmem:[%s2 + $0x28] sm:$0xff]
      %v499 = vld [vmem:[%s2 + $0x30] sm:$0xff]
      %v500 = vld [vmem:[%s2 + $0x38] sm:$0xff]
      %v501 = vld [vmem:[%s2 + $0x40] sm:$0xff]
      %v502 = vld [vmem:[%s2 + $0x48] sm:$0xff]
      %v503 = vld [vmem:[%s2 + $0x50] sm:$0xff]
      %v504 = vld [vmem:[%s2 + $0x58] sm:$0xff]
      %v505 = vld [vmem:[%s2 + $0x60] sm:$0xff]
      %v506 = vld [vmem:[%s2 + $0x68] sm:$0xff]
      %v507 = vld [vmem:[%s2 + $0x70] sm:$0xff]
      %v508 = vld [vmem:[%s2 + $0x78] sm:$0xff]
      %v509 = vld [vmem:[%s2 + $0x80] sm:$0xff]
      %v510 = vld [vmem:[%s2 + $0x88] sm:$0xff]
      %v511 = vld [vmem:[%s2 + $0x90] sm:$0xff]
      %v512 = vld [vmem:[%s2 + $0x98] sm:$0xff]
      %v513 = vld [vmem:[%s2 + $0xa0] sm:$0xff]
      %v514 = vld [vmem:[%s2 + $0xa8] sm:$0xff]
      %v515 = vld [vmem:[%s2 + $0xb0] sm:$0xff]
      %v516 = vld [vmem:[%s2 + $0xb8] sm:$0xff]
      %v517 = vld [vmem:[%s2 + $0xc0] sm:$0xff]
      %v518 = vld [vmem:[%s2 + $0xc8] sm:$0xff]
      %v519 = vld [vmem:[%s2 + $0xd0] sm:$0xff]
      %v520 = vld [vmem:[%s2 + $0xd8] sm:$0xff]
      %v521 = vld [vmem:[%s2 + $0xe0] sm:$0xff]
      %v522 = vld [vmem:[%s2 + $0xe8] sm:$0xff]
      %v523 = vld [vmem:[%s2 + $0xf0] sm:$0xff]
      %v524 = vld [vmem:[%s2 + $0xf8] sm:$0xff]
      %526 = vset.pattern.permute.xlu0 0
      %527 = vperm.xlu0 %526, %v493
      %v528 = vpop.permute.xlu0 %527
      %531 = vset.pattern.permute.xlu0 0
      %532 = vperm.xlu0 %531, %v494
      %v533 = vpop.permute.xlu0 %532
      %536 = vset.pattern.permute.xlu0 0
      %537 = vperm.xlu0 %536, %v495
      %v538 = vpop.permute.xlu0 %537
      %541 = vset.pattern.permute.xlu0 0
      %542 = vperm.xlu0 %541, %v496
      %v543 = vpop.permute.xlu0 %542
      %546 = vset.pattern.permute.xlu0 0
      %547 = vperm.xlu0 %546, %v497
      %v548 = vpop.permute.xlu0 %547
      %551 = vset.pattern.permute.xlu0 0
      %552 = vperm.xlu0 %551, %v498
      %v553 = vpop.permute.xlu0 %552
      %556 = vset.pattern.permute.xlu0 0
      %557 = vperm.xlu0 %556, %v499
      %v558 = vpop.permute.xlu0 %557
      %561 = vset.pattern.permute.xlu0 0
      %562 = vperm.xlu0 %561, %v500
      %v563 = vpop.permute.xlu0 %562
      %566 = vset.pattern.permute.xlu0 0
      %567 = vperm.xlu0 %566, %v501
      %v568 = vpop.permute.xlu0 %567
      %571 = vset.pattern.permute.xlu0 0
      %572 = vperm.xlu0 %571, %v502
      %v573 = vpop.permute.xlu0 %572
      %576 = vset.pattern.permute.xlu0 0
      %577 = vperm.xlu0 %576, %v503
      %v578 = vpop.permute.xlu0 %577
      %581 = vset.pattern.permute.xlu0 0
      %582 = vperm.xlu0 %581, %v504
      %v583 = vpop.permute.xlu0 %582
      %586 = vset.pattern.permute.xlu0 0
      %587 = vperm.xlu0 %586, %v505
      %v588 = vpop.permute.xlu0 %587
      %591 = vset.pattern.permute.xlu0 0
      %592 = vperm.xlu0 %591, %v506
      %v593 = vpop.permute.xlu0 %592
      %596 = vset.pattern.permute.xlu0 0
      %597 = vperm.xlu0 %596, %v507
      %v598 = vpop.permute.xlu0 %597
      %601 = vset.pattern.permute.xlu0 0
      %602 = vperm.xlu0 %601, %v508
      %v603 = vpop.permute.xlu0 %602
      %606 = vset.pattern.permute.xlu0 0
      %607 = vperm.xlu0 %606, %v509
      %v608 = vpop.permute.xlu0 %607
      %611 = vset.pattern.permute.xlu0 0
      %612 = vperm.xlu0 %611, %v510
      %v613 = vpop.permute.xlu0 %612
      %616 = vset.pattern.permute.xlu0 0
      %617 = vperm.xlu0 %616, %v511
      %v618 = vpop.permute.xlu0 %617
      %621 = vset.pattern.permute.xlu0 0
      %622 = vperm.xlu0 %621, %v512
      %v623 = vpop.permute.xlu0 %622
      %626 = vset.pattern.permute.xlu0 0
      %627 = vperm.xlu0 %626, %v513
      %v628 = vpop.permute.xlu0 %627
      %631 = vset.pattern.permute.xlu0 0
      %632 = vperm.xlu0 %631, %v514
      %v633 = vpop.permute.xlu0 %632
      %636 = vset.pattern.permute.xlu0 0
      %637 = vperm.xlu0 %636, %v515
      %v638 = vpop.permute.xlu0 %637
      %641 = vset.pattern.permute.xlu0 0
      %642 = vperm.xlu0 %641, %v516
      %v643 = vpop.permute.xlu0 %642
      %646 = vset.pattern.permute.xlu0 0
      %647 = vperm.xlu0 %646, %v517
      %v648 = vpop.permute.xlu0 %647
      %651 = vset.pattern.permute.xlu0 0
      %652 = vperm.xlu0 %651, %v518
      %v653 = vpop.permute.xlu0 %652
      %656 = vset.pattern.permute.xlu0 0
      %657 = vperm.xlu0 %656, %v519
      %v658 = vpop.permute.xlu0 %657
      %661 = vset.pattern.permute.xlu0 0
      %662 = vperm.xlu0 %661, %v520
      %v663 = vpop.permute.xlu0 %662
      %666 = vset.pattern.permute.xlu0 0
      %667 = vperm.xlu0 %666, %v521
      %v668 = vpop.permute.xlu0 %667
      %671 = vset.pattern.permute.xlu0 0
      %672 = vperm.xlu0 %671, %v522
      %v673 = vpop.permute.xlu0 %672
      %676 = vset.pattern.permute.xlu0 0
      %677 = vperm.xlu0 %676, %v523
      %v678 = vpop.permute.xlu0 %677
      %681 = vset.pattern.permute.xlu0 0
      %682 = vperm.xlu0 %681, %v524
      %v683 = vpop.permute.xlu0 %682
      %v717 = vunpack.c.l.b16 %v461
      %v718 = vunpack.c.l.b16 %v462
      %v719 = vunpack.c.l.b16 %v463
      %v720 = vunpack.c.l.b16 %v464
      %v721 = vunpack.c.l.b16 %v465
      %v722 = vunpack.c.l.b16 %v466
      %v723 = vunpack.c.l.b16 %v467
      %v724 = vunpack.c.l.b16 %v468
      %v725 = vunpack.c.l.b16 %v469
      %v726 = vunpack.c.l.b16 %v470
      %v727 = vunpack.c.l.b16 %v471
      %v728 = vunpack.c.l.b16 %v472
      %v729 = vunpack.c.l.b16 %v473
      %v730 = vunpack.c.l.b16 %v474
      %v731 = vunpack.c.l.b16 %v475
      %v732 = vunpack.c.l.b16 %v476
      %v733 = vunpack.c.l.b16 %v477
      %v734 = vunpack.c.l.b16 %v478
      %v735 = vunpack.c.l.b16 %v479
      %v736 = vunpack.c.l.b16 %v480
      %v737 = vunpack.c.l.b16 %v481
      %v738 = vunpack.c.l.b16 %v482
      %v739 = vunpack.c.l.b16 %v483
      %v740 = vunpack.c.l.b16 %v484
      %v741 = vunpack.c.l.b16 %v485
      %v742 = vunpack.c.l.b16 %v486
      %v743 = vunpack.c.l.b16 %v487
      %v744 = vunpack.c.l.b16 %v488
      %v745 = vunpack.c.l.b16 %v489
      %v746 = vunpack.c.l.b16 %v490
      %v747 = vunpack.c.l.b16 %v491
      %v748 = vunpack.c.l.b16 %v492
      %v749 = vpack.c.b16 %v718, %v717
      %v750 = vpack.c.b16 %v720, %v719
      %v751 = vpack.c.b16 %v722, %v721
      %v752 = vpack.c.b16 %v724, %v723
      %v753 = vpack.c.b16 %v726, %v725
      %v754 = vpack.c.b16 %v728, %v727
      %v755 = vpack.c.b16 %v730, %v729
      %v756 = vpack.c.b16 %v732, %v731
      %v757 = vpack.c.b16 %v734, %v733
      %v758 = vpack.c.b16 %v736, %v735
      %v759 = vpack.c.b16 %v738, %v737
      %v760 = vpack.c.b16 %v740, %v739
      %v761 = vpack.c.b16 %v742, %v741
      %v762 = vpack.c.b16 %v744, %v743
      %v763 = vpack.c.b16 %v746, %v745
      %v764 = vpack.c.b16 %v748, %v747
      %vm765 = vcmask 64512
      %v767 = vsel %vm765, %v749, 0
      %v770 = vsel %vm765, %v750, 0
      %v773 = vsel %vm765, %v751, 0
      %v776 = vsel %vm765, %v752, 0
      %v779 = vsel %vm765, %v753, 0
      %v782 = vsel %vm765, %v754, 0
      %v785 = vsel %vm765, %v755, 0
      %v788 = vsel %vm765, %v756, 0
      %v791 = vsel %vm765, %v757, 0
      %v794 = vsel %vm765, %v758, 0
      %v797 = vsel %vm765, %v759, 0
      %v800 = vsel %vm765, %v760, 0
      %v803 = vsel %vm765, %v761, 0
      %v806 = vsel %vm765, %v762, 0
      %v809 = vsel %vm765, %v763, 0
      %v812 = vsel %vm765, %v764, 0
      %vm814 = vcmask 1043456
      %v816 = vsel %vm814, %v453, 0
      %v819 = vsel %vm814, %v454, 0
      %v822 = vsel %vm814, %v455, 0
      %v825 = vsel %vm814, %v456, 0
      %v828 = vsel %vm814, %v457, 0
      %v831 = vsel %vm814, %v458, 0
      %v834 = vsel %vm814, %v459, 0
      %v837 = vsel %vm814, %v460, 0
      %839 = vmatprep.subr.bf16.mxu0 %v819
      %840 = vmatpush1.bf16.msra.mxu0 %v816
      %841 = vmatprep.subr.bf16.mxu0 0
      %842 = vmatpush1.bf16.msra.mxu0 0
      %843 = vmatprep.subr.bf16.mxu0 0
      %844 = vmatpush1.bf16.msra.mxu0 0
      %845 = vmatprep.subr.bf16.mxu0 0
      %846 = vmatpush1.bf16.msra.mxu0 0
      %847 = vmatprep.subr.bf16.mxu0 0
      %848 = vmatpush1.bf16.msra.mxu0 0
      %849 = vmatprep.subr.bf16.mxu0 0
      %850 = vmatpush1.bf16.msra.mxu0 0
      %851 = vmatprep.subr.bf16.mxu0 0
      %852 = vmatpush1.bf16.msra.mxu0 0
      %853 = vmatprep.subr.bf16.mxu0 0
      %854 = vmatpush1.bf16.msra.mxu0 0
      %855 = vmatprep.subr.bf16.mxu0 0
      %856 = vmatpush1.bf16.msra.mxu0 0
      %857 = vmatprep.subr.bf16.mxu0 0
      %858 = vmatpush1.bf16.msra.mxu0 0
      %859 = vmatprep.subr.bf16.mxu0 0
      %860 = vmatpush1.bf16.msra.mxu0 0
      %861 = vmatprep.subr.bf16.mxu0 0
      %862 = vmatpush1.bf16.msra.mxu0 0
      %863 = vmatprep.subr.bf16.mxu0 0
      %864 = vmatpush1.bf16.msra.mxu0 0
      %865 = vmatprep.subr.bf16.mxu0 0
      %866 = vmatpush1.bf16.msra.mxu0 0
      %867 = vmatprep.subr.bf16.mxu0 0
      %868 = vmatpush1.bf16.msra.mxu0 0
      %869 = vmatprep.subr.bf16.mxu0 0
      %870 = vmatpush1.bf16.msra.mxu0 0
      %871 = vmatprep.mubr.bf16.mxu0 0
      %872 = vmatmul.mubr.bf16.gmra.mrb[0].mxu0 %v767
      %v873 = vpop.f32.mrb[0].mxu0
      %v874 = vadd.f32 %v528, %v873
      %v875 = vpop.f32.mrb[0].mxu0
      %v876 = vadd.f32 %v528, %v875
      %v877 = vpop.f32.mrb[0].mxu0
      %v878 = vadd.f32 %v533, %v877
      %v879 = vpop.f32.mrb[0].mxu0
      %v880 = vadd.f32 %v533, %v879
      %881 = vmatprep.mubr.bf16.mxu0 0
      %882 = vmatmul.mubr.bf16.gmra.mrb[0].mxu0 %v770
      %v883 = vpop.f32.mrb[0].mxu0
      %v884 = vadd.f32 %v538, %v883
      %v885 = vpop.f32.mrb[0].mxu0
      %v886 = vadd.f32 %v538, %v885
      %v887 = vpop.f32.mrb[0].mxu0
      %v888 = vadd.f32 %v543, %v887
      %v889 = vpop.f32.mrb[0].mxu0
      %v890 = vadd.f32 %v543, %v889
      %891 = vmatprep.mubr.bf16.mxu0 0
      %892 = vmatmul.mubr.bf16.gmra.mrb[0].mxu0 %v773
      %v893 = vpop.f32.mrb[0].mxu0
      %v894 = vadd.f32 %v548, %v893
      %v895 = vpop.f32.mrb[0].mxu0
      %v896 = vadd.f32 %v548, %v895
      %v897 = vpop.f32.mrb[0].mxu0
      %v898 = vadd.f32 %v553, %v897
      %v899 = vpop.f32.mrb[0].mxu0
      %v900 = vadd.f32 %v553, %v899
      %901 = vmatprep.mubr.bf16.mxu0 0
      %902 = vmatmul.mubr.bf16.gmra.mrb[0].mxu0 %v776
      %v903 = vpop.f32.mrb[0].mxu0
      %v904 = vadd.f32 %v558, %v903
      %v905 = vpop.f32.mrb[0].mxu0
      %v906 = vadd.f32 %v558, %v905
      %v907 = vpop.f32.mrb[0].mxu0
      %v908 = vadd.f32 %v563, %v907
      %v909 = vpop.f32.mrb[0].mxu0
      %v910 = vadd.f32 %v563, %v909
      %911 = vmatprep.mubr.bf16.mxu0 0
      %912 = vmatmul.mubr.bf16.gmra.mrb[0].mxu0 %v779
      %v913 = vpop.f32.mrb[0].mxu0
      %v914 = vadd.f32 %v568, %v913
      %v915 = vpop.f32.mrb[0].mxu0
      %v916 = vadd.f32 %v568, %v915
      %v917 = vpop.f32.mrb[0].mxu0
      %v918 = vadd.f32 %v573, %v917
      %v919 = vpop.f32.mrb[0].mxu0
      %v920 = vadd.f32 %v573, %v919
      %921 = vmatprep.mubr.bf16.mxu0 0
      %922 = vmatmul.mubr.bf16.gmra.mrb[0].mxu0 %v782
      %v923 = vpop.f32.mrb[0].mxu0
      %v924 = vadd.f32 %v578, %v923
      %v925 = vpop.f32.mrb[0].mxu0
      %v926 = vadd.f32 %v578, %v925
      %v927 = vpop.f32.mrb[0].mxu0
      %v928 = vadd.f32 %v583, %v927
      %v929 = vpop.f32.mrb[0].mxu0
      %v930 = vadd.f32 %v583, %v929
      %931 = vmatprep.mubr.bf16.mxu0 0
      %932 = vmatmul.mubr.bf16.gmra.mrb[0].mxu0 %v785
      %v933 = vpop.f32.mrb[0].mxu0
      %v934 = vadd.f32 %v588, %v933
      %v935 = vpop.f32.mrb[0].mxu0
      %v936 = vadd.f32 %v588, %v935
      %v937 = vpop.f32.mrb[0].mxu0
      %v938 = vadd.f32 %v593, %v937
      %v939 = vpop.f32.mrb[0].mxu0
      %v940 = vadd.f32 %v593, %v939
      %941 = vmatprep.mubr.bf16.mxu0 0
      %942 = vmatmul.mubr.bf16.gmra.mrb[0].mxu0 %v788
      %v943 = vpop.f32.mrb[0].mxu0
      %v944 = vadd.f32 %v598, %v943
      %v945 = vpop.f32.mrb[0].mxu0
      %v946 = vadd.f32 %v598, %v945
      %v947 = vpop.f32.mrb[0].mxu0
      %v948 = vadd.f32 %v603, %v947
      %v949 = vpop.f32.mrb[0].mxu0
      %v950 = vadd.f32 %v603, %v949
      %951 = vmatprep.mubr.bf16.mxu0 0
      %952 = vmatmul.mubr.bf16.gmra.mrb[0].mxu0 %v791
      %v953 = vpop.f32.mrb[0].mxu0
      %v954 = vadd.f32 %v608, %v953
      %v955 = vpop.f32.mrb[0].mxu0
      %v956 = vadd.f32 %v608, %v955
      %v957 = vpop.f32.mrb[0].mxu0
      %v958 = vadd.f32 %v613, %v957
      %v959 = vpop.f32.mrb[0].mxu0
      %v960 = vadd.f32 %v613, %v959
      %961 = vmatprep.mubr.bf16.mxu0 0
      %962 = vmatmul.mubr.bf16.gmra.mrb[0].mxu0 %v794
      %v963 = vpop.f32.mrb[0].mxu0
      %v964 = vadd.f32 %v618, %v963
      %v965 = vpop.f32.mrb[0].mxu0
      %v966 = vadd.f32 %v618, %v965
      %v967 = vpop.f32.mrb[0].mxu0
      %v968 = vadd.f32 %v623, %v967
      %v969 = vpop.f32.mrb[0].mxu0
      %v970 = vadd.f32 %v623, %v969
      %971 = vmatprep.mubr.bf16.mxu0 0
      %972 = vmatmul.mubr.bf16.gmra.mrb[0].mxu0 %v797
      %v973 = vpop.f32.mrb[0].mxu0
      %v974 = vadd.f32 %v628, %v973
      %v975 = vpop.f32.mrb[0].mxu0
      %v976 = vadd.f32 %v628, %v975
      %v977 = vpop.f32.mrb[0].mxu0
      %v978 = vadd.f32 %v633, %v977
      %v979 = vpop.f32.mrb[0].mxu0
      %v980 = vadd.f32 %v633, %v979
      %981 = vmatprep.mubr.bf16.mxu0 0
      %982 = vmatmul.mubr.bf16.gmra.mrb[0].mxu0 %v800
      %v983 = vpop.f32.mrb[0].mxu0
      %v984 = vadd.f32 %v638, %v983
      %v985 = vpop.f32.mrb[0].mxu0
      %v986 = vadd.f32 %v638, %v985
      %v987 = vpop.f32.mrb[0].mxu0
      %v988 = vadd.f32 %v643, %v987
      %v989 = vpop.f32.mrb[0].mxu0
      %v990 = vadd.f32 %v643, %v989
      %991 = vmatprep.mubr.bf16.mxu0 0
      %992 = vmatmul.mubr.bf16.gmra.mrb[0].mxu0 %v803
      %v993 = vpop.f32.mrb[0].mxu0
      %v994 = vadd.f32 %v648, %v993
      %v995 = vpop.f32.mrb[0].mxu0
      %v996 = vadd.f32 %v648, %v995
      %v997 = vpop.f32.mrb[0].mxu0
      %v998 = vadd.f32 %v653, %v997
      %v999 = vpop.f32.mrb[0].mxu0
      %v1000 = vadd.f32 %v653, %v999
      %1001 = vmatprep.mubr.bf16.mxu0 0
      %1002 = vmatmul.mubr.bf16.gmra.mrb[0].mxu0 %v806
      %v1003 = vpop.f32.mrb[0].mxu0
      %v1004 = vadd.f32 %v658, %v1003
      %v1005 = vpop.f32.mrb[0].mxu0
      %v1006 = vadd.f32 %v658, %v1005
      %v1007 = vpop.f32.mrb[0].mxu0
      %v1008 = vadd.f32 %v663, %v1007
      %v1009 = vpop.f32.mrb[0].mxu0
      %v1010 = vadd.f32 %v663, %v1009
      %1011 = vmatprep.mubr.bf16.mxu0 0
      %1012 = vmatmul.mubr.bf16.gmra.mrb[0].mxu0 %v809
      %v1013 = vpop.f32.mrb[0].mxu0
      %v1014 = vadd.f32 %v668, %v1013
      %v1015 = vpop.f32.mrb[0].mxu0
      %v1016 = vadd.f32 %v668, %v1015
      %v1017 = vpop.f32.mrb[0].mxu0
      %v1018 = vadd.f32 %v673, %v1017
      %v1019 = vpop.f32.mrb[0].mxu0
      %v1020 = vadd.f32 %v673, %v1019
      %1021 = vmatprep.mubr.bf16.mxu0 0
      %1022 = vmatmul.mubr.bf16.gmra.mrb[0].mxu0 %v812
      %v1023 = vpop.f32.mrb[0].mxu0
      %v1024 = vadd.f32 %v678, %v1023
      %v1025 = vpop.f32.mrb[0].mxu0
      %v1026 = vadd.f32 %v678, %v1025
      %v1027 = vpop.f32.mrb[0].mxu0
      %v1028 = vadd.f32 %v683, %v1027
      %v1029 = vpop.f32.mrb[0].mxu0
      %v1030 = vadd.f32 %v683, %v1029
      %1031 = vdwg.mxu0
      %1032 = vmatprep.subr.bf16.mxu0 %v825
      %1033 = vmatpush1.bf16.msra.mxu0 %v822
      %1034 = vmatprep.subr.bf16.mxu0 0
      %1035 = vmatpush1.bf16.msra.mxu0 0
      %1036 = vmatprep.subr.bf16.mxu0 0
      %1037 = vmatpush1.bf16.msra.mxu0 0
      %1038 = vmatprep.subr.bf16.mxu0 0
      %1039 = vmatpush1.bf16.msra.mxu0 0
      %1040 = vmatprep.subr.bf16.mxu0 0
      %1041 = vmatpush1.bf16.msra.mxu0 0
      %1042 = vmatprep.subr.bf16.mxu0 0
      %1043 = vmatpush1.bf16.msra.mxu0 0
      %1044 = vmatprep.subr.bf16.mxu0 0
      %1045 = vmatpush1.bf16.msra.mxu0 0
      %1046 = vmatprep.subr.bf16.mxu0 0
      %1047 = vmatpush1.bf16.msra.mxu0 0
      %1048 = vmatprep.subr.bf16.mxu0 0
      %1049 = vmatpush1.bf16.msra.mxu0 0
      %1050 = vmatprep.subr.bf16.mxu0 0
      %1051 = vmatpush1.bf16.msra.mxu0 0
      %1052 = vmatprep.subr.bf16.mxu0 0
      %1053 = vmatpush1.bf16.msra.mxu0 0
      %1054 = vmatprep.subr.bf16.mxu0 0
      %1055 = vmatpush1.bf16.msra.mxu0 0
      %1056 = vmatprep.subr.bf16.mxu0 0
      %1057 = vmatpush1.bf16.msra.mxu0 0
      %1058 = vmatprep.subr.bf16.mxu0 0
      %1059 = vmatpush1.bf16.msra.mxu0 0
      %1060 = vmatprep.subr.bf16.mxu0 0
      %1061 = vmatpush1.bf16.msra.mxu0 0
      %1062 = vmatprep.subr.bf16.mxu0 0
      %1063 = vmatpush1.bf16.msra.mxu0 0
      %1064 = vmatprep.mubr.bf16.mxu0 0
      %1065 = vmatmul.mubr.bf16.gmra.mrb[0].mxu0 %v767
      %v1066 = vpop.f32.mrb[0].mxu0
      %v1067 = vadd.f32 %v528, %v1066
      %v1068 = vpop.f32.mrb[0].mxu0
      %v1069 = vadd.f32 %v528, %v1068
      %v1070 = vpop.f32.mrb[0].mxu0
      %v1071 = vadd.f32 %v533, %v1070
      %v1072 = vpop.f32.mrb[0].mxu0
      %v1073 = vadd.f32 %v533, %v1072
      %1074 = vmatprep.mubr.bf16.mxu0 0
      %1075 = vmatmul.mubr.bf16.gmra.mrb[0].mxu0 %v770
      %v1076 = vpop.f32.mrb[0].mxu0
      %v1077 = vadd.f32 %v538, %v1076
      %v1078 = vpop.f32.mrb[0].mxu0
      %v1079 = vadd.f32 %v538, %v1078
      %v1080 = vpop.f32.mrb[0].mxu0
      %v1081 = vadd.f32 %v543, %v1080
      %v1082 = vpop.f32.mrb[0].mxu0
      %v1083 = vadd.f32 %v543, %v1082
      %1084 = vmatprep.mubr.bf16.mxu0 0
      %1085 = vmatmul.mubr.bf16.gmra.mrb[0].mxu0 %v773
      %v1086 = vpop.f32.mrb[0].mxu0
      %v1087 = vadd.f32 %v548, %v1086
      %v1088 = vpop.f32.mrb[0].mxu0
      %v1089 = vadd.f32 %v548, %v1088
      %v1090 = vpop.f32.mrb[0].mxu0
      %v1091 = vadd.f32 %v553, %v1090
      %v1092 = vpop.f32.mrb[0].mxu0
      %v1093 = vadd.f32 %v553, %v1092
      %1094 = vmatprep.mubr.bf16.mxu0 0
      %1095 = vmatmul.mubr.bf16.gmra.mrb[0].mxu0 %v776
      %v1096 = vpop.f32.mrb[0].mxu0
      %v1097 = vadd.f32 %v558, %v1096
      %v1098 = vpop.f32.mrb[0].mxu0
      %v1099 = vadd.f32 %v558, %v1098
      %v1100 = vpop.f32.mrb[0].mxu0
      %v1101 = vadd.f32 %v563, %v1100
      %v1102 = vpop.f32.mrb[0].mxu0
      %v1103 = vadd.f32 %v563, %v1102
      %1104 = vmatprep.mubr.bf16.mxu0 0
      %1105 = vmatmul.mubr.bf16.gmra.mrb[0].mxu0 %v779
      %v1106 = vpop.f32.mrb[0].mxu0
      %v1107 = vadd.f32 %v568, %v1106
      %v1108 = vpop.f32.mrb[0].mxu0
      %v1109 = vadd.f32 %v568, %v1108
      %v1110 = vpop.f32.mrb[0].mxu0
      %v1111 = vadd.f32 %v573, %v1110
      %v1112 = vpop.f32.mrb[0].mxu0
      %v1113 = vadd.f32 %v573, %v1112
      %1114 = vmatprep.mubr.bf16.mxu0 0
      %1115 = vmatmul.mubr.bf16.gmra.mrb[0].mxu0 %v782
      %v1116 = vpop.f32.mrb[0].mxu0
      %v1117 = vadd.f32 %v578, %v1116
      %v1118 = vpop.f32.mrb[0].mxu0
      %v1119 = vadd.f32 %v578, %v1118
      %v1120 = vpop.f32.mrb[0].mxu0
      %v1121 = vadd.f32 %v583, %v1120
      %v1122 = vpop.f32.mrb[0].mxu0
      %v1123 = vadd.f32 %v583, %v1122
      %1124 = vmatprep.mubr.bf16.mxu0 0
      %1125 = vmatmul.mubr.bf16.gmra.mrb[0].mxu0 %v785
      %v1126 = vpop.f32.mrb[0].mxu0
      %v1127 = vadd.f32 %v588, %v1126
      %v1128 = vpop.f32.mrb[0].mxu0
      %v1129 = vadd.f32 %v588, %v1128
      %v1130 = vpop.f32.mrb[0].mxu0
      %v1131 = vadd.f32 %v593, %v1130
      %v1132 = vpop.f32.mrb[0].mxu0
      %v1133 = vadd.f32 %v593, %v1132
      %1134 = vmatprep.mubr.bf16.mxu0 0
      %1135 = vmatmul.mubr.bf16.gmra.mrb[0].mxu0 %v788
      %v1136 = vpop.f32.mrb[0].mxu0
      %v1137 = vadd.f32 %v598, %v1136
      %v1138 = vpop.f32.mrb[0].mxu0
      %v1139 = vadd.f32 %v598, %v1138
      %v1140 = vpop.f32.mrb[0].mxu0
      %v1141 = vadd.f32 %v603, %v1140
      %v1142 = vpop.f32.mrb[0].mxu0
      %v1143 = vadd.f32 %v603, %v1142
      %1144 = vmatprep.mubr.bf16.mxu0 0
      %1145 = vmatmul.mubr.bf16.gmra.mrb[0].mxu0 %v791
      %v1146 = vpop.f32.mrb[0].mxu0
      %v1147 = vadd.f32 %v608, %v1146
      %v1148 = vpop.f32.mrb[0].mxu0
      %v1149 = vadd.f32 %v608, %v1148
      %v1150 = vpop.f32.mrb[0].mxu0
      %v1151 = vadd.f32 %v613, %v1150
      %v1152 = vpop.f32.mrb[0].mxu0
      %v1153 = vadd.f32 %v613, %v1152
      %1154 = vmatprep.mubr.bf16.mxu0 0
      %1155 = vmatmul.mubr.bf16.gmra.mrb[0].mxu0 %v794
      %v1156 = vpop.f32.mrb[0].mxu0
      %v1157 = vadd.f32 %v618, %v1156
      %v1158 = vpop.f32.mrb[0].mxu0
      %v1159 = vadd.f32 %v618, %v1158
      %v1160 = vpop.f32.mrb[0].mxu0
      %v1161 = vadd.f32 %v623, %v1160
      %v1162 = vpop.f32.mrb[0].mxu0
      %v1163 = vadd.f32 %v623, %v1162
      %1164 = vmatprep.mubr.bf16.mxu0 0
      %1165 = vmatmul.mubr.bf16.gmra.mrb[0].mxu0 %v797
      %v1166 = vpop.f32.mrb[0].mxu0
      %v1167 = vadd.f32 %v628, %v1166
      %v1168 = vpop.f32.mrb[0].mxu0
      %v1169 = vadd.f32 %v628, %v1168
      %v1170 = vpop.f32.mrb[0].mxu0
      %v1171 = vadd.f32 %v633, %v1170
      %v1172 = vpop.f32.mrb[0].mxu0
      %v1173 = vadd.f32 %v633, %v1172
      %1174 = vmatprep.mubr.bf16.mxu0 0
      %1175 = vmatmul.mubr.bf16.gmra.mrb[0].mxu0 %v800
      %v1176 = vpop.f32.mrb[0].mxu0
      %v1177 = vadd.f32 %v638, %v1176
      %v1178 = vpop.f32.mrb[0].mxu0
      %v1179 = vadd.f32 %v638, %v1178
      %v1180 = vpop.f32.mrb[0].mxu0
      %v1181 = vadd.f32 %v643, %v1180
      %v1182 = vpop.f32.mrb[0].mxu0
      %v1183 = vadd.f32 %v643, %v1182
      %1184 = vmatprep.mubr.bf16.mxu0 0
      %1185 = vmatmul.mubr.bf16.gmra.mrb[0].mxu0 %v803
      %v1186 = vpop.f32.mrb[0].mxu0
      %v1187 = vadd.f32 %v648, %v1186
      %v1188 = vpop.f32.mrb[0].mxu0
      %v1189 = vadd.f32 %v648, %v1188
      %v1190 = vpop.f32.mrb[0].mxu0
      %v1191 = vadd.f32 %v653, %v1190
      %v1192 = vpop.f32.mrb[0].mxu0
      %v1193 = vadd.f32 %v653, %v1192
      %1194 = vmatprep.mubr.bf16.mxu0 0
      %1195 = vmatmul.mubr.bf16.gmra.mrb[0].mxu0 %v806
      %v1196 = vpop.f32.mrb[0].mxu0
      %v1197 = vadd.f32 %v658, %v1196
      %v1198 = vpop.f32.mrb[0].mxu0
      %v1199 = vadd.f32 %v658, %v1198
      %v1200 = vpop.f32.mrb[0].mxu0
      %v1201 = vadd.f32 %v663, %v1200
      %v1202 = vpop.f32.mrb[0].mxu0
      %v1203 = vadd.f32 %v663, %v1202
      %1204 = vmatprep.mubr.bf16.mxu0 0
      %1205 = vmatmul.mubr.bf16.gmra.mrb[0].mxu0 %v809
      %v1206 = vpop.f32.mrb[0].mxu0
      %v1207 = vadd.f32 %v668, %v1206
      %v1208 = vpop.f32.mrb[0].mxu0
      %v1209 = vadd.f32 %v668, %v1208
      %v1210 = vpop.f32.mrb[0].mxu0
      %v1211 = vadd.f32 %v673, %v1210
      %v1212 = vpop.f32.mrb[0].mxu0
      %v1213 = vadd.f32 %v673, %v1212
      %1214 = vmatprep.mubr.bf16.mxu0 0
      %1215 = vmatmul.mubr.bf16.gmra.mrb[0].mxu0 %v812
      %v1216 = vpop.f32.mrb[0].mxu0
      %v1217 = vadd.f32 %v678, %v1216
      %v1218 = vpop.f32.mrb[0].mxu0
      %v1219 = vadd.f32 %v678, %v1218
      %v1220 = vpop.f32.mrb[0].mxu0
      %v1221 = vadd.f32 %v683, %v1220
      %v1222 = vpop.f32.mrb[0].mxu0
      %v1223 = vadd.f32 %v683, %v1222
      %1224 = vdwg.mxu0
      %1225 = vmatprep.subr.bf16.mxu0 %v831
      %1226 = vmatpush1.bf16.msra.mxu0 %v828
      %1227 = vmatprep.subr.bf16.mxu0 0
      %1228 = vmatpush1.bf16.msra.mxu0 0
      %1229 = vmatprep.subr.bf16.mxu0 0
      %1230 = vmatpush1.bf16.msra.mxu0 0
      %1231 = vmatprep.subr.bf16.mxu0 0
      %1232 = vmatpush1.bf16.msra.mxu0 0
      %1233 = vmatprep.subr.bf16.mxu0 0
      %1234 = vmatpush1.bf16.msra.mxu0 0
      %1235 = vmatprep.subr.bf16.mxu0 0
      %1236 = vmatpush1.bf16.msra.mxu0 0
      %1237 = vmatprep.subr.bf16.mxu0 0
      %1238 = vmatpush1.bf16.msra.mxu0 0
      %1239 = vmatprep.subr.bf16.mxu0 0
      %1240 = vmatpush1.bf16.msra.mxu0 0
      %1241 = vmatprep.subr.bf16.mxu0 0
      %1242 = vmatpush1.bf16.msra.mxu0 0
      %1243 = vmatprep.subr.bf16.mxu0 0
      %1244 = vmatpush1.bf16.msra.mxu0 0
      %1245 = vmatprep.subr.bf16.mxu0 0
      %1246 = vmatpush1.bf16.msra.mxu0 0
      %1247 = vmatprep.subr.bf16.mxu0 0
      %1248 = vmatpush1.bf16.msra.mxu0 0
      %1249 = vmatprep.subr.bf16.mxu0 0
      %1250 = vmatpush1.bf16.msra.mxu0 0
      %1251 = vmatprep.subr.bf16.mxu0 0
      %1252 = vmatpush1.bf16.msra.mxu0 0
      %1253 = vmatprep.subr.bf16.mxu0 0
      %1254 = vmatpush1.bf16.msra.mxu0 0
      %1255 = vmatprep.subr.bf16.mxu0 0
      %1256 = vmatpush1.bf16.msra.mxu0 0
      %1257 = vmatprep.mubr.bf16.mxu0 0
      %1258 = vmatmul.mubr.bf16.gmra.mrb[0].mxu0 %v767
      %v1259 = vpop.f32.mrb[0].mxu0
      %v1260 = vadd.f32 %v528, %v1259
      %v1261 = vpop.f32.mrb[0].mxu0
      %v1262 = vadd.f32 %v528, %v1261
      %v1263 = vpop.f32.mrb[0].mxu0
      %v1264 = vadd.f32 %v533, %v1263
      %v1265 = vpop.f32.mrb[0].mxu0
      %v1266 = vadd.f32 %v533, %v1265
      %1267 = vmatprep.mubr.bf16.mxu0 0
      %1268 = vmatmul.mubr.bf16.gmra.mrb[0].mxu0 %v770
      %v1269 = vpop.f32.mrb[0].mxu0
      %v1270 = vadd.f32 %v538, %v1269
      %v1271 = vpop.f32.mrb[0].mxu0
      %v1272 = vadd.f32 %v538, %v1271
      %v1273 = vpop.f32.mrb[0].mxu0
      %v1274 = vadd.f32 %v543, %v1273
      %v1275 = vpop.f32.mrb[0].mxu0
      %v1276 = vadd.f32 %v543, %v1275
      %1277 = vmatprep.mubr.bf16.mxu0 0
      %1278 = vmatmul.mubr.bf16.gmra.mrb[0].mxu0 %v773
      %v1279 = vpop.f32.mrb[0].mxu0
      %v1280 = vadd.f32 %v548, %v1279
      %v1281 = vpop.f32.mrb[0].mxu0
      %v1282 = vadd.f32 %v548, %v1281
      %v1283 = vpop.f32.mrb[0].mxu0
      %v1284 = vadd.f32 %v553, %v1283
      %v1285 = vpop.f32.mrb[0].mxu0
      %v1286 = vadd.f32 %v553, %v1285
      %1287 = vmatprep.mubr.bf16.mxu0 0
      %1288 = vmatmul.mubr.bf16.gmra.mrb[0].mxu0 %v776
      %v1289 = vpop.f32.mrb[0].mxu0
      %v1290 = vadd.f32 %v558, %v1289
      %v1291 = vpop.f32.mrb[0].mxu0
      %v1292 = vadd.f32 %v558, %v1291
      %v1293 = vpop.f32.mrb[0].mxu0
      %v1294 = vadd.f32 %v563, %v1293
      %v1295 = vpop.f32.mrb[0].mxu0
      %v1296 = vadd.f32 %v563, %v1295
      %1297 = vmatprep.mubr.bf16.mxu0 0
      %1298 = vmatmul.mubr.bf16.gmra.mrb[0].mxu0 %v779
      %v1299 = vpop.f32.mrb[0].mxu0
      %v1300 = vadd.f32 %v568, %v1299
      %v1301 = vpop.f32.mrb[0].mxu0
      %v1302 = vadd.f32 %v568, %v1301
      %v1303 = vpop.f32.mrb[0].mxu0
      %v1304 = vadd.f32 %v573, %v1303
      %v1305 = vpop.f32.mrb[0].mxu0
      %v1306 = vadd.f32 %v573, %v1305
      %1307 = vmatprep.mubr.bf16.mxu0 0
      %1308 = vmatmul.mubr.bf16.gmra.mrb[0].mxu0 %v782
      %v1309 = vpop.f32.mrb[0].mxu0
      %v1310 = vadd.f32 %v578, %v1309
      %v1311 = vpop.f32.mrb[0].mxu0
      %v1312 = vadd.f32 %v578, %v1311
      %v1313 = vpop.f32.mrb[0].mxu0
      %v1314 = vadd.f32 %v583, %v1313
      %v1315 = vpop.f32.mrb[0].mxu0
      %v1316 = vadd.f32 %v583, %v1315
      %1317 = vmatprep.mubr.bf16.mxu0 0
      %1318 = vmatmul.mubr.bf16.gmra.mrb[0].mxu0 %v785
      %v1319 = vpop.f32.mrb[0].mxu0
      %v1320 = vadd.f32 %v588, %v1319
      %v1321 = vpop.f32.mrb[0].mxu0
      %v1322 = vadd.f32 %v588, %v1321
      %v1323 = vpop.f32.mrb[0].mxu0
      %v1324 = vadd.f32 %v593, %v1323
      %v1325 = vpop.f32.mrb[0].mxu0
      %v1326 = vadd.f32 %v593, %v1325
      %1327 = vmatprep.mubr.bf16.mxu0 0
      %1328 = vmatmul.mubr.bf16.gmra.mrb[0].mxu0 %v788
      %v1329 = vpop.f32.mrb[0].mxu0
      %v1330 = vadd.f32 %v598, %v1329
      %v1331 = vpop.f32.mrb[0].mxu0
      %v1332 = vadd.f32 %v598, %v1331
      %v1333 = vpop.f32.mrb[0].mxu0
      %v1334 = vadd.f32 %v603, %v1333
      %v1335 = vpop.f32.mrb[0].mxu0
      %v1336 = vadd.f32 %v603, %v1335
      %1337 = vmatprep.mubr.bf16.mxu0 0
      %1338 = vmatmul.mubr.bf16.gmra.mrb[0].mxu0 %v791
      %v1339 = vpop.f32.mrb[0].mxu0
      %v1340 = vadd.f32 %v608, %v1339
      %v1341 = vpop.f32.mrb[0].mxu0
      %v1342 = vadd.f32 %v608, %v1341
      %v1343 = vpop.f32.mrb[0].mxu0
      %v1344 = vadd.f32 %v613, %v1343
      %v1345 = vpop.f32.mrb[0].mxu0
      %v1346 = vadd.f32 %v613, %v1345
      %1347 = vmatprep.mubr.bf16.mxu0 0
      %1348 = vmatmul.mubr.bf16.gmra.mrb[0].mxu0 %v794
      %v1349 = vpop.f32.mrb[0].mxu0
      %v1350 = vadd.f32 %v618, %v1349
      %v1351 = vpop.f32.mrb[0].mxu0
      %v1352 = vadd.f32 %v618, %v1351
      %v1353 = vpop.f32.mrb[0].mxu0
      %v1354 = vadd.f32 %v623, %v1353
      %v1355 = vpop.f32.mrb[0].mxu0
      %v1356 = vadd.f32 %v623, %v1355
      %1357 = vmatprep.mubr.bf16.mxu0 0
      %1358 = vmatmul.mubr.bf16.gmra.mrb[0].mxu0 %v797
      %v1359 = vpop.f32.mrb[0].mxu0
      %v1360 = vadd.f32 %v628, %v1359
      %v1361 = vpop.f32.mrb[0].mxu0
      %v1362 = vadd.f32 %v628, %v1361
      %v1363 = vpop.f32.mrb[0].mxu0
      %v1364 = vadd.f32 %v633, %v1363
      %v1365 = vpop.f32.mrb[0].mxu0
      %v1366 = vadd.f32 %v633, %v1365
      %1367 = vmatprep.mubr.bf16.mxu0 0
      %1368 = vmatmul.mubr.bf16.gmra.mrb[0].mxu0 %v800
      %v1369 = vpop.f32.mrb[0].mxu0
      %v1370 = vadd.f32 %v638, %v1369
      %v1371 = vpop.f32.mrb[0].mxu0
      %v1372 = vadd.f32 %v638, %v1371
      %v1373 = vpop.f32.mrb[0].mxu0
      %v1374 = vadd.f32 %v643, %v1373
      %v1375 = vpop.f32.mrb[0].mxu0
      %v1376 = vadd.f32 %v643, %v1375
      %1377 = vmatprep.mubr.bf16.mxu0 0
      %1378 = vmatmul.mubr.bf16.gmra.mrb[0].mxu0 %v803
      %v1379 = vpop.f32.mrb[0].mxu0
      %v1380 = vadd.f32 %v648, %v1379
      %v1381 = vpop.f32.mrb[0].mxu0
      %v1382 = vadd.f32 %v648, %v1381
      %v1383 = vpop.f32.mrb[0].mxu0
      %v1384 = vadd.f32 %v653, %v1383
      %v1385 = vpop.f32.mrb[0].mxu0
      %v1386 = vadd.f32 %v653, %v1385
      %1387 = vmatprep.mubr.bf16.mxu0 0
      %1388 = vmatmul.mubr.bf16.gmra.mrb[0].mxu0 %v806
      %v1389 = vpop.f32.mrb[0].mxu0
      %v1390 = vadd.f32 %v658, %v1389
      %v1391 = vpop.f32.mrb[0].mxu0
      %v1392 = vadd.f32 %v658, %v1391
      %v1393 = vpop.f32.mrb[0].mxu0
      %v1394 = vadd.f32 %v663, %v1393
      %v1395 = vpop.f32.mrb[0].mxu0
      %v1396 = vadd.f32 %v663, %v1395
      %1397 = vmatprep.mubr.bf16.mxu0 0
      %1398 = vmatmul.mubr.bf16.gmra.mrb[0].mxu0 %v809
      %v1399 = vpop.f32.mrb[0].mxu0
      %v1400 = vadd.f32 %v668, %v1399
      %v1401 = vpop.f32.mrb[0].mxu0
      %v1402 = vadd.f32 %v668, %v1401
      %v1403 = vpop.f32.mrb[0].mxu0
      %v1404 = vadd.f32 %v673, %v1403
      %v1405 = vpop.f32.mrb[0].mxu0
      %v1406 = vadd.f32 %v673, %v1405
      %1407 = vmatprep.mubr.bf16.mxu0 0
      %1408 = vmatmul.mubr.bf16.gmra.mrb[0].mxu0 %v812
      %v1409 = vpop.f32.mrb[0].mxu0
      %v1410 = vadd.f32 %v678, %v1409
      %v1411 = vpop.f32.mrb[0].mxu0
      %v1412 = vadd.f32 %v678, %v1411
      %v1413 = vpop.f32.mrb[0].mxu0
      %v1414 = vadd.f32 %v683, %v1413
      %v1415 = vpop.f32.mrb[0].mxu0
      %v1416 = vadd.f32 %v683, %v1415
      %1417 = vdwg.mxu0
      %1418 = vmatprep.subr.bf16.mxu0 %v837
      %1419 = vmatpush1.bf16.msra.mxu0 %v834
      %1420 = vmatprep.subr.bf16.mxu0 0
      %1421 = vmatpush1.bf16.msra.mxu0 0
      %1422 = vmatprep.subr.bf16.mxu0 0
      %1423 = vmatpush1.bf16.msra.mxu0 0
      %1424 = vmatprep.subr.bf16.mxu0 0
      %1425 = vmatpush1.bf16.msra.mxu0 0
      %1426 = vmatprep.subr.bf16.mxu0 0
      %1427 = vmatpush1.bf16.msra.mxu0 0
      %1428 = vmatprep.subr.bf16.mxu0 0
      %1429 = vmatpush1.bf16.msra.mxu0 0
      %1430 = vmatprep.subr.bf16.mxu0 0
      %1431 = vmatpush1.bf16.msra.mxu0 0
      %1432 = vmatprep.subr.bf16.mxu0 0
      %1433 = vmatpush1.bf16.msra.mxu0 0
      %1434 = vmatprep.subr.bf16.mxu0 0
      %1435 = vmatpush1.bf16.msra.mxu0 0
      %1436 = vmatprep.subr.bf16.mxu0 0
      %1437 = vmatpush1.bf16.msra.mxu0 0
      %1438 = vmatprep.subr.bf16.mxu0 0
      %1439 = vmatpush1.bf16.msra.mxu0 0
      %1440 = vmatprep.subr.bf16.mxu0 0
      %1441 = vmatpush1.bf16.msra.mxu0 0
      %1442 = vmatprep.subr.bf16.mxu0 0
      %1443 = vmatpush1.bf16.msra.mxu0 0
      %1444 = vmatprep.subr.bf16.mxu0 0
      %1445 = vmatpush1.bf16.msra.mxu0 0
      %1446 = vmatprep.subr.bf16.mxu0 0
      %1447 = vmatpush1.bf16.msra.mxu0 0
      %1448 = vmatprep.subr.bf16.mxu0 0
      %1449 = vmatpush1.bf16.msra.mxu0 0
      %1450 = vmatprep.mubr.bf16.mxu0 0
      %1451 = vmatmul.mubr.bf16.gmra.mrb[0].mxu0 %v767
      %v1452 = vpop.f32.mrb[0].mxu0
      %v1453 = vadd.f32 %v528, %v1452
      %v1454 = vpop.f32.mrb[0].mxu0
      %v1455 = vadd.f32 %v528, %v1454
      %v1456 = vpop.f32.mrb[0].mxu0
      %v1457 = vadd.f32 %v533, %v1456
      %v1458 = vpop.f32.mrb[0].mxu0
      %v1459 = vadd.f32 %v533, %v1458
      %1460 = vmatprep.mubr.bf16.mxu0 0
      %1461 = vmatmul.mubr.bf16.gmra.mrb[0].mxu0 %v770
      %v1462 = vpop.f32.mrb[0].mxu0
      %v1463 = vadd.f32 %v538, %v1462
      %v1464 = vpop.f32.mrb[0].mxu0
      %v1465 = vadd.f32 %v538, %v1464
      %v1466 = vpop.f32.mrb[0].mxu0
      %v1467 = vadd.f32 %v543, %v1466
      %v1468 = vpop.f32.mrb[0].mxu0
      %v1469 = vadd.f32 %v543, %v1468
      %1470 = vmatprep.mubr.bf16.mxu0 0
      %1471 = vmatmul.mubr.bf16.gmra.mrb[0].mxu0 %v773
      %v1472 = vpop.f32.mrb[0].mxu0
      %v1473 = vadd.f32 %v548, %v1472
      %v1474 = vpop.f32.mrb[0].mxu0
      %v1475 = vadd.f32 %v548, %v1474
      %v1476 = vpop.f32.mrb[0].mxu0
      %v1477 = vadd.f32 %v553, %v1476
      %v1478 = vpop.f32.mrb[0].mxu0
      %v1479 = vadd.f32 %v553, %v1478
      %1480 = vmatprep.mubr.bf16.mxu0 0
      %1481 = vmatmul.mubr.bf16.gmra.mrb[0].mxu0 %v776
      %v1482 = vpop.f32.mrb[0].mxu0
      %v1483 = vadd.f32 %v558, %v1482
      %v1484 = vpop.f32.mrb[0].mxu0
      %v1485 = vadd.f32 %v558, %v1484
      %v1486 = vpop.f32.mrb[0].mxu0
      %v1487 = vadd.f32 %v563, %v1486
      %v1488 = vpop.f32.mrb[0].mxu0
      %v1489 = vadd.f32 %v563, %v1488
      %1490 = vmatprep.mubr.bf16.mxu0 0
      %1491 = vmatmul.mubr.bf16.gmra.mrb[0].mxu0 %v779
      %v1492 = vpop.f32.mrb[0].mxu0
      %v1493 = vadd.f32 %v568, %v1492
      %v1494 = vpop.f32.mrb[0].mxu0
      %v1495 = vadd.f32 %v568, %v1494
      %v1496 = vpop.f32.mrb[0].mxu0
      %v1497 = vadd.f32 %v573, %v1496
      %v1498 = vpop.f32.mrb[0].mxu0
      %v1499 = vadd.f32 %v573, %v1498
      %1500 = vmatprep.mubr.bf16.mxu0 0
      %1501 = vmatmul.mubr.bf16.gmra.mrb[0].mxu0 %v782
      %v1502 = vpop.f32.mrb[0].mxu0
      %v1503 = vadd.f32 %v578, %v1502
      %v1504 = vpop.f32.mrb[0].mxu0
      %v1505 = vadd.f32 %v578, %v1504
      %v1506 = vpop.f32.mrb[0].mxu0
      %v1507 = vadd.f32 %v583, %v1506
      %v1508 = vpop.f32.mrb[0].mxu0
      %v1509 = vadd.f32 %v583, %v1508
      %1510 = vmatprep.mubr.bf16.mxu0 0
      %1511 = vmatmul.mubr.bf16.gmra.mrb[0].mxu0 %v785
      %v1512 = vpop.f32.mrb[0].mxu0
      %v1513 = vadd.f32 %v588, %v1512
      %v1514 = vpop.f32.mrb[0].mxu0
      %v1515 = vadd.f32 %v588, %v1514
      %v1516 = vpop.f32.mrb[0].mxu0
      %v1517 = vadd.f32 %v593, %v1516
      %v1518 = vpop.f32.mrb[0].mxu0
      %v1519 = vadd.f32 %v593, %v1518
      %1520 = vmatprep.mubr.bf16.mxu0 0
      %1521 = vmatmul.mubr.bf16.gmra.mrb[0].mxu0 %v788
      %v1522 = vpop.f32.mrb[0].mxu0
      %v1523 = vadd.f32 %v598, %v1522
      %v1524 = vpop.f32.mrb[0].mxu0
      %v1525 = vadd.f32 %v598, %v1524
      %v1526 = vpop.f32.mrb[0].mxu0
      %v1527 = vadd.f32 %v603, %v1526
      %v1528 = vpop.f32.mrb[0].mxu0
      %v1529 = vadd.f32 %v603, %v1528
      %1530 = vmatprep.mubr.bf16.mxu0 0
      %1531 = vmatmul.mubr.bf16.gmra.mrb[0].mxu0 %v791
      %v1532 = vpop.f32.mrb[0].mxu0
      %v1533 = vadd.f32 %v608, %v1532
      %v1534 = vpop.f32.mrb[0].mxu0
      %v1535 = vadd.f32 %v608, %v1534
      %v1536 = vpop.f32.mrb[0].mxu0
      %v1537 = vadd.f32 %v613, %v1536
      %v1538 = vpop.f32.mrb[0].mxu0
      %v1539 = vadd.f32 %v613, %v1538
      %1540 = vmatprep.mubr.bf16.mxu0 0
      %1541 = vmatmul.mubr.bf16.gmra.mrb[0].mxu0 %v794
      %v1542 = vpop.f32.mrb[0].mxu0
      %v1543 = vadd.f32 %v618, %v1542
      %v1544 = vpop.f32.mrb[0].mxu0
      %v1545 = vadd.f32 %v618, %v1544
      %v1546 = vpop.f32.mrb[0].mxu0
      %v1547 = vadd.f32 %v623, %v1546
      %v1548 = vpop.f32.mrb[0].mxu0
      %v1549 = vadd.f32 %v623, %v1548
      %1550 = vmatprep.mubr.bf16.mxu0 0
      %1551 = vmatmul.mubr.bf16.gmra.mrb[0].mxu0 %v797
      %v1552 = vpop.f32.mrb[0].mxu0
      %v1553 = vadd.f32 %v628, %v1552
      %v1554 = vpop.f32.mrb[0].mxu0
      %v1555 = vadd.f32 %v628, %v1554
      %v1556 = vpop.f32.mrb[0].mxu0
      %v1557 = vadd.f32 %v633, %v1556
      %v1558 = vpop.f32.mrb[0].mxu0
      %v1559 = vadd.f32 %v633, %v1558
      %1560 = vmatprep.mubr.bf16.mxu0 0
      %1561 = vmatmul.mubr.bf16.gmra.mrb[0].mxu0 %v800
      %v1562 = vpop.f32.mrb[0].mxu0
      %v1563 = vadd.f32 %v638, %v1562
      %v1564 = vpop.f32.mrb[0].mxu0
      %v1565 = vadd.f32 %v638, %v1564
      %v1566 = vpop.f32.mrb[0].mxu0
      %v1567 = vadd.f32 %v643, %v1566
      %v1568 = vpop.f32.mrb[0].mxu0
      %v1569 = vadd.f32 %v643, %v1568
      %1570 = vmatprep.mubr.bf16.mxu0 0
      %1571 = vmatmul.mubr.bf16.gmra.mrb[0].mxu0 %v803
      %v1572 = vpop.f32.mrb[0].mxu0
      %v1573 = vadd.f32 %v648, %v1572
      %v1574 = vpop.f32.mrb[0].mxu0
      %v1575 = vadd.f32 %v648, %v1574
      %v1576 = vpop.f32.mrb[0].mxu0
      %v1577 = vadd.f32 %v653, %v1576
      %v1578 = vpop.f32.mrb[0].mxu0
      %v1579 = vadd.f32 %v653, %v1578
      %1580 = vmatprep.mubr.bf16.mxu0 0
      %1581 = vmatmul.mubr.bf16.gmra.mrb[0].mxu0 %v806
      %v1582 = vpop.f32.mrb[0].mxu0
      %v1583 = vadd.f32 %v658, %v1582
      %v1584 = vpop.f32.mrb[0].mxu0
      %v1585 = vadd.f32 %v658, %v1584
      %v1586 = vpop.f32.mrb[0].mxu0
      %v1587 = vadd.f32 %v663, %v1586
      %v1588 = vpop.f32.mrb[0].mxu0
      %v1589 = vadd.f32 %v663, %v1588
      %1590 = vmatprep.mubr.bf16.mxu0 0
      %1591 = vmatmul.mubr.bf16.gmra.mrb[0].mxu0 %v809
      %v1592 = vpop.f32.mrb[0].mxu0
      %v1593 = vadd.f32 %v668, %v1592
      %v1594 = vpop.f32.mrb[0].mxu0
      %v1595 = vadd.f32 %v668, %v1594
      %v1596 = vpop.f32.mrb[0].mxu0
      %v1597 = vadd.f32 %v673, %v1596
      %v1598 = vpop.f32.mrb[0].mxu0
      %v1599 = vadd.f32 %v673, %v1598
      %1600 = vmatprep.mubr.bf16.mxu0 0
      %1601 = vmatmul.mubr.bf16.gmra.mrb[0].mxu0 %v812
      %v1602 = vpop.f32.mrb[0].mxu0
      %v1603 = vadd.f32 %v678, %v1602
      %v1604 = vpop.f32.mrb[0].mxu0
      %v1605 = vadd.f32 %v678, %v1604
      %v1606 = vpop.f32.mrb[0].mxu0
      %v1607 = vadd.f32 %v683, %v1606
      %v1608 = vpop.f32.mrb[0].mxu0
      %v1609 = vadd.f32 %v683, %v1608
      %1610 = vdwg.mxu0
      %v1611 = vmax.f32 %v874, 0.0
      %v1612 = vmax.f32 %v876, 0.0
      %v1613 = vmax.f32 %v1067, 0.0
      %v1614 = vmax.f32 %v1069, 0.0
      %v1615 = vmax.f32 %v1260, 0.0
      %v1616 = vmax.f32 %v1262, 0.0
      %v1617 = vmax.f32 %v1453, 0.0
      %v1618 = vmax.f32 %v1455, 0.0
      %v1619 = vmax.f32 %v878, 0.0
      %v1620 = vmax.f32 %v880, 0.0
      %v1621 = vmax.f32 %v1071, 0.0
      %v1622 = vmax.f32 %v1073, 0.0
      %v1623 = vmax.f32 %v1264, 0.0
      %v1624 = vmax.f32 %v1266, 0.0
      %v1625 = vmax.f32 %v1457, 0.0
      %v1626 = vmax.f32 %v1459, 0.0
      %v1627 = vmax.f32 %v884, 0.0
      %v1628 = vmax.f32 %v886, 0.0
      %v1629 = vmax.f32 %v1077, 0.0
      %v1630 = vmax.f32 %v1079, 0.0
      %v1631 = vmax.f32 %v1270, 0.0
      %v1632 = vmax.f32 %v1272, 0.0
      %v1633 = vmax.f32 %v1463, 0.0
      %v1634 = vmax.f32 %v1465, 0.0
      %v1635 = vmax.f32 %v888, 0.0
      %v1636 = vmax.f32 %v890, 0.0
      %v1637 = vmax.f32 %v1081, 0.0
      %v1638 = vmax.f32 %v1083, 0.0
      %v1639 = vmax.f32 %v1274, 0.0
      %v1640 = vmax.f32 %v1276, 0.0
      %v1641 = vmax.f32 %v1467, 0.0
      %v1642 = vmax.f32 %v1469, 0.0
      %v1643 = vmax.f32 %v894, 0.0
      %v1644 = vmax.f32 %v896, 0.0
      %v1645 = vmax.f32 %v1087, 0.0
      %v1646 = vmax.f32 %v1089, 0.0
      %v1647 = vmax.f32 %v1280, 0.0
      %v1648 = vmax.f32 %v1282, 0.0
      %v1649 = vmax.f32 %v1473, 0.0
      %v1650 = vmax.f32 %v1475, 0.0
      %v1651 = vmax.f32 %v898, 0.0
      %v1652 = vmax.f32 %v900, 0.0
      %v1653 = vmax.f32 %v1091, 0.0
      %v1654 = vmax.f32 %v1093, 0.0
      %v1655 = vmax.f32 %v1284, 0.0
      %v1656 = vmax.f32 %v1286, 0.0
      %v1657 = vmax.f32 %v1477, 0.0
      %v1658 = vmax.f32 %v1479, 0.0
      %v1659 = vmax.f32 %v904, 0.0
      %v1660 = vmax.f32 %v906, 0.0
      %v1661 = vmax.f32 %v1097, 0.0
      %v1662 = vmax.f32 %v1099, 0.0
      %v1663 = vmax.f32 %v1290, 0.0
      %v1664 = vmax.f32 %v1292, 0.0
      %v1665 = vmax.f32 %v1483, 0.0
      %v1666 = vmax.f32 %v1485, 0.0
      %v1667 = vmax.f32 %v908, 0.0
      %v1668 = vmax.f32 %v910, 0.0
      %v1669 = vmax.f32 %v1101, 0.0
      %v1670 = vmax.f32 %v1103, 0.0
      %v1671 = vmax.f32 %v1294, 0.0
      %v1672 = vmax.f32 %v1296, 0.0
      %v1673 = vmax.f32 %v1487, 0.0
      %v1674 = vmax.f32 %v1489, 0.0
      %v1675 = vmax.f32 %v914, 0.0
      %v1676 = vmax.f32 %v916, 0.0
      %v1677 = vmax.f32 %v1107, 0.0
      %v1678 = vmax.f32 %v1109, 0.0
      %v1679 = vmax.f32 %v1300, 0.0
      %v1680 = vmax.f32 %v1302, 0.0
      %v1681 = vmax.f32 %v1493, 0.0
      %v1682 = vmax.f32 %v1495, 0.0
      %v1683 = vmax.f32 %v918, 0.0
      %v1684 = vmax.f32 %v920, 0.0
      %v1685 = vmax.f32 %v1111, 0.0
      %v1686 = vmax.f32 %v1113, 0.0
      %v1687 = vmax.f32 %v1304, 0.0
      %v1688 = vmax.f32 %v1306, 0.0
      %v1689 = vmax.f32 %v1497, 0.0
      %v1690 = vmax.f32 %v1499, 0.0
      %v1691 = vmax.f32 %v924, 0.0
      %v1692 = vmax.f32 %v926, 0.0
      %v1693 = vmax.f32 %v1117, 0.0
      %v1694 = vmax.f32 %v1119, 0.0
      %v1695 = vmax.f32 %v1310, 0.0
      %v1696 = vmax.f32 %v1312, 0.0
      %v1697 = vmax.f32 %v1503, 0.0
      %v1698 = vmax.f32 %v1505, 0.0
      %v1699 = vmax.f32 %v928, 0.0
      %v1700 = vmax.f32 %v930, 0.0
      %v1701 = vmax.f32 %v1121, 0.0
      %v1702 = vmax.f32 %v1123, 0.0
      %v1703 = vmax.f32 %v1314, 0.0
      %v1704 = vmax.f32 %v1316, 0.0
      %v1705 = vmax.f32 %v1507, 0.0
      %v1706 = vmax.f32 %v1509, 0.0
      %v1707 = vmax.f32 %v934, 0.0
      %v1708 = vmax.f32 %v936, 0.0
      %v1709 = vmax.f32 %v1127, 0.0
      %v1710 = vmax.f32 %v1129, 0.0
      %v1711 = vmax.f32 %v1320, 0.0
      %v1712 = vmax.f32 %v1322, 0.0
      %v1713 = vmax.f32 %v1513, 0.0
      %v1714 = vmax.f32 %v1515, 0.0
      %v1715 = vmax.f32 %v938, 0.0
      %v1716 = vmax.f32 %v940, 0.0
      %v1717 = vmax.f32 %v1131, 0.0
      %v1718 = vmax.f32 %v1133, 0.0
      %v1719 = vmax.f32 %v1324, 0.0
      %v1720 = vmax.f32 %v1326, 0.0
      %v1721 = vmax.f32 %v1517, 0.0
      %v1722 = vmax.f32 %v1519, 0.0
      %v1723 = vmax.f32 %v944, 0.0
      %v1724 = vmax.f32 %v946, 0.0
      %v1725 = vmax.f32 %v1137, 0.0
      %v1726 = vmax.f32 %v1139, 0.0
      %v1727 = vmax.f32 %v1330, 0.0
      %v1728 = vmax.f32 %v1332, 0.0
      %v1729 = vmax.f32 %v1523, 0.0
      %v1730 = vmax.f32 %v1525, 0.0
      %v1731 = vmax.f32 %v948, 0.0
      %v1732 = vmax.f32 %v950, 0.0
      %v1733 = vmax.f32 %v1141, 0.0
      %v1734 = vmax.f32 %v1143, 0.0
      %v1735 = vmax.f32 %v1334, 0.0
      %v1736 = vmax.f32 %v1336, 0.0
      %v1737 = vmax.f32 %v1527, 0.0
      %v1738 = vmax.f32 %v1529, 0.0
      %v1739 = vmax.f32 %v954, 0.0
      %v1740 = vmax.f32 %v956, 0.0
      %v1741 = vmax.f32 %v1147, 0.0
      %v1742 = vmax.f32 %v1149, 0.0
      %v1743 = vmax.f32 %v1340, 0.0
      %v1744 = vmax.f32 %v1342, 0.0
      %v1745 = vmax.f32 %v1533, 0.0
      %v1746 = vmax.f32 %v1535, 0.0
      %v1747 = vmax.f32 %v958, 0.0
      %v1748 = vmax.f32 %v960, 0.0
      %v1749 = vmax.f32 %v1151, 0.0
      %v1750 = vmax.f32 %v1153, 0.0
      %v1751 = vmax.f32 %v1344, 0.0
      %v1752 = vmax.f32 %v1346, 0.0
      %v1753 = vmax.f32 %v1537, 0.0
      %v1754 = vmax.f32 %v1539, 0.0
      %v1755 = vmax.f32 %v964, 0.0
      %v1756 = vmax.f32 %v966, 0.0
      %v1757 = vmax.f32 %v1157, 0.0
      %v1758 = vmax.f32 %v1159, 0.0
      %v1759 = vmax.f32 %v1350, 0.0
      %v1760 = vmax.f32 %v1352, 0.0
      %v1761 = vmax.f32 %v1543, 0.0
      %v1762 = vmax.f32 %v1545, 0.0
      %v1763 = vmax.f32 %v968, 0.0
      %v1764 = vmax.f32 %v970, 0.0
      %v1765 = vmax.f32 %v1161, 0.0
      %v1766 = vmax.f32 %v1163, 0.0
      %v1767 = vmax.f32 %v1354, 0.0
      %v1768 = vmax.f32 %v1356, 0.0
      %v1769 = vmax.f32 %v1547, 0.0
      %v1770 = vmax.f32 %v1549, 0.0
      %v1771 = vmax.f32 %v974, 0.0
      %v1772 = vmax.f32 %v976, 0.0
      %v1773 = vmax.f32 %v1167, 0.0
      %v1774 = vmax.f32 %v1169, 0.0
      %v1775 = vmax.f32 %v1360, 0.0
      %v1776 = vmax.f32 %v1362, 0.0
      %v1777 = vmax.f32 %v1553, 0.0
      %v1778 = vmax.f32 %v1555, 0.0
      %v1779 = vmax.f32 %v978, 0.0
      %v1780 = vmax.f32 %v980, 0.0
      %v1781 = vmax.f32 %v1171, 0.0
      %v1782 = vmax.f32 %v1173, 0.0
      %v1783 = vmax.f32 %v1364, 0.0
      %v1784 = vmax.f32 %v1366, 0.0
      %v1785 = vmax.f32 %v1557, 0.0
      %v1786 = vmax.f32 %v1559, 0.0
      %v1787 = vmax.f32 %v984, 0.0
      %v1788 = vmax.f32 %v986, 0.0
      %v1789 = vmax.f32 %v1177, 0.0
      %v1790 = vmax.f32 %v1179, 0.0
      %v1791 = vmax.f32 %v1370, 0.0
      %v1792 = vmax.f32 %v1372, 0.0
      %v1793 = vmax.f32 %v1563, 0.0
      %v1794 = vmax.f32 %v1565, 0.0
      %v1795 = vmax.f32 %v988, 0.0
      %v1796 = vmax.f32 %v990, 0.0
      %v1797 = vmax.f32 %v1181, 0.0
      %v1798 = vmax.f32 %v1183, 0.0
      %v1799 = vmax.f32 %v1374, 0.0
      %v1800 = vmax.f32 %v1376, 0.0
      %v1801 = vmax.f32 %v1567, 0.0
      %v1802 = vmax.f32 %v1569, 0.0
      %v1803 = vmax.f32 %v994, 0.0
      %v1804 = vmax.f32 %v996, 0.0
      %v1805 = vmax.f32 %v1187, 0.0
      %v1806 = vmax.f32 %v1189, 0.0
      %v1807 = vmax.f32 %v1380, 0.0
      %v1808 = vmax.f32 %v1382, 0.0
      %v1809 = vmax.f32 %v1573, 0.0
      %v1810 = vmax.f32 %v1575, 0.0
      %v1811 = vmax.f32 %v998, 0.0
      %v1812 = vmax.f32 %v1000, 0.0
      %v1813 = vmax.f32 %v1191, 0.0
      %v1814 = vmax.f32 %v1193, 0.0
      %v1815 = vmax.f32 %v1384, 0.0
      %v1816 = vmax.f32 %v1386, 0.0
      %v1817 = vmax.f32 %v1577, 0.0
      %v1818 = vmax.f32 %v1579, 0.0
      %v1819 = vmax.f32 %v1004, 0.0
      %v1820 = vmax.f32 %v1006, 0.0
      %v1821 = vmax.f32 %v1197, 0.0
      %v1822 = vmax.f32 %v1199, 0.0
      %v1823 = vmax.f32 %v1390, 0.0
      %v1824 = vmax.f32 %v1392, 0.0
      %v1825 = vmax.f32 %v1583, 0.0
      %v1826 = vmax.f32 %v1585, 0.0
      %v1827 = vmax.f32 %v1008, 0.0
      %v1828 = vmax.f32 %v1010, 0.0
      %v1829 = vmax.f32 %v1201, 0.0
      %v1830 = vmax.f32 %v1203, 0.0
      %v1831 = vmax.f32 %v1394, 0.0
      %v1832 = vmax.f32 %v1396, 0.0
      %v1833 = vmax.f32 %v1587, 0.0
      %v1834 = vmax.f32 %v1589, 0.0
      %v1835 = vmax.f32 %v1014, 0.0
      %v1836 = vmax.f32 %v1016, 0.0
      %v1837 = vmax.f32 %v1207, 0.0
      %v1838 = vmax.f32 %v1209, 0.0
      %v1839 = vmax.f32 %v1400, 0.0
      %v1840 = vmax.f32 %v1402, 0.0
      %v1841 = vmax.f32 %v1593, 0.0
      %v1842 = vmax.f32 %v1595, 0.0
      %v1843 = vmax.f32 %v1018, 0.0
      %v1844 = vmax.f32 %v1020, 0.0
      %v1845 = vmax.f32 %v1211, 0.0
      %v1846 = vmax.f32 %v1213, 0.0
      %v1847 = vmax.f32 %v1404, 0.0
      %v1848 = vmax.f32 %v1406, 0.0
      %v1849 = vmax.f32 %v1597, 0.0
      %v1850 = vmax.f32 %v1599, 0.0
      %v1851 = vmax.f32 %v1024, 0.0
      %v1852 = vmax.f32 %v1026, 0.0
      %v1853 = vmax.f32 %v1217, 0.0
      %v1854 = vmax.f32 %v1219, 0.0
      %v1855 = vmax.f32 %v1410, 0.0
      %v1856 = vmax.f32 %v1412, 0.0
      %v1857 = vmax.f32 %v1603, 0.0
      %v1858 = vmax.f32 %v1605, 0.0
      %v1859 = vmax.f32 %v1028, 0.0
      %v1860 = vmax.f32 %v1030, 0.0
      %v1861 = vmax.f32 %v1221, 0.0
      %v1862 = vmax.f32 %v1223, 0.0
      %v1863 = vmax.f32 %v1414, 0.0
      %v1864 = vmax.f32 %v1416, 0.0
      %v1865 = vmax.f32 %v1607, 0.0
      %v1866 = vmax.f32 %v1609, 0.0
      %v1867 = vpack.c.bf16 %v1619, %v1611
      %v1868 = vpack.c.bf16 %v1620, %v1612
      %v1869 = vpack.c.bf16 %v1621, %v1613
      %v1870 = vpack.c.bf16 %v1622, %v1614
      %v1871 = vpack.c.bf16 %v1623, %v1615
      %v1872 = vpack.c.bf16 %v1624, %v1616
      %v1873 = vpack.c.bf16 %v1625, %v1617
      %v1874 = vpack.c.bf16 %v1626, %v1618
      %v1875 = vpack.c.bf16 %v1635, %v1627
      %v1876 = vpack.c.bf16 %v1636, %v1628
      %v1877 = vpack.c.bf16 %v1637, %v1629
      %v1878 = vpack.c.bf16 %v1638, %v1630
      %v1879 = vpack.c.bf16 %v1639, %v1631
      %v1880 = vpack.c.bf16 %v1640, %v1632
      %v1881 = vpack.c.bf16 %v1641, %v1633
      %v1882 = vpack.c.bf16 %v1642, %v1634
      %v1883 = vpack.c.bf16 %v1651, %v1643
      %v1884 = vpack.c.bf16 %v1652, %v1644
      %v1885 = vpack.c.bf16 %v1653, %v1645
      %v1886 = vpack.c.bf16 %v1654, %v1646
      %v1887 = vpack.c.bf16 %v1655, %v1647
      %v1888 = vpack.c.bf16 %v1656, %v1648
      %v1889 = vpack.c.bf16 %v1657, %v1649
      %v1890 = vpack.c.bf16 %v1658, %v1650
      %v1891 = vpack.c.bf16 %v1667, %v1659
      %v1892 = vpack.c.bf16 %v1668, %v1660
      %v1893 = vpack.c.bf16 %v1669, %v1661
      %v1894 = vpack.c.bf16 %v1670, %v1662
      %v1895 = vpack.c.bf16 %v1671, %v1663
      %v1896 = vpack.c.bf16 %v1672, %v1664
      %v1897 = vpack.c.bf16 %v1673, %v1665
      %v1898 = vpack.c.bf16 %v1674, %v1666
      %v1899 = vpack.c.bf16 %v1683, %v1675
      %v1900 = vpack.c.bf16 %v1684, %v1676
      %v1901 = vpack.c.bf16 %v1685, %v1677
      %v1902 = vpack.c.bf16 %v1686, %v1678
      %v1903 = vpack.c.bf16 %v1687, %v1679
      %v1904 = vpack.c.bf16 %v1688, %v1680
      %v1905 = vpack.c.bf16 %v1689, %v1681
      %v1906 = vpack.c.bf16 %v1690, %v1682
      %v1907 = vpack.c.bf16 %v1699, %v1691
      %v1908 = vpack.c.bf16 %v1700, %v1692
      %v1909 = vpack.c.bf16 %v1701, %v1693
      %v1910 = vpack.c.bf16 %v1702, %v1694
      %v1911 = vpack.c.bf16 %v1703, %v1695
      %v1912 = vpack.c.bf16 %v1704, %v1696
      %v1913 = vpack.c.bf16 %v1705, %v1697
      %v1914 = vpack.c.bf16 %v1706, %v1698
      %v1915 = vpack.c.bf16 %v1715, %v1707
      %v1916 = vpack.c.bf16 %v1716, %v1708
      %v1917 = vpack.c.bf16 %v1717, %v1709
      %v1918 = vpack.c.bf16 %v1718, %v1710
      %v1919 = vpack.c.bf16 %v1719, %v1711
      %v1920 = vpack.c.bf16 %v1720, %v1712
      %v1921 = vpack.c.bf16 %v1721, %v1713
      %v1922 = vpack.c.bf16 %v1722, %v1714
      %v1923 = vpack.c.bf16 %v1731, %v1723
      %v1924 = vpack.c.bf16 %v1732, %v1724
      %v1925 = vpack.c.bf16 %v1733, %v1725
      %v1926 = vpack.c.bf16 %v1734, %v1726
      %v1927 = vpack.c.bf16 %v1735, %v1727
      %v1928 = vpack.c.bf16 %v1736, %v1728
      %v1929 = vpack.c.bf16 %v1737, %v1729
      %v1930 = vpack.c.bf16 %v1738, %v1730
      %v1931 = vpack.c.bf16 %v1747, %v1739
      %v1932 = vpack.c.bf16 %v1748, %v1740
      %v1933 = vpack.c.bf16 %v1749, %v1741
      %v1934 = vpack.c.bf16 %v1750, %v1742
      %v1935 = vpack.c.bf16 %v1751, %v1743
      %v1936 = vpack.c.bf16 %v1752, %v1744
      %v1937 = vpack.c.bf16 %v1753, %v1745
      %v1938 = vpack.c.bf16 %v1754, %v1746
      %v1939 = vpack.c.bf16 %v1763, %v1755
      %v1940 = vpack.c.bf16 %v1764, %v1756
      %v1941 = vpack.c.bf16 %v1765, %v1757
      %v1942 = vpack.c.bf16 %v1766, %v1758
      %v1943 = vpack.c.bf16 %v1767, %v1759
      %v1944 = vpack.c.bf16 %v1768, %v1760
      %v1945 = vpack.c.bf16 %v1769, %v1761
      %v1946 = vpack.c.bf16 %v1770, %v1762
      %v1947 = vpack.c.bf16 %v1779, %v1771
      %v1948 = vpack.c.bf16 %v1780, %v1772
      %v1949 = vpack.c.bf16 %v1781, %v1773
      %v1950 = vpack.c.bf16 %v1782, %v1774
      %v1951 = vpack.c.bf16 %v1783, %v1775
      %v1952 = vpack.c.bf16 %v1784, %v1776
      %v1953 = vpack.c.bf16 %v1785, %v1777
      %v1954 = vpack.c.bf16 %v1786, %v1778
      %v1955 = vpack.c.bf16 %v1795, %v1787
      %v1956 = vpack.c.bf16 %v1796, %v1788
      %v1957 = vpack.c.bf16 %v1797, %v1789
      %v1958 = vpack.c.bf16 %v1798, %v1790
      %v1959 = vpack.c.bf16 %v1799, %v1791
      %v1960 = vpack.c.bf16 %v1800, %v1792
      %v1961 = vpack.c.bf16 %v1801, %v1793
      %v1962 = vpack.c.bf16 %v1802, %v1794
      %v1963 = vpack.c.bf16 %v1811, %v1803
      %v1964 = vpack.c.bf16 %v1812, %v1804
      %v1965 = vpack.c.bf16 %v1813, %v1805
      %v1966 = vpack.c.bf16 %v1814, %v1806
      %v1967 = vpack.c.bf16 %v1815, %v1807
      %v1968 = vpack.c.bf16 %v1816, %v1808
      %v1969 = vpack.c.bf16 %v1817, %v1809
      %v1970 = vpack.c.bf16 %v1818, %v1810
      %v1971 = vpack.c.bf16 %v1827, %v1819
      %v1972 = vpack.c.bf16 %v1828, %v1820
      %v1973 = vpack.c.bf16 %v1829, %v1821
      %v1974 = vpack.c.bf16 %v1830, %v1822
      %v1975 = vpack.c.bf16 %v1831, %v1823
      %v1976 = vpack.c.bf16 %v1832, %v1824
      %v1977 = vpack.c.bf16 %v1833, %v1825
      %v1978 = vpack.c.bf16 %v1834, %v1826
      %v1979 = vpack.c.bf16 %v1843, %v1835
      %v1980 = vpack.c.bf16 %v1844, %v1836
      %v1981 = vpack.c.bf16 %v1845, %v1837
      %v1982 = vpack.c.bf16 %v1846, %v1838
      %v1983 = vpack.c.bf16 %v1847, %v1839
      %v1984 = vpack.c.bf16 %v1848, %v1840
      %v1985 = vpack.c.bf16 %v1849, %v1841
      %v1986 = vpack.c.bf16 %v1850, %v1842
      %v1987 = vpack.c.bf16 %v1859, %v1851
      %v1988 = vpack.c.bf16 %v1860, %v1852
      %v1989 = vpack.c.bf16 %v1861, %v1853
      %v1990 = vpack.c.bf16 %v1862, %v1854
      %v1991 = vpack.c.bf16 %v1863, %v1855
      %v1992 = vpack.c.bf16 %v1864, %v1856
      %v1993 = vpack.c.bf16 %v1865, %v1857
      %v1994 = vpack.c.bf16 %v1866, %v1858
      %v1995 = vld [vmem:[%s3] sm:$0xff]
      %v1996 = vld [vmem:[%s3 + $0x8] sm:$0xff]
      %v1997 = vld [vmem:[%s3 + $0x10] sm:$0xff]
      %v1998 = vld [vmem:[%s3 + $0x18] sm:$0xff]
      %v1999 = vld [vmem:[%s3 + $0x20] sm:$0xff]
      %v2000 = vld [vmem:[%s3 + $0x28] sm:$0xff]
      %v2001 = vld [vmem:[%s3 + $0x30] sm:$0xff]
      %v2002 = vld [vmem:[%s3 + $0x38] sm:$0xff]
      %v2003 = vld [vmem:[%s3 + $0x40] sm:$0xff]
      %v2004 = vld [vmem:[%s3 + $0x48] sm:$0xff]
      %v2005 = vld [vmem:[%s3 + $0x50] sm:$0xff]
      %v2006 = vld [vmem:[%s3 + $0x58] sm:$0xff]
      %v2007 = vld [vmem:[%s3 + $0x60] sm:$0xff]
      %v2008 = vld [vmem:[%s3 + $0x68] sm:$0xff]
      %v2009 = vld [vmem:[%s3 + $0x70] sm:$0xff]
      %v2010 = vld [vmem:[%s3 + $0x78] sm:$0xff]
      %v2011 = vld [vmem:[%s3 + $0x80] sm:$0xff]
      %v2012 = vld [vmem:[%s3 + $0x88] sm:$0xff]
      %v2013 = vld [vmem:[%s3 + $0x90] sm:$0xff]
      %v2014 = vld [vmem:[%s3 + $0x98] sm:$0xff]
      %v2015 = vld [vmem:[%s3 + $0xa0] sm:$0xff]
      %v2016 = vld [vmem:[%s3 + $0xa8] sm:$0xff]
      %v2017 = vld [vmem:[%s3 + $0xb0] sm:$0xff]
      %v2018 = vld [vmem:[%s3 + $0xb8] sm:$0xff]
      %v2019 = vld [vmem:[%s3 + $0xc0] sm:$0xff]
      %v2020 = vld [vmem:[%s3 + $0xc8] sm:$0xff]
      %v2021 = vld [vmem:[%s3 + $0xd0] sm:$0xff]
      %v2022 = vld [vmem:[%s3 + $0xd8] sm:$0xff]
      %v2023 = vld [vmem:[%s3 + $0xe0] sm:$0xff]
      %v2024 = vld [vmem:[%s3 + $0xe8] sm:$0xff]
      %v2025 = vld [vmem:[%s3 + $0xf0] sm:$0xff]
      %v2026 = vld [vmem:[%s3 + $0xf8] sm:$0xff]
      %v2027 = vld [vmem:[%s4] sm:$0xff]
      %v2028 = vld [vmem:[%s4 + $0x8] sm:$0xff]
      %v2029 = vld [vmem:[%s4 + $0x10] sm:$0xff]
      %v2030 = vld [vmem:[%s4 + $0x18] sm:$0xff]
      %v2031 = vld [vmem:[%s4 + $0x20] sm:$0xff]
      %v2032 = vld [vmem:[%s4 + $0x28] sm:$0xff]
      %v2033 = vld [vmem:[%s4 + $0x30] sm:$0xff]
      %v2034 = vld [vmem:[%s4 + $0x38] sm:$0xff]
      %v2035 = vld [vmem:[%s4 + $0x40] sm:$0xff]
      %v2036 = vld [vmem:[%s4 + $0x48] sm:$0xff]
      %v2037 = vld [vmem:[%s4 + $0x50] sm:$0xff]
      %v2038 = vld [vmem:[%s4 + $0x58] sm:$0xff]
      %v2039 = vld [vmem:[%s4 + $0x60] sm:$0xff]
      %v2040 = vld [vmem:[%s4 + $0x68] sm:$0xff]
      %v2041 = vld [vmem:[%s4 + $0x70] sm:$0xff]
      %v2042 = vld [vmem:[%s4 + $0x78] sm:$0xff]
      %v2043 = vld [vmem:[%s4 + $0x80] sm:$0xff]
      %v2044 = vld [vmem:[%s4 + $0x88] sm:$0xff]
      %v2045 = vld [vmem:[%s4 + $0x90] sm:$0xff]
      %v2046 = vld [vmem:[%s4 + $0x98] sm:$0xff]
      %v2047 = vld [vmem:[%s4 + $0xa0] sm:$0xff]
      %v2048 = vld [vmem:[%s4 + $0xa8] sm:$0xff]
      %v2049 = vld [vmem:[%s4 + $0xb0] sm:$0xff]
      %v2050 = vld [vmem:[%s4 + $0xb8] sm:$0xff]
      %v2051 = vld [vmem:[%s4 + $0xc0] sm:$0xff]
      %v2052 = vld [vmem:[%s4 + $0xc8] sm:$0xff]
      %v2053 = vld [vmem:[%s4 + $0xd0] sm:$0xff]
      %v2054 = vld [vmem:[%s4 + $0xd8] sm:$0xff]
      %v2055 = vld [vmem:[%s4 + $0xe0] sm:$0xff]
      %v2056 = vld [vmem:[%s4 + $0xe8] sm:$0xff]
      %v2057 = vld [vmem:[%s4 + $0xf0] sm:$0xff]
      %v2058 = vld [vmem:[%s4 + $0xf8] sm:$0xff]
      %2060 = vset.pattern.permute.xlu0 0
      %2061 = vperm.xlu0 %2060, %v2027
      %v2062 = vpop.permute.xlu0 %2061
      %2065 = vset.pattern.permute.xlu0 0
      %2066 = vperm.xlu0 %2065, %v2028
      %v2067 = vpop.permute.xlu0 %2066
      %2070 = vset.pattern.permute.xlu0 0
      %2071 = vperm.xlu0 %2070, %v2029
      %v2072 = vpop.permute.xlu0 %2071
      %2075 = vset.pattern.permute.xlu0 0
      %2076 = vperm.xlu0 %2075, %v2030
      %v2077 = vpop.permute.xlu0 %2076
      %2080 = vset.pattern.permute.xlu0 0
      %2081 = vperm.xlu0 %2080, %v2031
      %v2082 = vpop.permute.xlu0 %2081
      %2085 = vset.pattern.permute.xlu0 0
      %2086 = vperm.xlu0 %2085, %v2032
      %v2087 = vpop.permute.xlu0 %2086
      %2090 = vset.pattern.permute.xlu0 0
      %2091 = vperm.xlu0 %2090, %v2033
      %v2092 = vpop.permute.xlu0 %2091
      %2095 = vset.pattern.permute.xlu0 0
      %2096 = vperm.xlu0 %2095, %v2034
      %v2097 = vpop.permute.xlu0 %2096
      %2100 = vset.pattern.permute.xlu0 0
      %2101 = vperm.xlu0 %2100, %v2035
      %v2102 = vpop.permute.xlu0 %2101
      %2105 = vset.pattern.permute.xlu0 0
      %2106 = vperm.xlu0 %2105, %v2036
      %v2107 = vpop.permute.xlu0 %2106
      %2110 = vset.pattern.permute.xlu0 0
      %2111 = vperm.xlu0 %2110, %v2037
      %v2112 = vpop.permute.xlu0 %2111
      %2115 = vset.pattern.permute.xlu0 0
      %2116 = vperm.xlu0 %2115, %v2038
      %v2117 = vpop.permute.xlu0 %2116
      %2120 = vset.pattern.permute.xlu0 0
      %2121 = vperm.xlu0 %2120, %v2039
      %v2122 = vpop.permute.xlu0 %2121
      %2125 = vset.pattern.permute.xlu0 0
      %2126 = vperm.xlu0 %2125, %v2040
      %v2127 = vpop.permute.xlu0 %2126
      %2130 = vset.pattern.permute.xlu0 0
      %2131 = vperm.xlu0 %2130, %v2041
      %v2132 = vpop.permute.xlu0 %2131
      %2135 = vset.pattern.permute.xlu0 0
      %2136 = vperm.xlu0 %2135, %v2042
      %v2137 = vpop.permute.xlu0 %2136
      %2140 = vset.pattern.permute.xlu0 0
      %2141 = vperm.xlu0 %2140, %v2043
      %v2142 = vpop.permute.xlu0 %2141
      %2145 = vset.pattern.permute.xlu0 0
      %2146 = vperm.xlu0 %2145, %v2044
      %v2147 = vpop.permute.xlu0 %2146
      %2150 = vset.pattern.permute.xlu0 0
      %2151 = vperm.xlu0 %2150, %v2045
      %v2152 = vpop.permute.xlu0 %2151
      %2155 = vset.pattern.permute.xlu0 0
      %2156 = vperm.xlu0 %2155, %v2046
      %v2157 = vpop.permute.xlu0 %2156
      %2160 = vset.pattern.permute.xlu0 0
      %2161 = vperm.xlu0 %2160, %v2047
      %v2162 = vpop.permute.xlu0 %2161
      %2165 = vset.pattern.permute.xlu0 0
      %2166 = vperm.xlu0 %2165, %v2048
      %v2167 = vpop.permute.xlu0 %2166
      %2170 = vset.pattern.permute.xlu0 0
      %2171 = vperm.xlu0 %2170, %v2049
      %v2172 = vpop.permute.xlu0 %2171
      %2175 = vset.pattern.permute.xlu0 0
      %2176 = vperm.xlu0 %2175, %v2050
      %v2177 = vpop.permute.xlu0 %2176
      %2180 = vset.pattern.permute.xlu0 0
      %2181 = vperm.xlu0 %2180, %v2051
      %v2182 = vpop.permute.xlu0 %2181
      %2185 = vset.pattern.permute.xlu0 0
      %2186 = vperm.xlu0 %2185, %v2052
      %v2187 = vpop.permute.xlu0 %2186
      %2190 = vset.pattern.permute.xlu0 0
      %2191 = vperm.xlu0 %2190, %v2053
      %v2192 = vpop.permute.xlu0 %2191
      %2195 = vset.pattern.permute.xlu0 0
      %2196 = vperm.xlu0 %2195, %v2054
      %v2197 = vpop.permute.xlu0 %2196
      %2200 = vset.pattern.permute.xlu0 0
      %2201 = vperm.xlu0 %2200, %v2055
      %v2202 = vpop.permute.xlu0 %2201
      %2205 = vset.pattern.permute.xlu0 0
      %2206 = vperm.xlu0 %2205, %v2056
      %v2207 = vpop.permute.xlu0 %2206
      %2210 = vset.pattern.permute.xlu0 0
      %2211 = vperm.xlu0 %2210, %v2057
      %v2212 = vpop.permute.xlu0 %2211
      %2215 = vset.pattern.permute.xlu0 0
      %2216 = vperm.xlu0 %2215, %v2058
      %v2217 = vpop.permute.xlu0 %2216
      %v2251 = vunpack.c.l.b16 %v1995
      %v2252 = vunpack.c.h.b16 %v1995
      %v2253 = vunpack.c.l.b16 %v1996
      %v2254 = vunpack.c.h.b16 %v1996
      %v2255 = vunpack.c.l.b16 %v1997
      %v2256 = vunpack.c.h.b16 %v1997
      %v2257 = vunpack.c.l.b16 %v1998
      %v2258 = vunpack.c.h.b16 %v1998
      %v2259 = vunpack.c.l.b16 %v1999
      %v2260 = vunpack.c.h.b16 %v1999
      %v2261 = vunpack.c.l.b16 %v2000
      %v2262 = vunpack.c.h.b16 %v2000
      %v2263 = vunpack.c.l.b16 %v2001
      %v2264 = vunpack.c.h.b16 %v2001
      %v2265 = vunpack.c.l.b16 %v2002
      %v2266 = vunpack.c.h.b16 %v2002
      %v2267 = vunpack.c.l.b16 %v2003
      %v2268 = vunpack.c.h.b16 %v2003
      %v2269 = vunpack.c.l.b16 %v2004
      %v2270 = vunpack.c.h.b16 %v2004
      %v2271 = vunpack.c.l.b16 %v2005
      %v2272 = vunpack.c.h.b16 %v2005
      %v2273 = vunpack.c.l.b16 %v2006
      %v2274 = vunpack.c.h.b16 %v2006
      %v2275 = vunpack.c.l.b16 %v2007
      %v2276 = vunpack.c.h.b16 %v2007
      %v2277 = vunpack.c.l.b16 %v2008
      %v2278 = vunpack.c.h.b16 %v2008
      %v2279 = vunpack.c.l.b16 %v2009
      %v2280 = vunpack.c.h.b16 %v2009
      %v2281 = vunpack.c.l.b16 %v2010
      %v2282 = vunpack.c.h.b16 %v2010
      %v2283 = vunpack.c.l.b16 %v2011
      %v2284 = vunpack.c.h.b16 %v2011
      %v2285 = vunpack.c.l.b16 %v2012
      %v2286 = vunpack.c.h.b16 %v2012
      %v2287 = vunpack.c.l.b16 %v2013
      %v2288 = vunpack.c.h.b16 %v2013
      %v2289 = vunpack.c.l.b16 %v2014
      %v2290 = vunpack.c.h.b16 %v2014
      %v2291 = vunpack.c.l.b16 %v2015
      %v2292 = vunpack.c.h.b16 %v2015
      %v2293 = vunpack.c.l.b16 %v2016
      %v2294 = vunpack.c.h.b16 %v2016
      %v2295 = vunpack.c.l.b16 %v2017
      %v2296 = vunpack.c.h.b16 %v2017
      %v2297 = vunpack.c.l.b16 %v2018
      %v2298 = vunpack.c.h.b16 %v2018
      %v2299 = vunpack.c.l.b16 %v2019
      %v2300 = vunpack.c.h.b16 %v2019
      %v2301 = vunpack.c.l.b16 %v2020
      %v2302 = vunpack.c.h.b16 %v2020
      %v2303 = vunpack.c.l.b16 %v2021
      %v2304 = vunpack.c.h.b16 %v2021
      %v2305 = vunpack.c.l.b16 %v2022
      %v2306 = vunpack.c.h.b16 %v2022
      %v2307 = vunpack.c.l.b16 %v2023
      %v2308 = vunpack.c.h.b16 %v2023
      %v2309 = vunpack.c.l.b16 %v2024
      %v2310 = vunpack.c.h.b16 %v2024
      %v2311 = vunpack.c.l.b16 %v2025
      %v2312 = vunpack.c.h.b16 %v2025
      %v2313 = vunpack.c.l.b16 %v2026
      %v2314 = vunpack.c.h.b16 %v2026
      %v2315 = vpack.c.b16 %v2253, %v2251
      %v2316 = vpack.c.b16 %v2254, %v2252
      %v2317 = vpack.c.b16 %v2257, %v2255
      %v2318 = vpack.c.b16 %v2258, %v2256
      %v2319 = vpack.c.b16 %v2261, %v2259
      %v2320 = vpack.c.b16 %v2262, %v2260
      %v2321 = vpack.c.b16 %v2265, %v2263
      %v2322 = vpack.c.b16 %v2266, %v2264
      %v2323 = vpack.c.b16 %v2269, %v2267
      %v2324 = vpack.c.b16 %v2270, %v2268
      %v2325 = vpack.c.b16 %v2273, %v2271
      %v2326 = vpack.c.b16 %v2274, %v2272
      %v2327 = vpack.c.b16 %v2277, %v2275
      %v2328 = vpack.c.b16 %v2278, %v2276
      %v2329 = vpack.c.b16 %v2281, %v2279
      %v2330 = vpack.c.b16 %v2282, %v2280
      %v2331 = vpack.c.b16 %v2285, %v2283
      %v2332 = vpack.c.b16 %v2286, %v2284
      %v2333 = vpack.c.b16 %v2289, %v2287
      %v2334 = vpack.c.b16 %v2290, %v2288
      %v2335 = vpack.c.b16 %v2293, %v2291
      %v2336 = vpack.c.b16 %v2294, %v2292
      %v2337 = vpack.c.b16 %v2297, %v2295
      %v2338 = vpack.c.b16 %v2298, %v2296
      %v2339 = vpack.c.b16 %v2301, %v2299
      %v2340 = vpack.c.b16 %v2302, %v2300
      %v2341 = vpack.c.b16 %v2305, %v2303
      %v2342 = vpack.c.b16 %v2306, %v2304
      %v2343 = vpack.c.b16 %v2309, %v2307
      %v2344 = vpack.c.b16 %v2310, %v2308
      %v2345 = vpack.c.b16 %v2313, %v2311
      %v2346 = vpack.c.b16 %v2314, %v2312
      %2379 = vmatprep.subr.bf16.mxu0 %v1868
      %2380 = vmatpush1.bf16.msra.mxu0 %v1867
      %2381 = vmatprep.subr.bf16.mxu0 %v1876
      %2382 = vmatpush1.bf16.msra.mxu0 %v1875
      %2383 = vmatprep.subr.bf16.mxu0 %v1884
      %2384 = vmatpush1.bf16.msra.mxu0 %v1883
      %2385 = vmatprep.subr.bf16.mxu0 %v1892
      %2386 = vmatpush1.bf16.msra.mxu0 %v1891
      %2387 = vmatprep.subr.bf16.mxu0 %v1900
      %2388 = vmatpush1.bf16.msra.mxu0 %v1899
      %2389 = vmatprep.subr.bf16.mxu0 %v1908
      %2390 = vmatpush1.bf16.msra.mxu0 %v1907
      %2391 = vmatprep.subr.bf16.mxu0 %v1916
      %2392 = vmatpush1.bf16.msra.mxu0 %v1915
      %2393 = vmatprep.subr.bf16.mxu0 %v1924
      %2394 = vmatpush1.bf16.msra.mxu0 %v1923
      %2395 = vmatprep.subr.bf16.mxu0 %v1932
      %2396 = vmatpush1.bf16.msra.mxu0 %v1931
      %2397 = vmatprep.subr.bf16.mxu0 %v1940
      %2398 = vmatpush1.bf16.msra.mxu0 %v1939
      %2399 = vmatprep.subr.bf16.mxu0 %v1948
      %2400 = vmatpush1.bf16.msra.mxu0 %v1947
      %2401 = vmatprep.subr.bf16.mxu0 %v1956
      %2402 = vmatpush1.bf16.msra.mxu0 %v1955
      %2403 = vmatprep.subr.bf16.mxu0 %v1964
      %2404 = vmatpush1.bf16.msra.mxu0 %v1963
      %2405 = vmatprep.subr.bf16.mxu0 %v1972
      %2406 = vmatpush1.bf16.msra.mxu0 %v1971
      %2407 = vmatprep.subr.bf16.mxu0 %v1980
      %2408 = vmatpush1.bf16.msra.mxu0 %v1979
      %2409 = vmatprep.subr.bf16.mxu0 %v1988
      %2410 = vmatpush1.bf16.msra.mxu0 %v1987
      %2411 = vmatprep.mubr.bf16.mxu0 %v2316
      %2412 = vmatmul.mubr.bf16.gmra.mrb[0].mxu0 %v2315
      %v2413 = vpop.f32.mrb[0].mxu0
      %v2414 = vadd.f32 %v2062, %v2413
      %v2415 = vpop.f32.mrb[0].mxu0
      %v2416 = vadd.f32 %v2062, %v2415
      %v2417 = vpop.f32.mrb[0].mxu0
      %v2418 = vadd.f32 %v2067, %v2417
      %v2419 = vpop.f32.mrb[0].mxu0
      %v2420 = vadd.f32 %v2067, %v2419
      %2421 = vmatprep.mubr.bf16.mxu0 %v2318
      %2422 = vmatmul.mubr.bf16.gmra.mrb[0].mxu0 %v2317
      %v2423 = vpop.f32.mrb[0].mxu0
      %v2424 = vadd.f32 %v2072, %v2423
      %v2425 = vpop.f32.mrb[0].mxu0
      %v2426 = vadd.f32 %v2072, %v2425
      %v2427 = vpop.f32.mrb[0].mxu0
      %v2428 = vadd.f32 %v2077, %v2427
      %v2429 = vpop.f32.mrb[0].mxu0
      %v2430 = vadd.f32 %v2077, %v2429
      %2431 = vmatprep.mubr.bf16.mxu0 %v2320
      %2432 = vmatmul.mubr.bf16.gmra.mrb[0].mxu0 %v2319
      %v2433 = vpop.f32.mrb[0].mxu0
      %v2434 = vadd.f32 %v2082, %v2433
      %v2435 = vpop.f32.mrb[0].mxu0
      %v2436 = vadd.f32 %v2082, %v2435
      %v2437 = vpop.f32.mrb[0].mxu0
      %v2438 = vadd.f32 %v2087, %v2437
      %v2439 = vpop.f32.mrb[0].mxu0
      %v2440 = vadd.f32 %v2087, %v2439
      %2441 = vmatprep.mubr.bf16.mxu0 %v2322
      %2442 = vmatmul.mubr.bf16.gmra.mrb[0].mxu0 %v2321
      %v2443 = vpop.f32.mrb[0].mxu0
      %v2444 = vadd.f32 %v2092, %v2443
      %v2445 = vpop.f32.mrb[0].mxu0
      %v2446 = vadd.f32 %v2092, %v2445
      %v2447 = vpop.f32.mrb[0].mxu0
      %v2448 = vadd.f32 %v2097, %v2447
      %v2449 = vpop.f32.mrb[0].mxu0
      %v2450 = vadd.f32 %v2097, %v2449
      %2451 = vmatprep.mubr.bf16.mxu0 %v2324
      %2452 = vmatmul.mubr.bf16.gmra.mrb[0].mxu0 %v2323
      %v2453 = vpop.f32.mrb[0].mxu0
      %v2454 = vadd.f32 %v2102, %v2453
      %v2455 = vpop.f32.mrb[0].mxu0
      %v2456 = vadd.f32 %v2102, %v2455
      %v2457 = vpop.f32.mrb[0].mxu0
      %v2458 = vadd.f32 %v2107, %v2457
      %v2459 = vpop.f32.mrb[0].mxu0
      %v2460 = vadd.f32 %v2107, %v2459
      %2461 = vmatprep.mubr.bf16.mxu0 %v2326
      %2462 = vmatmul.mubr.bf16.gmra.mrb[0].mxu0 %v2325
      %v2463 = vpop.f32.mrb[0].mxu0
      %v2464 = vadd.f32 %v2112, %v2463
      %v2465 = vpop.f32.mrb[0].mxu0
      %v2466 = vadd.f32 %v2112, %v2465
      %v2467 = vpop.f32.mrb[0].mxu0
      %v2468 = vadd.f32 %v2117, %v2467
      %v2469 = vpop.f32.mrb[0].mxu0
      %v2470 = vadd.f32 %v2117, %v2469
      %2471 = vmatprep.mubr.bf16.mxu0 %v2328
      %2472 = vmatmul.mubr.bf16.gmra.mrb[0].mxu0 %v2327
      %v2473 = vpop.f32.mrb[0].mxu0
      %v2474 = vadd.f32 %v2122, %v2473
      %v2475 = vpop.f32.mrb[0].mxu0
      %v2476 = vadd.f32 %v2122, %v2475
      %v2477 = vpop.f32.mrb[0].mxu0
      %v2478 = vadd.f32 %v2127, %v2477
      %v2479 = vpop.f32.mrb[0].mxu0
      %v2480 = vadd.f32 %v2127, %v2479
      %2481 = vmatprep.mubr.bf16.mxu0 %v2330
      %2482 = vmatmul.mubr.bf16.gmra.mrb[0].mxu0 %v2329
      %v2483 = vpop.f32.mrb[0].mxu0
      %v2484 = vadd.f32 %v2132, %v2483
      %v2485 = vpop.f32.mrb[0].mxu0
      %v2486 = vadd.f32 %v2132, %v2485
      %v2487 = vpop.f32.mrb[0].mxu0
      %v2488 = vadd.f32 %v2137, %v2487
      %v2489 = vpop.f32.mrb[0].mxu0
      %v2490 = vadd.f32 %v2137, %v2489
      %2491 = vmatprep.mubr.bf16.mxu0 %v2332
      %2492 = vmatmul.mubr.bf16.gmra.mrb[0].mxu0 %v2331
      %v2493 = vpop.f32.mrb[0].mxu0
      %v2494 = vadd.f32 %v2142, %v2493
      %v2495 = vpop.f32.mrb[0].mxu0
      %v2496 = vadd.f32 %v2142, %v2495
      %v2497 = vpop.f32.mrb[0].mxu0
      %v2498 = vadd.f32 %v2147, %v2497
      %v2499 = vpop.f32.mrb[0].mxu0
      %v2500 = vadd.f32 %v2147, %v2499
      %2501 = vmatprep.mubr.bf16.mxu0 %v2334
      %2502 = vmatmul.mubr.bf16.gmra.mrb[0].mxu0 %v2333
      %v2503 = vpop.f32.mrb[0].mxu0
      %v2504 = vadd.f32 %v2152, %v2503
      %v2505 = vpop.f32.mrb[0].mxu0
      %v2506 = vadd.f32 %v2152, %v2505
      %v2507 = vpop.f32.mrb[0].mxu0
      %v2508 = vadd.f32 %v2157, %v2507
      %v2509 = vpop.f32.mrb[0].mxu0
      %v2510 = vadd.f32 %v2157, %v2509
      %2511 = vmatprep.mubr.bf16.mxu0 %v2336
      %2512 = vmatmul.mubr.bf16.gmra.mrb[0].mxu0 %v2335
      %v2513 = vpop.f32.mrb[0].mxu0
      %v2514 = vadd.f32 %v2162, %v2513
      %v2515 = vpop.f32.mrb[0].mxu0
      %v2516 = vadd.f32 %v2162, %v2515
      %v2517 = vpop.f32.mrb[0].mxu0
      %v2518 = vadd.f32 %v2167, %v2517
      %v2519 = vpop.f32.mrb[0].mxu0
      %v2520 = vadd.f32 %v2167, %v2519
      %2521 = vmatprep.mubr.bf16.mxu0 %v2338
      %2522 = vmatmul.mubr.bf16.gmra.mrb[0].mxu0 %v2337
      %v2523 = vpop.f32.mrb[0].mxu0
      %v2524 = vadd.f32 %v2172, %v2523
      %v2525 = vpop.f32.mrb[0].mxu0
      %v2526 = vadd.f32 %v2172, %v2525
      %v2527 = vpop.f32.mrb[0].mxu0
      %v2528 = vadd.f32 %v2177, %v2527
      %v2529 = vpop.f32.mrb[0].mxu0
      %v2530 = vadd.f32 %v2177, %v2529
      %2531 = vmatprep.mubr.bf16.mxu0 %v2340
      %2532 = vmatmul.mubr.bf16.gmra.mrb[0].mxu0 %v2339
      %v2533 = vpop.f32.mrb[0].mxu0
      %v2534 = vadd.f32 %v2182, %v2533
      %v2535 = vpop.f32.mrb[0].mxu0
      %v2536 = vadd.f32 %v2182, %v2535
      %v2537 = vpop.f32.mrb[0].mxu0
      %v2538 = vadd.f32 %v2187, %v2537
      %v2539 = vpop.f32.mrb[0].mxu0
      %v2540 = vadd.f32 %v2187, %v2539
      %2541 = vmatprep.mubr.bf16.mxu0 %v2342
      %2542 = vmatmul.mubr.bf16.gmra.mrb[0].mxu0 %v2341
      %v2543 = vpop.f32.mrb[0].mxu0
      %v2544 = vadd.f32 %v2192, %v2543
      %v2545 = vpop.f32.mrb[0].mxu0
      %v2546 = vadd.f32 %v2192, %v2545
      %v2547 = vpop.f32.mrb[0].mxu0
      %v2548 = vadd.f32 %v2197, %v2547
      %v2549 = vpop.f32.mrb[0].mxu0
      %v2550 = vadd.f32 %v2197, %v2549
      %2551 = vmatprep.mubr.bf16.mxu0 %v2344
      %2552 = vmatmul.mubr.bf16.gmra.mrb[0].mxu0 %v2343
      %v2553 = vpop.f32.mrb[0].mxu0
      %v2554 = vadd.f32 %v2202, %v2553
      %v2555 = vpop.f32.mrb[0].mxu0
      %v2556 = vadd.f32 %v2202, %v2555
      %v2557 = vpop.f32.mrb[0].mxu0
      %v2558 = vadd.f32 %v2207, %v2557
      %v2559 = vpop.f32.mrb[0].mxu0
      %v2560 = vadd.f32 %v2207, %v2559
      %2561 = vmatprep.mubr.bf16.mxu0 %v2346
      %2562 = vmatmul.mubr.bf16.gmra.mrb[0].mxu0 %v2345
      %v2563 = vpop.f32.mrb[0].mxu0
      %v2564 = vadd.f32 %v2212, %v2563
      %v2565 = vpop.f32.mrb[0].mxu0
      %v2566 = vadd.f32 %v2212, %v2565
      %v2567 = vpop.f32.mrb[0].mxu0
      %v2568 = vadd.f32 %v2217, %v2567
      %v2569 = vpop.f32.mrb[0].mxu0
      %v2570 = vadd.f32 %v2217, %v2569
      %2571 = vdwg.mxu0
      %2572 = vmatprep.subr.bf16.mxu0 %v1870
      %2573 = vmatpush1.bf16.msra.mxu0 %v1869
      %2574 = vmatprep.subr.bf16.mxu0 %v1878
      %2575 = vmatpush1.bf16.msra.mxu0 %v1877
      %2576 = vmatprep.subr.bf16.mxu0 %v1886
      %2577 = vmatpush1.bf16.msra.mxu0 %v1885
      %2578 = vmatprep.subr.bf16.mxu0 %v1894
      %2579 = vmatpush1.bf16.msra.mxu0 %v1893
      %2580 = vmatprep.subr.bf16.mxu0 %v1902
      %2581 = vmatpush1.bf16.msra.mxu0 %v1901
      %2582 = vmatprep.subr.bf16.mxu0 %v1910
      %2583 = vmatpush1.bf16.msra.mxu0 %v1909
      %2584 = vmatprep.subr.bf16.mxu0 %v1918
      %2585 = vmatpush1.bf16.msra.mxu0 %v1917
      %2586 = vmatprep.subr.bf16.mxu0 %v1926
      %2587 = vmatpush1.bf16.msra.mxu0 %v1925
      %2588 = vmatprep.subr.bf16.mxu0 %v1934
      %2589 = vmatpush1.bf16.msra.mxu0 %v1933
      %2590 = vmatprep.subr.bf16.mxu0 %v1942
      %2591 = vmatpush1.bf16.msra.mxu0 %v1941
      %2592 = vmatprep.subr.bf16.mxu0 %v1950
      %2593 = vmatpush1.bf16.msra.mxu0 %v1949
      %2594 = vmatprep.subr.bf16.mxu0 %v1958
      %2595 = vmatpush1.bf16.msra.mxu0 %v1957
      %2596 = vmatprep.subr.bf16.mxu0 %v1966
      %2597 = vmatpush1.bf16.msra.mxu0 %v1965
      %2598 = vmatprep.subr.bf16.mxu0 %v1974
      %2599 = vmatpush1.bf16.msra.mxu0 %v1973
      %2600 = vmatprep.subr.bf16.mxu0 %v1982
      %2601 = vmatpush1.bf16.msra.mxu0 %v1981
      %2602 = vmatprep.subr.bf16.mxu0 %v1990
      %2603 = vmatpush1.bf16.msra.mxu0 %v1989
      %2604 = vmatprep.mubr.bf16.mxu0 %v2316
      %2605 = vmatmul.mubr.bf16.gmra.mrb[0].mxu0 %v2315
      %v2606 = vpop.f32.mrb[0].mxu0
      %v2607 = vadd.f32 %v2062, %v2606
      %v2608 = vpop.f32.mrb[0].mxu0
      %v2609 = vadd.f32 %v2062, %v2608
      %v2610 = vpop.f32.mrb[0].mxu0
      %v2611 = vadd.f32 %v2067, %v2610
      %v2612 = vpop.f32.mrb[0].mxu0
      %v2613 = vadd.f32 %v2067, %v2612
      %2614 = vmatprep.mubr.bf16.mxu0 %v2318
      %2615 = vmatmul.mubr.bf16.gmra.mrb[0].mxu0 %v2317
      %v2616 = vpop.f32.mrb[0].mxu0
      %v2617 = vadd.f32 %v2072, %v2616
      %v2618 = vpop.f32.mrb[0].mxu0
      %v2619 = vadd.f32 %v2072, %v2618
      %v2620 = vpop.f32.mrb[0].mxu0
      %v2621 = vadd.f32 %v2077, %v2620
      %v2622 = vpop.f32.mrb[0].mxu0
      %v2623 = vadd.f32 %v2077, %v2622
      %2624 = vmatprep.mubr.bf16.mxu0 %v2320
      %2625 = vmatmul.mubr.bf16.gmra.mrb[0].mxu0 %v2319
      %v2626 = vpop.f32.mrb[0].mxu0
      %v2627 = vadd.f32 %v2082, %v2626
      %v2628 = vpop.f32.mrb[0].mxu0
      %v2629 = vadd.f32 %v2082, %v2628
      %v2630 = vpop.f32.mrb[0].mxu0
      %v2631 = vadd.f32 %v2087, %v2630
      %v2632 = vpop.f32.mrb[0].mxu0
      %v2633 = vadd.f32 %v2087, %v2632
      %2634 = vmatprep.mubr.bf16.mxu0 %v2322
      %2635 = vmatmul.mubr.bf16.gmra.mrb[0].mxu0 %v2321
      %v2636 = vpop.f32.mrb[0].mxu0
      %v2637 = vadd.f32 %v2092, %v2636
      %v2638 = vpop.f32.mrb[0].mxu0
      %v2639 = vadd.f32 %v2092, %v2638
      %v2640 = vpop.f32.mrb[0].mxu0
      %v2641 = vadd.f32 %v2097, %v2640
      %v2642 = vpop.f32.mrb[0].mxu0
      %v2643 = vadd.f32 %v2097, %v2642
      %2644 = vmatprep.mubr.bf16.mxu0 %v2324
      %2645 = vmatmul.mubr.bf16.gmra.mrb[0].mxu0 %v2323
      %v2646 = vpop.f32.mrb[0].mxu0
      %v2647 = vadd.f32 %v2102, %v2646
      %v2648 = vpop.f32.mrb[0].mxu0
      %v2649 = vadd.f32 %v2102, %v2648
      %v2650 = vpop.f32.mrb[0].mxu0
      %v2651 = vadd.f32 %v2107, %v2650
      %v2652 = vpop.f32.mrb[0].mxu0
      %v2653 = vadd.f32 %v2107, %v2652
      %2654 = vmatprep.mubr.bf16.mxu0 %v2326
      %2655 = vmatmul.mubr.bf16.gmra.mrb[0].mxu0 %v2325
      %v2656 = vpop.f32.mrb[0].mxu0
      %v2657 = vadd.f32 %v2112, %v2656
      %v2658 = vpop.f32.mrb[0].mxu0
      %v2659 = vadd.f32 %v2112, %v2658
      %v2660 = vpop.f32.mrb[0].mxu0
      %v2661 = vadd.f32 %v2117, %v2660
      %v2662 = vpop.f32.mrb[0].mxu0
      %v2663 = vadd.f32 %v2117, %v2662
      %2664 = vmatprep.mubr.bf16.mxu0 %v2328
      %2665 = vmatmul.mubr.bf16.gmra.mrb[0].mxu0 %v2327
      %v2666 = vpop.f32.mrb[0].mxu0
      %v2667 = vadd.f32 %v2122, %v2666
      %v2668 = vpop.f32.mrb[0].mxu0
      %v2669 = vadd.f32 %v2122, %v2668
      %v2670 = vpop.f32.mrb[0].mxu0
      %v2671 = vadd.f32 %v2127, %v2670
      %v2672 = vpop.f32.mrb[0].mxu0
      %v2673 = vadd.f32 %v2127, %v2672
      %2674 = vmatprep.mubr.bf16.mxu0 %v2330
      %2675 = vmatmul.mubr.bf16.gmra.mrb[0].mxu0 %v2329
      %v2676 = vpop.f32.mrb[0].mxu0
      %v2677 = vadd.f32 %v2132, %v2676
      %v2678 = vpop.f32.mrb[0].mxu0
      %v2679 = vadd.f32 %v2132, %v2678
      %v2680 = vpop.f32.mrb[0].mxu0
      %v2681 = vadd.f32 %v2137, %v2680
      %v2682 = vpop.f32.mrb[0].mxu0
      %v2683 = vadd.f32 %v2137, %v2682
      %2684 = vmatprep.mubr.bf16.mxu0 %v2332
      %2685 = vmatmul.mubr.bf16.gmra.mrb[0].mxu0 %v2331
      %v2686 = vpop.f32.mrb[0].mxu0
      %v2687 = vadd.f32 %v2142, %v2686
      %v2688 = vpop.f32.mrb[0].mxu0
      %v2689 = vadd.f32 %v2142, %v2688
      %v2690 = vpop.f32.mrb[0].mxu0
      %v2691 = vadd.f32 %v2147, %v2690
      %v2692 = vpop.f32.mrb[0].mxu0
      %v2693 = vadd.f32 %v2147, %v2692
      %2694 = vmatprep.mubr.bf16.mxu0 %v2334
      %2695 = vmatmul.mubr.bf16.gmra.mrb[0].mxu0 %v2333
      %v2696 = vpop.f32.mrb[0].mxu0
      %v2697 = vadd.f32 %v2152, %v2696
      %v2698 = vpop.f32.mrb[0].mxu0
      %v2699 = vadd.f32 %v2152, %v2698
      %v2700 = vpop.f32.mrb[0].mxu0
      %v2701 = vadd.f32 %v2157, %v2700
      %v2702 = vpop.f32.mrb[0].mxu0
      %v2703 = vadd.f32 %v2157, %v2702
      %2704 = vmatprep.mubr.bf16.mxu0 %v2336
      %2705 = vmatmul.mubr.bf16.gmra.mrb[0].mxu0 %v2335
      %v2706 = vpop.f32.mrb[0].mxu0
      %v2707 = vadd.f32 %v2162, %v2706
      %v2708 = vpop.f32.mrb[0].mxu0
      %v2709 = vadd.f32 %v2162, %v2708
      %v2710 = vpop.f32.mrb[0].mxu0
      %v2711 = vadd.f32 %v2167, %v2710
      %v2712 = vpop.f32.mrb[0].mxu0
      %v2713 = vadd.f32 %v2167, %v2712
      %2714 = vmatprep.mubr.bf16.mxu0 %v2338
      %2715 = vmatmul.mubr.bf16.gmra.mrb[0].mxu0 %v2337
      %v2716 = vpop.f32.mrb[0].mxu0
      %v2717 = vadd.f32 %v2172, %v2716
      %v2718 = vpop.f32.mrb[0].mxu0
      %v2719 = vadd.f32 %v2172, %v2718
      %v2720 = vpop.f32.mrb[0].mxu0
      %v2721 = vadd.f32 %v2177, %v2720
      %v2722 = vpop.f32.mrb[0].mxu0
      %v2723 = vadd.f32 %v2177, %v2722
      %2724 = vmatprep.mubr.bf16.mxu0 %v2340
      %2725 = vmatmul.mubr.bf16.gmra.mrb[0].mxu0 %v2339
      %v2726 = vpop.f32.mrb[0].mxu0
      %v2727 = vadd.f32 %v2182, %v2726
      %v2728 = vpop.f32.mrb[0].mxu0
      %v2729 = vadd.f32 %v2182, %v2728
      %v2730 = vpop.f32.mrb[0].mxu0
      %v2731 = vadd.f32 %v2187, %v2730
      %v2732 = vpop.f32.mrb[0].mxu0
      %v2733 = vadd.f32 %v2187, %v2732
      %2734 = vmatprep.mubr.bf16.mxu0 %v2342
      %2735 = vmatmul.mubr.bf16.gmra.mrb[0].mxu0 %v2341
      %v2736 = vpop.f32.mrb[0].mxu0
      %v2737 = vadd.f32 %v2192, %v2736
      %v2738 = vpop.f32.mrb[0].mxu0
      %v2739 = vadd.f32 %v2192, %v2738
      %v2740 = vpop.f32.mrb[0].mxu0
      %v2741 = vadd.f32 %v2197, %v2740
      %v2742 = vpop.f32.mrb[0].mxu0
      %v2743 = vadd.f32 %v2197, %v2742
      %2744 = vmatprep.mubr.bf16.mxu0 %v2344
      %2745 = vmatmul.mubr.bf16.gmra.mrb[0].mxu0 %v2343
      %v2746 = vpop.f32.mrb[0].mxu0
      %v2747 = vadd.f32 %v2202, %v2746
      %v2748 = vpop.f32.mrb[0].mxu0
      %v2749 = vadd.f32 %v2202, %v2748
      %v2750 = vpop.f32.mrb[0].mxu0
      %v2751 = vadd.f32 %v2207, %v2750
      %v2752 = vpop.f32.mrb[0].mxu0
      %v2753 = vadd.f32 %v2207, %v2752
      %2754 = vmatprep.mubr.bf16.mxu0 %v2346
      %2755 = vmatmul.mubr.bf16.gmra.mrb[0].mxu0 %v2345
      %v2756 = vpop.f32.mrb[0].mxu0
      %v2757 = vadd.f32 %v2212, %v2756
      %v2758 = vpop.f32.mrb[0].mxu0
      %v2759 = vadd.f32 %v2212, %v2758
      %v2760 = vpop.f32.mrb[0].mxu0
      %v2761 = vadd.f32 %v2217, %v2760
      %v2762 = vpop.f32.mrb[0].mxu0
      %v2763 = vadd.f32 %v2217, %v2762
      %2764 = vdwg.mxu0
      %2765 = vmatprep.subr.bf16.mxu0 %v1872
      %2766 = vmatpush1.bf16.msra.mxu0 %v1871
      %2767 = vmatprep.subr.bf16.mxu0 %v1880
      %2768 = vmatpush1.bf16.msra.mxu0 %v1879
      %2769 = vmatprep.subr.bf16.mxu0 %v1888
      %2770 = vmatpush1.bf16.msra.mxu0 %v1887
      %2771 = vmatprep.subr.bf16.mxu0 %v1896
      %2772 = vmatpush1.bf16.msra.mxu0 %v1895
      %2773 = vmatprep.subr.bf16.mxu0 %v1904
      %2774 = vmatpush1.bf16.msra.mxu0 %v1903
      %2775 = vmatprep.subr.bf16.mxu0 %v1912
      %2776 = vmatpush1.bf16.msra.mxu0 %v1911
      %2777 = vmatprep.subr.bf16.mxu0 %v1920
      %2778 = vmatpush1.bf16.msra.mxu0 %v1919
      %2779 = vmatprep.subr.bf16.mxu0 %v1928
      %2780 = vmatpush1.bf16.msra.mxu0 %v1927
      %2781 = vmatprep.subr.bf16.mxu0 %v1936
      %2782 = vmatpush1.bf16.msra.mxu0 %v1935
      %2783 = vmatprep.subr.bf16.mxu0 %v1944
      %2784 = vmatpush1.bf16.msra.mxu0 %v1943
      %2785 = vmatprep.subr.bf16.mxu0 %v1952
      %2786 = vmatpush1.bf16.msra.mxu0 %v1951
      %2787 = vmatprep.subr.bf16.mxu0 %v1960
      %2788 = vmatpush1.bf16.msra.mxu0 %v1959
      %2789 = vmatprep.subr.bf16.mxu0 %v1968
      %2790 = vmatpush1.bf16.msra.mxu0 %v1967
      %2791 = vmatprep.subr.bf16.mxu0 %v1976
      %2792 = vmatpush1.bf16.msra.mxu0 %v1975
      %2793 = vmatprep.subr.bf16.mxu0 %v1984
      %2794 = vmatpush1.bf16.msra.mxu0 %v1983
      %2795 = vmatprep.subr.bf16.mxu0 %v1992
      %2796 = vmatpush1.bf16.msra.mxu0 %v1991
      %2797 = vmatprep.mubr.bf16.mxu0 %v2316
      %2798 = vmatmul.mubr.bf16.gmra.mrb[0].mxu0 %v2315
      %v2799 = vpop.f32.mrb[0].mxu0
      %v2800 = vadd.f32 %v2062, %v2799
      %v2801 = vpop.f32.mrb[0].mxu0
      %v2802 = vadd.f32 %v2062, %v2801
      %v2803 = vpop.f32.mrb[0].mxu0
      %v2804 = vadd.f32 %v2067, %v2803
      %v2805 = vpop.f32.mrb[0].mxu0
      %v2806 = vadd.f32 %v2067, %v2805
      %2807 = vmatprep.mubr.bf16.mxu0 %v2318
      %2808 = vmatmul.mubr.bf16.gmra.mrb[0].mxu0 %v2317
      %v2809 = vpop.f32.mrb[0].mxu0
      %v2810 = vadd.f32 %v2072, %v2809
      %v2811 = vpop.f32.mrb[0].mxu0
      %v2812 = vadd.f32 %v2072, %v2811
      %v2813 = vpop.f32.mrb[0].mxu0
      %v2814 = vadd.f32 %v2077, %v2813
      %v2815 = vpop.f32.mrb[0].mxu0
      %v2816 = vadd.f32 %v2077, %v2815
      %2817 = vmatprep.mubr.bf16.mxu0 %v2320
      %2818 = vmatmul.mubr.bf16.gmra.mrb[0].mxu0 %v2319
      %v2819 = vpop.f32.mrb[0].mxu0
      %v2820 = vadd.f32 %v2082, %v2819
      %v2821 = vpop.f32.mrb[0].mxu0
      %v2822 = vadd.f32 %v2082, %v2821
      %v2823 = vpop.f32.mrb[0].mxu0
      %v2824 = vadd.f32 %v2087, %v2823
      %v2825 = vpop.f32.mrb[0].mxu0
      %v2826 = vadd.f32 %v2087, %v2825
      %2827 = vmatprep.mubr.bf16.mxu0 %v2322
      %2828 = vmatmul.mubr.bf16.gmra.mrb[0].mxu0 %v2321
      %v2829 = vpop.f32.mrb[0].mxu0
      %v2830 = vadd.f32 %v2092, %v2829
      %v2831 = vpop.f32.mrb[0].mxu0
      %v2832 = vadd.f32 %v2092, %v2831
      %v2833 = vpop.f32.mrb[0].mxu0
      %v2834 = vadd.f32 %v2097, %v2833
      %v2835 = vpop.f32.mrb[0].mxu0
      %v2836 = vadd.f32 %v2097, %v2835
      %2837 = vmatprep.mubr.bf16.mxu0 %v2324
      %2838 = vmatmul.mubr.bf16.gmra.mrb[0].mxu0 %v2323
      %v2839 = vpop.f32.mrb[0].mxu0
      %v2840 = vadd.f32 %v2102, %v2839
      %v2841 = vpop.f32.mrb[0].mxu0
      %v2842 = vadd.f32 %v2102, %v2841
      %v2843 = vpop.f32.mrb[0].mxu0
      %v2844 = vadd.f32 %v2107, %v2843
      %v2845 = vpop.f32.mrb[0].mxu0
      %v2846 = vadd.f32 %v2107, %v2845
      %2847 = vmatprep.mubr.bf16.mxu0 %v2326
      %2848 = vmatmul.mubr.bf16.gmra.mrb[0].mxu0 %v2325
      %v2849 = vpop.f32.mrb[0].mxu0
      %v2850 = vadd.f32 %v2112, %v2849
      %v2851 = vpop.f32.mrb[0].mxu0
      %v2852 = vadd.f32 %v2112, %v2851
      %v2853 = vpop.f32.mrb[0].mxu0
      %v2854 = vadd.f32 %v2117, %v2853
      %v2855 = vpop.f32.mrb[0].mxu0
      %v2856 = vadd.f32 %v2117, %v2855
      %2857 = vmatprep.mubr.bf16.mxu0 %v2328
      %2858 = vmatmul.mubr.bf16.gmra.mrb[0].mxu0 %v2327
      %v2859 = vpop.f32.mrb[0].mxu0
      %v2860 = vadd.f32 %v2122, %v2859
      %v2861 = vpop.f32.mrb[0].mxu0
      %v2862 = vadd.f32 %v2122, %v2861
      %v2863 = vpop.f32.mrb[0].mxu0
      %v2864 = vadd.f32 %v2127, %v2863
      %v2865 = vpop.f32.mrb[0].mxu0
      %v2866 = vadd.f32 %v2127, %v2865
      %2867 = vmatprep.mubr.bf16.mxu0 %v2330
      %2868 = vmatmul.mubr.bf16.gmra.mrb[0].mxu0 %v2329
      %v2869 = vpop.f32.mrb[0].mxu0
      %v2870 = vadd.f32 %v2132, %v2869
      %v2871 = vpop.f32.mrb[0].mxu0
      %v2872 = vadd.f32 %v2132, %v2871
      %v2873 = vpop.f32.mrb[0].mxu0
      %v2874 = vadd.f32 %v2137, %v2873
      %v2875 = vpop.f32.mrb[0].mxu0
      %v2876 = vadd.f32 %v2137, %v2875
      %2877 = vmatprep.mubr.bf16.mxu0 %v2332
      %2878 = vmatmul.mubr.bf16.gmra.mrb[0].mxu0 %v2331
      %v2879 = vpop.f32.mrb[0].mxu0
      %v2880 = vadd.f32 %v2142, %v2879
      %v2881 = vpop.f32.mrb[0].mxu0
      %v2882 = vadd.f32 %v2142, %v2881
      %v2883 = vpop.f32.mrb[0].mxu0
      %v2884 = vadd.f32 %v2147, %v2883
      %v2885 = vpop.f32.mrb[0].mxu0
      %v2886 = vadd.f32 %v2147, %v2885
      %2887 = vmatprep.mubr.bf16.mxu0 %v2334
      %2888 = vmatmul.mubr.bf16.gmra.mrb[0].mxu0 %v2333
      %v2889 = vpop.f32.mrb[0].mxu0
      %v2890 = vadd.f32 %v2152, %v2889
      %v2891 = vpop.f32.mrb[0].mxu0
      %v2892 = vadd.f32 %v2152, %v2891
      %v2893 = vpop.f32.mrb[0].mxu0
      %v2894 = vadd.f32 %v2157, %v2893
      %v2895 = vpop.f32.mrb[0].mxu0
      %v2896 = vadd.f32 %v2157, %v2895
      %2897 = vmatprep.mubr.bf16.mxu0 %v2336
      %2898 = vmatmul.mubr.bf16.gmra.mrb[0].mxu0 %v2335
      %v2899 = vpop.f32.mrb[0].mxu0
      %v2900 = vadd.f32 %v2162, %v2899
      %v2901 = vpop.f32.mrb[0].mxu0
      %v2902 = vadd.f32 %v2162, %v2901
      %v2903 = vpop.f32.mrb[0].mxu0
      %v2904 = vadd.f32 %v2167, %v2903
      %v2905 = vpop.f32.mrb[0].mxu0
      %v2906 = vadd.f32 %v2167, %v2905
      %2907 = vmatprep.mubr.bf16.mxu0 %v2338
      %2908 = vmatmul.mubr.bf16.gmra.mrb[0].mxu0 %v2337
      %v2909 = vpop.f32.mrb[0].mxu0
      %v2910 = vadd.f32 %v2172, %v2909
      %v2911 = vpop.f32.mrb[0].mxu0
      %v2912 = vadd.f32 %v2172, %v2911
      %v2913 = vpop.f32.mrb[0].mxu0
      %v2914 = vadd.f32 %v2177, %v2913
      %v2915 = vpop.f32.mrb[0].mxu0
      %v2916 = vadd.f32 %v2177, %v2915
      %2917 = vmatprep.mubr.bf16.mxu0 %v2340
      %2918 = vmatmul.mubr.bf16.gmra.mrb[0].mxu0 %v2339
      %v2919 = vpop.f32.mrb[0].mxu0
      %v2920 = vadd.f32 %v2182, %v2919
      %v2921 = vpop.f32.mrb[0].mxu0
      %v2922 = vadd.f32 %v2182, %v2921
      %v2923 = vpop.f32.mrb[0].mxu0
      %v2924 = vadd.f32 %v2187, %v2923
      %v2925 = vpop.f32.mrb[0].mxu0
      %v2926 = vadd.f32 %v2187, %v2925
      %2927 = vmatprep.mubr.bf16.mxu0 %v2342
      %2928 = vmatmul.mubr.bf16.gmra.mrb[0].mxu0 %v2341
      %v2929 = vpop.f32.mrb[0].mxu0
      %v2930 = vadd.f32 %v2192, %v2929
      %v2931 = vpop.f32.mrb[0].mxu0
      %v2932 = vadd.f32 %v2192, %v2931
      %v2933 = vpop.f32.mrb[0].mxu0
      %v2934 = vadd.f32 %v2197, %v2933
      %v2935 = vpop.f32.mrb[0].mxu0
      %v2936 = vadd.f32 %v2197, %v2935
      %2937 = vmatprep.mubr.bf16.mxu0 %v2344
      %2938 = vmatmul.mubr.bf16.gmra.mrb[0].mxu0 %v2343
      %v2939 = vpop.f32.mrb[0].mxu0
      %v2940 = vadd.f32 %v2202, %v2939
      %v2941 = vpop.f32.mrb[0].mxu0
      %v2942 = vadd.f32 %v2202, %v2941
      %v2943 = vpop.f32.mrb[0].mxu0
      %v2944 = vadd.f32 %v2207, %v2943
      %v2945 = vpop.f32.mrb[0].mxu0
      %v2946 = vadd.f32 %v2207, %v2945
      %2947 = vmatprep.mubr.bf16.mxu0 %v2346
      %2948 = vmatmul.mubr.bf16.gmra.mrb[0].mxu0 %v2345
      %v2949 = vpop.f32.mrb[0].mxu0
      %v2950 = vadd.f32 %v2212, %v2949
      %v2951 = vpop.f32.mrb[0].mxu0
      %v2952 = vadd.f32 %v2212, %v2951
      %v2953 = vpop.f32.mrb[0].mxu0
      %v2954 = vadd.f32 %v2217, %v2953
      %v2955 = vpop.f32.mrb[0].mxu0
      %v2956 = vadd.f32 %v2217, %v2955
      %2957 = vdwg.mxu0
      %2958 = vmatprep.subr.bf16.mxu0 %v1874
      %2959 = vmatpush1.bf16.msra.mxu0 %v1873
      %2960 = vmatprep.subr.bf16.mxu0 %v1882
      %2961 = vmatpush1.bf16.msra.mxu0 %v1881
      %2962 = vmatprep.subr.bf16.mxu0 %v1890
      %2963 = vmatpush1.bf16.msra.mxu0 %v1889
      %2964 = vmatprep.subr.bf16.mxu0 %v1898
      %2965 = vmatpush1.bf16.msra.mxu0 %v1897
      %2966 = vmatprep.subr.bf16.mxu0 %v1906
      %2967 = vmatpush1.bf16.msra.mxu0 %v1905
      %2968 = vmatprep.subr.bf16.mxu0 %v1914
      %2969 = vmatpush1.bf16.msra.mxu0 %v1913
      %2970 = vmatprep.subr.bf16.mxu0 %v1922
      %2971 = vmatpush1.bf16.msra.mxu0 %v1921
      %2972 = vmatprep.subr.bf16.mxu0 %v1930
      %2973 = vmatpush1.bf16.msra.mxu0 %v1929
      %2974 = vmatprep.subr.bf16.mxu0 %v1938
      %2975 = vmatpush1.bf16.msra.mxu0 %v1937
      %2976 = vmatprep.subr.bf16.mxu0 %v1946
      %2977 = vmatpush1.bf16.msra.mxu0 %v1945
      %2978 = vmatprep.subr.bf16.mxu0 %v1954
      %2979 = vmatpush1.bf16.msra.mxu0 %v1953
      %2980 = vmatprep.subr.bf16.mxu0 %v1962
      %2981 = vmatpush1.bf16.msra.mxu0 %v1961
      %2982 = vmatprep.subr.bf16.mxu0 %v1970
      %2983 = vmatpush1.bf16.msra.mxu0 %v1969
      %2984 = vmatprep.subr.bf16.mxu0 %v1978
      %2985 = vmatpush1.bf16.msra.mxu0 %v1977
      %2986 = vmatprep.subr.bf16.mxu0 %v1986
      %2987 = vmatpush1.bf16.msra.mxu0 %v1985
      %2988 = vmatprep.subr.bf16.mxu0 %v1994
      %2989 = vmatpush1.bf16.msra.mxu0 %v1993
      %2990 = vmatprep.mubr.bf16.mxu0 %v2316
      %2991 = vmatmul.mubr.bf16.gmra.mrb[0].mxu0 %v2315
      %v2992 = vpop.f32.mrb[0].mxu0
      %v2993 = vadd.f32 %v2062, %v2992
      %v2994 = vpop.f32.mrb[0].mxu0
      %v2995 = vadd.f32 %v2062, %v2994
      %v2996 = vpop.f32.mrb[0].mxu0
      %v2997 = vadd.f32 %v2067, %v2996
      %v2998 = vpop.f32.mrb[0].mxu0
      %v2999 = vadd.f32 %v2067, %v2998
      %3000 = vmatprep.mubr.bf16.mxu0 %v2318
      %3001 = vmatmul.mubr.bf16.gmra.mrb[0].mxu0 %v2317
      %v3002 = vpop.f32.mrb[0].mxu0
      %v3003 = vadd.f32 %v2072, %v3002
      %v3004 = vpop.f32.mrb[0].mxu0
      %v3005 = vadd.f32 %v2072, %v3004
      %v3006 = vpop.f32.mrb[0].mxu0
      %v3007 = vadd.f32 %v2077, %v3006
      %v3008 = vpop.f32.mrb[0].mxu0
      %v3009 = vadd.f32 %v2077, %v3008
      %3010 = vmatprep.mubr.bf16.mxu0 %v2320
      %3011 = vmatmul.mubr.bf16.gmra.mrb[0].mxu0 %v2319
      %v3012 = vpop.f32.mrb[0].mxu0
      %v3013 = vadd.f32 %v2082, %v3012
      %v3014 = vpop.f32.mrb[0].mxu0
      %v3015 = vadd.f32 %v2082, %v3014
      %v3016 = vpop.f32.mrb[0].mxu0
      %v3017 = vadd.f32 %v2087, %v3016
      %v3018 = vpop.f32.mrb[0].mxu0
      %v3019 = vadd.f32 %v2087, %v3018
      %3020 = vmatprep.mubr.bf16.mxu0 %v2322
      %3021 = vmatmul.mubr.bf16.gmra.mrb[0].mxu0 %v2321
      %v3022 = vpop.f32.mrb[0].mxu0
      %v3023 = vadd.f32 %v2092, %v3022
      %v3024 = vpop.f32.mrb[0].mxu0
      %v3025 = vadd.f32 %v2092, %v3024
      %v3026 = vpop.f32.mrb[0].mxu0
      %v3027 = vadd.f32 %v2097, %v3026
      %v3028 = vpop.f32.mrb[0].mxu0
      %v3029 = vadd.f32 %v2097, %v3028
      %3030 = vmatprep.mubr.bf16.mxu0 %v2324
      %3031 = vmatmul.mubr.bf16.gmra.mrb[0].mxu0 %v2323
      %v3032 = vpop.f32.mrb[0].mxu0
      %v3033 = vadd.f32 %v2102, %v3032
      %v3034 = vpop.f32.mrb[0].mxu0
      %v3035 = vadd.f32 %v2102, %v3034
      %v3036 = vpop.f32.mrb[0].mxu0
      %v3037 = vadd.f32 %v2107, %v3036
      %v3038 = vpop.f32.mrb[0].mxu0
      %v3039 = vadd.f32 %v2107, %v3038
      %3040 = vmatprep.mubr.bf16.mxu0 %v2326
      %3041 = vmatmul.mubr.bf16.gmra.mrb[0].mxu0 %v2325
      %v3042 = vpop.f32.mrb[0].mxu0
      %v3043 = vadd.f32 %v2112, %v3042
      %v3044 = vpop.f32.mrb[0].mxu0
      %v3045 = vadd.f32 %v2112, %v3044
      %v3046 = vpop.f32.mrb[0].mxu0
      %v3047 = vadd.f32 %v2117, %v3046
      %v3048 = vpop.f32.mrb[0].mxu0
      %v3049 = vadd.f32 %v2117, %v3048
      %3050 = vmatprep.mubr.bf16.mxu0 %v2328
      %3051 = vmatmul.mubr.bf16.gmra.mrb[0].mxu0 %v2327
      %v3052 = vpop.f32.mrb[0].mxu0
      %v3053 = vadd.f32 %v2122, %v3052
      %v3054 = vpop.f32.mrb[0].mxu0
      %v3055 = vadd.f32 %v2122, %v3054
      %v3056 = vpop.f32.mrb[0].mxu0
      %v3057 = vadd.f32 %v2127, %v3056
      %v3058 = vpop.f32.mrb[0].mxu0
      %v3059 = vadd.f32 %v2127, %v3058
      %3060 = vmatprep.mubr.bf16.mxu0 %v2330
      %3061 = vmatmul.mubr.bf16.gmra.mrb[0].mxu0 %v2329
      %v3062 = vpop.f32.mrb[0].mxu0
      %v3063 = vadd.f32 %v2132, %v3062
      %v3064 = vpop.f32.mrb[0].mxu0
      %v3065 = vadd.f32 %v2132, %v3064
      %v3066 = vpop.f32.mrb[0].mxu0
      %v3067 = vadd.f32 %v2137, %v3066
      %v3068 = vpop.f32.mrb[0].mxu0
      %v3069 = vadd.f32 %v2137, %v3068
      %3070 = vmatprep.mubr.bf16.mxu0 %v2332
      %3071 = vmatmul.mubr.bf16.gmra.mrb[0].mxu0 %v2331
      %v3072 = vpop.f32.mrb[0].mxu0
      %v3073 = vadd.f32 %v2142, %v3072
      %v3074 = vpop.f32.mrb[0].mxu0
      %v3075 = vadd.f32 %v2142, %v3074
      %v3076 = vpop.f32.mrb[0].mxu0
      %v3077 = vadd.f32 %v2147, %v3076
      %v3078 = vpop.f32.mrb[0].mxu0
      %v3079 = vadd.f32 %v2147, %v3078
      %3080 = vmatprep.mubr.bf16.mxu0 %v2334
      %3081 = vmatmul.mubr.bf16.gmra.mrb[0].mxu0 %v2333
      %v3082 = vpop.f32.mrb[0].mxu0
      %v3083 = vadd.f32 %v2152, %v3082
      %v3084 = vpop.f32.mrb[0].mxu0
      %v3085 = vadd.f32 %v2152, %v3084
      %v3086 = vpop.f32.mrb[0].mxu0
      %v3087 = vadd.f32 %v2157, %v3086
      %v3088 = vpop.f32.mrb[0].mxu0
      %v3089 = vadd.f32 %v2157, %v3088
      %3090 = vmatprep.mubr.bf16.mxu0 %v2336
      %3091 = vmatmul.mubr.bf16.gmra.mrb[0].mxu0 %v2335
      %v3092 = vpop.f32.mrb[0].mxu0
      %v3093 = vadd.f32 %v2162, %v3092
      %v3094 = vpop.f32.mrb[0].mxu0
      %v3095 = vadd.f32 %v2162, %v3094
      %v3096 = vpop.f32.mrb[0].mxu0
      %v3097 = vadd.f32 %v2167, %v3096
      %v3098 = vpop.f32.mrb[0].mxu0
      %v3099 = vadd.f32 %v2167, %v3098
      %3100 = vmatprep.mubr.bf16.mxu0 %v2338
      %3101 = vmatmul.mubr.bf16.gmra.mrb[0].mxu0 %v2337
      %v3102 = vpop.f32.mrb[0].mxu0
      %v3103 = vadd.f32 %v2172, %v3102
      %v3104 = vpop.f32.mrb[0].mxu0
      %v3105 = vadd.f32 %v2172, %v3104
      %v3106 = vpop.f32.mrb[0].mxu0
      %v3107 = vadd.f32 %v2177, %v3106
      %v3108 = vpop.f32.mrb[0].mxu0
      %v3109 = vadd.f32 %v2177, %v3108
      %3110 = vmatprep.mubr.bf16.mxu0 %v2340
      %3111 = vmatmul.mubr.bf16.gmra.mrb[0].mxu0 %v2339
      %v3112 = vpop.f32.mrb[0].mxu0
      %v3113 = vadd.f32 %v2182, %v3112
      %v3114 = vpop.f32.mrb[0].mxu0
      %v3115 = vadd.f32 %v2182, %v3114
      %v3116 = vpop.f32.mrb[0].mxu0
      %v3117 = vadd.f32 %v2187, %v3116
      %v3118 = vpop.f32.mrb[0].mxu0
      %v3119 = vadd.f32 %v2187, %v3118
      %3120 = vmatprep.mubr.bf16.mxu0 %v2342
      %3121 = vmatmul.mubr.bf16.gmra.mrb[0].mxu0 %v2341
      %v3122 = vpop.f32.mrb[0].mxu0
      %v3123 = vadd.f32 %v2192, %v3122
      %v3124 = vpop.f32.mrb[0].mxu0
      %v3125 = vadd.f32 %v2192, %v3124
      %v3126 = vpop.f32.mrb[0].mxu0
      %v3127 = vadd.f32 %v2197, %v3126
      %v3128 = vpop.f32.mrb[0].mxu0
      %v3129 = vadd.f32 %v2197, %v3128
      %3130 = vmatprep.mubr.bf16.mxu0 %v2344
      %3131 = vmatmul.mubr.bf16.gmra.mrb[0].mxu0 %v2343
      %v3132 = vpop.f32.mrb[0].mxu0
      %v3133 = vadd.f32 %v2202, %v3132
      %v3134 = vpop.f32.mrb[0].mxu0
      %v3135 = vadd.f32 %v2202, %v3134
      %v3136 = vpop.f32.mrb[0].mxu0
      %v3137 = vadd.f32 %v2207, %v3136
      %v3138 = vpop.f32.mrb[0].mxu0
      %v3139 = vadd.f32 %v2207, %v3138
      %3140 = vmatprep.mubr.bf16.mxu0 %v2346
      %3141 = vmatmul.mubr.bf16.gmra.mrb[0].mxu0 %v2345
      %v3142 = vpop.f32.mrb[0].mxu0
      %v3143 = vadd.f32 %v2212, %v3142
      %v3144 = vpop.f32.mrb[0].mxu0
      %v3145 = vadd.f32 %v2212, %v3144
      %v3146 = vpop.f32.mrb[0].mxu0
      %v3147 = vadd.f32 %v2217, %v3146
      %v3148 = vpop.f32.mrb[0].mxu0
      %v3149 = vadd.f32 %v2217, %v3148
      %3150 = vdwg.mxu0
      %v3151 = vmax.f32 %v2414, 0.0
      %v3152 = vmax.f32 %v2416, 0.0
      %v3153 = vmax.f32 %v2607, 0.0
      %v3154 = vmax.f32 %v2609, 0.0
      %v3155 = vmax.f32 %v2800, 0.0
      %v3156 = vmax.f32 %v2802, 0.0
      %v3157 = vmax.f32 %v2993, 0.0
      %v3158 = vmax.f32 %v2995, 0.0
      %v3159 = vmax.f32 %v2418, 0.0
      %v3160 = vmax.f32 %v2420, 0.0
      %v3161 = vmax.f32 %v2611, 0.0
      %v3162 = vmax.f32 %v2613, 0.0
      %v3163 = vmax.f32 %v2804, 0.0
      %v3164 = vmax.f32 %v2806, 0.0
      %v3165 = vmax.f32 %v2997, 0.0
      %v3166 = vmax.f32 %v2999, 0.0
      %v3167 = vmax.f32 %v2424, 0.0
      %v3168 = vmax.f32 %v2426, 0.0
      %v3169 = vmax.f32 %v2617, 0.0
      %v3170 = vmax.f32 %v2619, 0.0
      %v3171 = vmax.f32 %v2810, 0.0
      %v3172 = vmax.f32 %v2812, 0.0
      %v3173 = vmax.f32 %v3003, 0.0
      %v3174 = vmax.f32 %v3005, 0.0
      %v3175 = vmax.f32 %v2428, 0.0
      %v3176 = vmax.f32 %v2430, 0.0
      %v3177 = vmax.f32 %v2621, 0.0
      %v3178 = vmax.f32 %v2623, 0.0
      %v3179 = vmax.f32 %v2814, 0.0
      %v3180 = vmax.f32 %v2816, 0.0
      %v3181 = vmax.f32 %v3007, 0.0
      %v3182 = vmax.f32 %v3009, 0.0
      %v3183 = vmax.f32 %v2434, 0.0
      %v3184 = vmax.f32 %v2436, 0.0
      %v3185 = vmax.f32 %v2627, 0.0
      %v3186 = vmax.f32 %v2629, 0.0
      %v3187 = vmax.f32 %v2820, 0.0
      %v3188 = vmax.f32 %v2822, 0.0
      %v3189 = vmax.f32 %v3013, 0.0
      %v3190 = vmax.f32 %v3015, 0.0
      %v3191 = vmax.f32 %v2438, 0.0
      %v3192 = vmax.f32 %v2440, 0.0
      %v3193 = vmax.f32 %v2631, 0.0
      %v3194 = vmax.f32 %v2633, 0.0
      %v3195 = vmax.f32 %v2824, 0.0
      %v3196 = vmax.f32 %v2826, 0.0
      %v3197 = vmax.f32 %v3017, 0.0
      %v3198 = vmax.f32 %v3019, 0.0
      %v3199 = vmax.f32 %v2444, 0.0
      %v3200 = vmax.f32 %v2446, 0.0
      %v3201 = vmax.f32 %v2637, 0.0
      %v3202 = vmax.f32 %v2639, 0.0
      %v3203 = vmax.f32 %v2830, 0.0
      %v3204 = vmax.f32 %v2832, 0.0
      %v3205 = vmax.f32 %v3023, 0.0
      %v3206 = vmax.f32 %v3025, 0.0
      %v3207 = vmax.f32 %v2448, 0.0
      %v3208 = vmax.f32 %v2450, 0.0
      %v3209 = vmax.f32 %v2641, 0.0
      %v3210 = vmax.f32 %v2643, 0.0
      %v3211 = vmax.f32 %v2834, 0.0
      %v3212 = vmax.f32 %v2836, 0.0
      %v3213 = vmax.f32 %v3027, 0.0
      %v3214 = vmax.f32 %v3029, 0.0
      %v3215 = vmax.f32 %v2454, 0.0
      %v3216 = vmax.f32 %v2456, 0.0
      %v3217 = vmax.f32 %v2647, 0.0
      %v3218 = vmax.f32 %v2649, 0.0
      %v3219 = vmax.f32 %v2840, 0.0
      %v3220 = vmax.f32 %v2842, 0.0
      %v3221 = vmax.f32 %v3033, 0.0
      %v3222 = vmax.f32 %v3035, 0.0
      %v3223 = vmax.f32 %v2458, 0.0
      %v3224 = vmax.f32 %v2460, 0.0
      %v3225 = vmax.f32 %v2651, 0.0
      %v3226 = vmax.f32 %v2653, 0.0
      %v3227 = vmax.f32 %v2844, 0.0
      %v3228 = vmax.f32 %v2846, 0.0
      %v3229 = vmax.f32 %v3037, 0.0
      %v3230 = vmax.f32 %v3039, 0.0
      %v3231 = vmax.f32 %v2464, 0.0
      %v3232 = vmax.f32 %v2466, 0.0
      %v3233 = vmax.f32 %v2657, 0.0
      %v3234 = vmax.f32 %v2659, 0.0
      %v3235 = vmax.f32 %v2850, 0.0
      %v3236 = vmax.f32 %v2852, 0.0
      %v3237 = vmax.f32 %v3043, 0.0
      %v3238 = vmax.f32 %v3045, 0.0
      %v3239 = vmax.f32 %v2468, 0.0
      %v3240 = vmax.f32 %v2470, 0.0
      %v3241 = vmax.f32 %v2661, 0.0
      %v3242 = vmax.f32 %v2663, 0.0
      %v3243 = vmax.f32 %v2854, 0.0
      %v3244 = vmax.f32 %v2856, 0.0
      %v3245 = vmax.f32 %v3047, 0.0
      %v3246 = vmax.f32 %v3049, 0.0
      %v3247 = vmax.f32 %v2474, 0.0
      %v3248 = vmax.f32 %v2476, 0.0
      %v3249 = vmax.f32 %v2667, 0.0
      %v3250 = vmax.f32 %v2669, 0.0
      %v3251 = vmax.f32 %v2860, 0.0
      %v3252 = vmax.f32 %v2862, 0.0
      %v3253 = vmax.f32 %v3053, 0.0
      %v3254 = vmax.f32 %v3055, 0.0
      %v3255 = vmax.f32 %v2478, 0.0
      %v3256 = vmax.f32 %v2480, 0.0
      %v3257 = vmax.f32 %v2671, 0.0
      %v3258 = vmax.f32 %v2673, 0.0
      %v3259 = vmax.f32 %v2864, 0.0
      %v3260 = vmax.f32 %v2866, 0.0
      %v3261 = vmax.f32 %v3057, 0.0
      %v3262 = vmax.f32 %v3059, 0.0
      %v3263 = vmax.f32 %v2484, 0.0
      %v3264 = vmax.f32 %v2486, 0.0
      %v3265 = vmax.f32 %v2677, 0.0
      %v3266 = vmax.f32 %v2679, 0.0
      %v3267 = vmax.f32 %v2870, 0.0
      %v3268 = vmax.f32 %v2872, 0.0
      %v3269 = vmax.f32 %v3063, 0.0
      %v3270 = vmax.f32 %v3065, 0.0
      %v3271 = vmax.f32 %v2488, 0.0
      %v3272 = vmax.f32 %v2490, 0.0
      %v3273 = vmax.f32 %v2681, 0.0
      %v3274 = vmax.f32 %v2683, 0.0
      %v3275 = vmax.f32 %v2874, 0.0
      %v3276 = vmax.f32 %v2876, 0.0
      %v3277 = vmax.f32 %v3067, 0.0
      %v3278 = vmax.f32 %v3069, 0.0
      %v3279 = vmax.f32 %v2494, 0.0
      %v3280 = vmax.f32 %v2496, 0.0
      %v3281 = vmax.f32 %v2687, 0.0
      %v3282 = vmax.f32 %v2689, 0.0
      %v3283 = vmax.f32 %v2880, 0.0
      %v3284 = vmax.f32 %v2882, 0.0
      %v3285 = vmax.f32 %v3073, 0.0
      %v3286 = vmax.f32 %v3075, 0.0
      %v3287 = vmax.f32 %v2498, 0.0
      %v3288 = vmax.f32 %v2500, 0.0
      %v3289 = vmax.f32 %v2691, 0.0
      %v3290 = vmax.f32 %v2693, 0.0
      %v3291 = vmax.f32 %v2884, 0.0
      %v3292 = vmax.f32 %v2886, 0.0
      %v3293 = vmax.f32 %v3077, 0.0
      %v3294 = vmax.f32 %v3079, 0.0
      %v3295 = vmax.f32 %v2504, 0.0
      %v3296 = vmax.f32 %v2506, 0.0
      %v3297 = vmax.f32 %v2697, 0.0
      %v3298 = vmax.f32 %v2699, 0.0
      %v3299 = vmax.f32 %v2890, 0.0
      %v3300 = vmax.f32 %v2892, 0.0
      %v3301 = vmax.f32 %v3083, 0.0
      %v3302 = vmax.f32 %v3085, 0.0
      %v3303 = vmax.f32 %v2508, 0.0
      %v3304 = vmax.f32 %v2510, 0.0
      %v3305 = vmax.f32 %v2701, 0.0
      %v3306 = vmax.f32 %v2703, 0.0
      %v3307 = vmax.f32 %v2894, 0.0
      %v3308 = vmax.f32 %v2896, 0.0
      %v3309 = vmax.f32 %v3087, 0.0
      %v3310 = vmax.f32 %v3089, 0.0
      %v3311 = vmax.f32 %v2514, 0.0
      %v3312 = vmax.f32 %v2516, 0.0
      %v3313 = vmax.f32 %v2707, 0.0
      %v3314 = vmax.f32 %v2709, 0.0
      %v3315 = vmax.f32 %v2900, 0.0
      %v3316 = vmax.f32 %v2902, 0.0
      %v3317 = vmax.f32 %v3093, 0.0
      %v3318 = vmax.f32 %v3095, 0.0
      %v3319 = vmax.f32 %v2518, 0.0
      %v3320 = vmax.f32 %v2520, 0.0
      %v3321 = vmax.f32 %v2711, 0.0
      %v3322 = vmax.f32 %v2713, 0.0
      %v3323 = vmax.f32 %v2904, 0.0
      %v3324 = vmax.f32 %v2906, 0.0
      %v3325 = vmax.f32 %v3097, 0.0
      %v3326 = vmax.f32 %v3099, 0.0
      %v3327 = vmax.f32 %v2524, 0.0
      %v3328 = vmax.f32 %v2526, 0.0
      %v3329 = vmax.f32 %v2717, 0.0
      %v3330 = vmax.f32 %v2719, 0.0
      %v3331 = vmax.f32 %v2910, 0.0
      %v3332 = vmax.f32 %v2912, 0.0
      %v3333 = vmax.f32 %v3103, 0.0
      %v3334 = vmax.f32 %v3105, 0.0
      %v3335 = vmax.f32 %v2528, 0.0
      %v3336 = vmax.f32 %v2530, 0.0
      %v3337 = vmax.f32 %v2721, 0.0
      %v3338 = vmax.f32 %v2723, 0.0
      %v3339 = vmax.f32 %v2914, 0.0
      %v3340 = vmax.f32 %v2916, 0.0
      %v3341 = vmax.f32 %v3107, 0.0
      %v3342 = vmax.f32 %v3109, 0.0
      %v3343 = vmax.f32 %v2534, 0.0
      %v3344 = vmax.f32 %v2536, 0.0
      %v3345 = vmax.f32 %v2727, 0.0
      %v3346 = vmax.f32 %v2729, 0.0
      %v3347 = vmax.f32 %v2920, 0.0
      %v3348 = vmax.f32 %v2922, 0.0
      %v3349 = vmax.f32 %v3113, 0.0
      %v3350 = vmax.f32 %v3115, 0.0
      %v3351 = vmax.f32 %v2538, 0.0
      %v3352 = vmax.f32 %v2540, 0.0
      %v3353 = vmax.f32 %v2731, 0.0
      %v3354 = vmax.f32 %v2733, 0.0
      %v3355 = vmax.f32 %v2924, 0.0
      %v3356 = vmax.f32 %v2926, 0.0
      %v3357 = vmax.f32 %v3117, 0.0
      %v3358 = vmax.f32 %v3119, 0.0
      %v3359 = vmax.f32 %v2544, 0.0
      %v3360 = vmax.f32 %v2546, 0.0
      %v3361 = vmax.f32 %v2737, 0.0
      %v3362 = vmax.f32 %v2739, 0.0
      %v3363 = vmax.f32 %v2930, 0.0
      %v3364 = vmax.f32 %v2932, 0.0
      %v3365 = vmax.f32 %v3123, 0.0
      %v3366 = vmax.f32 %v3125, 0.0
      %v3367 = vmax.f32 %v2548, 0.0
      %v3368 = vmax.f32 %v2550, 0.0
      %v3369 = vmax.f32 %v2741, 0.0
      %v3370 = vmax.f32 %v2743, 0.0
      %v3371 = vmax.f32 %v2934, 0.0
      %v3372 = vmax.f32 %v2936, 0.0
      %v3373 = vmax.f32 %v3127, 0.0
      %v3374 = vmax.f32 %v3129, 0.0
      %v3375 = vmax.f32 %v2554, 0.0
      %v3376 = vmax.f32 %v2556, 0.0
      %v3377 = vmax.f32 %v2747, 0.0
      %v3378 = vmax.f32 %v2749, 0.0
      %v3379 = vmax.f32 %v2940, 0.0
      %v3380 = vmax.f32 %v2942, 0.0
      %v3381 = vmax.f32 %v3133, 0.0
      %v3382 = vmax.f32 %v3135, 0.0
      %v3383 = vmax.f32 %v2558, 0.0
      %v3384 = vmax.f32 %v2560, 0.0
      %v3385 = vmax.f32 %v2751, 0.0
      %v3386 = vmax.f32 %v2753, 0.0
      %v3387 = vmax.f32 %v2944, 0.0
      %v3388 = vmax.f32 %v2946, 0.0
      %v3389 = vmax.f32 %v3137, 0.0
      %v3390 = vmax.f32 %v3139, 0.0
      %v3391 = vmax.f32 %v2564, 0.0
      %v3392 = vmax.f32 %v2566, 0.0
      %v3393 = vmax.f32 %v2757, 0.0
      %v3394 = vmax.f32 %v2759, 0.0
      %v3395 = vmax.f32 %v2950, 0.0
      %v3396 = vmax.f32 %v2952, 0.0
      %v3397 = vmax.f32 %v3143, 0.0
      %v3398 = vmax.f32 %v3145, 0.0
      %v3399 = vmax.f32 %v2568, 0.0
      %v3400 = vmax.f32 %v2570, 0.0
      %v3401 = vmax.f32 %v2761, 0.0
      %v3402 = vmax.f32 %v2763, 0.0
      %v3403 = vmax.f32 %v2954, 0.0
      %v3404 = vmax.f32 %v2956, 0.0
      %v3405 = vmax.f32 %v3147, 0.0
      %v3406 = vmax.f32 %v3149, 0.0
      %v3407 = vpack.c.bf16 %v3159, %v3151
      %v3408 = vpack.c.bf16 %v3160, %v3152
      %v3409 = vpack.c.bf16 %v3161, %v3153
      %v3410 = vpack.c.bf16 %v3162, %v3154
      %v3411 = vpack.c.bf16 %v3163, %v3155
      %v3412 = vpack.c.bf16 %v3164, %v3156
      %v3413 = vpack.c.bf16 %v3165, %v3157
      %v3414 = vpack.c.bf16 %v3166, %v3158
      %v3415 = vpack.c.bf16 %v3175, %v3167
      %v3416 = vpack.c.bf16 %v3176, %v3168
      %v3417 = vpack.c.bf16 %v3177, %v3169
      %v3418 = vpack.c.bf16 %v3178, %v3170
      %v3419 = vpack.c.bf16 %v3179, %v3171
      %v3420 = vpack.c.bf16 %v3180, %v3172
      %v3421 = vpack.c.bf16 %v3181, %v3173
      %v3422 = vpack.c.bf16 %v3182, %v3174
      %v3423 = vpack.c.bf16 %v3191, %v3183
      %v3424 = vpack.c.bf16 %v3192, %v3184
      %v3425 = vpack.c.bf16 %v3193, %v3185
      %v3426 = vpack.c.bf16 %v3194, %v3186
      %v3427 = vpack.c.bf16 %v3195, %v3187
      %v3428 = vpack.c.bf16 %v3196, %v3188
      %v3429 = vpack.c.bf16 %v3197, %v3189
      %v3430 = vpack.c.bf16 %v3198, %v3190
      %v3431 = vpack.c.bf16 %v3207, %v3199
      %v3432 = vpack.c.bf16 %v3208, %v3200
      %v3433 = vpack.c.bf16 %v3209, %v3201
      %v3434 = vpack.c.bf16 %v3210, %v3202
      %v3435 = vpack.c.bf16 %v3211, %v3203
      %v3436 = vpack.c.bf16 %v3212, %v3204
      %v3437 = vpack.c.bf16 %v3213, %v3205
      %v3438 = vpack.c.bf16 %v3214, %v3206
      %v3439 = vpack.c.bf16 %v3223, %v3215
      %v3440 = vpack.c.bf16 %v3224, %v3216
      %v3441 = vpack.c.bf16 %v3225, %v3217
      %v3442 = vpack.c.bf16 %v3226, %v3218
      %v3443 = vpack.c.bf16 %v3227, %v3219
      %v3444 = vpack.c.bf16 %v3228, %v3220
      %v3445 = vpack.c.bf16 %v3229, %v3221
      %v3446 = vpack.c.bf16 %v3230, %v3222
      %v3447 = vpack.c.bf16 %v3239, %v3231
      %v3448 = vpack.c.bf16 %v3240, %v3232
      %v3449 = vpack.c.bf16 %v3241, %v3233
      %v3450 = vpack.c.bf16 %v3242, %v3234
      %v3451 = vpack.c.bf16 %v3243, %v3235
      %v3452 = vpack.c.bf16 %v3244, %v3236
      %v3453 = vpack.c.bf16 %v3245, %v3237
      %v3454 = vpack.c.bf16 %v3246, %v3238
      %v3455 = vpack.c.bf16 %v3255, %v3247
      %v3456 = vpack.c.bf16 %v3256, %v3248
      %v3457 = vpack.c.bf16 %v3257, %v3249
      %v3458 = vpack.c.bf16 %v3258, %v3250
      %v3459 = vpack.c.bf16 %v3259, %v3251
      %v3460 = vpack.c.bf16 %v3260, %v3252
      %v3461 = vpack.c.bf16 %v3261, %v3253
      %v3462 = vpack.c.bf16 %v3262, %v3254
      %v3463 = vpack.c.bf16 %v3271, %v3263
      %v3464 = vpack.c.bf16 %v3272, %v3264
      %v3465 = vpack.c.bf16 %v3273, %v3265
      %v3466 = vpack.c.bf16 %v3274, %v3266
      %v3467 = vpack.c.bf16 %v3275, %v3267
      %v3468 = vpack.c.bf16 %v3276, %v3268
      %v3469 = vpack.c.bf16 %v3277, %v3269
      %v3470 = vpack.c.bf16 %v3278, %v3270
      %v3471 = vpack.c.bf16 %v3287, %v3279
      %v3472 = vpack.c.bf16 %v3288, %v3280
      %v3473 = vpack.c.bf16 %v3289, %v3281
      %v3474 = vpack.c.bf16 %v3290, %v3282
      %v3475 = vpack.c.bf16 %v3291, %v3283
      %v3476 = vpack.c.bf16 %v3292, %v3284
      %v3477 = vpack.c.bf16 %v3293, %v3285
      %v3478 = vpack.c.bf16 %v3294, %v3286
      %v3479 = vpack.c.bf16 %v3303, %v3295
      %v3480 = vpack.c.bf16 %v3304, %v3296
      %v3481 = vpack.c.bf16 %v3305, %v3297
      %v3482 = vpack.c.bf16 %v3306, %v3298
      %v3483 = vpack.c.bf16 %v3307, %v3299
      %v3484 = vpack.c.bf16 %v3308, %v3300
      %v3485 = vpack.c.bf16 %v3309, %v3301
      %v3486 = vpack.c.bf16 %v3310, %v3302
      %v3487 = vpack.c.bf16 %v3319, %v3311
      %v3488 = vpack.c.bf16 %v3320, %v3312
      %v3489 = vpack.c.bf16 %v3321, %v3313
      %v3490 = vpack.c.bf16 %v3322, %v3314
      %v3491 = vpack.c.bf16 %v3323, %v3315
      %v3492 = vpack.c.bf16 %v3324, %v3316
      %v3493 = vpack.c.bf16 %v3325, %v3317
      %v3494 = vpack.c.bf16 %v3326, %v3318
      %v3495 = vpack.c.bf16 %v3335, %v3327
      %v3496 = vpack.c.bf16 %v3336, %v3328
      %v3497 = vpack.c.bf16 %v3337, %v3329
      %v3498 = vpack.c.bf16 %v3338, %v3330
      %v3499 = vpack.c.bf16 %v3339, %v3331
      %v3500 = vpack.c.bf16 %v3340, %v3332
      %v3501 = vpack.c.bf16 %v3341, %v3333
      %v3502 = vpack.c.bf16 %v3342, %v3334
      %v3503 = vpack.c.bf16 %v3351, %v3343
      %v3504 = vpack.c.bf16 %v3352, %v3344
      %v3505 = vpack.c.bf16 %v3353, %v3345
      %v3506 = vpack.c.bf16 %v3354, %v3346
      %v3507 = vpack.c.bf16 %v3355, %v3347
      %v3508 = vpack.c.bf16 %v3356, %v3348
      %v3509 = vpack.c.bf16 %v3357, %v3349
      %v3510 = vpack.c.bf16 %v3358, %v3350
      %v3511 = vpack.c.bf16 %v3367, %v3359
      %v3512 = vpack.c.bf16 %v3368, %v3360
      %v3513 = vpack.c.bf16 %v3369, %v3361
      %v3514 = vpack.c.bf16 %v3370, %v3362
      %v3515 = vpack.c.bf16 %v3371, %v3363
      %v3516 = vpack.c.bf16 %v3372, %v3364
      %v3517 = vpack.c.bf16 %v3373, %v3365
      %v3518 = vpack.c.bf16 %v3374, %v3366
      %v3519 = vpack.c.bf16 %v3383, %v3375
      %v3520 = vpack.c.bf16 %v3384, %v3376
      %v3521 = vpack.c.bf16 %v3385, %v3377
      %v3522 = vpack.c.bf16 %v3386, %v3378
      %v3523 = vpack.c.bf16 %v3387, %v3379
      %v3524 = vpack.c.bf16 %v3388, %v3380
      %v3525 = vpack.c.bf16 %v3389, %v3381
      %v3526 = vpack.c.bf16 %v3390, %v3382
      %v3527 = vpack.c.bf16 %v3399, %v3391
      %v3528 = vpack.c.bf16 %v3400, %v3392
      %v3529 = vpack.c.bf16 %v3401, %v3393
      %v3530 = vpack.c.bf16 %v3402, %v3394
      %v3531 = vpack.c.bf16 %v3403, %v3395
      %v3532 = vpack.c.bf16 %v3404, %v3396
      %v3533 = vpack.c.bf16 %v3405, %v3397
      %v3534 = vpack.c.bf16 %v3406, %v3398
      %v3535 = vld [vmem:[%s5] sm:$0xff]
      %v3536 = vld [vmem:[%s5 + $0x8] sm:$0xff]
      %v3537 = vld [vmem:[%s5 + $0x10] sm:$0xff]
      %v3538 = vld [vmem:[%s5 + $0x18] sm:$0xff]
      %v3539 = vld [vmem:[%s5 + $0x20] sm:$0xff]
      %v3540 = vld [vmem:[%s5 + $0x28] sm:$0xff]
      %v3541 = vld [vmem:[%s5 + $0x30] sm:$0xff]
      %v3542 = vld [vmem:[%s5 + $0x38] sm:$0xff]
      %v3543 = vld [vmem:[%s5 + $0x40] sm:$0xff]
      %v3544 = vld [vmem:[%s5 + $0x48] sm:$0xff]
      %v3545 = vld [vmem:[%s5 + $0x50] sm:$0xff]
      %v3546 = vld [vmem:[%s5 + $0x58] sm:$0xff]
      %v3547 = vld [vmem:[%s5 + $0x60] sm:$0xff]
      %v3548 = vld [vmem:[%s5 + $0x68] sm:$0xff]
      %v3549 = vld [vmem:[%s5 + $0x70] sm:$0xff]
      %v3550 = vld [vmem:[%s5 + $0x78] sm:$0xff]
      %v3551 = vld [vmem:[%s5 + $0x80] sm:$0xff]
      %v3552 = vld [vmem:[%s5 + $0x88] sm:$0xff]
      %v3553 = vld [vmem:[%s5 + $0x90] sm:$0xff]
      %v3554 = vld [vmem:[%s5 + $0x98] sm:$0xff]
      %v3555 = vld [vmem:[%s5 + $0xa0] sm:$0xff]
      %v3556 = vld [vmem:[%s5 + $0xa8] sm:$0xff]
      %v3557 = vld [vmem:[%s5 + $0xb0] sm:$0xff]
      %v3558 = vld [vmem:[%s5 + $0xb8] sm:$0xff]
      %v3559 = vld [vmem:[%s5 + $0xc0] sm:$0xff]
      %v3560 = vld [vmem:[%s5 + $0xc8] sm:$0xff]
      %v3561 = vld [vmem:[%s5 + $0xd0] sm:$0xff]
      %v3562 = vld [vmem:[%s5 + $0xd8] sm:$0xff]
      %v3563 = vld [vmem:[%s5 + $0xe0] sm:$0xff]
      %v3564 = vld [vmem:[%s5 + $0xe8] sm:$0xff]
      %v3565 = vld [vmem:[%s5 + $0xf0] sm:$0xff]
      %v3566 = vld [vmem:[%s5 + $0xf8] sm:$0xff]
      %v3567 = vld [vmem:[%s6] sm:$0xff]
      %v3568 = vld [vmem:[%s6 + $0x8] sm:$0xff]
      %v3569 = vld [vmem:[%s6 + $0x10] sm:$0xff]
      %v3570 = vld [vmem:[%s6 + $0x18] sm:$0xff]
      %v3571 = vld [vmem:[%s6 + $0x20] sm:$0xff]
      %v3572 = vld [vmem:[%s6 + $0x28] sm:$0xff]
      %v3573 = vld [vmem:[%s6 + $0x30] sm:$0xff]
      %v3574 = vld [vmem:[%s6 + $0x38] sm:$0xff]
      %v3575 = vld [vmem:[%s6 + $0x40] sm:$0xff]
      %v3576 = vld [vmem:[%s6 + $0x48] sm:$0xff]
      %v3577 = vld [vmem:[%s6 + $0x50] sm:$0xff]
      %v3578 = vld [vmem:[%s6 + $0x58] sm:$0xff]
      %v3579 = vld [vmem:[%s6 + $0x60] sm:$0xff]
      %v3580 = vld [vmem:[%s6 + $0x68] sm:$0xff]
      %v3581 = vld [vmem:[%s6 + $0x70] sm:$0xff]
      %v3582 = vld [vmem:[%s6 + $0x78] sm:$0xff]
      %v3583 = vld [vmem:[%s6 + $0x80] sm:$0xff]
      %v3584 = vld [vmem:[%s6 + $0x88] sm:$0xff]
      %v3585 = vld [vmem:[%s6 + $0x90] sm:$0xff]
      %v3586 = vld [vmem:[%s6 + $0x98] sm:$0xff]
      %v3587 = vld [vmem:[%s6 + $0xa0] sm:$0xff]
      %v3588 = vld [vmem:[%s6 + $0xa8] sm:$0xff]
      %v3589 = vld [vmem:[%s6 + $0xb0] sm:$0xff]
      %v3590 = vld [vmem:[%s6 + $0xb8] sm:$0xff]
      %v3591 = vld [vmem:[%s6 + $0xc0] sm:$0xff]
      %v3592 = vld [vmem:[%s6 + $0xc8] sm:$0xff]
      %v3593 = vld [vmem:[%s6 + $0xd0] sm:$0xff]
      %v3594 = vld [vmem:[%s6 + $0xd8] sm:$0xff]
      %v3595 = vld [vmem:[%s6 + $0xe0] sm:$0xff]
      %v3596 = vld [vmem:[%s6 + $0xe8] sm:$0xff]
      %v3597 = vld [vmem:[%s6 + $0xf0] sm:$0xff]
      %v3598 = vld [vmem:[%s6 + $0xf8] sm:$0xff]
      %3600 = vset.pattern.permute.xlu0 0
      %3601 = vperm.xlu0 %3600, %v3567
      %v3602 = vpop.permute.xlu0 %3601
      %3605 = vset.pattern.permute.xlu0 0
      %3606 = vperm.xlu0 %3605, %v3568
      %v3607 = vpop.permute.xlu0 %3606
      %3610 = vset.pattern.permute.xlu0 0
      %3611 = vperm.xlu0 %3610, %v3569
      %v3612 = vpop.permute.xlu0 %3611
      %3615 = vset.pattern.permute.xlu0 0
      %3616 = vperm.xlu0 %3615, %v3570
      %v3617 = vpop.permute.xlu0 %3616
      %3620 = vset.pattern.permute.xlu0 0
      %3621 = vperm.xlu0 %3620, %v3571
      %v3622 = vpop.permute.xlu0 %3621
      %3625 = vset.pattern.permute.xlu0 0
      %3626 = vperm.xlu0 %3625, %v3572
      %v3627 = vpop.permute.xlu0 %3626
      %3630 = vset.pattern.permute.xlu0 0
      %3631 = vperm.xlu0 %3630, %v3573
      %v3632 = vpop.permute.xlu0 %3631
      %3635 = vset.pattern.permute.xlu0 0
      %3636 = vperm.xlu0 %3635, %v3574
      %v3637 = vpop.permute.xlu0 %3636
      %3640 = vset.pattern.permute.xlu0 0
      %3641 = vperm.xlu0 %3640, %v3575
      %v3642 = vpop.permute.xlu0 %3641
      %3645 = vset.pattern.permute.xlu0 0
      %3646 = vperm.xlu0 %3645, %v3576
      %v3647 = vpop.permute.xlu0 %3646
      %3650 = vset.pattern.permute.xlu0 0
      %3651 = vperm.xlu0 %3650, %v3577
      %v3652 = vpop.permute.xlu0 %3651
      %3655 = vset.pattern.permute.xlu0 0
      %3656 = vperm.xlu0 %3655, %v3578
      %v3657 = vpop.permute.xlu0 %3656
      %3660 = vset.pattern.permute.xlu0 0
      %3661 = vperm.xlu0 %3660, %v3579
      %v3662 = vpop.permute.xlu0 %3661
      %3665 = vset.pattern.permute.xlu0 0
      %3666 = vperm.xlu0 %3665, %v3580
      %v3667 = vpop.permute.xlu0 %3666
      %3670 = vset.pattern.permute.xlu0 0
      %3671 = vperm.xlu0 %3670, %v3581
      %v3672 = vpop.permute.xlu0 %3671
      %3675 = vset.pattern.permute.xlu0 0
      %3676 = vperm.xlu0 %3675, %v3582
      %v3677 = vpop.permute.xlu0 %3676
      %3680 = vset.pattern.permute.xlu0 0
      %3681 = vperm.xlu0 %3680, %v3583
      %v3682 = vpop.permute.xlu0 %3681
      %3685 = vset.pattern.permute.xlu0 0
      %3686 = vperm.xlu0 %3685, %v3584
      %v3687 = vpop.permute.xlu0 %3686
      %3690 = vset.pattern.permute.xlu0 0
      %3691 = vperm.xlu0 %3690, %v3585
      %v3692 = vpop.permute.xlu0 %3691
      %3695 = vset.pattern.permute.xlu0 0
      %3696 = vperm.xlu0 %3695, %v3586
      %v3697 = vpop.permute.xlu0 %3696
      %3700 = vset.pattern.permute.xlu0 0
      %3701 = vperm.xlu0 %3700, %v3587
      %v3702 = vpop.permute.xlu0 %3701
      %3705 = vset.pattern.permute.xlu0 0
      %3706 = vperm.xlu0 %3705, %v3588
      %v3707 = vpop.permute.xlu0 %3706
      %3710 = vset.pattern.permute.xlu0 0
      %3711 = vperm.xlu0 %3710, %v3589
      %v3712 = vpop.permute.xlu0 %3711
      %3715 = vset.pattern.permute.xlu0 0
      %3716 = vperm.xlu0 %3715, %v3590
      %v3717 = vpop.permute.xlu0 %3716
      %3720 = vset.pattern.permute.xlu0 0
      %3721 = vperm.xlu0 %3720, %v3591
      %v3722 = vpop.permute.xlu0 %3721
      %3725 = vset.pattern.permute.xlu0 0
      %3726 = vperm.xlu0 %3725, %v3592
      %v3727 = vpop.permute.xlu0 %3726
      %3730 = vset.pattern.permute.xlu0 0
      %3731 = vperm.xlu0 %3730, %v3593
      %v3732 = vpop.permute.xlu0 %3731
      %3735 = vset.pattern.permute.xlu0 0
      %3736 = vperm.xlu0 %3735, %v3594
      %v3737 = vpop.permute.xlu0 %3736
      %3740 = vset.pattern.permute.xlu0 0
      %3741 = vperm.xlu0 %3740, %v3595
      %v3742 = vpop.permute.xlu0 %3741
      %3745 = vset.pattern.permute.xlu0 0
      %3746 = vperm.xlu0 %3745, %v3596
      %v3747 = vpop.permute.xlu0 %3746
      %3750 = vset.pattern.permute.xlu0 0
      %3751 = vperm.xlu0 %3750, %v3597
      %v3752 = vpop.permute.xlu0 %3751
      %3755 = vset.pattern.permute.xlu0 0
      %3756 = vperm.xlu0 %3755, %v3598
      %v3757 = vpop.permute.xlu0 %3756
      %v3791 = vunpack.c.l.b16 %v3535
      %v3792 = vunpack.c.h.b16 %v3535
      %v3793 = vunpack.c.l.b16 %v3536
      %v3794 = vunpack.c.h.b16 %v3536
      %v3795 = vunpack.c.l.b16 %v3537
      %v3796 = vunpack.c.h.b16 %v3537
      %v3797 = vunpack.c.l.b16 %v3538
      %v3798 = vunpack.c.h.b16 %v3538
      %v3799 = vunpack.c.l.b16 %v3539
      %v3800 = vunpack.c.h.b16 %v3539
      %v3801 = vunpack.c.l.b16 %v3540
      %v3802 = vunpack.c.h.b16 %v3540
      %v3803 = vunpack.c.l.b16 %v3541
      %v3804 = vunpack.c.h.b16 %v3541
      %v3805 = vunpack.c.l.b16 %v3542
      %v3806 = vunpack.c.h.b16 %v3542
      %v3807 = vunpack.c.l.b16 %v3543
      %v3808 = vunpack.c.h.b16 %v3543
      %v3809 = vunpack.c.l.b16 %v3544
      %v3810 = vunpack.c.h.b16 %v3544
      %v3811 = vunpack.c.l.b16 %v3545
      %v3812 = vunpack.c.h.b16 %v3545
      %v3813 = vunpack.c.l.b16 %v3546
      %v3814 = vunpack.c.h.b16 %v3546
      %v3815 = vunpack.c.l.b16 %v3547
      %v3816 = vunpack.c.h.b16 %v3547
      %v3817 = vunpack.c.l.b16 %v3548
      %v3818 = vunpack.c.h.b16 %v3548
      %v3819 = vunpack.c.l.b16 %v3549
      %v3820 = vunpack.c.h.b16 %v3549
      %v3821 = vunpack.c.l.b16 %v3550
      %v3822 = vunpack.c.h.b16 %v3550
      %v3823 = vunpack.c.l.b16 %v3551
      %v3824 = vunpack.c.h.b16 %v3551
      %v3825 = vunpack.c.l.b16 %v3552
      %v3826 = vunpack.c.h.b16 %v3552
      %v3827 = vunpack.c.l.b16 %v3553
      %v3828 = vunpack.c.h.b16 %v3553
      %v3829 = vunpack.c.l.b16 %v3554
      %v3830 = vunpack.c.h.b16 %v3554
      %v3831 = vunpack.c.l.b16 %v3555
      %v3832 = vunpack.c.h.b16 %v3555
      %v3833 = vunpack.c.l.b16 %v3556
      %v3834 = vunpack.c.h.b16 %v3556
      %v3835 = vunpack.c.l.b16 %v3557
      %v3836 = vunpack.c.h.b16 %v3557
      %v3837 = vunpack.c.l.b16 %v3558
      %v3838 = vunpack.c.h.b16 %v3558
      %v3839 = vunpack.c.l.b16 %v3559
      %v3840 = vunpack.c.h.b16 %v3559
      %v3841 = vunpack.c.l.b16 %v3560
      %v3842 = vunpack.c.h.b16 %v3560
      %v3843 = vunpack.c.l.b16 %v3561
      %v3844 = vunpack.c.h.b16 %v3561
      %v3845 = vunpack.c.l.b16 %v3562
      %v3846 = vunpack.c.h.b16 %v3562
      %v3847 = vunpack.c.l.b16 %v3563
      %v3848 = vunpack.c.h.b16 %v3563
      %v3849 = vunpack.c.l.b16 %v3564
      %v3850 = vunpack.c.h.b16 %v3564
      %v3851 = vunpack.c.l.b16 %v3565
      %v3852 = vunpack.c.h.b16 %v3565
      %v3853 = vunpack.c.l.b16 %v3566
      %v3854 = vunpack.c.h.b16 %v3566
      %v3855 = vpack.c.b16 %v3793, %v3791
      %v3856 = vpack.c.b16 %v3794, %v3792
      %v3857 = vpack.c.b16 %v3797, %v3795
      %v3858 = vpack.c.b16 %v3798, %v3796
      %v3859 = vpack.c.b16 %v3801, %v3799
      %v3860 = vpack.c.b16 %v3802, %v3800
      %v3861 = vpack.c.b16 %v3805, %v3803
      %v3862 = vpack.c.b16 %v3806, %v3804
      %v3863 = vpack.c.b16 %v3809, %v3807
      %v3864 = vpack.c.b16 %v3810, %v3808
      %v3865 = vpack.c.b16 %v3813, %v3811
      %v3866 = vpack.c.b16 %v3814, %v3812
      %v3867 = vpack.c.b16 %v3817, %v3815
      %v3868 = vpack.c.b16 %v3818, %v3816
      %v3869 = vpack.c.b16 %v3821, %v3819
      %v3870 = vpack.c.b16 %v3822, %v3820
      %v3871 = vpack.c.b16 %v3825, %v3823
      %v3872 = vpack.c.b16 %v3826, %v3824
      %v3873 = vpack.c.b16 %v3829, %v3827
      %v3874 = vpack.c.b16 %v3830, %v3828
      %v3875 = vpack.c.b16 %v3833, %v3831
      %v3876 = vpack.c.b16 %v3834, %v3832
      %v3877 = vpack.c.b16 %v3837, %v3835
      %v3878 = vpack.c.b16 %v3838, %v3836
      %v3879 = vpack.c.b16 %v3841, %v3839
      %v3880 = vpack.c.b16 %v3842, %v3840
      %v3881 = vpack.c.b16 %v3845, %v3843
      %v3882 = vpack.c.b16 %v3846, %v3844
      %v3883 = vpack.c.b16 %v3849, %v3847
      %v3884 = vpack.c.b16 %v3850, %v3848
      %v3885 = vpack.c.b16 %v3853, %v3851
      %v3886 = vpack.c.b16 %v3854, %v3852
      %3919 = vmatprep.subr.bf16.mxu0 %v3408
      %3920 = vmatpush1.bf16.msra.mxu0 %v3407
      %3921 = vmatprep.subr.bf16.mxu0 %v3416
      %3922 = vmatpush1.bf16.msra.mxu0 %v3415
      %3923 = vmatprep.subr.bf16.mxu0 %v3424
      %3924 = vmatpush1.bf16.msra.mxu0 %v3423
      %3925 = vmatprep.subr.bf16.mxu0 %v3432
      %3926 = vmatpush1.bf16.msra.mxu0 %v3431
      %3927 = vmatprep.subr.bf16.mxu0 %v3440
      %3928 = vmatpush1.bf16.msra.mxu0 %v3439
      %3929 = vmatprep.subr.bf16.mxu0 %v3448
      %3930 = vmatpush1.bf16.msra.mxu0 %v3447
      %3931 = vmatprep.subr.bf16.mxu0 %v3456
      %3932 = vmatpush1.bf16.msra.mxu0 %v3455
      %3933 = vmatprep.subr.bf16.mxu0 %v3464
      %3934 = vmatpush1.bf16.msra.mxu0 %v3463
      %3935 = vmatprep.subr.bf16.mxu0 %v3472
      %3936 = vmatpush1.bf16.msra.mxu0 %v3471
      %3937 = vmatprep.subr.bf16.mxu0 %v3480
      %3938 = vmatpush1.bf16.msra.mxu0 %v3479
      %3939 = vmatprep.subr.bf16.mxu0 %v3488
      %3940 = vmatpush1.bf16.msra.mxu0 %v3487
      %3941 = vmatprep.subr.bf16.mxu0 %v3496
      %3942 = vmatpush1.bf16.msra.mxu0 %v3495
      %3943 = vmatprep.subr.bf16.mxu0 %v3504
      %3944 = vmatpush1.bf16.msra.mxu0 %v3503
      %3945 = vmatprep.subr.bf16.mxu0 %v3512
      %3946 = vmatpush1.bf16.msra.mxu0 %v3511
      %3947 = vmatprep.subr.bf16.mxu0 %v3520
      %3948 = vmatpush1.bf16.msra.mxu0 %v3519
      %3949 = vmatprep.subr.bf16.mxu0 %v3528
      %3950 = vmatpush1.bf16.msra.mxu0 %v3527
      %3951 = vmatprep.mubr.bf16.mxu0 %v3856
      %3952 = vmatmul.mubr.bf16.gmra.mrb[0].mxu0 %v3855
      %v3953 = vpop.f32.mrb[0].mxu0
      %v3954 = vadd.f32 %v3602, %v3953
      %v3955 = vpop.f32.mrb[0].mxu0
      %v3956 = vadd.f32 %v3602, %v3955
      %v3957 = vpop.f32.mrb[0].mxu0
      %v3958 = vadd.f32 %v3607, %v3957
      %v3959 = vpop.f32.mrb[0].mxu0
      %v3960 = vadd.f32 %v3607, %v3959
      %3961 = vmatprep.mubr.bf16.mxu0 %v3858
      %3962 = vmatmul.mubr.bf16.gmra.mrb[0].mxu0 %v3857
      %v3963 = vpop.f32.mrb[0].mxu0
      %v3964 = vadd.f32 %v3612, %v3963
      %v3965 = vpop.f32.mrb[0].mxu0
      %v3966 = vadd.f32 %v3612, %v3965
      %v3967 = vpop.f32.mrb[0].mxu0
      %v3968 = vadd.f32 %v3617, %v3967
      %v3969 = vpop.f32.mrb[0].mxu0
      %v3970 = vadd.f32 %v3617, %v3969
      %3971 = vmatprep.mubr.bf16.mxu0 %v3860
      %3972 = vmatmul.mubr.bf16.gmra.mrb[0].mxu0 %v3859
      %v3973 = vpop.f32.mrb[0].mxu0
      %v3974 = vadd.f32 %v3622, %v3973
      %v3975 = vpop.f32.mrb[0].mxu0
      %v3976 = vadd.f32 %v3622, %v3975
      %v3977 = vpop.f32.mrb[0].mxu0
      %v3978 = vadd.f32 %v3627, %v3977
      %v3979 = vpop.f32.mrb[0].mxu0
      %v3980 = vadd.f32 %v3627, %v3979
      %3981 = vmatprep.mubr.bf16.mxu0 %v3862
      %3982 = vmatmul.mubr.bf16.gmra.mrb[0].mxu0 %v3861
      %v3983 = vpop.f32.mrb[0].mxu0
      %v3984 = vadd.f32 %v3632, %v3983
      %v3985 = vpop.f32.mrb[0].mxu0
      %v3986 = vadd.f32 %v3632, %v3985
      %v3987 = vpop.f32.mrb[0].mxu0
      %v3988 = vadd.f32 %v3637, %v3987
      %v3989 = vpop.f32.mrb[0].mxu0
      %v3990 = vadd.f32 %v3637, %v3989
      %3991 = vmatprep.mubr.bf16.mxu0 %v3864
      %3992 = vmatmul.mubr.bf16.gmra.mrb[0].mxu0 %v3863
      %v3993 = vpop.f32.mrb[0].mxu0
      %v3994 = vadd.f32 %v3642, %v3993
      %v3995 = vpop.f32.mrb[0].mxu0
      %v3996 = vadd.f32 %v3642, %v3995
      %v3997 = vpop.f32.mrb[0].mxu0
      %v3998 = vadd.f32 %v3647, %v3997
      %v3999 = vpop.f32.mrb[0].mxu0
      %v4000 = vadd.f32 %v3647, %v3999
      %4001 = vmatprep.mubr.bf16.mxu0 %v3866
      %4002 = vmatmul.mubr.bf16.gmra.mrb[0].mxu0 %v3865
      %v4003 = vpop.f32.mrb[0].mxu0
      %v4004 = vadd.f32 %v3652, %v4003
      %v4005 = vpop.f32.mrb[0].mxu0
      %v4006 = vadd.f32 %v3652, %v4005
      %v4007 = vpop.f32.mrb[0].mxu0
      %v4008 = vadd.f32 %v3657, %v4007
      %v4009 = vpop.f32.mrb[0].mxu0
      %v4010 = vadd.f32 %v3657, %v4009
      %4011 = vmatprep.mubr.bf16.mxu0 %v3868
      %4012 = vmatmul.mubr.bf16.gmra.mrb[0].mxu0 %v3867
      %v4013 = vpop.f32.mrb[0].mxu0
      %v4014 = vadd.f32 %v3662, %v4013
      %v4015 = vpop.f32.mrb[0].mxu0
      %v4016 = vadd.f32 %v3662, %v4015
      %v4017 = vpop.f32.mrb[0].mxu0
      %v4018 = vadd.f32 %v3667, %v4017
      %v4019 = vpop.f32.mrb[0].mxu0
      %v4020 = vadd.f32 %v3667, %v4019
      %4021 = vmatprep.mubr.bf16.mxu0 %v3870
      %4022 = vmatmul.mubr.bf16.gmra.mrb[0].mxu0 %v3869
      %v4023 = vpop.f32.mrb[0].mxu0
      %v4024 = vadd.f32 %v3672, %v4023
      %v4025 = vpop.f32.mrb[0].mxu0
      %v4026 = vadd.f32 %v3672, %v4025
      %v4027 = vpop.f32.mrb[0].mxu0
      %v4028 = vadd.f32 %v3677, %v4027
      %v4029 = vpop.f32.mrb[0].mxu0
      %v4030 = vadd.f32 %v3677, %v4029
      %4031 = vmatprep.mubr.bf16.mxu0 %v3872
      %4032 = vmatmul.mubr.bf16.gmra.mrb[0].mxu0 %v3871
      %v4033 = vpop.f32.mrb[0].mxu0
      %v4034 = vadd.f32 %v3682, %v4033
      %v4035 = vpop.f32.mrb[0].mxu0
      %v4036 = vadd.f32 %v3682, %v4035
      %v4037 = vpop.f32.mrb[0].mxu0
      %v4038 = vadd.f32 %v3687, %v4037
      %v4039 = vpop.f32.mrb[0].mxu0
      %v4040 = vadd.f32 %v3687, %v4039
      %4041 = vmatprep.mubr.bf16.mxu0 %v3874
      %4042 = vmatmul.mubr.bf16.gmra.mrb[0].mxu0 %v3873
      %v4043 = vpop.f32.mrb[0].mxu0
      %v4044 = vadd.f32 %v3692, %v4043
      %v4045 = vpop.f32.mrb[0].mxu0
      %v4046 = vadd.f32 %v3692, %v4045
      %v4047 = vpop.f32.mrb[0].mxu0
      %v4048 = vadd.f32 %v3697, %v4047
      %v4049 = vpop.f32.mrb[0].mxu0
      %v4050 = vadd.f32 %v3697, %v4049
      %4051 = vmatprep.mubr.bf16.mxu0 %v3876
      %4052 = vmatmul.mubr.bf16.gmra.mrb[0].mxu0 %v3875
      %v4053 = vpop.f32.mrb[0].mxu0
      %v4054 = vadd.f32 %v3702, %v4053
      %v4055 = vpop.f32.mrb[0].mxu0
      %v4056 = vadd.f32 %v3702, %v4055
      %v4057 = vpop.f32.mrb[0].mxu0
      %v4058 = vadd.f32 %v3707, %v4057
      %v4059 = vpop.f32.mrb[0].mxu0
      %v4060 = vadd.f32 %v3707, %v4059
      %4061 = vmatprep.mubr.bf16.mxu0 %v3878
      %4062 = vmatmul.mubr.bf16.gmra.mrb[0].mxu0 %v3877
      %v4063 = vpop.f32.mrb[0].mxu0
      %v4064 = vadd.f32 %v3712, %v4063
      %v4065 = vpop.f32.mrb[0].mxu0
      %v4066 = vadd.f32 %v3712, %v4065
      %v4067 = vpop.f32.mrb[0].mxu0
      %v4068 = vadd.f32 %v3717, %v4067
      %v4069 = vpop.f32.mrb[0].mxu0
      %v4070 = vadd.f32 %v3717, %v4069
      %4071 = vmatprep.mubr.bf16.mxu0 %v3880
      %4072 = vmatmul.mubr.bf16.gmra.mrb[0].mxu0 %v3879
      %v4073 = vpop.f32.mrb[0].mxu0
      %v4074 = vadd.f32 %v3722, %v4073
      %v4075 = vpop.f32.mrb[0].mxu0
      %v4076 = vadd.f32 %v3722, %v4075
      %v4077 = vpop.f32.mrb[0].mxu0
      %v4078 = vadd.f32 %v3727, %v4077
      %v4079 = vpop.f32.mrb[0].mxu0
      %v4080 = vadd.f32 %v3727, %v4079
      %4081 = vmatprep.mubr.bf16.mxu0 %v3882
      %4082 = vmatmul.mubr.bf16.gmra.mrb[0].mxu0 %v3881
      %v4083 = vpop.f32.mrb[0].mxu0
      %v4084 = vadd.f32 %v3732, %v4083
      %v4085 = vpop.f32.mrb[0].mxu0
      %v4086 = vadd.f32 %v3732, %v4085
      %v4087 = vpop.f32.mrb[0].mxu0
      %v4088 = vadd.f32 %v3737, %v4087
      %v4089 = vpop.f32.mrb[0].mxu0
      %v4090 = vadd.f32 %v3737, %v4089
      %4091 = vmatprep.mubr.bf16.mxu0 %v3884
      %4092 = vmatmul.mubr.bf16.gmra.mrb[0].mxu0 %v3883
      %v4093 = vpop.f32.mrb[0].mxu0
      %v4094 = vadd.f32 %v3742, %v4093
      %v4095 = vpop.f32.mrb[0].mxu0
      %v4096 = vadd.f32 %v3742, %v4095
      %v4097 = vpop.f32.mrb[0].mxu0
      %v4098 = vadd.f32 %v3747, %v4097
      %v4099 = vpop.f32.mrb[0].mxu0
      %v4100 = vadd.f32 %v3747, %v4099
      %4101 = vmatprep.mubr.bf16.mxu0 %v3886
      %4102 = vmatmul.mubr.bf16.gmra.mrb[0].mxu0 %v3885
      %v4103 = vpop.f32.mrb[0].mxu0
      %v4104 = vadd.f32 %v3752, %v4103
      %v4105 = vpop.f32.mrb[0].mxu0
      %v4106 = vadd.f32 %v3752, %v4105
      %v4107 = vpop.f32.mrb[0].mxu0
      %v4108 = vadd.f32 %v3757, %v4107
      %v4109 = vpop.f32.mrb[0].mxu0
      %v4110 = vadd.f32 %v3757, %v4109
      %4111 = vdwg.mxu0
      %4112 = vmatprep.subr.bf16.mxu0 %v3410
      %4113 = vmatpush1.bf16.msra.mxu0 %v3409
      %4114 = vmatprep.subr.bf16.mxu0 %v3418
      %4115 = vmatpush1.bf16.msra.mxu0 %v3417
      %4116 = vmatprep.subr.bf16.mxu0 %v3426
      %4117 = vmatpush1.bf16.msra.mxu0 %v3425
      %4118 = vmatprep.subr.bf16.mxu0 %v3434
      %4119 = vmatpush1.bf16.msra.mxu0 %v3433
      %4120 = vmatprep.subr.bf16.mxu0 %v3442
      %4121 = vmatpush1.bf16.msra.mxu0 %v3441
      %4122 = vmatprep.subr.bf16.mxu0 %v3450
      %4123 = vmatpush1.bf16.msra.mxu0 %v3449
      %4124 = vmatprep.subr.bf16.mxu0 %v3458
      %4125 = vmatpush1.bf16.msra.mxu0 %v3457
      %4126 = vmatprep.subr.bf16.mxu0 %v3466
      %4127 = vmatpush1.bf16.msra.mxu0 %v3465
      %4128 = vmatprep.subr.bf16.mxu0 %v3474
      %4129 = vmatpush1.bf16.msra.mxu0 %v3473
      %4130 = vmatprep.subr.bf16.mxu0 %v3482
      %4131 = vmatpush1.bf16.msra.mxu0 %v3481
      %4132 = vmatprep.subr.bf16.mxu0 %v3490
      %4133 = vmatpush1.bf16.msra.mxu0 %v3489
      %4134 = vmatprep.subr.bf16.mxu0 %v3498
      %4135 = vmatpush1.bf16.msra.mxu0 %v3497
      %4136 = vmatprep.subr.bf16.mxu0 %v3506
      %4137 = vmatpush1.bf16.msra.mxu0 %v3505
      %4138 = vmatprep.subr.bf16.mxu0 %v3514
      %4139 = vmatpush1.bf16.msra.mxu0 %v3513
      %4140 = vmatprep.subr.bf16.mxu0 %v3522
      %4141 = vmatpush1.bf16.msra.mxu0 %v3521
      %4142 = vmatprep.subr.bf16.mxu0 %v3530
      %4143 = vmatpush1.bf16.msra.mxu0 %v3529
      %4144 = vmatprep.mubr.bf16.mxu0 %v3856
      %4145 = vmatmul.mubr.bf16.gmra.mrb[0].mxu0 %v3855
      %v4146 = vpop.f32.mrb[0].mxu0
      %v4147 = vadd.f32 %v3602, %v4146
      %v4148 = vpop.f32.mrb[0].mxu0
      %v4149 = vadd.f32 %v3602, %v4148
      %v4150 = vpop.f32.mrb[0].mxu0
      %v4151 = vadd.f32 %v3607, %v4150
      %v4152 = vpop.f32.mrb[0].mxu0
      %v4153 = vadd.f32 %v3607, %v4152
      %4154 = vmatprep.mubr.bf16.mxu0 %v3858
      %4155 = vmatmul.mubr.bf16.gmra.mrb[0].mxu0 %v3857
      %v4156 = vpop.f32.mrb[0].mxu0
      %v4157 = vadd.f32 %v3612, %v4156
      %v4158 = vpop.f32.mrb[0].mxu0
      %v4159 = vadd.f32 %v3612, %v4158
      %v4160 = vpop.f32.mrb[0].mxu0
      %v4161 = vadd.f32 %v3617, %v4160
      %v4162 = vpop.f32.mrb[0].mxu0
      %v4163 = vadd.f32 %v3617, %v4162
      %4164 = vmatprep.mubr.bf16.mxu0 %v3860
      %4165 = vmatmul.mubr.bf16.gmra.mrb[0].mxu0 %v3859
      %v4166 = vpop.f32.mrb[0].mxu0
      %v4167 = vadd.f32 %v3622, %v4166
      %v4168 = vpop.f32.mrb[0].mxu0
      %v4169 = vadd.f32 %v3622, %v4168
      %v4170 = vpop.f32.mrb[0].mxu0
      %v4171 = vadd.f32 %v3627, %v4170
      %v4172 = vpop.f32.mrb[0].mxu0
      %v4173 = vadd.f32 %v3627, %v4172
      %4174 = vmatprep.mubr.bf16.mxu0 %v3862
      %4175 = vmatmul.mubr.bf16.gmra.mrb[0].mxu0 %v3861
      %v4176 = vpop.f32.mrb[0].mxu0
      %v4177 = vadd.f32 %v3632, %v4176
      %v4178 = vpop.f32.mrb[0].mxu0
      %v4179 = vadd.f32 %v3632, %v4178
      %v4180 = vpop.f32.mrb[0].mxu0
      %v4181 = vadd.f32 %v3637, %v4180
      %v4182 = vpop.f32.mrb[0].mxu0
      %v4183 = vadd.f32 %v3637, %v4182
      %4184 = vmatprep.mubr.bf16.mxu0 %v3864
      %4185 = vmatmul.mubr.bf16.gmra.mrb[0].mxu0 %v3863
      %v4186 = vpop.f32.mrb[0].mxu0
      %v4187 = vadd.f32 %v3642, %v4186
      %v4188 = vpop.f32.mrb[0].mxu0
      %v4189 = vadd.f32 %v3642, %v4188
      %v4190 = vpop.f32.mrb[0].mxu0
      %v4191 = vadd.f32 %v3647, %v4190
      %v4192 = vpop.f32.mrb[0].mxu0
      %v4193 = vadd.f32 %v3647, %v4192
      %4194 = vmatprep.mubr.bf16.mxu0 %v3866
      %4195 = vmatmul.mubr.bf16.gmra.mrb[0].mxu0 %v3865
      %v4196 = vpop.f32.mrb[0].mxu0
      %v4197 = vadd.f32 %v3652, %v4196
      %v4198 = vpop.f32.mrb[0].mxu0
      %v4199 = vadd.f32 %v3652, %v4198
      %v4200 = vpop.f32.mrb[0].mxu0
      %v4201 = vadd.f32 %v3657, %v4200
      %v4202 = vpop.f32.mrb[0].mxu0
      %v4203 = vadd.f32 %v3657, %v4202
      %4204 = vmatprep.mubr.bf16.mxu0 %v3868
      %4205 = vmatmul.mubr.bf16.gmra.mrb[0].mxu0 %v3867
      %v4206 = vpop.f32.mrb[0].mxu0
      %v4207 = vadd.f32 %v3662, %v4206
      %v4208 = vpop.f32.mrb[0].mxu0
      %v4209 = vadd.f32 %v3662, %v4208
      %v4210 = vpop.f32.mrb[0].mxu0
      %v4211 = vadd.f32 %v3667, %v4210
      %v4212 = vpop.f32.mrb[0].mxu0
      %v4213 = vadd.f32 %v3667, %v4212
      %4214 = vmatprep.mubr.bf16.mxu0 %v3870
      %4215 = vmatmul.mubr.bf16.gmra.mrb[0].mxu0 %v3869
      %v4216 = vpop.f32.mrb[0].mxu0
      %v4217 = vadd.f32 %v3672, %v4216
      %v4218 = vpop.f32.mrb[0].mxu0
      %v4219 = vadd.f32 %v3672, %v4218
      %v4220 = vpop.f32.mrb[0].mxu0
      %v4221 = vadd.f32 %v3677, %v4220
      %v4222 = vpop.f32.mrb[0].mxu0
      %v4223 = vadd.f32 %v3677, %v4222
      %4224 = vmatprep.mubr.bf16.mxu0 %v3872
      %4225 = vmatmul.mubr.bf16.gmra.mrb[0].mxu0 %v3871
      %v4226 = vpop.f32.mrb[0].mxu0
      %v4227 = vadd.f32 %v3682, %v4226
      %v4228 = vpop.f32.mrb[0].mxu0
      %v4229 = vadd.f32 %v3682, %v4228
      %v4230 = vpop.f32.mrb[0].mxu0
      %v4231 = vadd.f32 %v3687, %v4230
      %v4232 = vpop.f32.mrb[0].mxu0
      %v4233 = vadd.f32 %v3687, %v4232
      %4234 = vmatprep.mubr.bf16.mxu0 %v3874
      %4235 = vmatmul.mubr.bf16.gmra.mrb[0].mxu0 %v3873
      %v4236 = vpop.f32.mrb[0].mxu0
      %v4237 = vadd.f32 %v3692, %v4236
      %v4238 = vpop.f32.mrb[0].mxu0
      %v4239 = vadd.f32 %v3692, %v4238
      %v4240 = vpop.f32.mrb[0].mxu0
      %v4241 = vadd.f32 %v3697, %v4240
      %v4242 = vpop.f32.mrb[0].mxu0
      %v4243 = vadd.f32 %v3697, %v4242
      %4244 = vmatprep.mubr.bf16.mxu0 %v3876
      %4245 = vmatmul.mubr.bf16.gmra.mrb[0].mxu0 %v3875
      %v4246 = vpop.f32.mrb[0].mxu0
      %v4247 = vadd.f32 %v3702, %v4246
      %v4248 = vpop.f32.mrb[0].mxu0
      %v4249 = vadd.f32 %v3702, %v4248
      %v4250 = vpop.f32.mrb[0].mxu0
      %v4251 = vadd.f32 %v3707, %v4250
      %v4252 = vpop.f32.mrb[0].mxu0
      %v4253 = vadd.f32 %v3707, %v4252
      %4254 = vmatprep.mubr.bf16.mxu0 %v3878
      %4255 = vmatmul.mubr.bf16.gmra.mrb[0].mxu0 %v3877
      %v4256 = vpop.f32.mrb[0].mxu0
      %v4257 = vadd.f32 %v3712, %v4256
      %v4258 = vpop.f32.mrb[0].mxu0
      %v4259 = vadd.f32 %v3712, %v4258
      %v4260 = vpop.f32.mrb[0].mxu0
      %v4261 = vadd.f32 %v3717, %v4260
      %v4262 = vpop.f32.mrb[0].mxu0
      %v4263 = vadd.f32 %v3717, %v4262
      %4264 = vmatprep.mubr.bf16.mxu0 %v3880
      %4265 = vmatmul.mubr.bf16.gmra.mrb[0].mxu0 %v3879
      %v4266 = vpop.f32.mrb[0].mxu0
      %v4267 = vadd.f32 %v3722, %v4266
      %v4268 = vpop.f32.mrb[0].mxu0
      %v4269 = vadd.f32 %v3722, %v4268
      %v4270 = vpop.f32.mrb[0].mxu0
      %v4271 = vadd.f32 %v3727, %v4270
      %v4272 = vpop.f32.mrb[0].mxu0
      %v4273 = vadd.f32 %v3727, %v4272
      %4274 = vmatprep.mubr.bf16.mxu0 %v3882
      %4275 = vmatmul.mubr.bf16.gmra.mrb[0].mxu0 %v3881
      %v4276 = vpop.f32.mrb[0].mxu0
      %v4277 = vadd.f32 %v3732, %v4276
      %v4278 = vpop.f32.mrb[0].mxu0
      %v4279 = vadd.f32 %v3732, %v4278
      %v4280 = vpop.f32.mrb[0].mxu0
      %v4281 = vadd.f32 %v3737, %v4280
      %v4282 = vpop.f32.mrb[0].mxu0
      %v4283 = vadd.f32 %v3737, %v4282
      %4284 = vmatprep.mubr.bf16.mxu0 %v3884
      %4285 = vmatmul.mubr.bf16.gmra.mrb[0].mxu0 %v3883
      %v4286 = vpop.f32.mrb[0].mxu0
      %v4287 = vadd.f32 %v3742, %v4286
      %v4288 = vpop.f32.mrb[0].mxu0
      %v4289 = vadd.f32 %v3742, %v4288
      %v4290 = vpop.f32.mrb[0].mxu0
      %v4291 = vadd.f32 %v3747, %v4290
      %v4292 = vpop.f32.mrb[0].mxu0
      %v4293 = vadd.f32 %v3747, %v4292
      %4294 = vmatprep.mubr.bf16.mxu0 %v3886
      %4295 = vmatmul.mubr.bf16.gmra.mrb[0].mxu0 %v3885
      %v4296 = vpop.f32.mrb[0].mxu0
      %v4297 = vadd.f32 %v3752, %v4296
      %v4298 = vpop.f32.mrb[0].mxu0
      %v4299 = vadd.f32 %v3752, %v4298
      %v4300 = vpop.f32.mrb[0].mxu0
      %v4301 = vadd.f32 %v3757, %v4300
      %v4302 = vpop.f32.mrb[0].mxu0
      %v4303 = vadd.f32 %v3757, %v4302
      %4304 = vdwg.mxu0
      %4305 = vmatprep.subr.bf16.mxu0 %v3412
      %4306 = vmatpush1.bf16.msra.mxu0 %v3411
      %4307 = vmatprep.subr.bf16.mxu0 %v3420
      %4308 = vmatpush1.bf16.msra.mxu0 %v3419
      %4309 = vmatprep.subr.bf16.mxu0 %v3428
      %4310 = vmatpush1.bf16.msra.mxu0 %v3427
      %4311 = vmatprep.subr.bf16.mxu0 %v3436
      %4312 = vmatpush1.bf16.msra.mxu0 %v3435
      %4313 = vmatprep.subr.bf16.mxu0 %v3444
      %4314 = vmatpush1.bf16.msra.mxu0 %v3443
      %4315 = vmatprep.subr.bf16.mxu0 %v3452
      %4316 = vmatpush1.bf16.msra.mxu0 %v3451
      %4317 = vmatprep.subr.bf16.mxu0 %v3460
      %4318 = vmatpush1.bf16.msra.mxu0 %v3459
      %4319 = vmatprep.subr.bf16.mxu0 %v3468
      %4320 = vmatpush1.bf16.msra.mxu0 %v3467
      %4321 = vmatprep.subr.bf16.mxu0 %v3476
      %4322 = vmatpush1.bf16.msra.mxu0 %v3475
      %4323 = vmatprep.subr.bf16.mxu0 %v3484
      %4324 = vmatpush1.bf16.msra.mxu0 %v3483
      %4325 = vmatprep.subr.bf16.mxu0 %v3492
      %4326 = vmatpush1.bf16.msra.mxu0 %v3491
      %4327 = vmatprep.subr.bf16.mxu0 %v3500
      %4328 = vmatpush1.bf16.msra.mxu0 %v3499
      %4329 = vmatprep.subr.bf16.mxu0 %v3508
      %4330 = vmatpush1.bf16.msra.mxu0 %v3507
      %4331 = vmatprep.subr.bf16.mxu0 %v3516
      %4332 = vmatpush1.bf16.msra.mxu0 %v3515
      %4333 = vmatprep.subr.bf16.mxu0 %v3524
      %4334 = vmatpush1.bf16.msra.mxu0 %v3523
      %4335 = vmatprep.subr.bf16.mxu0 %v3532
      %4336 = vmatpush1.bf16.msra.mxu0 %v3531
      %4337 = vmatprep.mubr.bf16.mxu0 %v3856
      %4338 = vmatmul.mubr.bf16.gmra.mrb[0].mxu0 %v3855
      %v4339 = vpop.f32.mrb[0].mxu0
      %v4340 = vadd.f32 %v3602, %v4339
      %v4341 = vpop.f32.mrb[0].mxu0
      %v4342 = vadd.f32 %v3602, %v4341
      %v4343 = vpop.f32.mrb[0].mxu0
      %v4344 = vadd.f32 %v3607, %v4343
      %v4345 = vpop.f32.mrb[0].mxu0
      %v4346 = vadd.f32 %v3607, %v4345
      %4347 = vmatprep.mubr.bf16.mxu0 %v3858
      %4348 = vmatmul.mubr.bf16.gmra.mrb[0].mxu0 %v3857
      %v4349 = vpop.f32.mrb[0].mxu0
      %v4350 = vadd.f32 %v3612, %v4349
      %v4351 = vpop.f32.mrb[0].mxu0
      %v4352 = vadd.f32 %v3612, %v4351
      %v4353 = vpop.f32.mrb[0].mxu0
      %v4354 = vadd.f32 %v3617, %v4353
      %v4355 = vpop.f32.mrb[0].mxu0
      %v4356 = vadd.f32 %v3617, %v4355
      %4357 = vmatprep.mubr.bf16.mxu0 %v3860
      %4358 = vmatmul.mubr.bf16.gmra.mrb[0].mxu0 %v3859
      %v4359 = vpop.f32.mrb[0].mxu0
      %v4360 = vadd.f32 %v3622, %v4359
      %v4361 = vpop.f32.mrb[0].mxu0
      %v4362 = vadd.f32 %v3622, %v4361
      %v4363 = vpop.f32.mrb[0].mxu0
      %v4364 = vadd.f32 %v3627, %v4363
      %v4365 = vpop.f32.mrb[0].mxu0
      %v4366 = vadd.f32 %v3627, %v4365
      %4367 = vmatprep.mubr.bf16.mxu0 %v3862
      %4368 = vmatmul.mubr.bf16.gmra.mrb[0].mxu0 %v3861
      %v4369 = vpop.f32.mrb[0].mxu0
      %v4370 = vadd.f32 %v3632, %v4369
      %v4371 = vpop.f32.mrb[0].mxu0
      %v4372 = vadd.f32 %v3632, %v4371
      %v4373 = vpop.f32.mrb[0].mxu0
      %v4374 = vadd.f32 %v3637, %v4373
      %v4375 = vpop.f32.mrb[0].mxu0
      %v4376 = vadd.f32 %v3637, %v4375
      %4377 = vmatprep.mubr.bf16.mxu0 %v3864
      %4378 = vmatmul.mubr.bf16.gmra.mrb[0].mxu0 %v3863
      %v4379 = vpop.f32.mrb[0].mxu0
      %v4380 = vadd.f32 %v3642, %v4379
      %v4381 = vpop.f32.mrb[0].mxu0
      %v4382 = vadd.f32 %v3642, %v4381
      %v4383 = vpop.f32.mrb[0].mxu0
      %v4384 = vadd.f32 %v3647, %v4383
      %v4385 = vpop.f32.mrb[0].mxu0
      %v4386 = vadd.f32 %v3647, %v4385
      %4387 = vmatprep.mubr.bf16.mxu0 %v3866
      %4388 = vmatmul.mubr.bf16.gmra.mrb[0].mxu0 %v3865
      %v4389 = vpop.f32.mrb[0].mxu0
      %v4390 = vadd.f32 %v3652, %v4389
      %v4391 = vpop.f32.mrb[0].mxu0
      %v4392 = vadd.f32 %v3652, %v4391
      %v4393 = vpop.f32.mrb[0].mxu0
      %v4394 = vadd.f32 %v3657, %v4393
      %v4395 = vpop.f32.mrb[0].mxu0
      %v4396 = vadd.f32 %v3657, %v4395
      %4397 = vmatprep.mubr.bf16.mxu0 %v3868
      %4398 = vmatmul.mubr.bf16.gmra.mrb[0].mxu0 %v3867
      %v4399 = vpop.f32.mrb[0].mxu0
      %v4400 = vadd.f32 %v3662, %v4399
      %v4401 = vpop.f32.mrb[0].mxu0
      %v4402 = vadd.f32 %v3662, %v4401
      %v4403 = vpop.f32.mrb[0].mxu0
      %v4404 = vadd.f32 %v3667, %v4403
      %v4405 = vpop.f32.mrb[0].mxu0
      %v4406 = vadd.f32 %v3667, %v4405
      %4407 = vmatprep.mubr.bf16.mxu0 %v3870
      %4408 = vmatmul.mubr.bf16.gmra.mrb[0].mxu0 %v3869
      %v4409 = vpop.f32.mrb[0].mxu0
      %v4410 = vadd.f32 %v3672, %v4409
      %v4411 = vpop.f32.mrb[0].mxu0
      %v4412 = vadd.f32 %v3672, %v4411
      %v4413 = vpop.f32.mrb[0].mxu0
      %v4414 = vadd.f32 %v3677, %v4413
      %v4415 = vpop.f32.mrb[0].mxu0
      %v4416 = vadd.f32 %v3677, %v4415
      %4417 = vmatprep.mubr.bf16.mxu0 %v3872
      %4418 = vmatmul.mubr.bf16.gmra.mrb[0].mxu0 %v3871
      %v4419 = vpop.f32.mrb[0].mxu0
      %v4420 = vadd.f32 %v3682, %v4419
      %v4421 = vpop.f32.mrb[0].mxu0
      %v4422 = vadd.f32 %v3682, %v4421
      %v4423 = vpop.f32.mrb[0].mxu0
      %v4424 = vadd.f32 %v3687, %v4423
      %v4425 = vpop.f32.mrb[0].mxu0
      %v4426 = vadd.f32 %v3687, %v4425
      %4427 = vmatprep.mubr.bf16.mxu0 %v3874
      %4428 = vmatmul.mubr.bf16.gmra.mrb[0].mxu0 %v3873
      %v4429 = vpop.f32.mrb[0].mxu0
      %v4430 = vadd.f32 %v3692, %v4429
      %v4431 = vpop.f32.mrb[0].mxu0
      %v4432 = vadd.f32 %v3692, %v4431
      %v4433 = vpop.f32.mrb[0].mxu0
      %v4434 = vadd.f32 %v3697, %v4433
      %v4435 = vpop.f32.mrb[0].mxu0
      %v4436 = vadd.f32 %v3697, %v4435
      %4437 = vmatprep.mubr.bf16.mxu0 %v3876
      %4438 = vmatmul.mubr.bf16.gmra.mrb[0].mxu0 %v3875
      %v4439 = vpop.f32.mrb[0].mxu0
      %v4440 = vadd.f32 %v3702, %v4439
      %v4441 = vpop.f32.mrb[0].mxu0
      %v4442 = vadd.f32 %v3702, %v4441
      %v4443 = vpop.f32.mrb[0].mxu0
      %v4444 = vadd.f32 %v3707, %v4443
      %v4445 = vpop.f32.mrb[0].mxu0
      %v4446 = vadd.f32 %v3707, %v4445
      %4447 = vmatprep.mubr.bf16.mxu0 %v3878
      %4448 = vmatmul.mubr.bf16.gmra.mrb[0].mxu0 %v3877
      %v4449 = vpop.f32.mrb[0].mxu0
      %v4450 = vadd.f32 %v3712, %v4449
      %v4451 = vpop.f32.mrb[0].mxu0
      %v4452 = vadd.f32 %v3712, %v4451
      %v4453 = vpop.f32.mrb[0].mxu0
      %v4454 = vadd.f32 %v3717, %v4453
      %v4455 = vpop.f32.mrb[0].mxu0
      %v4456 = vadd.f32 %v3717, %v4455
      %4457 = vmatprep.mubr.bf16.mxu0 %v3880
      %4458 = vmatmul.mubr.bf16.gmra.mrb[0].mxu0 %v3879
      %v4459 = vpop.f32.mrb[0].mxu0
      %v4460 = vadd.f32 %v3722, %v4459
      %v4461 = vpop.f32.mrb[0].mxu0
      %v4462 = vadd.f32 %v3722, %v4461
      %v4463 = vpop.f32.mrb[0].mxu0
      %v4464 = vadd.f32 %v3727, %v4463
      %v4465 = vpop.f32.mrb[0].mxu0
      %v4466 = vadd.f32 %v3727, %v4465
      %4467 = vmatprep.mubr.bf16.mxu0 %v3882
      %4468 = vmatmul.mubr.bf16.gmra.mrb[0].mxu0 %v3881
      %v4469 = vpop.f32.mrb[0].mxu0
      %v4470 = vadd.f32 %v3732, %v4469
      %v4471 = vpop.f32.mrb[0].mxu0
      %v4472 = vadd.f32 %v3732, %v4471
      %v4473 = vpop.f32.mrb[0].mxu0
      %v4474 = vadd.f32 %v3737, %v4473
      %v4475 = vpop.f32.mrb[0].mxu0
      %v4476 = vadd.f32 %v3737, %v4475
      %4477 = vmatprep.mubr.bf16.mxu0 %v3884
      %4478 = vmatmul.mubr.bf16.gmra.mrb[0].mxu0 %v3883
      %v4479 = vpop.f32.mrb[0].mxu0
      %v4480 = vadd.f32 %v3742, %v4479
      %v4481 = vpop.f32.mrb[0].mxu0
      %v4482 = vadd.f32 %v3742, %v4481
      %v4483 = vpop.f32.mrb[0].mxu0
      %v4484 = vadd.f32 %v3747, %v4483
      %v4485 = vpop.f32.mrb[0].mxu0
      %v4486 = vadd.f32 %v3747, %v4485
      %4487 = vmatprep.mubr.bf16.mxu0 %v3886
      %4488 = vmatmul.mubr.bf16.gmra.mrb[0].mxu0 %v3885
      %v4489 = vpop.f32.mrb[0].mxu0
      %v4490 = vadd.f32 %v3752, %v4489
      %v4491 = vpop.f32.mrb[0].mxu0
      %v4492 = vadd.f32 %v3752, %v4491
      %v4493 = vpop.f32.mrb[0].mxu0
      %v4494 = vadd.f32 %v3757, %v4493
      %v4495 = vpop.f32.mrb[0].mxu0
      %v4496 = vadd.f32 %v3757, %v4495
      %4497 = vdwg.mxu0
      %4498 = vmatprep.subr.bf16.mxu0 %v3414
      %4499 = vmatpush1.bf16.msra.mxu0 %v3413
      %4500 = vmatprep.subr.bf16.mxu0 %v3422
      %4501 = vmatpush1.bf16.msra.mxu0 %v3421
      %4502 = vmatprep.subr.bf16.mxu0 %v3430
      %4503 = vmatpush1.bf16.msra.mxu0 %v3429
      %4504 = vmatprep.subr.bf16.mxu0 %v3438
      %4505 = vmatpush1.bf16.msra.mxu0 %v3437
      %4506 = vmatprep.subr.bf16.mxu0 %v3446
      %4507 = vmatpush1.bf16.msra.mxu0 %v3445
      %4508 = vmatprep.subr.bf16.mxu0 %v3454
      %4509 = vmatpush1.bf16.msra.mxu0 %v3453
      %4510 = vmatprep.subr.bf16.mxu0 %v3462
      %4511 = vmatpush1.bf16.msra.mxu0 %v3461
      %4512 = vmatprep.subr.bf16.mxu0 %v3470
      %4513 = vmatpush1.bf16.msra.mxu0 %v3469
      %4514 = vmatprep.subr.bf16.mxu0 %v3478
      %4515 = vmatpush1.bf16.msra.mxu0 %v3477
      %4516 = vmatprep.subr.bf16.mxu0 %v3486
      %4517 = vmatpush1.bf16.msra.mxu0 %v3485
      %4518 = vmatprep.subr.bf16.mxu0 %v3494
      %4519 = vmatpush1.bf16.msra.mxu0 %v3493
      %4520 = vmatprep.subr.bf16.mxu0 %v3502
      %4521 = vmatpush1.bf16.msra.mxu0 %v3501
      %4522 = vmatprep.subr.bf16.mxu0 %v3510
      %4523 = vmatpush1.bf16.msra.mxu0 %v3509
      %4524 = vmatprep.subr.bf16.mxu0 %v3518
      %4525 = vmatpush1.bf16.msra.mxu0 %v3517
      %4526 = vmatprep.subr.bf16.mxu0 %v3526
      %4527 = vmatpush1.bf16.msra.mxu0 %v3525
      %4528 = vmatprep.subr.bf16.mxu0 %v3534
      %4529 = vmatpush1.bf16.msra.mxu0 %v3533
      %4530 = vmatprep.mubr.bf16.mxu0 %v3856
      %4531 = vmatmul.mubr.bf16.gmra.mrb[0].mxu0 %v3855
      %v4532 = vpop.f32.mrb[0].mxu0
      %v4533 = vadd.f32 %v3602, %v4532
      %v4534 = vpop.f32.mrb[0].mxu0
      %v4535 = vadd.f32 %v3602, %v4534
      %v4536 = vpop.f32.mrb[0].mxu0
      %v4537 = vadd.f32 %v3607, %v4536
      %v4538 = vpop.f32.mrb[0].mxu0
      %v4539 = vadd.f32 %v3607, %v4538
      %4540 = vmatprep.mubr.bf16.mxu0 %v3858
      %4541 = vmatmul.mubr.bf16.gmra.mrb[0].mxu0 %v3857
      %v4542 = vpop.f32.mrb[0].mxu0
      %v4543 = vadd.f32 %v3612, %v4542
      %v4544 = vpop.f32.mrb[0].mxu0
      %v4545 = vadd.f32 %v3612, %v4544
      %v4546 = vpop.f32.mrb[0].mxu0
      %v4547 = vadd.f32 %v3617, %v4546
      %v4548 = vpop.f32.mrb[0].mxu0
      %v4549 = vadd.f32 %v3617, %v4548
      %4550 = vmatprep.mubr.bf16.mxu0 %v3860
      %4551 = vmatmul.mubr.bf16.gmra.mrb[0].mxu0 %v3859
      %v4552 = vpop.f32.mrb[0].mxu0
      %v4553 = vadd.f32 %v3622, %v4552
      %v4554 = vpop.f32.mrb[0].mxu0
      %v4555 = vadd.f32 %v3622, %v4554
      %v4556 = vpop.f32.mrb[0].mxu0
      %v4557 = vadd.f32 %v3627, %v4556
      %v4558 = vpop.f32.mrb[0].mxu0
      %v4559 = vadd.f32 %v3627, %v4558
      %4560 = vmatprep.mubr.bf16.mxu0 %v3862
      %4561 = vmatmul.mubr.bf16.gmra.mrb[0].mxu0 %v3861
      %v4562 = vpop.f32.mrb[0].mxu0
      %v4563 = vadd.f32 %v3632, %v4562
      %v4564 = vpop.f32.mrb[0].mxu0
      %v4565 = vadd.f32 %v3632, %v4564
      %v4566 = vpop.f32.mrb[0].mxu0
      %v4567 = vadd.f32 %v3637, %v4566
      %v4568 = vpop.f32.mrb[0].mxu0
      %v4569 = vadd.f32 %v3637, %v4568
      %4570 = vmatprep.mubr.bf16.mxu0 %v3864
      %4571 = vmatmul.mubr.bf16.gmra.mrb[0].mxu0 %v3863
      %v4572 = vpop.f32.mrb[0].mxu0
      %v4573 = vadd.f32 %v3642, %v4572
      %v4574 = vpop.f32.mrb[0].mxu0
      %v4575 = vadd.f32 %v3642, %v4574
      %v4576 = vpop.f32.mrb[0].mxu0
      %v4577 = vadd.f32 %v3647, %v4576
      %v4578 = vpop.f32.mrb[0].mxu0
      %v4579 = vadd.f32 %v3647, %v4578
      %4580 = vmatprep.mubr.bf16.mxu0 %v3866
      %4581 = vmatmul.mubr.bf16.gmra.mrb[0].mxu0 %v3865
      %v4582 = vpop.f32.mrb[0].mxu0
      %v4583 = vadd.f32 %v3652, %v4582
      %v4584 = vpop.f32.mrb[0].mxu0
      %v4585 = vadd.f32 %v3652, %v4584
      %v4586 = vpop.f32.mrb[0].mxu0
      %v4587 = vadd.f32 %v3657, %v4586
      %v4588 = vpop.f32.mrb[0].mxu0
      %v4589 = vadd.f32 %v3657, %v4588
      %4590 = vmatprep.mubr.bf16.mxu0 %v3868
      %4591 = vmatmul.mubr.bf16.gmra.mrb[0].mxu0 %v3867
      %v4592 = vpop.f32.mrb[0].mxu0
      %v4593 = vadd.f32 %v3662, %v4592
      %v4594 = vpop.f32.mrb[0].mxu0
      %v4595 = vadd.f32 %v3662, %v4594
      %v4596 = vpop.f32.mrb[0].mxu0
      %v4597 = vadd.f32 %v3667, %v4596
      %v4598 = vpop.f32.mrb[0].mxu0
      %v4599 = vadd.f32 %v3667, %v4598
      %4600 = vmatprep.mubr.bf16.mxu0 %v3870
      %4601 = vmatmul.mubr.bf16.gmra.mrb[0].mxu0 %v3869
      %v4602 = vpop.f32.mrb[0].mxu0
      %v4603 = vadd.f32 %v3672, %v4602
      %v4604 = vpop.f32.mrb[0].mxu0
      %v4605 = vadd.f32 %v3672, %v4604
      %v4606 = vpop.f32.mrb[0].mxu0
      %v4607 = vadd.f32 %v3677, %v4606
      %v4608 = vpop.f32.mrb[0].mxu0
      %v4609 = vadd.f32 %v3677, %v4608
      %4610 = vmatprep.mubr.bf16.mxu0 %v3872
      %4611 = vmatmul.mubr.bf16.gmra.mrb[0].mxu0 %v3871
      %v4612 = vpop.f32.mrb[0].mxu0
      %v4613 = vadd.f32 %v3682, %v4612
      %v4614 = vpop.f32.mrb[0].mxu0
      %v4615 = vadd.f32 %v3682, %v4614
      %v4616 = vpop.f32.mrb[0].mxu0
      %v4617 = vadd.f32 %v3687, %v4616
      %v4618 = vpop.f32.mrb[0].mxu0
      %v4619 = vadd.f32 %v3687, %v4618
      %4620 = vmatprep.mubr.bf16.mxu0 %v3874
      %4621 = vmatmul.mubr.bf16.gmra.mrb[0].mxu0 %v3873
      %v4622 = vpop.f32.mrb[0].mxu0
      %v4623 = vadd.f32 %v3692, %v4622
      %v4624 = vpop.f32.mrb[0].mxu0
      %v4625 = vadd.f32 %v3692, %v4624
      %v4626 = vpop.f32.mrb[0].mxu0
      %v4627 = vadd.f32 %v3697, %v4626
      %v4628 = vpop.f32.mrb[0].mxu0
      %v4629 = vadd.f32 %v3697, %v4628
      %4630 = vmatprep.mubr.bf16.mxu0 %v3876
      %4631 = vmatmul.mubr.bf16.gmra.mrb[0].mxu0 %v3875
      %v4632 = vpop.f32.mrb[0].mxu0
      %v4633 = vadd.f32 %v3702, %v4632
      %v4634 = vpop.f32.mrb[0].mxu0
      %v4635 = vadd.f32 %v3702, %v4634
      %v4636 = vpop.f32.mrb[0].mxu0
      %v4637 = vadd.f32 %v3707, %v4636
      %v4638 = vpop.f32.mrb[0].mxu0
      %v4639 = vadd.f32 %v3707, %v4638
      %4640 = vmatprep.mubr.bf16.mxu0 %v3878
      %4641 = vmatmul.mubr.bf16.gmra.mrb[0].mxu0 %v3877
      %v4642 = vpop.f32.mrb[0].mxu0
      %v4643 = vadd.f32 %v3712, %v4642
      %v4644 = vpop.f32.mrb[0].mxu0
      %v4645 = vadd.f32 %v3712, %v4644
      %v4646 = vpop.f32.mrb[0].mxu0
      %v4647 = vadd.f32 %v3717, %v4646
      %v4648 = vpop.f32.mrb[0].mxu0
      %v4649 = vadd.f32 %v3717, %v4648
      %4650 = vmatprep.mubr.bf16.mxu0 %v3880
      %4651 = vmatmul.mubr.bf16.gmra.mrb[0].mxu0 %v3879
      %v4652 = vpop.f32.mrb[0].mxu0
      %v4653 = vadd.f32 %v3722, %v4652
      %v4654 = vpop.f32.mrb[0].mxu0
      %v4655 = vadd.f32 %v3722, %v4654
      %v4656 = vpop.f32.mrb[0].mxu0
      %v4657 = vadd.f32 %v3727, %v4656
      %v4658 = vpop.f32.mrb[0].mxu0
      %v4659 = vadd.f32 %v3727, %v4658
      %4660 = vmatprep.mubr.bf16.mxu0 %v3882
      %4661 = vmatmul.mubr.bf16.gmra.mrb[0].mxu0 %v3881
      %v4662 = vpop.f32.mrb[0].mxu0
      %v4663 = vadd.f32 %v3732, %v4662
      %v4664 = vpop.f32.mrb[0].mxu0
      %v4665 = vadd.f32 %v3732, %v4664
      %v4666 = vpop.f32.mrb[0].mxu0
      %v4667 = vadd.f32 %v3737, %v4666
      %v4668 = vpop.f32.mrb[0].mxu0
      %v4669 = vadd.f32 %v3737, %v4668
      %4670 = vmatprep.mubr.bf16.mxu0 %v3884
      %4671 = vmatmul.mubr.bf16.gmra.mrb[0].mxu0 %v3883
      %v4672 = vpop.f32.mrb[0].mxu0
      %v4673 = vadd.f32 %v3742, %v4672
      %v4674 = vpop.f32.mrb[0].mxu0
      %v4675 = vadd.f32 %v3742, %v4674
      %v4676 = vpop.f32.mrb[0].mxu0
      %v4677 = vadd.f32 %v3747, %v4676
      %v4678 = vpop.f32.mrb[0].mxu0
      %v4679 = vadd.f32 %v3747, %v4678
      %4680 = vmatprep.mubr.bf16.mxu0 %v3886
      %4681 = vmatmul.mubr.bf16.gmra.mrb[0].mxu0 %v3885
      %v4682 = vpop.f32.mrb[0].mxu0
      %v4683 = vadd.f32 %v3752, %v4682
      %v4684 = vpop.f32.mrb[0].mxu0
      %v4685 = vadd.f32 %v3752, %v4684
      %v4686 = vpop.f32.mrb[0].mxu0
      %v4687 = vadd.f32 %v3757, %v4686
      %v4688 = vpop.f32.mrb[0].mxu0
      %v4689 = vadd.f32 %v3757, %v4688
      %4690 = vdwg.mxu0
      %v4691 = vmax.f32 %v3954, 0.0
      %v4692 = vmax.f32 %v3956, 0.0
      %v4693 = vmax.f32 %v4147, 0.0
      %v4694 = vmax.f32 %v4149, 0.0
      %v4695 = vmax.f32 %v4340, 0.0
      %v4696 = vmax.f32 %v4342, 0.0
      %v4697 = vmax.f32 %v4533, 0.0
      %v4698 = vmax.f32 %v4535, 0.0
      %v4699 = vmax.f32 %v3958, 0.0
      %v4700 = vmax.f32 %v3960, 0.0
      %v4701 = vmax.f32 %v4151, 0.0
      %v4702 = vmax.f32 %v4153, 0.0
      %v4703 = vmax.f32 %v4344, 0.0
      %v4704 = vmax.f32 %v4346, 0.0
      %v4705 = vmax.f32 %v4537, 0.0
      %v4706 = vmax.f32 %v4539, 0.0
      %v4707 = vmax.f32 %v3964, 0.0
      %v4708 = vmax.f32 %v3966, 0.0
      %v4709 = vmax.f32 %v4157, 0.0
      %v4710 = vmax.f32 %v4159, 0.0
      %v4711 = vmax.f32 %v4350, 0.0
      %v4712 = vmax.f32 %v4352, 0.0
      %v4713 = vmax.f32 %v4543, 0.0
      %v4714 = vmax.f32 %v4545, 0.0
      %v4715 = vmax.f32 %v3968, 0.0
      %v4716 = vmax.f32 %v3970, 0.0
      %v4717 = vmax.f32 %v4161, 0.0
      %v4718 = vmax.f32 %v4163, 0.0
      %v4719 = vmax.f32 %v4354, 0.0
      %v4720 = vmax.f32 %v4356, 0.0
      %v4721 = vmax.f32 %v4547, 0.0
      %v4722 = vmax.f32 %v4549, 0.0
      %v4723 = vmax.f32 %v3974, 0.0
      %v4724 = vmax.f32 %v3976, 0.0
      %v4725 = vmax.f32 %v4167, 0.0
      %v4726 = vmax.f32 %v4169, 0.0
      %v4727 = vmax.f32 %v4360, 0.0
      %v4728 = vmax.f32 %v4362, 0.0
      %v4729 = vmax.f32 %v4553, 0.0
      %v4730 = vmax.f32 %v4555, 0.0
      %v4731 = vmax.f32 %v3978, 0.0
      %v4732 = vmax.f32 %v3980, 0.0
      %v4733 = vmax.f32 %v4171, 0.0
      %v4734 = vmax.f32 %v4173, 0.0
      %v4735 = vmax.f32 %v4364, 0.0
      %v4736 = vmax.f32 %v4366, 0.0
      %v4737 = vmax.f32 %v4557, 0.0
      %v4738 = vmax.f32 %v4559, 0.0
      %v4739 = vmax.f32 %v3984, 0.0
      %v4740 = vmax.f32 %v3986, 0.0
      %v4741 = vmax.f32 %v4177, 0.0
      %v4742 = vmax.f32 %v4179, 0.0
      %v4743 = vmax.f32 %v4370, 0.0
      %v4744 = vmax.f32 %v4372, 0.0
      %v4745 = vmax.f32 %v4563, 0.0
      %v4746 = vmax.f32 %v4565, 0.0
      %v4747 = vmax.f32 %v3988, 0.0
      %v4748 = vmax.f32 %v3990, 0.0
      %v4749 = vmax.f32 %v4181, 0.0
      %v4750 = vmax.f32 %v4183, 0.0
      %v4751 = vmax.f32 %v4374, 0.0
      %v4752 = vmax.f32 %v4376, 0.0
      %v4753 = vmax.f32 %v4567, 0.0
      %v4754 = vmax.f32 %v4569, 0.0
      %v4755 = vmax.f32 %v3994, 0.0
      %v4756 = vmax.f32 %v3996, 0.0
      %v4757 = vmax.f32 %v4187, 0.0
      %v4758 = vmax.f32 %v4189, 0.0
      %v4759 = vmax.f32 %v4380, 0.0
      %v4760 = vmax.f32 %v4382, 0.0
      %v4761 = vmax.f32 %v4573, 0.0
      %v4762 = vmax.f32 %v4575, 0.0
      %v4763 = vmax.f32 %v3998, 0.0
      %v4764 = vmax.f32 %v4000, 0.0
      %v4765 = vmax.f32 %v4191, 0.0
      %v4766 = vmax.f32 %v4193, 0.0
      %v4767 = vmax.f32 %v4384, 0.0
      %v4768 = vmax.f32 %v4386, 0.0
      %v4769 = vmax.f32 %v4577, 0.0
      %v4770 = vmax.f32 %v4579, 0.0
      %v4771 = vmax.f32 %v4004, 0.0
      %v4772 = vmax.f32 %v4006, 0.0
      %v4773 = vmax.f32 %v4197, 0.0
      %v4774 = vmax.f32 %v4199, 0.0
      %v4775 = vmax.f32 %v4390, 0.0
      %v4776 = vmax.f32 %v4392, 0.0
      %v4777 = vmax.f32 %v4583, 0.0
      %v4778 = vmax.f32 %v4585, 0.0
      %v4779 = vmax.f32 %v4008, 0.0
      %v4780 = vmax.f32 %v4010, 0.0
      %v4781 = vmax.f32 %v4201, 0.0
      %v4782 = vmax.f32 %v4203, 0.0
      %v4783 = vmax.f32 %v4394, 0.0
      %v4784 = vmax.f32 %v4396, 0.0
      %v4785 = vmax.f32 %v4587, 0.0
      %v4786 = vmax.f32 %v4589, 0.0
      %v4787 = vmax.f32 %v4014, 0.0
      %v4788 = vmax.f32 %v4016, 0.0
      %v4789 = vmax.f32 %v4207, 0.0
      %v4790 = vmax.f32 %v4209, 0.0
      %v4791 = vmax.f32 %v4400, 0.0
      %v4792 = vmax.f32 %v4402, 0.0
      %v4793 = vmax.f32 %v4593, 0.0
      %v4794 = vmax.f32 %v4595, 0.0
      %v4795 = vmax.f32 %v4018, 0.0
      %v4796 = vmax.f32 %v4020, 0.0
      %v4797 = vmax.f32 %v4211, 0.0
      %v4798 = vmax.f32 %v4213, 0.0
      %v4799 = vmax.f32 %v4404, 0.0
      %v4800 = vmax.f32 %v4406, 0.0
      %v4801 = vmax.f32 %v4597, 0.0
      %v4802 = vmax.f32 %v4599, 0.0
      %v4803 = vmax.f32 %v4024, 0.0
      %v4804 = vmax.f32 %v4026, 0.0
      %v4805 = vmax.f32 %v4217, 0.0
      %v4806 = vmax.f32 %v4219, 0.0
      %v4807 = vmax.f32 %v4410, 0.0
      %v4808 = vmax.f32 %v4412, 0.0
      %v4809 = vmax.f32 %v4603, 0.0
      %v4810 = vmax.f32 %v4605, 0.0
      %v4811 = vmax.f32 %v4028, 0.0
      %v4812 = vmax.f32 %v4030, 0.0
      %v4813 = vmax.f32 %v4221, 0.0
      %v4814 = vmax.f32 %v4223, 0.0
      %v4815 = vmax.f32 %v4414, 0.0
      %v4816 = vmax.f32 %v4416, 0.0
      %v4817 = vmax.f32 %v4607, 0.0
      %v4818 = vmax.f32 %v4609, 0.0
      %v4819 = vmax.f32 %v4034, 0.0
      %v4820 = vmax.f32 %v4036, 0.0
      %v4821 = vmax.f32 %v4227, 0.0
      %v4822 = vmax.f32 %v4229, 0.0
      %v4823 = vmax.f32 %v4420, 0.0
      %v4824 = vmax.f32 %v4422, 0.0
      %v4825 = vmax.f32 %v4613, 0.0
      %v4826 = vmax.f32 %v4615, 0.0
      %v4827 = vmax.f32 %v4038, 0.0
      %v4828 = vmax.f32 %v4040, 0.0
      %v4829 = vmax.f32 %v4231, 0.0
      %v4830 = vmax.f32 %v4233, 0.0
      %v4831 = vmax.f32 %v4424, 0.0
      %v4832 = vmax.f32 %v4426, 0.0
      %v4833 = vmax.f32 %v4617, 0.0
      %v4834 = vmax.f32 %v4619, 0.0
      %v4835 = vmax.f32 %v4044, 0.0
      %v4836 = vmax.f32 %v4046, 0.0
      %v4837 = vmax.f32 %v4237, 0.0
      %v4838 = vmax.f32 %v4239, 0.0
      %v4839 = vmax.f32 %v4430, 0.0
      %v4840 = vmax.f32 %v4432, 0.0
      %v4841 = vmax.f32 %v4623, 0.0
      %v4842 = vmax.f32 %v4625, 0.0
      %v4843 = vmax.f32 %v4048, 0.0
      %v4844 = vmax.f32 %v4050, 0.0
      %v4845 = vmax.f32 %v4241, 0.0
      %v4846 = vmax.f32 %v4243, 0.0
      %v4847 = vmax.f32 %v4434, 0.0
      %v4848 = vmax.f32 %v4436, 0.0
      %v4849 = vmax.f32 %v4627, 0.0
      %v4850 = vmax.f32 %v4629, 0.0
      %v4851 = vmax.f32 %v4054, 0.0
      %v4852 = vmax.f32 %v4056, 0.0
      %v4853 = vmax.f32 %v4247, 0.0
      %v4854 = vmax.f32 %v4249, 0.0
      %v4855 = vmax.f32 %v4440, 0.0
      %v4856 = vmax.f32 %v4442, 0.0
      %v4857 = vmax.f32 %v4633, 0.0
      %v4858 = vmax.f32 %v4635, 0.0
      %v4859 = vmax.f32 %v4058, 0.0
      %v4860 = vmax.f32 %v4060, 0.0
      %v4861 = vmax.f32 %v4251, 0.0
      %v4862 = vmax.f32 %v4253, 0.0
      %v4863 = vmax.f32 %v4444, 0.0
      %v4864 = vmax.f32 %v4446, 0.0
      %v4865 = vmax.f32 %v4637, 0.0
      %v4866 = vmax.f32 %v4639, 0.0
      %v4867 = vmax.f32 %v4064, 0.0
      %v4868 = vmax.f32 %v4066, 0.0
      %v4869 = vmax.f32 %v4257, 0.0
      %v4870 = vmax.f32 %v4259, 0.0
      %v4871 = vmax.f32 %v4450, 0.0
      %v4872 = vmax.f32 %v4452, 0.0
      %v4873 = vmax.f32 %v4643, 0.0
      %v4874 = vmax.f32 %v4645, 0.0
      %v4875 = vmax.f32 %v4068, 0.0
      %v4876 = vmax.f32 %v4070, 0.0
      %v4877 = vmax.f32 %v4261, 0.0
      %v4878 = vmax.f32 %v4263, 0.0
      %v4879 = vmax.f32 %v4454, 0.0
      %v4880 = vmax.f32 %v4456, 0.0
      %v4881 = vmax.f32 %v4647, 0.0
      %v4882 = vmax.f32 %v4649, 0.0
      %v4883 = vmax.f32 %v4074, 0.0
      %v4884 = vmax.f32 %v4076, 0.0
      %v4885 = vmax.f32 %v4267, 0.0
      %v4886 = vmax.f32 %v4269, 0.0
      %v4887 = vmax.f32 %v4460, 0.0
      %v4888 = vmax.f32 %v4462, 0.0
      %v4889 = vmax.f32 %v4653, 0.0
      %v4890 = vmax.f32 %v4655, 0.0
      %v4891 = vmax.f32 %v4078, 0.0
      %v4892 = vmax.f32 %v4080, 0.0
      %v4893 = vmax.f32 %v4271, 0.0
      %v4894 = vmax.f32 %v4273, 0.0
      %v4895 = vmax.f32 %v4464, 0.0
      %v4896 = vmax.f32 %v4466, 0.0
      %v4897 = vmax.f32 %v4657, 0.0
      %v4898 = vmax.f32 %v4659, 0.0
      %v4899 = vmax.f32 %v4084, 0.0
      %v4900 = vmax.f32 %v4086, 0.0
      %v4901 = vmax.f32 %v4277, 0.0
      %v4902 = vmax.f32 %v4279, 0.0
      %v4903 = vmax.f32 %v4470, 0.0
      %v4904 = vmax.f32 %v4472, 0.0
      %v4905 = vmax.f32 %v4663, 0.0
      %v4906 = vmax.f32 %v4665, 0.0
      %v4907 = vmax.f32 %v4088, 0.0
      %v4908 = vmax.f32 %v4090, 0.0
      %v4909 = vmax.f32 %v4281, 0.0
      %v4910 = vmax.f32 %v4283, 0.0
      %v4911 = vmax.f32 %v4474, 0.0
      %v4912 = vmax.f32 %v4476, 0.0
      %v4913 = vmax.f32 %v4667, 0.0
      %v4914 = vmax.f32 %v4669, 0.0
      %v4915 = vmax.f32 %v4094, 0.0
      %v4916 = vmax.f32 %v4096, 0.0
      %v4917 = vmax.f32 %v4287, 0.0
      %v4918 = vmax.f32 %v4289, 0.0
      %v4919 = vmax.f32 %v4480, 0.0
      %v4920 = vmax.f32 %v4482, 0.0
      %v4921 = vmax.f32 %v4673, 0.0
      %v4922 = vmax.f32 %v4675, 0.0
      %v4923 = vmax.f32 %v4098, 0.0
      %v4924 = vmax.f32 %v4100, 0.0
      %v4925 = vmax.f32 %v4291, 0.0
      %v4926 = vmax.f32 %v4293, 0.0
      %v4927 = vmax.f32 %v4484, 0.0
      %v4928 = vmax.f32 %v4486, 0.0
      %v4929 = vmax.f32 %v4677, 0.0
      %v4930 = vmax.f32 %v4679, 0.0
      %v4931 = vmax.f32 %v4104, 0.0
      %v4932 = vmax.f32 %v4106, 0.0
      %v4933 = vmax.f32 %v4297, 0.0
      %v4934 = vmax.f32 %v4299, 0.0
      %v4935 = vmax.f32 %v4490, 0.0
      %v4936 = vmax.f32 %v4492, 0.0
      %v4937 = vmax.f32 %v4683, 0.0
      %v4938 = vmax.f32 %v4685, 0.0
      %v4939 = vmax.f32 %v4108, 0.0
      %v4940 = vmax.f32 %v4110, 0.0
      %v4941 = vmax.f32 %v4301, 0.0
      %v4942 = vmax.f32 %v4303, 0.0
      %v4943 = vmax.f32 %v4494, 0.0
      %v4944 = vmax.f32 %v4496, 0.0
      %v4945 = vmax.f32 %v4687, 0.0
      %v4946 = vmax.f32 %v4689, 0.0
      %v4947 = vpack.c.bf16 %v4699, %v4691
      %v4948 = vpack.c.bf16 %v4700, %v4692
      %v4949 = vpack.c.bf16 %v4701, %v4693
      %v4950 = vpack.c.bf16 %v4702, %v4694
      %v4951 = vpack.c.bf16 %v4703, %v4695
      %v4952 = vpack.c.bf16 %v4704, %v4696
      %v4953 = vpack.c.bf16 %v4705, %v4697
      %v4954 = vpack.c.bf16 %v4706, %v4698
      %v4955 = vpack.c.bf16 %v4715, %v4707
      %v4956 = vpack.c.bf16 %v4716, %v4708
      %v4957 = vpack.c.bf16 %v4717, %v4709
      %v4958 = vpack.c.bf16 %v4718, %v4710
      %v4959 = vpack.c.bf16 %v4719, %v4711
      %v4960 = vpack.c.bf16 %v4720, %v4712
      %v4961 = vpack.c.bf16 %v4721, %v4713
      %v4962 = vpack.c.bf16 %v4722, %v4714
      %v4963 = vpack.c.bf16 %v4731, %v4723
      %v4964 = vpack.c.bf16 %v4732, %v4724
      %v4965 = vpack.c.bf16 %v4733, %v4725
      %v4966 = vpack.c.bf16 %v4734, %v4726
      %v4967 = vpack.c.bf16 %v4735, %v4727
      %v4968 = vpack.c.bf16 %v4736, %v4728
      %v4969 = vpack.c.bf16 %v4737, %v4729
      %v4970 = vpack.c.bf16 %v4738, %v4730
      %v4971 = vpack.c.bf16 %v4747, %v4739
      %v4972 = vpack.c.bf16 %v4748, %v4740
      %v4973 = vpack.c.bf16 %v4749, %v4741
      %v4974 = vpack.c.bf16 %v4750, %v4742
      %v4975 = vpack.c.bf16 %v4751, %v4743
      %v4976 = vpack.c.bf16 %v4752, %v4744
      %v4977 = vpack.c.bf16 %v4753, %v4745
      %v4978 = vpack.c.bf16 %v4754, %v4746
      %v4979 = vpack.c.bf16 %v4763, %v4755
      %v4980 = vpack.c.bf16 %v4764, %v4756
      %v4981 = vpack.c.bf16 %v4765, %v4757
      %v4982 = vpack.c.bf16 %v4766, %v4758
      %v4983 = vpack.c.bf16 %v4767, %v4759
      %v4984 = vpack.c.bf16 %v4768, %v4760
      %v4985 = vpack.c.bf16 %v4769, %v4761
      %v4986 = vpack.c.bf16 %v4770, %v4762
      %v4987 = vpack.c.bf16 %v4779, %v4771
      %v4988 = vpack.c.bf16 %v4780, %v4772
      %v4989 = vpack.c.bf16 %v4781, %v4773
      %v4990 = vpack.c.bf16 %v4782, %v4774
      %v4991 = vpack.c.bf16 %v4783, %v4775
      %v4992 = vpack.c.bf16 %v4784, %v4776
      %v4993 = vpack.c.bf16 %v4785, %v4777
      %v4994 = vpack.c.bf16 %v4786, %v4778
      %v4995 = vpack.c.bf16 %v4795, %v4787
      %v4996 = vpack.c.bf16 %v4796, %v4788
      %v4997 = vpack.c.bf16 %v4797, %v4789
      %v4998 = vpack.c.bf16 %v4798, %v4790
      %v4999 = vpack.c.bf16 %v4799, %v4791
      %v5000 = vpack.c.bf16 %v4800, %v4792
      %v5001 = vpack.c.bf16 %v4801, %v4793
      %v5002 = vpack.c.bf16 %v4802, %v4794
      %v5003 = vpack.c.bf16 %v4811, %v4803
      %v5004 = vpack.c.bf16 %v4812, %v4804
      %v5005 = vpack.c.bf16 %v4813, %v4805
      %v5006 = vpack.c.bf16 %v4814, %v4806
      %v5007 = vpack.c.bf16 %v4815, %v4807
      %v5008 = vpack.c.bf16 %v4816, %v4808
      %v5009 = vpack.c.bf16 %v4817, %v4809
      %v5010 = vpack.c.bf16 %v4818, %v4810
      %v5011 = vpack.c.bf16 %v4827, %v4819
      %v5012 = vpack.c.bf16 %v4828, %v4820
      %v5013 = vpack.c.bf16 %v4829, %v4821
      %v5014 = vpack.c.bf16 %v4830, %v4822
      %v5015 = vpack.c.bf16 %v4831, %v4823
      %v5016 = vpack.c.bf16 %v4832, %v4824
      %v5017 = vpack.c.bf16 %v4833, %v4825
      %v5018 = vpack.c.bf16 %v4834, %v4826
      %v5019 = vpack.c.bf16 %v4843, %v4835
      %v5020 = vpack.c.bf16 %v4844, %v4836
      %v5021 = vpack.c.bf16 %v4845, %v4837
      %v5022 = vpack.c.bf16 %v4846, %v4838
      %v5023 = vpack.c.bf16 %v4847, %v4839
      %v5024 = vpack.c.bf16 %v4848, %v4840
      %v5025 = vpack.c.bf16 %v4849, %v4841
      %v5026 = vpack.c.bf16 %v4850, %v4842
      %v5027 = vpack.c.bf16 %v4859, %v4851
      %v5028 = vpack.c.bf16 %v4860, %v4852
      %v5029 = vpack.c.bf16 %v4861, %v4853
      %v5030 = vpack.c.bf16 %v4862, %v4854
      %v5031 = vpack.c.bf16 %v4863, %v4855
      %v5032 = vpack.c.bf16 %v4864, %v4856
      %v5033 = vpack.c.bf16 %v4865, %v4857
      %v5034 = vpack.c.bf16 %v4866, %v4858
      %v5035 = vpack.c.bf16 %v4875, %v4867
      %v5036 = vpack.c.bf16 %v4876, %v4868
      %v5037 = vpack.c.bf16 %v4877, %v4869
      %v5038 = vpack.c.bf16 %v4878, %v4870
      %v5039 = vpack.c.bf16 %v4879, %v4871
      %v5040 = vpack.c.bf16 %v4880, %v4872
      %v5041 = vpack.c.bf16 %v4881, %v4873
      %v5042 = vpack.c.bf16 %v4882, %v4874
      %v5043 = vpack.c.bf16 %v4891, %v4883
      %v5044 = vpack.c.bf16 %v4892, %v4884
      %v5045 = vpack.c.bf16 %v4893, %v4885
      %v5046 = vpack.c.bf16 %v4894, %v4886
      %v5047 = vpack.c.bf16 %v4895, %v4887
      %v5048 = vpack.c.bf16 %v4896, %v4888
      %v5049 = vpack.c.bf16 %v4897, %v4889
      %v5050 = vpack.c.bf16 %v4898, %v4890
      %v5051 = vpack.c.bf16 %v4907, %v4899
      %v5052 = vpack.c.bf16 %v4908, %v4900
      %v5053 = vpack.c.bf16 %v4909, %v4901
      %v5054 = vpack.c.bf16 %v4910, %v4902
      %v5055 = vpack.c.bf16 %v4911, %v4903
      %v5056 = vpack.c.bf16 %v4912, %v4904
      %v5057 = vpack.c.bf16 %v4913, %v4905
      %v5058 = vpack.c.bf16 %v4914, %v4906
      %v5059 = vpack.c.bf16 %v4923, %v4915
      %v5060 = vpack.c.bf16 %v4924, %v4916
      %v5061 = vpack.c.bf16 %v4925, %v4917
      %v5062 = vpack.c.bf16 %v4926, %v4918
      %v5063 = vpack.c.bf16 %v4927, %v4919
      %v5064 = vpack.c.bf16 %v4928, %v4920
      %v5065 = vpack.c.bf16 %v4929, %v4921
      %v5066 = vpack.c.bf16 %v4930, %v4922
      %v5067 = vpack.c.bf16 %v4939, %v4931
      %v5068 = vpack.c.bf16 %v4940, %v4932
      %v5069 = vpack.c.bf16 %v4941, %v4933
      %v5070 = vpack.c.bf16 %v4942, %v4934
      %v5071 = vpack.c.bf16 %v4943, %v4935
      %v5072 = vpack.c.bf16 %v4944, %v4936
      %v5073 = vpack.c.bf16 %v4945, %v4937
      %v5074 = vpack.c.bf16 %v4946, %v4938
      %v5075 = vld [vmem:[%s7] sm:$0xff]
      %v5076 = vld [vmem:[%s7 + $0x8] sm:$0xff]
      %v5077 = vld [vmem:[%s7 + $0x10] sm:$0xff]
      %v5078 = vld [vmem:[%s7 + $0x18] sm:$0xff]
      %v5079 = vld [vmem:[%s7 + $0x20] sm:$0xff]
      %v5080 = vld [vmem:[%s7 + $0x28] sm:$0xff]
      %v5081 = vld [vmem:[%s7 + $0x30] sm:$0xff]
      %v5082 = vld [vmem:[%s7 + $0x38] sm:$0xff]
      %v5083 = vld [vmem:[%s7 + $0x40] sm:$0xff]
      %v5084 = vld [vmem:[%s7 + $0x48] sm:$0xff]
      %v5085 = vld [vmem:[%s7 + $0x50] sm:$0xff]
      %v5086 = vld [vmem:[%s7 + $0x58] sm:$0xff]
      %v5087 = vld [vmem:[%s7 + $0x60] sm:$0xff]
      %v5088 = vld [vmem:[%s7 + $0x68] sm:$0xff]
      %v5089 = vld [vmem:[%s7 + $0x70] sm:$0xff]
      %v5090 = vld [vmem:[%s7 + $0x78] sm:$0xff]
      %v5091 = vld [vmem:[%s7 + $0x80] sm:$0xff]
      %v5092 = vld [vmem:[%s7 + $0x88] sm:$0xff]
      %v5093 = vld [vmem:[%s7 + $0x90] sm:$0xff]
      %v5094 = vld [vmem:[%s7 + $0x98] sm:$0xff]
      %v5095 = vld [vmem:[%s7 + $0xa0] sm:$0xff]
      %v5096 = vld [vmem:[%s7 + $0xa8] sm:$0xff]
      %v5097 = vld [vmem:[%s7 + $0xb0] sm:$0xff]
      %v5098 = vld [vmem:[%s7 + $0xb8] sm:$0xff]
      %v5099 = vld [vmem:[%s7 + $0xc0] sm:$0xff]
      %v5100 = vld [vmem:[%s7 + $0xc8] sm:$0xff]
      %v5101 = vld [vmem:[%s7 + $0xd0] sm:$0xff]
      %v5102 = vld [vmem:[%s7 + $0xd8] sm:$0xff]
      %v5103 = vld [vmem:[%s7 + $0xe0] sm:$0xff]
      %v5104 = vld [vmem:[%s7 + $0xe8] sm:$0xff]
      %v5105 = vld [vmem:[%s7 + $0xf0] sm:$0xff]
      %v5106 = vld [vmem:[%s7 + $0xf8] sm:$0xff]
      %v5107 = vld [vmem:[%s8] sm:$0xff]
      %v5108 = vld [vmem:[%s8 + $0x8] sm:$0xff]
      %v5109 = vld [vmem:[%s8 + $0x10] sm:$0xff]
      %v5110 = vld [vmem:[%s8 + $0x18] sm:$0xff]
      %v5111 = vld [vmem:[%s8 + $0x20] sm:$0xff]
      %v5112 = vld [vmem:[%s8 + $0x28] sm:$0xff]
      %v5113 = vld [vmem:[%s8 + $0x30] sm:$0xff]
      %v5114 = vld [vmem:[%s8 + $0x38] sm:$0xff]
      %v5115 = vld [vmem:[%s8 + $0x40] sm:$0xff]
      %v5116 = vld [vmem:[%s8 + $0x48] sm:$0xff]
      %v5117 = vld [vmem:[%s8 + $0x50] sm:$0xff]
      %v5118 = vld [vmem:[%s8 + $0x58] sm:$0xff]
      %v5119 = vld [vmem:[%s8 + $0x60] sm:$0xff]
      %v5120 = vld [vmem:[%s8 + $0x68] sm:$0xff]
      %v5121 = vld [vmem:[%s8 + $0x70] sm:$0xff]
      %v5122 = vld [vmem:[%s8 + $0x78] sm:$0xff]
      %v5123 = vld [vmem:[%s8 + $0x80] sm:$0xff]
      %v5124 = vld [vmem:[%s8 + $0x88] sm:$0xff]
      %v5125 = vld [vmem:[%s8 + $0x90] sm:$0xff]
      %v5126 = vld [vmem:[%s8 + $0x98] sm:$0xff]
      %v5127 = vld [vmem:[%s8 + $0xa0] sm:$0xff]
      %v5128 = vld [vmem:[%s8 + $0xa8] sm:$0xff]
      %v5129 = vld [vmem:[%s8 + $0xb0] sm:$0xff]
      %v5130 = vld [vmem:[%s8 + $0xb8] sm:$0xff]
      %v5131 = vld [vmem:[%s8 + $0xc0] sm:$0xff]
      %v5132 = vld [vmem:[%s8 + $0xc8] sm:$0xff]
      %v5133 = vld [vmem:[%s8 + $0xd0] sm:$0xff]
      %v5134 = vld [vmem:[%s8 + $0xd8] sm:$0xff]
      %v5135 = vld [vmem:[%s8 + $0xe0] sm:$0xff]
      %v5136 = vld [vmem:[%s8 + $0xe8] sm:$0xff]
      %v5137 = vld [vmem:[%s8 + $0xf0] sm:$0xff]
      %v5138 = vld [vmem:[%s8 + $0xf8] sm:$0xff]
      %5140 = vset.pattern.permute.xlu0 0
      %5141 = vperm.xlu0 %5140, %v5107
      %v5142 = vpop.permute.xlu0 %5141
      %5145 = vset.pattern.permute.xlu0 0
      %5146 = vperm.xlu0 %5145, %v5108
      %v5147 = vpop.permute.xlu0 %5146
      %5150 = vset.pattern.permute.xlu0 0
      %5151 = vperm.xlu0 %5150, %v5109
      %v5152 = vpop.permute.xlu0 %5151
      %5155 = vset.pattern.permute.xlu0 0
      %5156 = vperm.xlu0 %5155, %v5110
      %v5157 = vpop.permute.xlu0 %5156
      %5160 = vset.pattern.permute.xlu0 0
      %5161 = vperm.xlu0 %5160, %v5111
      %v5162 = vpop.permute.xlu0 %5161
      %5165 = vset.pattern.permute.xlu0 0
      %5166 = vperm.xlu0 %5165, %v5112
      %v5167 = vpop.permute.xlu0 %5166
      %5170 = vset.pattern.permute.xlu0 0
      %5171 = vperm.xlu0 %5170, %v5113
      %v5172 = vpop.permute.xlu0 %5171
      %5175 = vset.pattern.permute.xlu0 0
      %5176 = vperm.xlu0 %5175, %v5114
      %v5177 = vpop.permute.xlu0 %5176
      %5180 = vset.pattern.permute.xlu0 0
      %5181 = vperm.xlu0 %5180, %v5115
      %v5182 = vpop.permute.xlu0 %5181
      %5185 = vset.pattern.permute.xlu0 0
      %5186 = vperm.xlu0 %5185, %v5116
      %v5187 = vpop.permute.xlu0 %5186
      %5190 = vset.pattern.permute.xlu0 0
      %5191 = vperm.xlu0 %5190, %v5117
      %v5192 = vpop.permute.xlu0 %5191
      %5195 = vset.pattern.permute.xlu0 0
      %5196 = vperm.xlu0 %5195, %v5118
      %v5197 = vpop.permute.xlu0 %5196
      %5200 = vset.pattern.permute.xlu0 0
      %5201 = vperm.xlu0 %5200, %v5119
      %v5202 = vpop.permute.xlu0 %5201
      %5205 = vset.pattern.permute.xlu0 0
      %5206 = vperm.xlu0 %5205, %v5120
      %v5207 = vpop.permute.xlu0 %5206
      %5210 = vset.pattern.permute.xlu0 0
      %5211 = vperm.xlu0 %5210, %v5121
      %v5212 = vpop.permute.xlu0 %5211
      %5215 = vset.pattern.permute.xlu0 0
      %5216 = vperm.xlu0 %5215, %v5122
      %v5217 = vpop.permute.xlu0 %5216
      %5220 = vset.pattern.permute.xlu0 0
      %5221 = vperm.xlu0 %5220, %v5123
      %v5222 = vpop.permute.xlu0 %5221
      %5225 = vset.pattern.permute.xlu0 0
      %5226 = vperm.xlu0 %5225, %v5124
      %v5227 = vpop.permute.xlu0 %5226
      %5230 = vset.pattern.permute.xlu0 0
      %5231 = vperm.xlu0 %5230, %v5125
      %v5232 = vpop.permute.xlu0 %5231
      %5235 = vset.pattern.permute.xlu0 0
      %5236 = vperm.xlu0 %5235, %v5126
      %v5237 = vpop.permute.xlu0 %5236
      %5240 = vset.pattern.permute.xlu0 0
      %5241 = vperm.xlu0 %5240, %v5127
      %v5242 = vpop.permute.xlu0 %5241
      %5245 = vset.pattern.permute.xlu0 0
      %5246 = vperm.xlu0 %5245, %v5128
      %v5247 = vpop.permute.xlu0 %5246
      %5250 = vset.pattern.permute.xlu0 0
      %5251 = vperm.xlu0 %5250, %v5129
      %v5252 = vpop.permute.xlu0 %5251
      %5255 = vset.pattern.permute.xlu0 0
      %5256 = vperm.xlu0 %5255, %v5130
      %v5257 = vpop.permute.xlu0 %5256
      %5260 = vset.pattern.permute.xlu0 0
      %5261 = vperm.xlu0 %5260, %v5131
      %v5262 = vpop.permute.xlu0 %5261
      %5265 = vset.pattern.permute.xlu0 0
      %5266 = vperm.xlu0 %5265, %v5132
      %v5267 = vpop.permute.xlu0 %5266
      %5270 = vset.pattern.permute.xlu0 0
      %5271 = vperm.xlu0 %5270, %v5133
      %v5272 = vpop.permute.xlu0 %5271
      %5275 = vset.pattern.permute.xlu0 0
      %5276 = vperm.xlu0 %5275, %v5134
      %v5277 = vpop.permute.xlu0 %5276
      %5280 = vset.pattern.permute.xlu0 0
      %5281 = vperm.xlu0 %5280, %v5135
      %v5282 = vpop.permute.xlu0 %5281
      %5285 = vset.pattern.permute.xlu0 0
      %5286 = vperm.xlu0 %5285, %v5136
      %v5287 = vpop.permute.xlu0 %5286
      %5290 = vset.pattern.permute.xlu0 0
      %5291 = vperm.xlu0 %5290, %v5137
      %v5292 = vpop.permute.xlu0 %5291
      %5295 = vset.pattern.permute.xlu0 0
      %5296 = vperm.xlu0 %5295, %v5138
      %v5297 = vpop.permute.xlu0 %5296
      %v5331 = vunpack.c.l.b16 %v5075
      %v5332 = vunpack.c.h.b16 %v5075
      %v5333 = vunpack.c.l.b16 %v5076
      %v5334 = vunpack.c.h.b16 %v5076
      %v5335 = vunpack.c.l.b16 %v5077
      %v5336 = vunpack.c.h.b16 %v5077
      %v5337 = vunpack.c.l.b16 %v5078
      %v5338 = vunpack.c.h.b16 %v5078
      %v5339 = vunpack.c.l.b16 %v5079
      %v5340 = vunpack.c.h.b16 %v5079
      %v5341 = vunpack.c.l.b16 %v5080
      %v5342 = vunpack.c.h.b16 %v5080
      %v5343 = vunpack.c.l.b16 %v5081
      %v5344 = vunpack.c.h.b16 %v5081
      %v5345 = vunpack.c.l.b16 %v5082
      %v5346 = vunpack.c.h.b16 %v5082
      %v5347 = vunpack.c.l.b16 %v5083
      %v5348 = vunpack.c.h.b16 %v5083
      %v5349 = vunpack.c.l.b16 %v5084
      %v5350 = vunpack.c.h.b16 %v5084
      %v5351 = vunpack.c.l.b16 %v5085
      %v5352 = vunpack.c.h.b16 %v5085
      %v5353 = vunpack.c.l.b16 %v5086
      %v5354 = vunpack.c.h.b16 %v5086
      %v5355 = vunpack.c.l.b16 %v5087
      %v5356 = vunpack.c.h.b16 %v5087
      %v5357 = vunpack.c.l.b16 %v5088
      %v5358 = vunpack.c.h.b16 %v5088
      %v5359 = vunpack.c.l.b16 %v5089
      %v5360 = vunpack.c.h.b16 %v5089
      %v5361 = vunpack.c.l.b16 %v5090
      %v5362 = vunpack.c.h.b16 %v5090
      %v5363 = vunpack.c.l.b16 %v5091
      %v5364 = vunpack.c.h.b16 %v5091
      %v5365 = vunpack.c.l.b16 %v5092
      %v5366 = vunpack.c.h.b16 %v5092
      %v5367 = vunpack.c.l.b16 %v5093
      %v5368 = vunpack.c.h.b16 %v5093
      %v5369 = vunpack.c.l.b16 %v5094
      %v5370 = vunpack.c.h.b16 %v5094
      %v5371 = vunpack.c.l.b16 %v5095
      %v5372 = vunpack.c.h.b16 %v5095
      %v5373 = vunpack.c.l.b16 %v5096
      %v5374 = vunpack.c.h.b16 %v5096
      %v5375 = vunpack.c.l.b16 %v5097
      %v5376 = vunpack.c.h.b16 %v5097
      %v5377 = vunpack.c.l.b16 %v5098
      %v5378 = vunpack.c.h.b16 %v5098
      %v5379 = vunpack.c.l.b16 %v5099
      %v5380 = vunpack.c.h.b16 %v5099
      %v5381 = vunpack.c.l.b16 %v5100
      %v5382 = vunpack.c.h.b16 %v5100
      %v5383 = vunpack.c.l.b16 %v5101
      %v5384 = vunpack.c.h.b16 %v5101
      %v5385 = vunpack.c.l.b16 %v5102
      %v5386 = vunpack.c.h.b16 %v5102
      %v5387 = vunpack.c.l.b16 %v5103
      %v5388 = vunpack.c.h.b16 %v5103
      %v5389 = vunpack.c.l.b16 %v5104
      %v5390 = vunpack.c.h.b16 %v5104
      %v5391 = vunpack.c.l.b16 %v5105
      %v5392 = vunpack.c.h.b16 %v5105
      %v5393 = vunpack.c.l.b16 %v5106
      %v5394 = vunpack.c.h.b16 %v5106
      %v5395 = vpack.c.b16 %v5333, %v5331
      %v5396 = vpack.c.b16 %v5334, %v5332
      %v5397 = vpack.c.b16 %v5337, %v5335
      %v5398 = vpack.c.b16 %v5338, %v5336
      %v5399 = vpack.c.b16 %v5341, %v5339
      %v5400 = vpack.c.b16 %v5342, %v5340
      %v5401 = vpack.c.b16 %v5345, %v5343
      %v5402 = vpack.c.b16 %v5346, %v5344
      %v5403 = vpack.c.b16 %v5349, %v5347
      %v5404 = vpack.c.b16 %v5350, %v5348
      %v5405 = vpack.c.b16 %v5353, %v5351
      %v5406 = vpack.c.b16 %v5354, %v5352
      %v5407 = vpack.c.b16 %v5357, %v5355
      %v5408 = vpack.c.b16 %v5358, %v5356
      %v5409 = vpack.c.b16 %v5361, %v5359
      %v5410 = vpack.c.b16 %v5362, %v5360
      %v5411 = vpack.c.b16 %v5365, %v5363
      %v5412 = vpack.c.b16 %v5366, %v5364
      %v5413 = vpack.c.b16 %v5369, %v5367
      %v5414 = vpack.c.b16 %v5370, %v5368
      %v5415 = vpack.c.b16 %v5373, %v5371
      %v5416 = vpack.c.b16 %v5374, %v5372
      %v5417 = vpack.c.b16 %v5377, %v5375
      %v5418 = vpack.c.b16 %v5378, %v5376
      %v5419 = vpack.c.b16 %v5381, %v5379
      %v5420 = vpack.c.b16 %v5382, %v5380
      %v5421 = vpack.c.b16 %v5385, %v5383
      %v5422 = vpack.c.b16 %v5386, %v5384
      %v5423 = vpack.c.b16 %v5389, %v5387
      %v5424 = vpack.c.b16 %v5390, %v5388
      %v5425 = vpack.c.b16 %v5393, %v5391
      %v5426 = vpack.c.b16 %v5394, %v5392
      %5459 = vmatprep.subr.bf16.mxu0 %v4948
      %5460 = vmatpush1.bf16.msra.mxu0 %v4947
      %5461 = vmatprep.subr.bf16.mxu0 %v4956
      %5462 = vmatpush1.bf16.msra.mxu0 %v4955
      %5463 = vmatprep.subr.bf16.mxu0 %v4964
      %5464 = vmatpush1.bf16.msra.mxu0 %v4963
      %5465 = vmatprep.subr.bf16.mxu0 %v4972
      %5466 = vmatpush1.bf16.msra.mxu0 %v4971
      %5467 = vmatprep.subr.bf16.mxu0 %v4980
      %5468 = vmatpush1.bf16.msra.mxu0 %v4979
      %5469 = vmatprep.subr.bf16.mxu0 %v4988
      %5470 = vmatpush1.bf16.msra.mxu0 %v4987
      %5471 = vmatprep.subr.bf16.mxu0 %v4996
      %5472 = vmatpush1.bf16.msra.mxu0 %v4995
      %5473 = vmatprep.subr.bf16.mxu0 %v5004
      %5474 = vmatpush1.bf16.msra.mxu0 %v5003
      %5475 = vmatprep.subr.bf16.mxu0 %v5012
      %5476 = vmatpush1.bf16.msra.mxu0 %v5011
      %5477 = vmatprep.subr.bf16.mxu0 %v5020
      %5478 = vmatpush1.bf16.msra.mxu0 %v5019
      %5479 = vmatprep.subr.bf16.mxu0 %v5028
      %5480 = vmatpush1.bf16.msra.mxu0 %v5027
      %5481 = vmatprep.subr.bf16.mxu0 %v5036
      %5482 = vmatpush1.bf16.msra.mxu0 %v5035
      %5483 = vmatprep.subr.bf16.mxu0 %v5044
      %5484 = vmatpush1.bf16.msra.mxu0 %v5043
      %5485 = vmatprep.subr.bf16.mxu0 %v5052
      %5486 = vmatpush1.bf16.msra.mxu0 %v5051
      %5487 = vmatprep.subr.bf16.mxu0 %v5060
      %5488 = vmatpush1.bf16.msra.mxu0 %v5059
      %5489 = vmatprep.subr.bf16.mxu0 %v5068
      %5490 = vmatpush1.bf16.msra.mxu0 %v5067
      %5491 = vmatprep.mubr.bf16.mxu0 %v5396
      %5492 = vmatmul.mubr.bf16.gmra.mrb[0].mxu0 %v5395
      %v5493 = vpop.f32.mrb[0].mxu0
      %v5494 = vadd.f32 %v5142, %v5493
      %v5495 = vpop.f32.mrb[0].mxu0
      %v5496 = vadd.f32 %v5142, %v5495
      %v5497 = vpop.f32.mrb[0].mxu0
      %v5498 = vadd.f32 %v5147, %v5497
      %v5499 = vpop.f32.mrb[0].mxu0
      %v5500 = vadd.f32 %v5147, %v5499
      %5501 = vmatprep.mubr.bf16.mxu0 %v5398
      %5502 = vmatmul.mubr.bf16.gmra.mrb[0].mxu0 %v5397
      %v5503 = vpop.f32.mrb[0].mxu0
      %v5504 = vadd.f32 %v5152, %v5503
      %v5505 = vpop.f32.mrb[0].mxu0
      %v5506 = vadd.f32 %v5152, %v5505
      %v5507 = vpop.f32.mrb[0].mxu0
      %v5508 = vadd.f32 %v5157, %v5507
      %v5509 = vpop.f32.mrb[0].mxu0
      %v5510 = vadd.f32 %v5157, %v5509
      %5511 = vmatprep.mubr.bf16.mxu0 %v5400
      %5512 = vmatmul.mubr.bf16.gmra.mrb[0].mxu0 %v5399
      %v5513 = vpop.f32.mrb[0].mxu0
      %v5514 = vadd.f32 %v5162, %v5513
      %v5515 = vpop.f32.mrb[0].mxu0
      %v5516 = vadd.f32 %v5162, %v5515
      %v5517 = vpop.f32.mrb[0].mxu0
      %v5518 = vadd.f32 %v5167, %v5517
      %v5519 = vpop.f32.mrb[0].mxu0
      %v5520 = vadd.f32 %v5167, %v5519
      %5521 = vmatprep.mubr.bf16.mxu0 %v5402
      %5522 = vmatmul.mubr.bf16.gmra.mrb[0].mxu0 %v5401
      %v5523 = vpop.f32.mrb[0].mxu0
      %v5524 = vadd.f32 %v5172, %v5523
      %v5525 = vpop.f32.mrb[0].mxu0
      %v5526 = vadd.f32 %v5172, %v5525
      %v5527 = vpop.f32.mrb[0].mxu0
      %v5528 = vadd.f32 %v5177, %v5527
      %v5529 = vpop.f32.mrb[0].mxu0
      %v5530 = vadd.f32 %v5177, %v5529
      %5531 = vmatprep.mubr.bf16.mxu0 %v5404
      %5532 = vmatmul.mubr.bf16.gmra.mrb[0].mxu0 %v5403
      %v5533 = vpop.f32.mrb[0].mxu0
      %v5534 = vadd.f32 %v5182, %v5533
      %v5535 = vpop.f32.mrb[0].mxu0
      %v5536 = vadd.f32 %v5182, %v5535
      %v5537 = vpop.f32.mrb[0].mxu0
      %v5538 = vadd.f32 %v5187, %v5537
      %v5539 = vpop.f32.mrb[0].mxu0
      %v5540 = vadd.f32 %v5187, %v5539
      %5541 = vmatprep.mubr.bf16.mxu0 %v5406
      %5542 = vmatmul.mubr.bf16.gmra.mrb[0].mxu0 %v5405
      %v5543 = vpop.f32.mrb[0].mxu0
      %v5544 = vadd.f32 %v5192, %v5543
      %v5545 = vpop.f32.mrb[0].mxu0
      %v5546 = vadd.f32 %v5192, %v5545
      %v5547 = vpop.f32.mrb[0].mxu0
      %v5548 = vadd.f32 %v5197, %v5547
      %v5549 = vpop.f32.mrb[0].mxu0
      %v5550 = vadd.f32 %v5197, %v5549
      %5551 = vmatprep.mubr.bf16.mxu0 %v5408
      %5552 = vmatmul.mubr.bf16.gmra.mrb[0].mxu0 %v5407
      %v5553 = vpop.f32.mrb[0].mxu0
      %v5554 = vadd.f32 %v5202, %v5553
      %v5555 = vpop.f32.mrb[0].mxu0
      %v5556 = vadd.f32 %v5202, %v5555
      %v5557 = vpop.f32.mrb[0].mxu0
      %v5558 = vadd.f32 %v5207, %v5557
      %v5559 = vpop.f32.mrb[0].mxu0
      %v5560 = vadd.f32 %v5207, %v5559
      %5561 = vmatprep.mubr.bf16.mxu0 %v5410
      %5562 = vmatmul.mubr.bf16.gmra.mrb[0].mxu0 %v5409
      %v5563 = vpop.f32.mrb[0].mxu0
      %v5564 = vadd.f32 %v5212, %v5563
      %v5565 = vpop.f32.mrb[0].mxu0
      %v5566 = vadd.f32 %v5212, %v5565
      %v5567 = vpop.f32.mrb[0].mxu0
      %v5568 = vadd.f32 %v5217, %v5567
      %v5569 = vpop.f32.mrb[0].mxu0
      %v5570 = vadd.f32 %v5217, %v5569
      %5571 = vmatprep.mubr.bf16.mxu0 %v5412
      %5572 = vmatmul.mubr.bf16.gmra.mrb[0].mxu0 %v5411
      %v5573 = vpop.f32.mrb[0].mxu0
      %v5574 = vadd.f32 %v5222, %v5573
      %v5575 = vpop.f32.mrb[0].mxu0
      %v5576 = vadd.f32 %v5222, %v5575
      %v5577 = vpop.f32.mrb[0].mxu0
      %v5578 = vadd.f32 %v5227, %v5577
      %v5579 = vpop.f32.mrb[0].mxu0
      %v5580 = vadd.f32 %v5227, %v5579
      %5581 = vmatprep.mubr.bf16.mxu0 %v5414
      %5582 = vmatmul.mubr.bf16.gmra.mrb[0].mxu0 %v5413
      %v5583 = vpop.f32.mrb[0].mxu0
      %v5584 = vadd.f32 %v5232, %v5583
      %v5585 = vpop.f32.mrb[0].mxu0
      %v5586 = vadd.f32 %v5232, %v5585
      %v5587 = vpop.f32.mrb[0].mxu0
      %v5588 = vadd.f32 %v5237, %v5587
      %v5589 = vpop.f32.mrb[0].mxu0
      %v5590 = vadd.f32 %v5237, %v5589
      %5591 = vmatprep.mubr.bf16.mxu0 %v5416
      %5592 = vmatmul.mubr.bf16.gmra.mrb[0].mxu0 %v5415
      %v5593 = vpop.f32.mrb[0].mxu0
      %v5594 = vadd.f32 %v5242, %v5593
      %v5595 = vpop.f32.mrb[0].mxu0
      %v5596 = vadd.f32 %v5242, %v5595
      %v5597 = vpop.f32.mrb[0].mxu0
      %v5598 = vadd.f32 %v5247, %v5597
      %v5599 = vpop.f32.mrb[0].mxu0
      %v5600 = vadd.f32 %v5247, %v5599
      %5601 = vmatprep.mubr.bf16.mxu0 %v5418
      %5602 = vmatmul.mubr.bf16.gmra.mrb[0].mxu0 %v5417
      %v5603 = vpop.f32.mrb[0].mxu0
      %v5604 = vadd.f32 %v5252, %v5603
      %v5605 = vpop.f32.mrb[0].mxu0
      %v5606 = vadd.f32 %v5252, %v5605
      %v5607 = vpop.f32.mrb[0].mxu0
      %v5608 = vadd.f32 %v5257, %v5607
      %v5609 = vpop.f32.mrb[0].mxu0
      %v5610 = vadd.f32 %v5257, %v5609
      %5611 = vmatprep.mubr.bf16.mxu0 %v5420
      %5612 = vmatmul.mubr.bf16.gmra.mrb[0].mxu0 %v5419
      %v5613 = vpop.f32.mrb[0].mxu0
      %v5614 = vadd.f32 %v5262, %v5613
      %v5615 = vpop.f32.mrb[0].mxu0
      %v5616 = vadd.f32 %v5262, %v5615
      %v5617 = vpop.f32.mrb[0].mxu0
      %v5618 = vadd.f32 %v5267, %v5617
      %v5619 = vpop.f32.mrb[0].mxu0
      %v5620 = vadd.f32 %v5267, %v5619
      %5621 = vmatprep.mubr.bf16.mxu0 %v5422
      %5622 = vmatmul.mubr.bf16.gmra.mrb[0].mxu0 %v5421
      %v5623 = vpop.f32.mrb[0].mxu0
      %v5624 = vadd.f32 %v5272, %v5623
      %v5625 = vpop.f32.mrb[0].mxu0
      %v5626 = vadd.f32 %v5272, %v5625
      %v5627 = vpop.f32.mrb[0].mxu0
      %v5628 = vadd.f32 %v5277, %v5627
      %v5629 = vpop.f32.mrb[0].mxu0
      %v5630 = vadd.f32 %v5277, %v5629
      %5631 = vmatprep.mubr.bf16.mxu0 %v5424
      %5632 = vmatmul.mubr.bf16.gmra.mrb[0].mxu0 %v5423
      %v5633 = vpop.f32.mrb[0].mxu0
      %v5634 = vadd.f32 %v5282, %v5633
      %v5635 = vpop.f32.mrb[0].mxu0
      %v5636 = vadd.f32 %v5282, %v5635
      %v5637 = vpop.f32.mrb[0].mxu0
      %v5638 = vadd.f32 %v5287, %v5637
      %v5639 = vpop.f32.mrb[0].mxu0
      %v5640 = vadd.f32 %v5287, %v5639
      %5641 = vmatprep.mubr.bf16.mxu0 %v5426
      %5642 = vmatmul.mubr.bf16.gmra.mrb[0].mxu0 %v5425
      %v5643 = vpop.f32.mrb[0].mxu0
      %v5644 = vadd.f32 %v5292, %v5643
      %v5645 = vpop.f32.mrb[0].mxu0
      %v5646 = vadd.f32 %v5292, %v5645
      %v5647 = vpop.f32.mrb[0].mxu0
      %v5648 = vadd.f32 %v5297, %v5647
      %v5649 = vpop.f32.mrb[0].mxu0
      %v5650 = vadd.f32 %v5297, %v5649
      %5651 = vdwg.mxu0
      %5652 = vmatprep.subr.bf16.mxu0 %v4950
      %5653 = vmatpush1.bf16.msra.mxu0 %v4949
      %5654 = vmatprep.subr.bf16.mxu0 %v4958
      %5655 = vmatpush1.bf16.msra.mxu0 %v4957
      %5656 = vmatprep.subr.bf16.mxu0 %v4966
      %5657 = vmatpush1.bf16.msra.mxu0 %v4965
      %5658 = vmatprep.subr.bf16.mxu0 %v4974
      %5659 = vmatpush1.bf16.msra.mxu0 %v4973
      %5660 = vmatprep.subr.bf16.mxu0 %v4982
      %5661 = vmatpush1.bf16.msra.mxu0 %v4981
      %5662 = vmatprep.subr.bf16.mxu0 %v4990
      %5663 = vmatpush1.bf16.msra.mxu0 %v4989
      %5664 = vmatprep.subr.bf16.mxu0 %v4998
      %5665 = vmatpush1.bf16.msra.mxu0 %v4997
      %5666 = vmatprep.subr.bf16.mxu0 %v5006
      %5667 = vmatpush1.bf16.msra.mxu0 %v5005
      %5668 = vmatprep.subr.bf16.mxu0 %v5014
      %5669 = vmatpush1.bf16.msra.mxu0 %v5013
      %5670 = vmatprep.subr.bf16.mxu0 %v5022
      %5671 = vmatpush1.bf16.msra.mxu0 %v5021
      %5672 = vmatprep.subr.bf16.mxu0 %v5030
      %5673 = vmatpush1.bf16.msra.mxu0 %v5029
      %5674 = vmatprep.subr.bf16.mxu0 %v5038
      %5675 = vmatpush1.bf16.msra.mxu0 %v5037
      %5676 = vmatprep.subr.bf16.mxu0 %v5046
      %5677 = vmatpush1.bf16.msra.mxu0 %v5045
      %5678 = vmatprep.subr.bf16.mxu0 %v5054
      %5679 = vmatpush1.bf16.msra.mxu0 %v5053
      %5680 = vmatprep.subr.bf16.mxu0 %v5062
      %5681 = vmatpush1.bf16.msra.mxu0 %v5061
      %5682 = vmatprep.subr.bf16.mxu0 %v5070
      %5683 = vmatpush1.bf16.msra.mxu0 %v5069
      %5684 = vmatprep.mubr.bf16.mxu0 %v5396
      %5685 = vmatmul.mubr.bf16.gmra.mrb[0].mxu0 %v5395
      %v5686 = vpop.f32.mrb[0].mxu0
      %v5687 = vadd.f32 %v5142, %v5686
      %v5688 = vpop.f32.mrb[0].mxu0
      %v5689 = vadd.f32 %v5142, %v5688
      %v5690 = vpop.f32.mrb[0].mxu0
      %v5691 = vadd.f32 %v5147, %v5690
      %v5692 = vpop.f32.mrb[0].mxu0
      %v5693 = vadd.f32 %v5147, %v5692
      %5694 = vmatprep.mubr.bf16.mxu0 %v5398
      %5695 = vmatmul.mubr.bf16.gmra.mrb[0].mxu0 %v5397
      %v5696 = vpop.f32.mrb[0].mxu0
      %v5697 = vadd.f32 %v5152, %v5696
      %v5698 = vpop.f32.mrb[0].mxu0
      %v5699 = vadd.f32 %v5152, %v5698
      %v5700 = vpop.f32.mrb[0].mxu0
      %v5701 = vadd.f32 %v5157, %v5700
      %v5702 = vpop.f32.mrb[0].mxu0
      %v5703 = vadd.f32 %v5157, %v5702
      %5704 = vmatprep.mubr.bf16.mxu0 %v5400
      %5705 = vmatmul.mubr.bf16.gmra.mrb[0].mxu0 %v5399
      %v5706 = vpop.f32.mrb[0].mxu0
      %v5707 = vadd.f32 %v5162, %v5706
      %v5708 = vpop.f32.mrb[0].mxu0
      %v5709 = vadd.f32 %v5162, %v5708
      %v5710 = vpop.f32.mrb[0].mxu0
      %v5711 = vadd.f32 %v5167, %v5710
      %v5712 = vpop.f32.mrb[0].mxu0
      %v5713 = vadd.f32 %v5167, %v5712
      %5714 = vmatprep.mubr.bf16.mxu0 %v5402
      %5715 = vmatmul.mubr.bf16.gmra.mrb[0].mxu0 %v5401
      %v5716 = vpop.f32.mrb[0].mxu0
      %v5717 = vadd.f32 %v5172, %v5716
      %v5718 = vpop.f32.mrb[0].mxu0
      %v5719 = vadd.f32 %v5172, %v5718
      %v5720 = vpop.f32.mrb[0].mxu0
      %v5721 = vadd.f32 %v5177, %v5720
      %v5722 = vpop.f32.mrb[0].mxu0
      %v5723 = vadd.f32 %v5177, %v5722
      %5724 = vmatprep.mubr.bf16.mxu0 %v5404
      %5725 = vmatmul.mubr.bf16.gmra.mrb[0].mxu0 %v5403
      %v5726 = vpop.f32.mrb[0].mxu0
      %v5727 = vadd.f32 %v5182, %v5726
      %v5728 = vpop.f32.mrb[0].mxu0
      %v5729 = vadd.f32 %v5182, %v5728
      %v5730 = vpop.f32.mrb[0].mxu0
      %v5731 = vadd.f32 %v5187, %v5730
      %v5732 = vpop.f32.mrb[0].mxu0
      %v5733 = vadd.f32 %v5187, %v5732
      %5734 = vmatprep.mubr.bf16.mxu0 %v5406
      %5735 = vmatmul.mubr.bf16.gmra.mrb[0].mxu0 %v5405
      %v5736 = vpop.f32.mrb[0].mxu0
      %v5737 = vadd.f32 %v5192, %v5736
      %v5738 = vpop.f32.mrb[0].mxu0
      %v5739 = vadd.f32 %v5192, %v5738
      %v5740 = vpop.f32.mrb[0].mxu0
      %v5741 = vadd.f32 %v5197, %v5740
      %v5742 = vpop.f32.mrb[0].mxu0
      %v5743 = vadd.f32 %v5197, %v5742
      %5744 = vmatprep.mubr.bf16.mxu0 %v5408
      %5745 = vmatmul.mubr.bf16.gmra.mrb[0].mxu0 %v5407
      %v5746 = vpop.f32.mrb[0].mxu0
      %v5747 = vadd.f32 %v5202, %v5746
      %v5748 = vpop.f32.mrb[0].mxu0
      %v5749 = vadd.f32 %v5202, %v5748
      %v5750 = vpop.f32.mrb[0].mxu0
      %v5751 = vadd.f32 %v5207, %v5750
      %v5752 = vpop.f32.mrb[0].mxu0
      %v5753 = vadd.f32 %v5207, %v5752
      %5754 = vmatprep.mubr.bf16.mxu0 %v5410
      %5755 = vmatmul.mubr.bf16.gmra.mrb[0].mxu0 %v5409
      %v5756 = vpop.f32.mrb[0].mxu0
      %v5757 = vadd.f32 %v5212, %v5756
      %v5758 = vpop.f32.mrb[0].mxu0
      %v5759 = vadd.f32 %v5212, %v5758
      %v5760 = vpop.f32.mrb[0].mxu0
      %v5761 = vadd.f32 %v5217, %v5760
      %v5762 = vpop.f32.mrb[0].mxu0
      %v5763 = vadd.f32 %v5217, %v5762
      %5764 = vmatprep.mubr.bf16.mxu0 %v5412
      %5765 = vmatmul.mubr.bf16.gmra.mrb[0].mxu0 %v5411
      %v5766 = vpop.f32.mrb[0].mxu0
      %v5767 = vadd.f32 %v5222, %v5766
      %v5768 = vpop.f32.mrb[0].mxu0
      %v5769 = vadd.f32 %v5222, %v5768
      %v5770 = vpop.f32.mrb[0].mxu0
      %v5771 = vadd.f32 %v5227, %v5770
      %v5772 = vpop.f32.mrb[0].mxu0
      %v5773 = vadd.f32 %v5227, %v5772
      %5774 = vmatprep.mubr.bf16.mxu0 %v5414
      %5775 = vmatmul.mubr.bf16.gmra.mrb[0].mxu0 %v5413
      %v5776 = vpop.f32.mrb[0].mxu0
      %v5777 = vadd.f32 %v5232, %v5776
      %v5778 = vpop.f32.mrb[0].mxu0
      %v5779 = vadd.f32 %v5232, %v5778
      %v5780 = vpop.f32.mrb[0].mxu0
      %v5781 = vadd.f32 %v5237, %v5780
      %v5782 = vpop.f32.mrb[0].mxu0
      %v5783 = vadd.f32 %v5237, %v5782
      %5784 = vmatprep.mubr.bf16.mxu0 %v5416
      %5785 = vmatmul.mubr.bf16.gmra.mrb[0].mxu0 %v5415
      %v5786 = vpop.f32.mrb[0].mxu0
      %v5787 = vadd.f32 %v5242, %v5786
      %v5788 = vpop.f32.mrb[0].mxu0
      %v5789 = vadd.f32 %v5242, %v5788
      %v5790 = vpop.f32.mrb[0].mxu0
      %v5791 = vadd.f32 %v5247, %v5790
      %v5792 = vpop.f32.mrb[0].mxu0
      %v5793 = vadd.f32 %v5247, %v5792
      %5794 = vmatprep.mubr.bf16.mxu0 %v5418
      %5795 = vmatmul.mubr.bf16.gmra.mrb[0].mxu0 %v5417
      %v5796 = vpop.f32.mrb[0].mxu0
      %v5797 = vadd.f32 %v5252, %v5796
      %v5798 = vpop.f32.mrb[0].mxu0
      %v5799 = vadd.f32 %v5252, %v5798
      %v5800 = vpop.f32.mrb[0].mxu0
      %v5801 = vadd.f32 %v5257, %v5800
      %v5802 = vpop.f32.mrb[0].mxu0
      %v5803 = vadd.f32 %v5257, %v5802
      %5804 = vmatprep.mubr.bf16.mxu0 %v5420
      %5805 = vmatmul.mubr.bf16.gmra.mrb[0].mxu0 %v5419
      %v5806 = vpop.f32.mrb[0].mxu0
      %v5807 = vadd.f32 %v5262, %v5806
      %v5808 = vpop.f32.mrb[0].mxu0
      %v5809 = vadd.f32 %v5262, %v5808
      %v5810 = vpop.f32.mrb[0].mxu0
      %v5811 = vadd.f32 %v5267, %v5810
      %v5812 = vpop.f32.mrb[0].mxu0
      %v5813 = vadd.f32 %v5267, %v5812
      %5814 = vmatprep.mubr.bf16.mxu0 %v5422
      %5815 = vmatmul.mubr.bf16.gmra.mrb[0].mxu0 %v5421
      %v5816 = vpop.f32.mrb[0].mxu0
      %v5817 = vadd.f32 %v5272, %v5816
      %v5818 = vpop.f32.mrb[0].mxu0
      %v5819 = vadd.f32 %v5272, %v5818
      %v5820 = vpop.f32.mrb[0].mxu0
      %v5821 = vadd.f32 %v5277, %v5820
      %v5822 = vpop.f32.mrb[0].mxu0
      %v5823 = vadd.f32 %v5277, %v5822
      %5824 = vmatprep.mubr.bf16.mxu0 %v5424
      %5825 = vmatmul.mubr.bf16.gmra.mrb[0].mxu0 %v5423
      %v5826 = vpop.f32.mrb[0].mxu0
      %v5827 = vadd.f32 %v5282, %v5826
      %v5828 = vpop.f32.mrb[0].mxu0
      %v5829 = vadd.f32 %v5282, %v5828
      %v5830 = vpop.f32.mrb[0].mxu0
      %v5831 = vadd.f32 %v5287, %v5830
      %v5832 = vpop.f32.mrb[0].mxu0
      %v5833 = vadd.f32 %v5287, %v5832
      %5834 = vmatprep.mubr.bf16.mxu0 %v5426
      %5835 = vmatmul.mubr.bf16.gmra.mrb[0].mxu0 %v5425
      %v5836 = vpop.f32.mrb[0].mxu0
      %v5837 = vadd.f32 %v5292, %v5836
      %v5838 = vpop.f32.mrb[0].mxu0
      %v5839 = vadd.f32 %v5292, %v5838
      %v5840 = vpop.f32.mrb[0].mxu0
      %v5841 = vadd.f32 %v5297, %v5840
      %v5842 = vpop.f32.mrb[0].mxu0
      %v5843 = vadd.f32 %v5297, %v5842
      %5844 = vdwg.mxu0
      %5845 = vmatprep.subr.bf16.mxu0 %v4952
      %5846 = vmatpush1.bf16.msra.mxu0 %v4951
      %5847 = vmatprep.subr.bf16.mxu0 %v4960
      %5848 = vmatpush1.bf16.msra.mxu0 %v4959
      %5849 = vmatprep.subr.bf16.mxu0 %v4968
      %5850 = vmatpush1.bf16.msra.mxu0 %v4967
      %5851 = vmatprep.subr.bf16.mxu0 %v4976
      %5852 = vmatpush1.bf16.msra.mxu0 %v4975
      %5853 = vmatprep.subr.bf16.mxu0 %v4984
      %5854 = vmatpush1.bf16.msra.mxu0 %v4983
      %5855 = vmatprep.subr.bf16.mxu0 %v4992
      %5856 = vmatpush1.bf16.msra.mxu0 %v4991
      %5857 = vmatprep.subr.bf16.mxu0 %v5000
      %5858 = vmatpush1.bf16.msra.mxu0 %v4999
      %5859 = vmatprep.subr.bf16.mxu0 %v5008
      %5860 = vmatpush1.bf16.msra.mxu0 %v5007
      %5861 = vmatprep.subr.bf16.mxu0 %v5016
      %5862 = vmatpush1.bf16.msra.mxu0 %v5015
      %5863 = vmatprep.subr.bf16.mxu0 %v5024
      %5864 = vmatpush1.bf16.msra.mxu0 %v5023
      %5865 = vmatprep.subr.bf16.mxu0 %v5032
      %5866 = vmatpush1.bf16.msra.mxu0 %v5031
      %5867 = vmatprep.subr.bf16.mxu0 %v5040
      %5868 = vmatpush1.bf16.msra.mxu0 %v5039
      %5869 = vmatprep.subr.bf16.mxu0 %v5048
      %5870 = vmatpush1.bf16.msra.mxu0 %v5047
      %5871 = vmatprep.subr.bf16.mxu0 %v5056
      %5872 = vmatpush1.bf16.msra.mxu0 %v5055
      %5873 = vmatprep.subr.bf16.mxu0 %v5064
      %5874 = vmatpush1.bf16.msra.mxu0 %v5063
      %5875 = vmatprep.subr.bf16.mxu0 %v5072
      %5876 = vmatpush1.bf16.msra.mxu0 %v5071
      %5877 = vmatprep.mubr.bf16.mxu0 %v5396
      %5878 = vmatmul.mubr.bf16.gmra.mrb[0].mxu0 %v5395
      %v5879 = vpop.f32.mrb[0].mxu0
      %v5880 = vadd.f32 %v5142, %v5879
      %v5881 = vpop.f32.mrb[0].mxu0
      %v5882 = vadd.f32 %v5142, %v5881
      %v5883 = vpop.f32.mrb[0].mxu0
      %v5884 = vadd.f32 %v5147, %v5883
      %v5885 = vpop.f32.mrb[0].mxu0
      %v5886 = vadd.f32 %v5147, %v5885
      %5887 = vmatprep.mubr.bf16.mxu0 %v5398
      %5888 = vmatmul.mubr.bf16.gmra.mrb[0].mxu0 %v5397
      %v5889 = vpop.f32.mrb[0].mxu0
      %v5890 = vadd.f32 %v5152, %v5889
      %v5891 = vpop.f32.mrb[0].mxu0
      %v5892 = vadd.f32 %v5152, %v5891
      %v5893 = vpop.f32.mrb[0].mxu0
      %v5894 = vadd.f32 %v5157, %v5893
      %v5895 = vpop.f32.mrb[0].mxu0
      %v5896 = vadd.f32 %v5157, %v5895
      %5897 = vmatprep.mubr.bf16.mxu0 %v5400
      %5898 = vmatmul.mubr.bf16.gmra.mrb[0].mxu0 %v5399
      %v5899 = vpop.f32.mrb[0].mxu0
      %v5900 = vadd.f32 %v5162, %v5899
      %v5901 = vpop.f32.mrb[0].mxu0
      %v5902 = vadd.f32 %v5162, %v5901
      %v5903 = vpop.f32.mrb[0].mxu0
      %v5904 = vadd.f32 %v5167, %v5903
      %v5905 = vpop.f32.mrb[0].mxu0
      %v5906 = vadd.f32 %v5167, %v5905
      %5907 = vmatprep.mubr.bf16.mxu0 %v5402
      %5908 = vmatmul.mubr.bf16.gmra.mrb[0].mxu0 %v5401
      %v5909 = vpop.f32.mrb[0].mxu0
      %v5910 = vadd.f32 %v5172, %v5909
      %v5911 = vpop.f32.mrb[0].mxu0
      %v5912 = vadd.f32 %v5172, %v5911
      %v5913 = vpop.f32.mrb[0].mxu0
      %v5914 = vadd.f32 %v5177, %v5913
      %v5915 = vpop.f32.mrb[0].mxu0
      %v5916 = vadd.f32 %v5177, %v5915
      %5917 = vmatprep.mubr.bf16.mxu0 %v5404
      %5918 = vmatmul.mubr.bf16.gmra.mrb[0].mxu0 %v5403
      %v5919 = vpop.f32.mrb[0].mxu0
      %v5920 = vadd.f32 %v5182, %v5919
      %v5921 = vpop.f32.mrb[0].mxu0
      %v5922 = vadd.f32 %v5182, %v5921
      %v5923 = vpop.f32.mrb[0].mxu0
      %v5924 = vadd.f32 %v5187, %v5923
      %v5925 = vpop.f32.mrb[0].mxu0
      %v5926 = vadd.f32 %v5187, %v5925
      %5927 = vmatprep.mubr.bf16.mxu0 %v5406
      %5928 = vmatmul.mubr.bf16.gmra.mrb[0].mxu0 %v5405
      %v5929 = vpop.f32.mrb[0].mxu0
      %v5930 = vadd.f32 %v5192, %v5929
      %v5931 = vpop.f32.mrb[0].mxu0
      %v5932 = vadd.f32 %v5192, %v5931
      %v5933 = vpop.f32.mrb[0].mxu0
      %v5934 = vadd.f32 %v5197, %v5933
      %v5935 = vpop.f32.mrb[0].mxu0
      %v5936 = vadd.f32 %v5197, %v5935
      %5937 = vmatprep.mubr.bf16.mxu0 %v5408
      %5938 = vmatmul.mubr.bf16.gmra.mrb[0].mxu0 %v5407
      %v5939 = vpop.f32.mrb[0].mxu0
      %v5940 = vadd.f32 %v5202, %v5939
      %v5941 = vpop.f32.mrb[0].mxu0
      %v5942 = vadd.f32 %v5202, %v5941
      %v5943 = vpop.f32.mrb[0].mxu0
      %v5944 = vadd.f32 %v5207, %v5943
      %v5945 = vpop.f32.mrb[0].mxu0
      %v5946 = vadd.f32 %v5207, %v5945
      %5947 = vmatprep.mubr.bf16.mxu0 %v5410
      %5948 = vmatmul.mubr.bf16.gmra.mrb[0].mxu0 %v5409
      %v5949 = vpop.f32.mrb[0].mxu0
      %v5950 = vadd.f32 %v5212, %v5949
      %v5951 = vpop.f32.mrb[0].mxu0
      %v5952 = vadd.f32 %v5212, %v5951
      %v5953 = vpop.f32.mrb[0].mxu0
      %v5954 = vadd.f32 %v5217, %v5953
      %v5955 = vpop.f32.mrb[0].mxu0
      %v5956 = vadd.f32 %v5217, %v5955
      %5957 = vmatprep.mubr.bf16.mxu0 %v5412
      %5958 = vmatmul.mubr.bf16.gmra.mrb[0].mxu0 %v5411
      %v5959 = vpop.f32.mrb[0].mxu0
      %v5960 = vadd.f32 %v5222, %v5959
      %v5961 = vpop.f32.mrb[0].mxu0
      %v5962 = vadd.f32 %v5222, %v5961
      %v5963 = vpop.f32.mrb[0].mxu0
      %v5964 = vadd.f32 %v5227, %v5963
      %v5965 = vpop.f32.mrb[0].mxu0
      %v5966 = vadd.f32 %v5227, %v5965
      %5967 = vmatprep.mubr.bf16.mxu0 %v5414
      %5968 = vmatmul.mubr.bf16.gmra.mrb[0].mxu0 %v5413
      %v5969 = vpop.f32.mrb[0].mxu0
      %v5970 = vadd.f32 %v5232, %v5969
      %v5971 = vpop.f32.mrb[0].mxu0
      %v5972 = vadd.f32 %v5232, %v5971
      %v5973 = vpop.f32.mrb[0].mxu0
      %v5974 = vadd.f32 %v5237, %v5973
      %v5975 = vpop.f32.mrb[0].mxu0
      %v5976 = vadd.f32 %v5237, %v5975
      %5977 = vmatprep.mubr.bf16.mxu0 %v5416
      %5978 = vmatmul.mubr.bf16.gmra.mrb[0].mxu0 %v5415
      %v5979 = vpop.f32.mrb[0].mxu0
      %v5980 = vadd.f32 %v5242, %v5979
      %v5981 = vpop.f32.mrb[0].mxu0
      %v5982 = vadd.f32 %v5242, %v5981
      %v5983 = vpop.f32.mrb[0].mxu0
      %v5984 = vadd.f32 %v5247, %v5983
      %v5985 = vpop.f32.mrb[0].mxu0
      %v5986 = vadd.f32 %v5247, %v5985
      %5987 = vmatprep.mubr.bf16.mxu0 %v5418
      %5988 = vmatmul.mubr.bf16.gmra.mrb[0].mxu0 %v5417
      %v5989 = vpop.f32.mrb[0].mxu0
      %v5990 = vadd.f32 %v5252, %v5989
      %v5991 = vpop.f32.mrb[0].mxu0
      %v5992 = vadd.f32 %v5252, %v5991
      %v5993 = vpop.f32.mrb[0].mxu0
      %v5994 = vadd.f32 %v5257, %v5993
      %v5995 = vpop.f32.mrb[0].mxu0
      %v5996 = vadd.f32 %v5257, %v5995
      %5997 = vmatprep.mubr.bf16.mxu0 %v5420
      %5998 = vmatmul.mubr.bf16.gmra.mrb[0].mxu0 %v5419
      %v5999 = vpop.f32.mrb[0].mxu0
      %v6000 = vadd.f32 %v5262, %v5999
      %v6001 = vpop.f32.mrb[0].mxu0
      %v6002 = vadd.f32 %v5262, %v6001
      %v6003 = vpop.f32.mrb[0].mxu0
      %v6004 = vadd.f32 %v5267, %v6003
      %v6005 = vpop.f32.mrb[0].mxu0
      %v6006 = vadd.f32 %v5267, %v6005
      %6007 = vmatprep.mubr.bf16.mxu0 %v5422
      %6008 = vmatmul.mubr.bf16.gmra.mrb[0].mxu0 %v5421
      %v6009 = vpop.f32.mrb[0].mxu0
      %v6010 = vadd.f32 %v5272, %v6009
      %v6011 = vpop.f32.mrb[0].mxu0
      %v6012 = vadd.f32 %v5272, %v6011
      %v6013 = vpop.f32.mrb[0].mxu0
      %v6014 = vadd.f32 %v5277, %v6013
      %v6015 = vpop.f32.mrb[0].mxu0
      %v6016 = vadd.f32 %v5277, %v6015
      %6017 = vmatprep.mubr.bf16.mxu0 %v5424
      %6018 = vmatmul.mubr.bf16.gmra.mrb[0].mxu0 %v5423
      %v6019 = vpop.f32.mrb[0].mxu0
      %v6020 = vadd.f32 %v5282, %v6019
      %v6021 = vpop.f32.mrb[0].mxu0
      %v6022 = vadd.f32 %v5282, %v6021
      %v6023 = vpop.f32.mrb[0].mxu0
      %v6024 = vadd.f32 %v5287, %v6023
      %v6025 = vpop.f32.mrb[0].mxu0
      %v6026 = vadd.f32 %v5287, %v6025
      %6027 = vmatprep.mubr.bf16.mxu0 %v5426
      %6028 = vmatmul.mubr.bf16.gmra.mrb[0].mxu0 %v5425
      %v6029 = vpop.f32.mrb[0].mxu0
      %v6030 = vadd.f32 %v5292, %v6029
      %v6031 = vpop.f32.mrb[0].mxu0
      %v6032 = vadd.f32 %v5292, %v6031
      %v6033 = vpop.f32.mrb[0].mxu0
      %v6034 = vadd.f32 %v5297, %v6033
      %v6035 = vpop.f32.mrb[0].mxu0
      %v6036 = vadd.f32 %v5297, %v6035
      %6037 = vdwg.mxu0
      %6038 = vmatprep.subr.bf16.mxu0 %v4954
      %6039 = vmatpush1.bf16.msra.mxu0 %v4953
      %6040 = vmatprep.subr.bf16.mxu0 %v4962
      %6041 = vmatpush1.bf16.msra.mxu0 %v4961
      %6042 = vmatprep.subr.bf16.mxu0 %v4970
      %6043 = vmatpush1.bf16.msra.mxu0 %v4969
      %6044 = vmatprep.subr.bf16.mxu0 %v4978
      %6045 = vmatpush1.bf16.msra.mxu0 %v4977
      %6046 = vmatprep.subr.bf16.mxu0 %v4986
      %6047 = vmatpush1.bf16.msra.mxu0 %v4985
      %6048 = vmatprep.subr.bf16.mxu0 %v4994
      %6049 = vmatpush1.bf16.msra.mxu0 %v4993
      %6050 = vmatprep.subr.bf16.mxu0 %v5002
      %6051 = vmatpush1.bf16.msra.mxu0 %v5001
      %6052 = vmatprep.subr.bf16.mxu0 %v5010
      %6053 = vmatpush1.bf16.msra.mxu0 %v5009
      %6054 = vmatprep.subr.bf16.mxu0 %v5018
      %6055 = vmatpush1.bf16.msra.mxu0 %v5017
      %6056 = vmatprep.subr.bf16.mxu0 %v5026
      %6057 = vmatpush1.bf16.msra.mxu0 %v5025
      %6058 = vmatprep.subr.bf16.mxu0 %v5034
      %6059 = vmatpush1.bf16.msra.mxu0 %v5033
      %6060 = vmatprep.subr.bf16.mxu0 %v5042
      %6061 = vmatpush1.bf16.msra.mxu0 %v5041
      %6062 = vmatprep.subr.bf16.mxu0 %v5050
      %6063 = vmatpush1.bf16.msra.mxu0 %v5049
      %6064 = vmatprep.subr.bf16.mxu0 %v5058
      %6065 = vmatpush1.bf16.msra.mxu0 %v5057
      %6066 = vmatprep.subr.bf16.mxu0 %v5066
      %6067 = vmatpush1.bf16.msra.mxu0 %v5065
      %6068 = vmatprep.subr.bf16.mxu0 %v5074
      %6069 = vmatpush1.bf16.msra.mxu0 %v5073
      %6070 = vmatprep.mubr.bf16.mxu0 %v5396
      %6071 = vmatmul.mubr.bf16.gmra.mrb[0].mxu0 %v5395
      %v6072 = vpop.f32.mrb[0].mxu0
      %v6073 = vadd.f32 %v5142, %v6072
      %v6074 = vpop.f32.mrb[0].mxu0
      %v6075 = vadd.f32 %v5142, %v6074
      %v6076 = vpop.f32.mrb[0].mxu0
      %v6077 = vadd.f32 %v5147, %v6076
      %v6078 = vpop.f32.mrb[0].mxu0
      %v6079 = vadd.f32 %v5147, %v6078
      %6080 = vmatprep.mubr.bf16.mxu0 %v5398
      %6081 = vmatmul.mubr.bf16.gmra.mrb[0].mxu0 %v5397
      %v6082 = vpop.f32.mrb[0].mxu0
      %v6083 = vadd.f32 %v5152, %v6082
      %v6084 = vpop.f32.mrb[0].mxu0
      %v6085 = vadd.f32 %v5152, %v6084
      %v6086 = vpop.f32.mrb[0].mxu0
      %v6087 = vadd.f32 %v5157, %v6086
      %v6088 = vpop.f32.mrb[0].mxu0
      %v6089 = vadd.f32 %v5157, %v6088
      %6090 = vmatprep.mubr.bf16.mxu0 %v5400
      %6091 = vmatmul.mubr.bf16.gmra.mrb[0].mxu0 %v5399
      %v6092 = vpop.f32.mrb[0].mxu0
      %v6093 = vadd.f32 %v5162, %v6092
      %v6094 = vpop.f32.mrb[0].mxu0
      %v6095 = vadd.f32 %v5162, %v6094
      %v6096 = vpop.f32.mrb[0].mxu0
      %v6097 = vadd.f32 %v5167, %v6096
      %v6098 = vpop.f32.mrb[0].mxu0
      %v6099 = vadd.f32 %v5167, %v6098
      %6100 = vmatprep.mubr.bf16.mxu0 %v5402
      %6101 = vmatmul.mubr.bf16.gmra.mrb[0].mxu0 %v5401
      %v6102 = vpop.f32.mrb[0].mxu0
      %v6103 = vadd.f32 %v5172, %v6102
      %v6104 = vpop.f32.mrb[0].mxu0
      %v6105 = vadd.f32 %v5172, %v6104
      %v6106 = vpop.f32.mrb[0].mxu0
      %v6107 = vadd.f32 %v5177, %v6106
      %v6108 = vpop.f32.mrb[0].mxu0
      %v6109 = vadd.f32 %v5177, %v6108
      %6110 = vmatprep.mubr.bf16.mxu0 %v5404
      %6111 = vmatmul.mubr.bf16.gmra.mrb[0].mxu0 %v5403
      %v6112 = vpop.f32.mrb[0].mxu0
      %v6113 = vadd.f32 %v5182, %v6112
      %v6114 = vpop.f32.mrb[0].mxu0
      %v6115 = vadd.f32 %v5182, %v6114
      %v6116 = vpop.f32.mrb[0].mxu0
      %v6117 = vadd.f32 %v5187, %v6116
      %v6118 = vpop.f32.mrb[0].mxu0
      %v6119 = vadd.f32 %v5187, %v6118
      %6120 = vmatprep.mubr.bf16.mxu0 %v5406
      %6121 = vmatmul.mubr.bf16.gmra.mrb[0].mxu0 %v5405
      %v6122 = vpop.f32.mrb[0].mxu0
      %v6123 = vadd.f32 %v5192, %v6122
      %v6124 = vpop.f32.mrb[0].mxu0
      %v6125 = vadd.f32 %v5192, %v6124
      %v6126 = vpop.f32.mrb[0].mxu0
      %v6127 = vadd.f32 %v5197, %v6126
      %v6128 = vpop.f32.mrb[0].mxu0
      %v6129 = vadd.f32 %v5197, %v6128
      %6130 = vmatprep.mubr.bf16.mxu0 %v5408
      %6131 = vmatmul.mubr.bf16.gmra.mrb[0].mxu0 %v5407
      %v6132 = vpop.f32.mrb[0].mxu0
      %v6133 = vadd.f32 %v5202, %v6132
      %v6134 = vpop.f32.mrb[0].mxu0
      %v6135 = vadd.f32 %v5202, %v6134
      %v6136 = vpop.f32.mrb[0].mxu0
      %v6137 = vadd.f32 %v5207, %v6136
      %v6138 = vpop.f32.mrb[0].mxu0
      %v6139 = vadd.f32 %v5207, %v6138
      %6140 = vmatprep.mubr.bf16.mxu0 %v5410
      %6141 = vmatmul.mubr.bf16.gmra.mrb[0].mxu0 %v5409
      %v6142 = vpop.f32.mrb[0].mxu0
      %v6143 = vadd.f32 %v5212, %v6142
      %v6144 = vpop.f32.mrb[0].mxu0
      %v6145 = vadd.f32 %v5212, %v6144
      %v6146 = vpop.f32.mrb[0].mxu0
      %v6147 = vadd.f32 %v5217, %v6146
      %v6148 = vpop.f32.mrb[0].mxu0
      %v6149 = vadd.f32 %v5217, %v6148
      %6150 = vmatprep.mubr.bf16.mxu0 %v5412
      %6151 = vmatmul.mubr.bf16.gmra.mrb[0].mxu0 %v5411
      %v6152 = vpop.f32.mrb[0].mxu0
      %v6153 = vadd.f32 %v5222, %v6152
      %v6154 = vpop.f32.mrb[0].mxu0
      %v6155 = vadd.f32 %v5222, %v6154
      %v6156 = vpop.f32.mrb[0].mxu0
      %v6157 = vadd.f32 %v5227, %v6156
      %v6158 = vpop.f32.mrb[0].mxu0
      %v6159 = vadd.f32 %v5227, %v6158
      %6160 = vmatprep.mubr.bf16.mxu0 %v5414
      %6161 = vmatmul.mubr.bf16.gmra.mrb[0].mxu0 %v5413
      %v6162 = vpop.f32.mrb[0].mxu0
      %v6163 = vadd.f32 %v5232, %v6162
      %v6164 = vpop.f32.mrb[0].mxu0
      %v6165 = vadd.f32 %v5232, %v6164
      %v6166 = vpop.f32.mrb[0].mxu0
      %v6167 = vadd.f32 %v5237, %v6166
      %v6168 = vpop.f32.mrb[0].mxu0
      %v6169 = vadd.f32 %v5237, %v6168
      %6170 = vmatprep.mubr.bf16.mxu0 %v5416
      %6171 = vmatmul.mubr.bf16.gmra.mrb[0].mxu0 %v5415
      %v6172 = vpop.f32.mrb[0].mxu0
      %v6173 = vadd.f32 %v5242, %v6172
      %v6174 = vpop.f32.mrb[0].mxu0
      %v6175 = vadd.f32 %v5242, %v6174
      %v6176 = vpop.f32.mrb[0].mxu0
      %v6177 = vadd.f32 %v5247, %v6176
      %v6178 = vpop.f32.mrb[0].mxu0
      %v6179 = vadd.f32 %v5247, %v6178
      %6180 = vmatprep.mubr.bf16.mxu0 %v5418
      %6181 = vmatmul.mubr.bf16.gmra.mrb[0].mxu0 %v5417
      %v6182 = vpop.f32.mrb[0].mxu0
      %v6183 = vadd.f32 %v5252, %v6182
      %v6184 = vpop.f32.mrb[0].mxu0
      %v6185 = vadd.f32 %v5252, %v6184
      %v6186 = vpop.f32.mrb[0].mxu0
      %v6187 = vadd.f32 %v5257, %v6186
      %v6188 = vpop.f32.mrb[0].mxu0
      %v6189 = vadd.f32 %v5257, %v6188
      %6190 = vmatprep.mubr.bf16.mxu0 %v5420
      %6191 = vmatmul.mubr.bf16.gmra.mrb[0].mxu0 %v5419
      %v6192 = vpop.f32.mrb[0].mxu0
      %v6193 = vadd.f32 %v5262, %v6192
      %v6194 = vpop.f32.mrb[0].mxu0
      %v6195 = vadd.f32 %v5262, %v6194
      %v6196 = vpop.f32.mrb[0].mxu0
      %v6197 = vadd.f32 %v5267, %v6196
      %v6198 = vpop.f32.mrb[0].mxu0
      %v6199 = vadd.f32 %v5267, %v6198
      %6200 = vmatprep.mubr.bf16.mxu0 %v5422
      %6201 = vmatmul.mubr.bf16.gmra.mrb[0].mxu0 %v5421
      %v6202 = vpop.f32.mrb[0].mxu0
      %v6203 = vadd.f32 %v5272, %v6202
      %v6204 = vpop.f32.mrb[0].mxu0
      %v6205 = vadd.f32 %v5272, %v6204
      %v6206 = vpop.f32.mrb[0].mxu0
      %v6207 = vadd.f32 %v5277, %v6206
      %v6208 = vpop.f32.mrb[0].mxu0
      %v6209 = vadd.f32 %v5277, %v6208
      %6210 = vmatprep.mubr.bf16.mxu0 %v5424
      %6211 = vmatmul.mubr.bf16.gmra.mrb[0].mxu0 %v5423
      %v6212 = vpop.f32.mrb[0].mxu0
      %v6213 = vadd.f32 %v5282, %v6212
      %v6214 = vpop.f32.mrb[0].mxu0
      %v6215 = vadd.f32 %v5282, %v6214
      %v6216 = vpop.f32.mrb[0].mxu0
      %v6217 = vadd.f32 %v5287, %v6216
      %v6218 = vpop.f32.mrb[0].mxu0
      %v6219 = vadd.f32 %v5287, %v6218
      %6220 = vmatprep.mubr.bf16.mxu0 %v5426
      %6221 = vmatmul.mubr.bf16.gmra.mrb[0].mxu0 %v5425
      %v6222 = vpop.f32.mrb[0].mxu0
      %v6223 = vadd.f32 %v5292, %v6222
      %v6224 = vpop.f32.mrb[0].mxu0
      %v6225 = vadd.f32 %v5292, %v6224
      %v6226 = vpop.f32.mrb[0].mxu0
      %v6227 = vadd.f32 %v5297, %v6226
      %v6228 = vpop.f32.mrb[0].mxu0
      %v6229 = vadd.f32 %v5297, %v6228
      %6230 = vdwg.mxu0
      %v6231 = vmax.f32 %v5494, 0.0
      %v6232 = vmax.f32 %v5496, 0.0
      %v6233 = vmax.f32 %v5687, 0.0
      %v6234 = vmax.f32 %v5689, 0.0
      %v6235 = vmax.f32 %v5880, 0.0
      %v6236 = vmax.f32 %v5882, 0.0
      %v6237 = vmax.f32 %v6073, 0.0
      %v6238 = vmax.f32 %v6075, 0.0
      %v6239 = vmax.f32 %v5498, 0.0
      %v6240 = vmax.f32 %v5500, 0.0
      %v6241 = vmax.f32 %v5691, 0.0
      %v6242 = vmax.f32 %v5693, 0.0
      %v6243 = vmax.f32 %v5884, 0.0
      %v6244 = vmax.f32 %v5886, 0.0
      %v6245 = vmax.f32 %v6077, 0.0
      %v6246 = vmax.f32 %v6079, 0.0
      %v6247 = vmax.f32 %v5504, 0.0
      %v6248 = vmax.f32 %v5506, 0.0
      %v6249 = vmax.f32 %v5697, 0.0
      %v6250 = vmax.f32 %v5699, 0.0
      %v6251 = vmax.f32 %v5890, 0.0
      %v6252 = vmax.f32 %v5892, 0.0
      %v6253 = vmax.f32 %v6083, 0.0
      %v6254 = vmax.f32 %v6085, 0.0
      %v6255 = vmax.f32 %v5508, 0.0
      %v6256 = vmax.f32 %v5510, 0.0
      %v6257 = vmax.f32 %v5701, 0.0
      %v6258 = vmax.f32 %v5703, 0.0
      %v6259 = vmax.f32 %v5894, 0.0
      %v6260 = vmax.f32 %v5896, 0.0
      %v6261 = vmax.f32 %v6087, 0.0
      %v6262 = vmax.f32 %v6089, 0.0
      %v6263 = vmax.f32 %v5514, 0.0
      %v6264 = vmax.f32 %v5516, 0.0
      %v6265 = vmax.f32 %v5707, 0.0
      %v6266 = vmax.f32 %v5709, 0.0
      %v6267 = vmax.f32 %v5900, 0.0
      %v6268 = vmax.f32 %v5902, 0.0
      %v6269 = vmax.f32 %v6093, 0.0
      %v6270 = vmax.f32 %v6095, 0.0
      %v6271 = vmax.f32 %v5518, 0.0
      %v6272 = vmax.f32 %v5520, 0.0
      %v6273 = vmax.f32 %v5711, 0.0
      %v6274 = vmax.f32 %v5713, 0.0
      %v6275 = vmax.f32 %v5904, 0.0
      %v6276 = vmax.f32 %v5906, 0.0
      %v6277 = vmax.f32 %v6097, 0.0
      %v6278 = vmax.f32 %v6099, 0.0
      %v6279 = vmax.f32 %v5524, 0.0
      %v6280 = vmax.f32 %v5526, 0.0
      %v6281 = vmax.f32 %v5717, 0.0
      %v6282 = vmax.f32 %v5719, 0.0
      %v6283 = vmax.f32 %v5910, 0.0
      %v6284 = vmax.f32 %v5912, 0.0
      %v6285 = vmax.f32 %v6103, 0.0
      %v6286 = vmax.f32 %v6105, 0.0
      %v6287 = vmax.f32 %v5528, 0.0
      %v6288 = vmax.f32 %v5530, 0.0
      %v6289 = vmax.f32 %v5721, 0.0
      %v6290 = vmax.f32 %v5723, 0.0
      %v6291 = vmax.f32 %v5914, 0.0
      %v6292 = vmax.f32 %v5916, 0.0
      %v6293 = vmax.f32 %v6107, 0.0
      %v6294 = vmax.f32 %v6109, 0.0
      %v6295 = vmax.f32 %v5534, 0.0
      %v6296 = vmax.f32 %v5536, 0.0
      %v6297 = vmax.f32 %v5727, 0.0
      %v6298 = vmax.f32 %v5729, 0.0
      %v6299 = vmax.f32 %v5920, 0.0
      %v6300 = vmax.f32 %v5922, 0.0
      %v6301 = vmax.f32 %v6113, 0.0
      %v6302 = vmax.f32 %v6115, 0.0
      %v6303 = vmax.f32 %v5538, 0.0
      %v6304 = vmax.f32 %v5540, 0.0
      %v6305 = vmax.f32 %v5731, 0.0
      %v6306 = vmax.f32 %v5733, 0.0
      %v6307 = vmax.f32 %v5924, 0.0
      %v6308 = vmax.f32 %v5926, 0.0
      %v6309 = vmax.f32 %v6117, 0.0
      %v6310 = vmax.f32 %v6119, 0.0
      %v6311 = vmax.f32 %v5544, 0.0
      %v6312 = vmax.f32 %v5546, 0.0
      %v6313 = vmax.f32 %v5737, 0.0
      %v6314 = vmax.f32 %v5739, 0.0
      %v6315 = vmax.f32 %v5930, 0.0
      %v6316 = vmax.f32 %v5932, 0.0
      %v6317 = vmax.f32 %v6123, 0.0
      %v6318 = vmax.f32 %v6125, 0.0
      %v6319 = vmax.f32 %v5548, 0.0
      %v6320 = vmax.f32 %v5550, 0.0
      %v6321 = vmax.f32 %v5741, 0.0
      %v6322 = vmax.f32 %v5743, 0.0
      %v6323 = vmax.f32 %v5934, 0.0
      %v6324 = vmax.f32 %v5936, 0.0
      %v6325 = vmax.f32 %v6127, 0.0
      %v6326 = vmax.f32 %v6129, 0.0
      %v6327 = vmax.f32 %v5554, 0.0
      %v6328 = vmax.f32 %v5556, 0.0
      %v6329 = vmax.f32 %v5747, 0.0
      %v6330 = vmax.f32 %v5749, 0.0
      %v6331 = vmax.f32 %v5940, 0.0
      %v6332 = vmax.f32 %v5942, 0.0
      %v6333 = vmax.f32 %v6133, 0.0
      %v6334 = vmax.f32 %v6135, 0.0
      %v6335 = vmax.f32 %v5558, 0.0
      %v6336 = vmax.f32 %v5560, 0.0
      %v6337 = vmax.f32 %v5751, 0.0
      %v6338 = vmax.f32 %v5753, 0.0
      %v6339 = vmax.f32 %v5944, 0.0
      %v6340 = vmax.f32 %v5946, 0.0
      %v6341 = vmax.f32 %v6137, 0.0
      %v6342 = vmax.f32 %v6139, 0.0
      %v6343 = vmax.f32 %v5564, 0.0
      %v6344 = vmax.f32 %v5566, 0.0
      %v6345 = vmax.f32 %v5757, 0.0
      %v6346 = vmax.f32 %v5759, 0.0
      %v6347 = vmax.f32 %v5950, 0.0
      %v6348 = vmax.f32 %v5952, 0.0
      %v6349 = vmax.f32 %v6143, 0.0
      %v6350 = vmax.f32 %v6145, 0.0
      %v6351 = vmax.f32 %v5568, 0.0
      %v6352 = vmax.f32 %v5570, 0.0
      %v6353 = vmax.f32 %v5761, 0.0
      %v6354 = vmax.f32 %v5763, 0.0
      %v6355 = vmax.f32 %v5954, 0.0
      %v6356 = vmax.f32 %v5956, 0.0
      %v6357 = vmax.f32 %v6147, 0.0
      %v6358 = vmax.f32 %v6149, 0.0
      %v6359 = vmax.f32 %v5574, 0.0
      %v6360 = vmax.f32 %v5576, 0.0
      %v6361 = vmax.f32 %v5767, 0.0
      %v6362 = vmax.f32 %v5769, 0.0
      %v6363 = vmax.f32 %v5960, 0.0
      %v6364 = vmax.f32 %v5962, 0.0
      %v6365 = vmax.f32 %v6153, 0.0
      %v6366 = vmax.f32 %v6155, 0.0
      %v6367 = vmax.f32 %v5578, 0.0
      %v6368 = vmax.f32 %v5580, 0.0
      %v6369 = vmax.f32 %v5771, 0.0
      %v6370 = vmax.f32 %v5773, 0.0
      %v6371 = vmax.f32 %v5964, 0.0
      %v6372 = vmax.f32 %v5966, 0.0
      %v6373 = vmax.f32 %v6157, 0.0
      %v6374 = vmax.f32 %v6159, 0.0
      %v6375 = vmax.f32 %v5584, 0.0
      %v6376 = vmax.f32 %v5586, 0.0
      %v6377 = vmax.f32 %v5777, 0.0
      %v6378 = vmax.f32 %v5779, 0.0
      %v6379 = vmax.f32 %v5970, 0.0
      %v6380 = vmax.f32 %v5972, 0.0
      %v6381 = vmax.f32 %v6163, 0.0
      %v6382 = vmax.f32 %v6165, 0.0
      %v6383 = vmax.f32 %v5588, 0.0
      %v6384 = vmax.f32 %v5590, 0.0
      %v6385 = vmax.f32 %v5781, 0.0
      %v6386 = vmax.f32 %v5783, 0.0
      %v6387 = vmax.f32 %v5974, 0.0
      %v6388 = vmax.f32 %v5976, 0.0
      %v6389 = vmax.f32 %v6167, 0.0
      %v6390 = vmax.f32 %v6169, 0.0
      %v6391 = vmax.f32 %v5594, 0.0
      %v6392 = vmax.f32 %v5596, 0.0
      %v6393 = vmax.f32 %v5787, 0.0
      %v6394 = vmax.f32 %v5789, 0.0
      %v6395 = vmax.f32 %v5980, 0.0
      %v6396 = vmax.f32 %v5982, 0.0
      %v6397 = vmax.f32 %v6173, 0.0
      %v6398 = vmax.f32 %v6175, 0.0
      %v6399 = vmax.f32 %v5598, 0.0
      %v6400 = vmax.f32 %v5600, 0.0
      %v6401 = vmax.f32 %v5791, 0.0
      %v6402 = vmax.f32 %v5793, 0.0
      %v6403 = vmax.f32 %v5984, 0.0
      %v6404 = vmax.f32 %v5986, 0.0
      %v6405 = vmax.f32 %v6177, 0.0
      %v6406 = vmax.f32 %v6179, 0.0
      %v6407 = vmax.f32 %v5604, 0.0
      %v6408 = vmax.f32 %v5606, 0.0
      %v6409 = vmax.f32 %v5797, 0.0
      %v6410 = vmax.f32 %v5799, 0.0
      %v6411 = vmax.f32 %v5990, 0.0
      %v6412 = vmax.f32 %v5992, 0.0
      %v6413 = vmax.f32 %v6183, 0.0
      %v6414 = vmax.f32 %v6185, 0.0
      %v6415 = vmax.f32 %v5608, 0.0
      %v6416 = vmax.f32 %v5610, 0.0
      %v6417 = vmax.f32 %v5801, 0.0
      %v6418 = vmax.f32 %v5803, 0.0
      %v6419 = vmax.f32 %v5994, 0.0
      %v6420 = vmax.f32 %v5996, 0.0
      %v6421 = vmax.f32 %v6187, 0.0
      %v6422 = vmax.f32 %v6189, 0.0
      %v6423 = vmax.f32 %v5614, 0.0
      %v6424 = vmax.f32 %v5616, 0.0
      %v6425 = vmax.f32 %v5807, 0.0
      %v6426 = vmax.f32 %v5809, 0.0
      %v6427 = vmax.f32 %v6000, 0.0
      %v6428 = vmax.f32 %v6002, 0.0
      %v6429 = vmax.f32 %v6193, 0.0
      %v6430 = vmax.f32 %v6195, 0.0
      %v6431 = vmax.f32 %v5618, 0.0
      %v6432 = vmax.f32 %v5620, 0.0
      %v6433 = vmax.f32 %v5811, 0.0
      %v6434 = vmax.f32 %v5813, 0.0
      %v6435 = vmax.f32 %v6004, 0.0
      %v6436 = vmax.f32 %v6006, 0.0
      %v6437 = vmax.f32 %v6197, 0.0
      %v6438 = vmax.f32 %v6199, 0.0
      %v6439 = vmax.f32 %v5624, 0.0
      %v6440 = vmax.f32 %v5626, 0.0
      %v6441 = vmax.f32 %v5817, 0.0
      %v6442 = vmax.f32 %v5819, 0.0
      %v6443 = vmax.f32 %v6010, 0.0
      %v6444 = vmax.f32 %v6012, 0.0
      %v6445 = vmax.f32 %v6203, 0.0
      %v6446 = vmax.f32 %v6205, 0.0
      %v6447 = vmax.f32 %v5628, 0.0
      %v6448 = vmax.f32 %v5630, 0.0
      %v6449 = vmax.f32 %v5821, 0.0
      %v6450 = vmax.f32 %v5823, 0.0
      %v6451 = vmax.f32 %v6014, 0.0
      %v6452 = vmax.f32 %v6016, 0.0
      %v6453 = vmax.f32 %v6207, 0.0
      %v6454 = vmax.f32 %v6209, 0.0
      %v6455 = vmax.f32 %v5634, 0.0
      %v6456 = vmax.f32 %v5636, 0.0
      %v6457 = vmax.f32 %v5827, 0.0
      %v6458 = vmax.f32 %v5829, 0.0
      %v6459 = vmax.f32 %v6020, 0.0
      %v6460 = vmax.f32 %v6022, 0.0
      %v6461 = vmax.f32 %v6213, 0.0
      %v6462 = vmax.f32 %v6215, 0.0
      %v6463 = vmax.f32 %v5638, 0.0
      %v6464 = vmax.f32 %v5640, 0.0
      %v6465 = vmax.f32 %v5831, 0.0
      %v6466 = vmax.f32 %v5833, 0.0
      %v6467 = vmax.f32 %v6024, 0.0
      %v6468 = vmax.f32 %v6026, 0.0
      %v6469 = vmax.f32 %v6217, 0.0
      %v6470 = vmax.f32 %v6219, 0.0
      %v6471 = vmax.f32 %v5644, 0.0
      %v6472 = vmax.f32 %v5646, 0.0
      %v6473 = vmax.f32 %v5837, 0.0
      %v6474 = vmax.f32 %v5839, 0.0
      %v6475 = vmax.f32 %v6030, 0.0
      %v6476 = vmax.f32 %v6032, 0.0
      %v6477 = vmax.f32 %v6223, 0.0
      %v6478 = vmax.f32 %v6225, 0.0
      %v6479 = vmax.f32 %v5648, 0.0
      %v6480 = vmax.f32 %v5650, 0.0
      %v6481 = vmax.f32 %v5841, 0.0
      %v6482 = vmax.f32 %v5843, 0.0
      %v6483 = vmax.f32 %v6034, 0.0
      %v6484 = vmax.f32 %v6036, 0.0
      %v6485 = vmax.f32 %v6227, 0.0
      %v6486 = vmax.f32 %v6229, 0.0
      %v6487 = vpack.c.bf16 %v6239, %v6231
      %v6488 = vpack.c.bf16 %v6240, %v6232
      %v6489 = vpack.c.bf16 %v6241, %v6233
      %v6490 = vpack.c.bf16 %v6242, %v6234
      %v6491 = vpack.c.bf16 %v6243, %v6235
      %v6492 = vpack.c.bf16 %v6244, %v6236
      %v6493 = vpack.c.bf16 %v6245, %v6237
      %v6494 = vpack.c.bf16 %v6246, %v6238
      %v6495 = vpack.c.bf16 %v6255, %v6247
      %v6496 = vpack.c.bf16 %v6256, %v6248
      %v6497 = vpack.c.bf16 %v6257, %v6249
      %v6498 = vpack.c.bf16 %v6258, %v6250
      %v6499 = vpack.c.bf16 %v6259, %v6251
      %v6500 = vpack.c.bf16 %v6260, %v6252
      %v6501 = vpack.c.bf16 %v6261, %v6253
      %v6502 = vpack.c.bf16 %v6262, %v6254
      %v6503 = vpack.c.bf16 %v6271, %v6263
      %v6504 = vpack.c.bf16 %v6272, %v6264
      %v6505 = vpack.c.bf16 %v6273, %v6265
      %v6506 = vpack.c.bf16 %v6274, %v6266
      %v6507 = vpack.c.bf16 %v6275, %v6267
      %v6508 = vpack.c.bf16 %v6276, %v6268
      %v6509 = vpack.c.bf16 %v6277, %v6269
      %v6510 = vpack.c.bf16 %v6278, %v6270
      %v6511 = vpack.c.bf16 %v6287, %v6279
      %v6512 = vpack.c.bf16 %v6288, %v6280
      %v6513 = vpack.c.bf16 %v6289, %v6281
      %v6514 = vpack.c.bf16 %v6290, %v6282
      %v6515 = vpack.c.bf16 %v6291, %v6283
      %v6516 = vpack.c.bf16 %v6292, %v6284
      %v6517 = vpack.c.bf16 %v6293, %v6285
      %v6518 = vpack.c.bf16 %v6294, %v6286
      %v6519 = vpack.c.bf16 %v6303, %v6295
      %v6520 = vpack.c.bf16 %v6304, %v6296
      %v6521 = vpack.c.bf16 %v6305, %v6297
      %v6522 = vpack.c.bf16 %v6306, %v6298
      %v6523 = vpack.c.bf16 %v6307, %v6299
      %v6524 = vpack.c.bf16 %v6308, %v6300
      %v6525 = vpack.c.bf16 %v6309, %v6301
      %v6526 = vpack.c.bf16 %v6310, %v6302
      %v6527 = vpack.c.bf16 %v6319, %v6311
      %v6528 = vpack.c.bf16 %v6320, %v6312
      %v6529 = vpack.c.bf16 %v6321, %v6313
      %v6530 = vpack.c.bf16 %v6322, %v6314
      %v6531 = vpack.c.bf16 %v6323, %v6315
      %v6532 = vpack.c.bf16 %v6324, %v6316
      %v6533 = vpack.c.bf16 %v6325, %v6317
      %v6534 = vpack.c.bf16 %v6326, %v6318
      %v6535 = vpack.c.bf16 %v6335, %v6327
      %v6536 = vpack.c.bf16 %v6336, %v6328
      %v6537 = vpack.c.bf16 %v6337, %v6329
      %v6538 = vpack.c.bf16 %v6338, %v6330
      %v6539 = vpack.c.bf16 %v6339, %v6331
      %v6540 = vpack.c.bf16 %v6340, %v6332
      %v6541 = vpack.c.bf16 %v6341, %v6333
      %v6542 = vpack.c.bf16 %v6342, %v6334
      %v6543 = vpack.c.bf16 %v6351, %v6343
      %v6544 = vpack.c.bf16 %v6352, %v6344
      %v6545 = vpack.c.bf16 %v6353, %v6345
      %v6546 = vpack.c.bf16 %v6354, %v6346
      %v6547 = vpack.c.bf16 %v6355, %v6347
      %v6548 = vpack.c.bf16 %v6356, %v6348
      %v6549 = vpack.c.bf16 %v6357, %v6349
      %v6550 = vpack.c.bf16 %v6358, %v6350
      %v6551 = vpack.c.bf16 %v6367, %v6359
      %v6552 = vpack.c.bf16 %v6368, %v6360
      %v6553 = vpack.c.bf16 %v6369, %v6361
      %v6554 = vpack.c.bf16 %v6370, %v6362
      %v6555 = vpack.c.bf16 %v6371, %v6363
      %v6556 = vpack.c.bf16 %v6372, %v6364
      %v6557 = vpack.c.bf16 %v6373, %v6365
      %v6558 = vpack.c.bf16 %v6374, %v6366
      %v6559 = vpack.c.bf16 %v6383, %v6375
      %v6560 = vpack.c.bf16 %v6384, %v6376
      %v6561 = vpack.c.bf16 %v6385, %v6377
      %v6562 = vpack.c.bf16 %v6386, %v6378
      %v6563 = vpack.c.bf16 %v6387, %v6379
      %v6564 = vpack.c.bf16 %v6388, %v6380
      %v6565 = vpack.c.bf16 %v6389, %v6381
      %v6566 = vpack.c.bf16 %v6390, %v6382
      %v6567 = vpack.c.bf16 %v6399, %v6391
      %v6568 = vpack.c.bf16 %v6400, %v6392
      %v6569 = vpack.c.bf16 %v6401, %v6393
      %v6570 = vpack.c.bf16 %v6402, %v6394
      %v6571 = vpack.c.bf16 %v6403, %v6395
      %v6572 = vpack.c.bf16 %v6404, %v6396
      %v6573 = vpack.c.bf16 %v6405, %v6397
      %v6574 = vpack.c.bf16 %v6406, %v6398
      %v6575 = vpack.c.bf16 %v6415, %v6407
      %v6576 = vpack.c.bf16 %v6416, %v6408
      %v6577 = vpack.c.bf16 %v6417, %v6409
      %v6578 = vpack.c.bf16 %v6418, %v6410
      %v6579 = vpack.c.bf16 %v6419, %v6411
      %v6580 = vpack.c.bf16 %v6420, %v6412
      %v6581 = vpack.c.bf16 %v6421, %v6413
      %v6582 = vpack.c.bf16 %v6422, %v6414
      %v6583 = vpack.c.bf16 %v6431, %v6423
      %v6584 = vpack.c.bf16 %v6432, %v6424
      %v6585 = vpack.c.bf16 %v6433, %v6425
      %v6586 = vpack.c.bf16 %v6434, %v6426
      %v6587 = vpack.c.bf16 %v6435, %v6427
      %v6588 = vpack.c.bf16 %v6436, %v6428
      %v6589 = vpack.c.bf16 %v6437, %v6429
      %v6590 = vpack.c.bf16 %v6438, %v6430
      %v6591 = vpack.c.bf16 %v6447, %v6439
      %v6592 = vpack.c.bf16 %v6448, %v6440
      %v6593 = vpack.c.bf16 %v6449, %v6441
      %v6594 = vpack.c.bf16 %v6450, %v6442
      %v6595 = vpack.c.bf16 %v6451, %v6443
      %v6596 = vpack.c.bf16 %v6452, %v6444
      %v6597 = vpack.c.bf16 %v6453, %v6445
      %v6598 = vpack.c.bf16 %v6454, %v6446
      %v6599 = vpack.c.bf16 %v6463, %v6455
      %v6600 = vpack.c.bf16 %v6464, %v6456
      %v6601 = vpack.c.bf16 %v6465, %v6457
      %v6602 = vpack.c.bf16 %v6466, %v6458
      %v6603 = vpack.c.bf16 %v6467, %v6459
      %v6604 = vpack.c.bf16 %v6468, %v6460
      %v6605 = vpack.c.bf16 %v6469, %v6461
      %v6606 = vpack.c.bf16 %v6470, %v6462
      %v6607 = vpack.c.bf16 %v6479, %v6471
      %v6608 = vpack.c.bf16 %v6480, %v6472
      %v6609 = vpack.c.bf16 %v6481, %v6473
      %v6610 = vpack.c.bf16 %v6482, %v6474
      %v6611 = vpack.c.bf16 %v6483, %v6475
      %v6612 = vpack.c.bf16 %v6484, %v6476
      %v6613 = vpack.c.bf16 %v6485, %v6477
      %v6614 = vpack.c.bf16 %v6486, %v6478
      %v6615 = vld [vmem:[%s9] sm:$0xff]
      %v6616 = vld [vmem:[%s9 + $0x8] sm:$0xff]
      %v6617 = vld [vmem:[%s9 + $0x10] sm:$0xff]
      %v6618 = vld [vmem:[%s9 + $0x18] sm:$0xff]
      %v6619 = vld [vmem:[%s9 + $0x20] sm:$0xff]
      %v6620 = vld [vmem:[%s9 + $0x28] sm:$0xff]
      %v6621 = vld [vmem:[%s9 + $0x30] sm:$0xff]
      %v6622 = vld [vmem:[%s9 + $0x38] sm:$0xff]
      %v6623 = vld [vmem:[%s9 + $0x40] sm:$0xff]
      %v6624 = vld [vmem:[%s9 + $0x48] sm:$0xff]
      %v6625 = vld [vmem:[%s9 + $0x50] sm:$0xff]
      %v6626 = vld [vmem:[%s9 + $0x58] sm:$0xff]
      %v6627 = vld [vmem:[%s9 + $0x60] sm:$0xff]
      %v6628 = vld [vmem:[%s9 + $0x68] sm:$0xff]
      %v6629 = vld [vmem:[%s9 + $0x70] sm:$0xff]
      %v6630 = vld [vmem:[%s9 + $0x78] sm:$0xff]
      %v6631 = vld [vmem:[%s9 + $0x80] sm:$0xff]
      %v6632 = vld [vmem:[%s9 + $0x88] sm:$0xff]
      %v6633 = vld [vmem:[%s9 + $0x90] sm:$0xff]
      %v6634 = vld [vmem:[%s9 + $0x98] sm:$0xff]
      %v6635 = vld [vmem:[%s9 + $0xa0] sm:$0xff]
      %v6636 = vld [vmem:[%s9 + $0xa8] sm:$0xff]
      %v6637 = vld [vmem:[%s9 + $0xb0] sm:$0xff]
      %v6638 = vld [vmem:[%s9 + $0xb8] sm:$0xff]
      %v6639 = vld [vmem:[%s9 + $0xc0] sm:$0xff]
      %v6640 = vld [vmem:[%s9 + $0xc8] sm:$0xff]
      %v6641 = vld [vmem:[%s9 + $0xd0] sm:$0xff]
      %v6642 = vld [vmem:[%s9 + $0xd8] sm:$0xff]
      %v6643 = vld [vmem:[%s9 + $0xe0] sm:$0xff]
      %v6644 = vld [vmem:[%s9 + $0xe8] sm:$0xff]
      %v6645 = vld [vmem:[%s9 + $0xf0] sm:$0xff]
      %v6646 = vld [vmem:[%s9 + $0xf8] sm:$0xff]
      %v6647 = vld [vmem:[%s10] sm:$0xff]
      %v6648 = vld [vmem:[%s10 + $0x8] sm:$0xff]
      %v6649 = vld [vmem:[%s10 + $0x10] sm:$0xff]
      %v6650 = vld [vmem:[%s10 + $0x18] sm:$0xff]
      %v6651 = vld [vmem:[%s10 + $0x20] sm:$0xff]
      %v6652 = vld [vmem:[%s10 + $0x28] sm:$0xff]
      %v6653 = vld [vmem:[%s10 + $0x30] sm:$0xff]
      %v6654 = vld [vmem:[%s10 + $0x38] sm:$0xff]
      %v6655 = vld [vmem:[%s10 + $0x40] sm:$0xff]
      %v6656 = vld [vmem:[%s10 + $0x48] sm:$0xff]
      %v6657 = vld [vmem:[%s10 + $0x50] sm:$0xff]
      %v6658 = vld [vmem:[%s10 + $0x58] sm:$0xff]
      %v6659 = vld [vmem:[%s10 + $0x60] sm:$0xff]
      %v6660 = vld [vmem:[%s10 + $0x68] sm:$0xff]
      %v6661 = vld [vmem:[%s10 + $0x70] sm:$0xff]
      %v6662 = vld [vmem:[%s10 + $0x78] sm:$0xff]
      %v6663 = vld [vmem:[%s10 + $0x80] sm:$0xff]
      %v6664 = vld [vmem:[%s10 + $0x88] sm:$0xff]
      %v6665 = vld [vmem:[%s10 + $0x90] sm:$0xff]
      %v6666 = vld [vmem:[%s10 + $0x98] sm:$0xff]
      %v6667 = vld [vmem:[%s10 + $0xa0] sm:$0xff]
      %v6668 = vld [vmem:[%s10 + $0xa8] sm:$0xff]
      %v6669 = vld [vmem:[%s10 + $0xb0] sm:$0xff]
      %v6670 = vld [vmem:[%s10 + $0xb8] sm:$0xff]
      %v6671 = vld [vmem:[%s10 + $0xc0] sm:$0xff]
      %v6672 = vld [vmem:[%s10 + $0xc8] sm:$0xff]
      %v6673 = vld [vmem:[%s10 + $0xd0] sm:$0xff]
      %v6674 = vld [vmem:[%s10 + $0xd8] sm:$0xff]
      %v6675 = vld [vmem:[%s10 + $0xe0] sm:$0xff]
      %v6676 = vld [vmem:[%s10 + $0xe8] sm:$0xff]
      %v6677 = vld [vmem:[%s10 + $0xf0] sm:$0xff]
      %v6678 = vld [vmem:[%s10 + $0xf8] sm:$0xff]
      %6680 = vset.pattern.permute.xlu0 0
      %6681 = vperm.xlu0 %6680, %v6647
      %v6682 = vpop.permute.xlu0 %6681
      %6685 = vset.pattern.permute.xlu0 0
      %6686 = vperm.xlu0 %6685, %v6648
      %v6687 = vpop.permute.xlu0 %6686
      %6690 = vset.pattern.permute.xlu0 0
      %6691 = vperm.xlu0 %6690, %v6649
      %v6692 = vpop.permute.xlu0 %6691
      %6695 = vset.pattern.permute.xlu0 0
      %6696 = vperm.xlu0 %6695, %v6650
      %v6697 = vpop.permute.xlu0 %6696
      %6700 = vset.pattern.permute.xlu0 0
      %6701 = vperm.xlu0 %6700, %v6651
      %v6702 = vpop.permute.xlu0 %6701
      %6705 = vset.pattern.permute.xlu0 0
      %6706 = vperm.xlu0 %6705, %v6652
      %v6707 = vpop.permute.xlu0 %6706
      %6710 = vset.pattern.permute.xlu0 0
      %6711 = vperm.xlu0 %6710, %v6653
      %v6712 = vpop.permute.xlu0 %6711
      %6715 = vset.pattern.permute.xlu0 0
      %6716 = vperm.xlu0 %6715, %v6654
      %v6717 = vpop.permute.xlu0 %6716
      %6720 = vset.pattern.permute.xlu0 0
      %6721 = vperm.xlu0 %6720, %v6655
      %v6722 = vpop.permute.xlu0 %6721
      %6725 = vset.pattern.permute.xlu0 0
      %6726 = vperm.xlu0 %6725, %v6656
      %v6727 = vpop.permute.xlu0 %6726
      %6730 = vset.pattern.permute.xlu0 0
      %6731 = vperm.xlu0 %6730, %v6657
      %v6732 = vpop.permute.xlu0 %6731
      %6735 = vset.pattern.permute.xlu0 0
      %6736 = vperm.xlu0 %6735, %v6658
      %v6737 = vpop.permute.xlu0 %6736
      %6740 = vset.pattern.permute.xlu0 0
      %6741 = vperm.xlu0 %6740, %v6659
      %v6742 = vpop.permute.xlu0 %6741
      %6745 = vset.pattern.permute.xlu0 0
      %6746 = vperm.xlu0 %6745, %v6660
      %v6747 = vpop.permute.xlu0 %6746
      %6750 = vset.pattern.permute.xlu0 0
      %6751 = vperm.xlu0 %6750, %v6661
      %v6752 = vpop.permute.xlu0 %6751
      %6755 = vset.pattern.permute.xlu0 0
      %6756 = vperm.xlu0 %6755, %v6662
      %v6757 = vpop.permute.xlu0 %6756
      %6760 = vset.pattern.permute.xlu0 0
      %6761 = vperm.xlu0 %6760, %v6663
      %v6762 = vpop.permute.xlu0 %6761
      %6765 = vset.pattern.permute.xlu0 0
      %6766 = vperm.xlu0 %6765, %v6664
      %v6767 = vpop.permute.xlu0 %6766
      %6770 = vset.pattern.permute.xlu0 0
      %6771 = vperm.xlu0 %6770, %v6665
      %v6772 = vpop.permute.xlu0 %6771
      %6775 = vset.pattern.permute.xlu0 0
      %6776 = vperm.xlu0 %6775, %v6666
      %v6777 = vpop.permute.xlu0 %6776
      %6780 = vset.pattern.permute.xlu0 0
      %6781 = vperm.xlu0 %6780, %v6667
      %v6782 = vpop.permute.xlu0 %6781
      %6785 = vset.pattern.permute.xlu0 0
      %6786 = vperm.xlu0 %6785, %v6668
      %v6787 = vpop.permute.xlu0 %6786
      %6790 = vset.pattern.permute.xlu0 0
      %6791 = vperm.xlu0 %6790, %v6669
      %v6792 = vpop.permute.xlu0 %6791
      %6795 = vset.pattern.permute.xlu0 0
      %6796 = vperm.xlu0 %6795, %v6670
      %v6797 = vpop.permute.xlu0 %6796
      %6800 = vset.pattern.permute.xlu0 0
      %6801 = vperm.xlu0 %6800, %v6671
      %v6802 = vpop.permute.xlu0 %6801
      %6805 = vset.pattern.permute.xlu0 0
      %6806 = vperm.xlu0 %6805, %v6672
      %v6807 = vpop.permute.xlu0 %6806
      %6810 = vset.pattern.permute.xlu0 0
      %6811 = vperm.xlu0 %6810, %v6673
      %v6812 = vpop.permute.xlu0 %6811
      %6815 = vset.pattern.permute.xlu0 0
      %6816 = vperm.xlu0 %6815, %v6674
      %v6817 = vpop.permute.xlu0 %6816
      %6820 = vset.pattern.permute.xlu0 0
      %6821 = vperm.xlu0 %6820, %v6675
      %v6822 = vpop.permute.xlu0 %6821
      %6825 = vset.pattern.permute.xlu0 0
      %6826 = vperm.xlu0 %6825, %v6676
      %v6827 = vpop.permute.xlu0 %6826
      %6830 = vset.pattern.permute.xlu0 0
      %6831 = vperm.xlu0 %6830, %v6677
      %v6832 = vpop.permute.xlu0 %6831
      %6835 = vset.pattern.permute.xlu0 0
      %6836 = vperm.xlu0 %6835, %v6678
      %v6837 = vpop.permute.xlu0 %6836
      %v6871 = vunpack.c.l.b16 %v6615
      %v6872 = vunpack.c.h.b16 %v6615
      %v6873 = vunpack.c.l.b16 %v6616
      %v6874 = vunpack.c.h.b16 %v6616
      %v6875 = vunpack.c.l.b16 %v6617
      %v6876 = vunpack.c.h.b16 %v6617
      %v6877 = vunpack.c.l.b16 %v6618
      %v6878 = vunpack.c.h.b16 %v6618
      %v6879 = vunpack.c.l.b16 %v6619
      %v6880 = vunpack.c.h.b16 %v6619
      %v6881 = vunpack.c.l.b16 %v6620
      %v6882 = vunpack.c.h.b16 %v6620
      %v6883 = vunpack.c.l.b16 %v6621
      %v6884 = vunpack.c.h.b16 %v6621
      %v6885 = vunpack.c.l.b16 %v6622
      %v6886 = vunpack.c.h.b16 %v6622
      %v6887 = vunpack.c.l.b16 %v6623
      %v6888 = vunpack.c.h.b16 %v6623
      %v6889 = vunpack.c.l.b16 %v6624
      %v6890 = vunpack.c.h.b16 %v6624
      %v6891 = vunpack.c.l.b16 %v6625
      %v6892 = vunpack.c.h.b16 %v6625
      %v6893 = vunpack.c.l.b16 %v6626
      %v6894 = vunpack.c.h.b16 %v6626
      %v6895 = vunpack.c.l.b16 %v6627
      %v6896 = vunpack.c.h.b16 %v6627
      %v6897 = vunpack.c.l.b16 %v6628
      %v6898 = vunpack.c.h.b16 %v6628
      %v6899 = vunpack.c.l.b16 %v6629
      %v6900 = vunpack.c.h.b16 %v6629
      %v6901 = vunpack.c.l.b16 %v6630
      %v6902 = vunpack.c.h.b16 %v6630
      %v6903 = vunpack.c.l.b16 %v6631
      %v6904 = vunpack.c.h.b16 %v6631
      %v6905 = vunpack.c.l.b16 %v6632
      %v6906 = vunpack.c.h.b16 %v6632
      %v6907 = vunpack.c.l.b16 %v6633
      %v6908 = vunpack.c.h.b16 %v6633
      %v6909 = vunpack.c.l.b16 %v6634
      %v6910 = vunpack.c.h.b16 %v6634
      %v6911 = vunpack.c.l.b16 %v6635
      %v6912 = vunpack.c.h.b16 %v6635
      %v6913 = vunpack.c.l.b16 %v6636
      %v6914 = vunpack.c.h.b16 %v6636
      %v6915 = vunpack.c.l.b16 %v6637
      %v6916 = vunpack.c.h.b16 %v6637
      %v6917 = vunpack.c.l.b16 %v6638
      %v6918 = vunpack.c.h.b16 %v6638
      %v6919 = vunpack.c.l.b16 %v6639
      %v6920 = vunpack.c.h.b16 %v6639
      %v6921 = vunpack.c.l.b16 %v6640
      %v6922 = vunpack.c.h.b16 %v6640
      %v6923 = vunpack.c.l.b16 %v6641
      %v6924 = vunpack.c.h.b16 %v6641
      %v6925 = vunpack.c.l.b16 %v6642
      %v6926 = vunpack.c.h.b16 %v6642
      %v6927 = vunpack.c.l.b16 %v6643
      %v6928 = vunpack.c.h.b16 %v6643
      %v6929 = vunpack.c.l.b16 %v6644
      %v6930 = vunpack.c.h.b16 %v6644
      %v6931 = vunpack.c.l.b16 %v6645
      %v6932 = vunpack.c.h.b16 %v6645
      %v6933 = vunpack.c.l.b16 %v6646
      %v6934 = vunpack.c.h.b16 %v6646
      %v6935 = vpack.c.b16 %v6873, %v6871
      %v6936 = vpack.c.b16 %v6874, %v6872
      %v6937 = vpack.c.b16 %v6877, %v6875
      %v6938 = vpack.c.b16 %v6878, %v6876
      %v6939 = vpack.c.b16 %v6881, %v6879
      %v6940 = vpack.c.b16 %v6882, %v6880
      %v6941 = vpack.c.b16 %v6885, %v6883
      %v6942 = vpack.c.b16 %v6886, %v6884
      %v6943 = vpack.c.b16 %v6889, %v6887
      %v6944 = vpack.c.b16 %v6890, %v6888
      %v6945 = vpack.c.b16 %v6893, %v6891
      %v6946 = vpack.c.b16 %v6894, %v6892
      %v6947 = vpack.c.b16 %v6897, %v6895
      %v6948 = vpack.c.b16 %v6898, %v6896
      %v6949 = vpack.c.b16 %v6901, %v6899
      %v6950 = vpack.c.b16 %v6902, %v6900
      %v6951 = vpack.c.b16 %v6905, %v6903
      %v6952 = vpack.c.b16 %v6906, %v6904
      %v6953 = vpack.c.b16 %v6909, %v6907
      %v6954 = vpack.c.b16 %v6910, %v6908
      %v6955 = vpack.c.b16 %v6913, %v6911
      %v6956 = vpack.c.b16 %v6914, %v6912
      %v6957 = vpack.c.b16 %v6917, %v6915
      %v6958 = vpack.c.b16 %v6918, %v6916
      %v6959 = vpack.c.b16 %v6921, %v6919
      %v6960 = vpack.c.b16 %v6922, %v6920
      %v6961 = vpack.c.b16 %v6925, %v6923
      %v6962 = vpack.c.b16 %v6926, %v6924
      %v6963 = vpack.c.b16 %v6929, %v6927
      %v6964 = vpack.c.b16 %v6930, %v6928
      %v6965 = vpack.c.b16 %v6933, %v6931
      %v6966 = vpack.c.b16 %v6934, %v6932
      %6999 = vmatprep.subr.bf16.mxu0 %v6488
      %7000 = vmatpush1.bf16.msra.mxu0 %v6487
      %7001 = vmatprep.subr.bf16.mxu0 %v6496
      %7002 = vmatpush1.bf16.msra.mxu0 %v6495
      %7003 = vmatprep.subr.bf16.mxu0 %v6504
      %7004 = vmatpush1.bf16.msra.mxu0 %v6503
      %7005 = vmatprep.subr.bf16.mxu0 %v6512
      %7006 = vmatpush1.bf16.msra.mxu0 %v6511
      %7007 = vmatprep.subr.bf16.mxu0 %v6520
      %7008 = vmatpush1.bf16.msra.mxu0 %v6519
      %7009 = vmatprep.subr.bf16.mxu0 %v6528
      %7010 = vmatpush1.bf16.msra.mxu0 %v6527
      %7011 = vmatprep.subr.bf16.mxu0 %v6536
      %7012 = vmatpush1.bf16.msra.mxu0 %v6535
      %7013 = vmatprep.subr.bf16.mxu0 %v6544
      %7014 = vmatpush1.bf16.msra.mxu0 %v6543
      %7015 = vmatprep.subr.bf16.mxu0 %v6552
      %7016 = vmatpush1.bf16.msra.mxu0 %v6551
      %7017 = vmatprep.subr.bf16.mxu0 %v6560
      %7018 = vmatpush1.bf16.msra.mxu0 %v6559
      %7019 = vmatprep.subr.bf16.mxu0 %v6568
      %7020 = vmatpush1.bf16.msra.mxu0 %v6567
      %7021 = vmatprep.subr.bf16.mxu0 %v6576
      %7022 = vmatpush1.bf16.msra.mxu0 %v6575
      %7023 = vmatprep.subr.bf16.mxu0 %v6584
      %7024 = vmatpush1.bf16.msra.mxu0 %v6583
      %7025 = vmatprep.subr.bf16.mxu0 %v6592
      %7026 = vmatpush1.bf16.msra.mxu0 %v6591
      %7027 = vmatprep.subr.bf16.mxu0 %v6600
      %7028 = vmatpush1.bf16.msra.mxu0 %v6599
      %7029 = vmatprep.subr.bf16.mxu0 %v6608
      %7030 = vmatpush1.bf16.msra.mxu0 %v6607
      %7031 = vmatprep.mubr.bf16.mxu0 %v6936
      %7032 = vmatmul.mubr.bf16.gmra.mrb[0].mxu0 %v6935
      %v7033 = vpop.f32.mrb[0].mxu0
      %v7034 = vadd.f32 %v6682, %v7033
      %v7035 = vpop.f32.mrb[0].mxu0
      %v7036 = vadd.f32 %v6682, %v7035
      %v7037 = vpop.f32.mrb[0].mxu0
      %v7038 = vadd.f32 %v6687, %v7037
      %v7039 = vpop.f32.mrb[0].mxu0
      %v7040 = vadd.f32 %v6687, %v7039
      %7041 = vmatprep.mubr.bf16.mxu0 %v6938
      %7042 = vmatmul.mubr.bf16.gmra.mrb[0].mxu0 %v6937
      %v7043 = vpop.f32.mrb[0].mxu0
      %v7044 = vadd.f32 %v6692, %v7043
      %v7045 = vpop.f32.mrb[0].mxu0
      %v7046 = vadd.f32 %v6692, %v7045
      %v7047 = vpop.f32.mrb[0].mxu0
      %v7048 = vadd.f32 %v6697, %v7047
      %v7049 = vpop.f32.mrb[0].mxu0
      %v7050 = vadd.f32 %v6697, %v7049
      %7051 = vmatprep.mubr.bf16.mxu0 %v6940
      %7052 = vmatmul.mubr.bf16.gmra.mrb[0].mxu0 %v6939
      %v7053 = vpop.f32.mrb[0].mxu0
      %v7054 = vadd.f32 %v6702, %v7053
      %v7055 = vpop.f32.mrb[0].mxu0
      %v7056 = vadd.f32 %v6702, %v7055
      %v7057 = vpop.f32.mrb[0].mxu0
      %v7058 = vadd.f32 %v6707, %v7057
      %v7059 = vpop.f32.mrb[0].mxu0
      %v7060 = vadd.f32 %v6707, %v7059
      %7061 = vmatprep.mubr.bf16.mxu0 %v6942
      %7062 = vmatmul.mubr.bf16.gmra.mrb[0].mxu0 %v6941
      %v7063 = vpop.f32.mrb[0].mxu0
      %v7064 = vadd.f32 %v6712, %v7063
      %v7065 = vpop.f32.mrb[0].mxu0
      %v7066 = vadd.f32 %v6712, %v7065
      %v7067 = vpop.f32.mrb[0].mxu0
      %v7068 = vadd.f32 %v6717, %v7067
      %v7069 = vpop.f32.mrb[0].mxu0
      %v7070 = vadd.f32 %v6717, %v7069
      %7071 = vmatprep.mubr.bf16.mxu0 %v6944
      %7072 = vmatmul.mubr.bf16.gmra.mrb[0].mxu0 %v6943
      %v7073 = vpop.f32.mrb[0].mxu0
      %v7074 = vadd.f32 %v6722, %v7073
      %v7075 = vpop.f32.mrb[0].mxu0
      %v7076 = vadd.f32 %v6722, %v7075
      %v7077 = vpop.f32.mrb[0].mxu0
      %v7078 = vadd.f32 %v6727, %v7077
      %v7079 = vpop.f32.mrb[0].mxu0
      %v7080 = vadd.f32 %v6727, %v7079
      %7081 = vmatprep.mubr.bf16.mxu0 %v6946
      %7082 = vmatmul.mubr.bf16.gmra.mrb[0].mxu0 %v6945
      %v7083 = vpop.f32.mrb[0].mxu0
      %v7084 = vadd.f32 %v6732, %v7083
      %v7085 = vpop.f32.mrb[0].mxu0
      %v7086 = vadd.f32 %v6732, %v7085
      %v7087 = vpop.f32.mrb[0].mxu0
      %v7088 = vadd.f32 %v6737, %v7087
      %v7089 = vpop.f32.mrb[0].mxu0
      %v7090 = vadd.f32 %v6737, %v7089
      %7091 = vmatprep.mubr.bf16.mxu0 %v6948
      %7092 = vmatmul.mubr.bf16.gmra.mrb[0].mxu0 %v6947
      %v7093 = vpop.f32.mrb[0].mxu0
      %v7094 = vadd.f32 %v6742, %v7093
      %v7095 = vpop.f32.mrb[0].mxu0
      %v7096 = vadd.f32 %v6742, %v7095
      %v7097 = vpop.f32.mrb[0].mxu0
      %v7098 = vadd.f32 %v6747, %v7097
      %v7099 = vpop.f32.mrb[0].mxu0
      %v7100 = vadd.f32 %v6747, %v7099
      %7101 = vmatprep.mubr.bf16.mxu0 %v6950
      %7102 = vmatmul.mubr.bf16.gmra.mrb[0].mxu0 %v6949
      %v7103 = vpop.f32.mrb[0].mxu0
      %v7104 = vadd.f32 %v6752, %v7103
      %v7105 = vpop.f32.mrb[0].mxu0
      %v7106 = vadd.f32 %v6752, %v7105
      %v7107 = vpop.f32.mrb[0].mxu0
      %v7108 = vadd.f32 %v6757, %v7107
      %v7109 = vpop.f32.mrb[0].mxu0
      %v7110 = vadd.f32 %v6757, %v7109
      %7111 = vmatprep.mubr.bf16.mxu0 %v6952
      %7112 = vmatmul.mubr.bf16.gmra.mrb[0].mxu0 %v6951
      %v7113 = vpop.f32.mrb[0].mxu0
      %v7114 = vadd.f32 %v6762, %v7113
      %v7115 = vpop.f32.mrb[0].mxu0
      %v7116 = vadd.f32 %v6762, %v7115
      %v7117 = vpop.f32.mrb[0].mxu0
      %v7118 = vadd.f32 %v6767, %v7117
      %v7119 = vpop.f32.mrb[0].mxu0
      %v7120 = vadd.f32 %v6767, %v7119
      %7121 = vmatprep.mubr.bf16.mxu0 %v6954
      %7122 = vmatmul.mubr.bf16.gmra.mrb[0].mxu0 %v6953
      %v7123 = vpop.f32.mrb[0].mxu0
      %v7124 = vadd.f32 %v6772, %v7123
      %v7125 = vpop.f32.mrb[0].mxu0
      %v7126 = vadd.f32 %v6772, %v7125
      %v7127 = vpop.f32.mrb[0].mxu0
      %v7128 = vadd.f32 %v6777, %v7127
      %v7129 = vpop.f32.mrb[0].mxu0
      %v7130 = vadd.f32 %v6777, %v7129
      %7131 = vmatprep.mubr.bf16.mxu0 %v6956
      %7132 = vmatmul.mubr.bf16.gmra.mrb[0].mxu0 %v6955
      %v7133 = vpop.f32.mrb[0].mxu0
      %v7134 = vadd.f32 %v6782, %v7133
      %v7135 = vpop.f32.mrb[0].mxu0
      %v7136 = vadd.f32 %v6782, %v7135
      %v7137 = vpop.f32.mrb[0].mxu0
      %v7138 = vadd.f32 %v6787, %v7137
      %v7139 = vpop.f32.mrb[0].mxu0
      %v7140 = vadd.f32 %v6787, %v7139
      %7141 = vmatprep.mubr.bf16.mxu0 %v6958
      %7142 = vmatmul.mubr.bf16.gmra.mrb[0].mxu0 %v6957
      %v7143 = vpop.f32.mrb[0].mxu0
      %v7144 = vadd.f32 %v6792, %v7143
      %v7145 = vpop.f32.mrb[0].mxu0
      %v7146 = vadd.f32 %v6792, %v7145
      %v7147 = vpop.f32.mrb[0].mxu0
      %v7148 = vadd.f32 %v6797, %v7147
      %v7149 = vpop.f32.mrb[0].mxu0
      %v7150 = vadd.f32 %v6797, %v7149
      %7151 = vmatprep.mubr.bf16.mxu0 %v6960
      %7152 = vmatmul.mubr.bf16.gmra.mrb[0].mxu0 %v6959
      %v7153 = vpop.f32.mrb[0].mxu0
      %v7154 = vadd.f32 %v6802, %v7153
      %v7155 = vpop.f32.mrb[0].mxu0
      %v7156 = vadd.f32 %v6802, %v7155
      %v7157 = vpop.f32.mrb[0].mxu0
      %v7158 = vadd.f32 %v6807, %v7157
      %v7159 = vpop.f32.mrb[0].mxu0
      %v7160 = vadd.f32 %v6807, %v7159
      %7161 = vmatprep.mubr.bf16.mxu0 %v6962
      %7162 = vmatmul.mubr.bf16.gmra.mrb[0].mxu0 %v6961
      %v7163 = vpop.f32.mrb[0].mxu0
      %v7164 = vadd.f32 %v6812, %v7163
      %v7165 = vpop.f32.mrb[0].mxu0
      %v7166 = vadd.f32 %v6812, %v7165
      %v7167 = vpop.f32.mrb[0].mxu0
      %v7168 = vadd.f32 %v6817, %v7167
      %v7169 = vpop.f32.mrb[0].mxu0
      %v7170 = vadd.f32 %v6817, %v7169
      %7171 = vmatprep.mubr.bf16.mxu0 %v6964
      %7172 = vmatmul.mubr.bf16.gmra.mrb[0].mxu0 %v6963
      %v7173 = vpop.f32.mrb[0].mxu0
      %v7174 = vadd.f32 %v6822, %v7173
      %v7175 = vpop.f32.mrb[0].mxu0
      %v7176 = vadd.f32 %v6822, %v7175
      %v7177 = vpop.f32.mrb[0].mxu0
      %v7178 = vadd.f32 %v6827, %v7177
      %v7179 = vpop.f32.mrb[0].mxu0
      %v7180 = vadd.f32 %v6827, %v7179
      %7181 = vmatprep.mubr.bf16.mxu0 %v6966
      %7182 = vmatmul.mubr.bf16.gmra.mrb[0].mxu0 %v6965
      %v7183 = vpop.f32.mrb[0].mxu0
      %v7184 = vadd.f32 %v6832, %v7183
      %v7185 = vpop.f32.mrb[0].mxu0
      %v7186 = vadd.f32 %v6832, %v7185
      %v7187 = vpop.f32.mrb[0].mxu0
      %v7188 = vadd.f32 %v6837, %v7187
      %v7189 = vpop.f32.mrb[0].mxu0
      %v7190 = vadd.f32 %v6837, %v7189
      %7191 = vdwg.mxu0
      %7192 = vmatprep.subr.bf16.mxu0 %v6490
      %7193 = vmatpush1.bf16.msra.mxu0 %v6489
      %7194 = vmatprep.subr.bf16.mxu0 %v6498
      %7195 = vmatpush1.bf16.msra.mxu0 %v6497
      %7196 = vmatprep.subr.bf16.mxu0 %v6506
      %7197 = vmatpush1.bf16.msra.mxu0 %v6505
      %7198 = vmatprep.subr.bf16.mxu0 %v6514
      %7199 = vmatpush1.bf16.msra.mxu0 %v6513
      %7200 = vmatprep.subr.bf16.mxu0 %v6522
      %7201 = vmatpush1.bf16.msra.mxu0 %v6521
      %7202 = vmatprep.subr.bf16.mxu0 %v6530
      %7203 = vmatpush1.bf16.msra.mxu0 %v6529
      %7204 = vmatprep.subr.bf16.mxu0 %v6538
      %7205 = vmatpush1.bf16.msra.mxu0 %v6537
      %7206 = vmatprep.subr.bf16.mxu0 %v6546
      %7207 = vmatpush1.bf16.msra.mxu0 %v6545
      %7208 = vmatprep.subr.bf16.mxu0 %v6554
      %7209 = vmatpush1.bf16.msra.mxu0 %v6553
      %7210 = vmatprep.subr.bf16.mxu0 %v6562
      %7211 = vmatpush1.bf16.msra.mxu0 %v6561
      %7212 = vmatprep.subr.bf16.mxu0 %v6570
      %7213 = vmatpush1.bf16.msra.mxu0 %v6569
      %7214 = vmatprep.subr.bf16.mxu0 %v6578
      %7215 = vmatpush1.bf16.msra.mxu0 %v6577
      %7216 = vmatprep.subr.bf16.mxu0 %v6586
      %7217 = vmatpush1.bf16.msra.mxu0 %v6585
      %7218 = vmatprep.subr.bf16.mxu0 %v6594
      %7219 = vmatpush1.bf16.msra.mxu0 %v6593
      %7220 = vmatprep.subr.bf16.mxu0 %v6602
      %7221 = vmatpush1.bf16.msra.mxu0 %v6601
      %7222 = vmatprep.subr.bf16.mxu0 %v6610
      %7223 = vmatpush1.bf16.msra.mxu0 %v6609
      %7224 = vmatprep.mubr.bf16.mxu0 %v6936
      %7225 = vmatmul.mubr.bf16.gmra.mrb[0].mxu0 %v6935
      %v7226 = vpop.f32.mrb[0].mxu0
      %v7227 = vadd.f32 %v6682, %v7226
      %v7228 = vpop.f32.mrb[0].mxu0
      %v7229 = vadd.f32 %v6682, %v7228
      %v7230 = vpop.f32.mrb[0].mxu0
      %v7231 = vadd.f32 %v6687, %v7230
      %v7232 = vpop.f32.mrb[0].mxu0
      %v7233 = vadd.f32 %v6687, %v7232
      %7234 = vmatprep.mubr.bf16.mxu0 %v6938
      %7235 = vmatmul.mubr.bf16.gmra.mrb[0].mxu0 %v6937
      %v7236 = vpop.f32.mrb[0].mxu0
      %v7237 = vadd.f32 %v6692, %v7236
      %v7238 = vpop.f32.mrb[0].mxu0
      %v7239 = vadd.f32 %v6692, %v7238
      %v7240 = vpop.f32.mrb[0].mxu0
      %v7241 = vadd.f32 %v6697, %v7240
      %v7242 = vpop.f32.mrb[0].mxu0
      %v7243 = vadd.f32 %v6697, %v7242
      %7244 = vmatprep.mubr.bf16.mxu0 %v6940
      %7245 = vmatmul.mubr.bf16.gmra.mrb[0].mxu0 %v6939
      %v7246 = vpop.f32.mrb[0].mxu0
      %v7247 = vadd.f32 %v6702, %v7246
      %v7248 = vpop.f32.mrb[0].mxu0
      %v7249 = vadd.f32 %v6702, %v7248
      %v7250 = vpop.f32.mrb[0].mxu0
      %v7251 = vadd.f32 %v6707, %v7250
      %v7252 = vpop.f32.mrb[0].mxu0
      %v7253 = vadd.f32 %v6707, %v7252
      %7254 = vmatprep.mubr.bf16.mxu0 %v6942
      %7255 = vmatmul.mubr.bf16.gmra.mrb[0].mxu0 %v6941
      %v7256 = vpop.f32.mrb[0].mxu0
      %v7257 = vadd.f32 %v6712, %v7256
      %v7258 = vpop.f32.mrb[0].mxu0
      %v7259 = vadd.f32 %v6712, %v7258
      %v7260 = vpop.f32.mrb[0].mxu0
      %v7261 = vadd.f32 %v6717, %v7260
      %v7262 = vpop.f32.mrb[0].mxu0
      %v7263 = vadd.f32 %v6717, %v7262
      %7264 = vmatprep.mubr.bf16.mxu0 %v6944
      %7265 = vmatmul.mubr.bf16.gmra.mrb[0].mxu0 %v6943
      %v7266 = vpop.f32.mrb[0].mxu0
      %v7267 = vadd.f32 %v6722, %v7266
      %v7268 = vpop.f32.mrb[0].mxu0
      %v7269 = vadd.f32 %v6722, %v7268
      %v7270 = vpop.f32.mrb[0].mxu0
      %v7271 = vadd.f32 %v6727, %v7270
      %v7272 = vpop.f32.mrb[0].mxu0
      %v7273 = vadd.f32 %v6727, %v7272
      %7274 = vmatprep.mubr.bf16.mxu0 %v6946
      %7275 = vmatmul.mubr.bf16.gmra.mrb[0].mxu0 %v6945
      %v7276 = vpop.f32.mrb[0].mxu0
      %v7277 = vadd.f32 %v6732, %v7276
      %v7278 = vpop.f32.mrb[0].mxu0
      %v7279 = vadd.f32 %v6732, %v7278
      %v7280 = vpop.f32.mrb[0].mxu0
      %v7281 = vadd.f32 %v6737, %v7280
      %v7282 = vpop.f32.mrb[0].mxu0
      %v7283 = vadd.f32 %v6737, %v7282
      %7284 = vmatprep.mubr.bf16.mxu0 %v6948
      %7285 = vmatmul.mubr.bf16.gmra.mrb[0].mxu0 %v6947
      %v7286 = vpop.f32.mrb[0].mxu0
      %v7287 = vadd.f32 %v6742, %v7286
      %v7288 = vpop.f32.mrb[0].mxu0
      %v7289 = vadd.f32 %v6742, %v7288
      %v7290 = vpop.f32.mrb[0].mxu0
      %v7291 = vadd.f32 %v6747, %v7290
      %v7292 = vpop.f32.mrb[0].mxu0
      %v7293 = vadd.f32 %v6747, %v7292
      %7294 = vmatprep.mubr.bf16.mxu0 %v6950
      %7295 = vmatmul.mubr.bf16.gmra.mrb[0].mxu0 %v6949
      %v7296 = vpop.f32.mrb[0].mxu0
      %v7297 = vadd.f32 %v6752, %v7296
      %v7298 = vpop.f32.mrb[0].mxu0
      %v7299 = vadd.f32 %v6752, %v7298
      %v7300 = vpop.f32.mrb[0].mxu0
      %v7301 = vadd.f32 %v6757, %v7300
      %v7302 = vpop.f32.mrb[0].mxu0
      %v7303 = vadd.f32 %v6757, %v7302
      %7304 = vmatprep.mubr.bf16.mxu0 %v6952
      %7305 = vmatmul.mubr.bf16.gmra.mrb[0].mxu0 %v6951
      %v7306 = vpop.f32.mrb[0].mxu0
      %v7307 = vadd.f32 %v6762, %v7306
      %v7308 = vpop.f32.mrb[0].mxu0
      %v7309 = vadd.f32 %v6762, %v7308
      %v7310 = vpop.f32.mrb[0].mxu0
      %v7311 = vadd.f32 %v6767, %v7310
      %v7312 = vpop.f32.mrb[0].mxu0
      %v7313 = vadd.f32 %v6767, %v7312
      %7314 = vmatprep.mubr.bf16.mxu0 %v6954
      %7315 = vmatmul.mubr.bf16.gmra.mrb[0].mxu0 %v6953
      %v7316 = vpop.f32.mrb[0].mxu0
      %v7317 = vadd.f32 %v6772, %v7316
      %v7318 = vpop.f32.mrb[0].mxu0
      %v7319 = vadd.f32 %v6772, %v7318
      %v7320 = vpop.f32.mrb[0].mxu0
      %v7321 = vadd.f32 %v6777, %v7320
      %v7322 = vpop.f32.mrb[0].mxu0
      %v7323 = vadd.f32 %v6777, %v7322
      %7324 = vmatprep.mubr.bf16.mxu0 %v6956
      %7325 = vmatmul.mubr.bf16.gmra.mrb[0].mxu0 %v6955
      %v7326 = vpop.f32.mrb[0].mxu0
      %v7327 = vadd.f32 %v6782, %v7326
      %v7328 = vpop.f32.mrb[0].mxu0
      %v7329 = vadd.f32 %v6782, %v7328
      %v7330 = vpop.f32.mrb[0].mxu0
      %v7331 = vadd.f32 %v6787, %v7330
      %v7332 = vpop.f32.mrb[0].mxu0
      %v7333 = vadd.f32 %v6787, %v7332
      %7334 = vmatprep.mubr.bf16.mxu0 %v6958
      %7335 = vmatmul.mubr.bf16.gmra.mrb[0].mxu0 %v6957
      %v7336 = vpop.f32.mrb[0].mxu0
      %v7337 = vadd.f32 %v6792, %v7336
      %v7338 = vpop.f32.mrb[0].mxu0
      %v7339 = vadd.f32 %v6792, %v7338
      %v7340 = vpop.f32.mrb[0].mxu0
      %v7341 = vadd.f32 %v6797, %v7340
      %v7342 = vpop.f32.mrb[0].mxu0
      %v7343 = vadd.f32 %v6797, %v7342
      %7344 = vmatprep.mubr.bf16.mxu0 %v6960
      %7345 = vmatmul.mubr.bf16.gmra.mrb[0].mxu0 %v6959
      %v7346 = vpop.f32.mrb[0].mxu0
      %v7347 = vadd.f32 %v6802, %v7346
      %v7348 = vpop.f32.mrb[0].mxu0
      %v7349 = vadd.f32 %v6802, %v7348
      %v7350 = vpop.f32.mrb[0].mxu0
      %v7351 = vadd.f32 %v6807, %v7350
      %v7352 = vpop.f32.mrb[0].mxu0
      %v7353 = vadd.f32 %v6807, %v7352
      %7354 = vmatprep.mubr.bf16.mxu0 %v6962
      %7355 = vmatmul.mubr.bf16.gmra.mrb[0].mxu0 %v6961
      %v7356 = vpop.f32.mrb[0].mxu0
      %v7357 = vadd.f32 %v6812, %v7356
      %v7358 = vpop.f32.mrb[0].mxu0
      %v7359 = vadd.f32 %v6812, %v7358
      %v7360 = vpop.f32.mrb[0].mxu0
      %v7361 = vadd.f32 %v6817, %v7360
      %v7362 = vpop.f32.mrb[0].mxu0
      %v7363 = vadd.f32 %v6817, %v7362
      %7364 = vmatprep.mubr.bf16.mxu0 %v6964
      %7365 = vmatmul.mubr.bf16.gmra.mrb[0].mxu0 %v6963
      %v7366 = vpop.f32.mrb[0].mxu0
      %v7367 = vadd.f32 %v6822, %v7366
      %v7368 = vpop.f32.mrb[0].mxu0
      %v7369 = vadd.f32 %v6822, %v7368
      %v7370 = vpop.f32.mrb[0].mxu0
      %v7371 = vadd.f32 %v6827, %v7370
      %v7372 = vpop.f32.mrb[0].mxu0
      %v7373 = vadd.f32 %v6827, %v7372
      %7374 = vmatprep.mubr.bf16.mxu0 %v6966
      %7375 = vmatmul.mubr.bf16.gmra.mrb[0].mxu0 %v6965
      %v7376 = vpop.f32.mrb[0].mxu0
      %v7377 = vadd.f32 %v6832, %v7376
      %v7378 = vpop.f32.mrb[0].mxu0
      %v7379 = vadd.f32 %v6832, %v7378
      %v7380 = vpop.f32.mrb[0].mxu0
      %v7381 = vadd.f32 %v6837, %v7380
      %v7382 = vpop.f32.mrb[0].mxu0
      %v7383 = vadd.f32 %v6837, %v7382
      %7384 = vdwg.mxu0
      %7385 = vmatprep.subr.bf16.mxu0 %v6492
      %7386 = vmatpush1.bf16.msra.mxu0 %v6491
      %7387 = vmatprep.subr.bf16.mxu0 %v6500
      %7388 = vmatpush1.bf16.msra.mxu0 %v6499
      %7389 = vmatprep.subr.bf16.mxu0 %v6508
      %7390 = vmatpush1.bf16.msra.mxu0 %v6507
      %7391 = vmatprep.subr.bf16.mxu0 %v6516
      %7392 = vmatpush1.bf16.msra.mxu0 %v6515
      %7393 = vmatprep.subr.bf16.mxu0 %v6524
      %7394 = vmatpush1.bf16.msra.mxu0 %v6523
      %7395 = vmatprep.subr.bf16.mxu0 %v6532
      %7396 = vmatpush1.bf16.msra.mxu0 %v6531
      %7397 = vmatprep.subr.bf16.mxu0 %v6540
      %7398 = vmatpush1.bf16.msra.mxu0 %v6539
      %7399 = vmatprep.subr.bf16.mxu0 %v6548
      %7400 = vmatpush1.bf16.msra.mxu0 %v6547
      %7401 = vmatprep.subr.bf16.mxu0 %v6556
      %7402 = vmatpush1.bf16.msra.mxu0 %v6555
      %7403 = vmatprep.subr.bf16.mxu0 %v6564
      %7404 = vmatpush1.bf16.msra.mxu0 %v6563
      %7405 = vmatprep.subr.bf16.mxu0 %v6572
      %7406 = vmatpush1.bf16.msra.mxu0 %v6571
      %7407 = vmatprep.subr.bf16.mxu0 %v6580
      %7408 = vmatpush1.bf16.msra.mxu0 %v6579
      %7409 = vmatprep.subr.bf16.mxu0 %v6588
      %7410 = vmatpush1.bf16.msra.mxu0 %v6587
      %7411 = vmatprep.subr.bf16.mxu0 %v6596
      %7412 = vmatpush1.bf16.msra.mxu0 %v6595
      %7413 = vmatprep.subr.bf16.mxu0 %v6604
      %7414 = vmatpush1.bf16.msra.mxu0 %v6603
      %7415 = vmatprep.subr.bf16.mxu0 %v6612
      %7416 = vmatpush1.bf16.msra.mxu0 %v6611
      %7417 = vmatprep.mubr.bf16.mxu0 %v6936
      %7418 = vmatmul.mubr.bf16.gmra.mrb[0].mxu0 %v6935
      %v7419 = vpop.f32.mrb[0].mxu0
      %v7420 = vadd.f32 %v6682, %v7419
      %v7421 = vpop.f32.mrb[0].mxu0
      %v7422 = vadd.f32 %v6682, %v7421
      %v7423 = vpop.f32.mrb[0].mxu0
      %v7424 = vadd.f32 %v6687, %v7423
      %v7425 = vpop.f32.mrb[0].mxu0
      %v7426 = vadd.f32 %v6687, %v7425
      %7427 = vmatprep.mubr.bf16.mxu0 %v6938
      %7428 = vmatmul.mubr.bf16.gmra.mrb[0].mxu0 %v6937
      %v7429 = vpop.f32.mrb[0].mxu0
      %v7430 = vadd.f32 %v6692, %v7429
      %v7431 = vpop.f32.mrb[0].mxu0
      %v7432 = vadd.f32 %v6692, %v7431
      %v7433 = vpop.f32.mrb[0].mxu0
      %v7434 = vadd.f32 %v6697, %v7433
      %v7435 = vpop.f32.mrb[0].mxu0
      %v7436 = vadd.f32 %v6697, %v7435
      %7437 = vmatprep.mubr.bf16.mxu0 %v6940
      %7438 = vmatmul.mubr.bf16.gmra.mrb[0].mxu0 %v6939
      %v7439 = vpop.f32.mrb[0].mxu0
      %v7440 = vadd.f32 %v6702, %v7439
      %v7441 = vpop.f32.mrb[0].mxu0
      %v7442 = vadd.f32 %v6702, %v7441
      %v7443 = vpop.f32.mrb[0].mxu0
      %v7444 = vadd.f32 %v6707, %v7443
      %v7445 = vpop.f32.mrb[0].mxu0
      %v7446 = vadd.f32 %v6707, %v7445
      %7447 = vmatprep.mubr.bf16.mxu0 %v6942
      %7448 = vmatmul.mubr.bf16.gmra.mrb[0].mxu0 %v6941
      %v7449 = vpop.f32.mrb[0].mxu0
      %v7450 = vadd.f32 %v6712, %v7449
      %v7451 = vpop.f32.mrb[0].mxu0
      %v7452 = vadd.f32 %v6712, %v7451
      %v7453 = vpop.f32.mrb[0].mxu0
      %v7454 = vadd.f32 %v6717, %v7453
      %v7455 = vpop.f32.mrb[0].mxu0
      %v7456 = vadd.f32 %v6717, %v7455
      %7457 = vmatprep.mubr.bf16.mxu0 %v6944
      %7458 = vmatmul.mubr.bf16.gmra.mrb[0].mxu0 %v6943
      %v7459 = vpop.f32.mrb[0].mxu0
      %v7460 = vadd.f32 %v6722, %v7459
      %v7461 = vpop.f32.mrb[0].mxu0
      %v7462 = vadd.f32 %v6722, %v7461
      %v7463 = vpop.f32.mrb[0].mxu0
      %v7464 = vadd.f32 %v6727, %v7463
      %v7465 = vpop.f32.mrb[0].mxu0
      %v7466 = vadd.f32 %v6727, %v7465
      %7467 = vmatprep.mubr.bf16.mxu0 %v6946
      %7468 = vmatmul.mubr.bf16.gmra.mrb[0].mxu0 %v6945
      %v7469 = vpop.f32.mrb[0].mxu0
      %v7470 = vadd.f32 %v6732, %v7469
      %v7471 = vpop.f32.mrb[0].mxu0
      %v7472 = vadd.f32 %v6732, %v7471
      %v7473 = vpop.f32.mrb[0].mxu0
      %v7474 = vadd.f32 %v6737, %v7473
      %v7475 = vpop.f32.mrb[0].mxu0
      %v7476 = vadd.f32 %v6737, %v7475
      %7477 = vmatprep.mubr.bf16.mxu0 %v6948
      %7478 = vmatmul.mubr.bf16.gmra.mrb[0].mxu0 %v6947
      %v7479 = vpop.f32.mrb[0].mxu0
      %v7480 = vadd.f32 %v6742, %v7479
      %v7481 = vpop.f32.mrb[0].mxu0
      %v7482 = vadd.f32 %v6742, %v7481
      %v7483 = vpop.f32.mrb[0].mxu0
      %v7484 = vadd.f32 %v6747, %v7483
      %v7485 = vpop.f32.mrb[0].mxu0
      %v7486 = vadd.f32 %v6747, %v7485
      %7487 = vmatprep.mubr.bf16.mxu0 %v6950
      %7488 = vmatmul.mubr.bf16.gmra.mrb[0].mxu0 %v6949
      %v7489 = vpop.f32.mrb[0].mxu0
      %v7490 = vadd.f32 %v6752, %v7489
      %v7491 = vpop.f32.mrb[0].mxu0
      %v7492 = vadd.f32 %v6752, %v7491
      %v7493 = vpop.f32.mrb[0].mxu0
      %v7494 = vadd.f32 %v6757, %v7493
      %v7495 = vpop.f32.mrb[0].mxu0
      %v7496 = vadd.f32 %v6757, %v7495
      %7497 = vmatprep.mubr.bf16.mxu0 %v6952
      %7498 = vmatmul.mubr.bf16.gmra.mrb[0].mxu0 %v6951
      %v7499 = vpop.f32.mrb[0].mxu0
      %v7500 = vadd.f32 %v6762, %v7499
      %v7501 = vpop.f32.mrb[0].mxu0
      %v7502 = vadd.f32 %v6762, %v7501
      %v7503 = vpop.f32.mrb[0].mxu0
      %v7504 = vadd.f32 %v6767, %v7503
      %v7505 = vpop.f32.mrb[0].mxu0
      %v7506 = vadd.f32 %v6767, %v7505
      %7507 = vmatprep.mubr.bf16.mxu0 %v6954
      %7508 = vmatmul.mubr.bf16.gmra.mrb[0].mxu0 %v6953
      %v7509 = vpop.f32.mrb[0].mxu0
      %v7510 = vadd.f32 %v6772, %v7509
      %v7511 = vpop.f32.mrb[0].mxu0
      %v7512 = vadd.f32 %v6772, %v7511
      %v7513 = vpop.f32.mrb[0].mxu0
      %v7514 = vadd.f32 %v6777, %v7513
      %v7515 = vpop.f32.mrb[0].mxu0
      %v7516 = vadd.f32 %v6777, %v7515
      %7517 = vmatprep.mubr.bf16.mxu0 %v6956
      %7518 = vmatmul.mubr.bf16.gmra.mrb[0].mxu0 %v6955
      %v7519 = vpop.f32.mrb[0].mxu0
      %v7520 = vadd.f32 %v6782, %v7519
      %v7521 = vpop.f32.mrb[0].mxu0
      %v7522 = vadd.f32 %v6782, %v7521
      %v7523 = vpop.f32.mrb[0].mxu0
      %v7524 = vadd.f32 %v6787, %v7523
      %v7525 = vpop.f32.mrb[0].mxu0
      %v7526 = vadd.f32 %v6787, %v7525
      %7527 = vmatprep.mubr.bf16.mxu0 %v6958
      %7528 = vmatmul.mubr.bf16.gmra.mrb[0].mxu0 %v6957
      %v7529 = vpop.f32.mrb[0].mxu0
      %v7530 = vadd.f32 %v6792, %v7529
      %v7531 = vpop.f32.mrb[0].mxu0
      %v7532 = vadd.f32 %v6792, %v7531
      %v7533 = vpop.f32.mrb[0].mxu0
      %v7534 = vadd.f32 %v6797, %v7533
      %v7535 = vpop.f32.mrb[0].mxu0
      %v7536 = vadd.f32 %v6797, %v7535
      %7537 = vmatprep.mubr.bf16.mxu0 %v6960
      %7538 = vmatmul.mubr.bf16.gmra.mrb[0].mxu0 %v6959
      %v7539 = vpop.f32.mrb[0].mxu0
      %v7540 = vadd.f32 %v6802, %v7539
      %v7541 = vpop.f32.mrb[0].mxu0
      %v7542 = vadd.f32 %v6802, %v7541
      %v7543 = vpop.f32.mrb[0].mxu0
      %v7544 = vadd.f32 %v6807, %v7543
      %v7545 = vpop.f32.mrb[0].mxu0
      %v7546 = vadd.f32 %v6807, %v7545
      %7547 = vmatprep.mubr.bf16.mxu0 %v6962
      %7548 = vmatmul.mubr.bf16.gmra.mrb[0].mxu0 %v6961
      %v7549 = vpop.f32.mrb[0].mxu0
      %v7550 = vadd.f32 %v6812, %v7549
      %v7551 = vpop.f32.mrb[0].mxu0
      %v7552 = vadd.f32 %v6812, %v7551
      %v7553 = vpop.f32.mrb[0].mxu0
      %v7554 = vadd.f32 %v6817, %v7553
      %v7555 = vpop.f32.mrb[0].mxu0
      %v7556 = vadd.f32 %v6817, %v7555
      %7557 = vmatprep.mubr.bf16.mxu0 %v6964
      %7558 = vmatmul.mubr.bf16.gmra.mrb[0].mxu0 %v6963
      %v7559 = vpop.f32.mrb[0].mxu0
      %v7560 = vadd.f32 %v6822, %v7559
      %v7561 = vpop.f32.mrb[0].mxu0
      %v7562 = vadd.f32 %v6822, %v7561
      %v7563 = vpop.f32.mrb[0].mxu0
      %v7564 = vadd.f32 %v6827, %v7563
      %v7565 = vpop.f32.mrb[0].mxu0
      %v7566 = vadd.f32 %v6827, %v7565
      %7567 = vmatprep.mubr.bf16.mxu0 %v6966
      %7568 = vmatmul.mubr.bf16.gmra.mrb[0].mxu0 %v6965
      %v7569 = vpop.f32.mrb[0].mxu0
      %v7570 = vadd.f32 %v6832, %v7569
      %v7571 = vpop.f32.mrb[0].mxu0
      %v7572 = vadd.f32 %v6832, %v7571
      %v7573 = vpop.f32.mrb[0].mxu0
      %v7574 = vadd.f32 %v6837, %v7573
      %v7575 = vpop.f32.mrb[0].mxu0
      %v7576 = vadd.f32 %v6837, %v7575
      %7577 = vdwg.mxu0
      %7578 = vmatprep.subr.bf16.mxu0 %v6494
      %7579 = vmatpush1.bf16.msra.mxu0 %v6493
      %7580 = vmatprep.subr.bf16.mxu0 %v6502
      %7581 = vmatpush1.bf16.msra.mxu0 %v6501
      %7582 = vmatprep.subr.bf16.mxu0 %v6510
      %7583 = vmatpush1.bf16.msra.mxu0 %v6509
      %7584 = vmatprep.subr.bf16.mxu0 %v6518
      %7585 = vmatpush1.bf16.msra.mxu0 %v6517
      %7586 = vmatprep.subr.bf16.mxu0 %v6526
      %7587 = vmatpush1.bf16.msra.mxu0 %v6525
      %7588 = vmatprep.subr.bf16.mxu0 %v6534
      %7589 = vmatpush1.bf16.msra.mxu0 %v6533
      %7590 = vmatprep.subr.bf16.mxu0 %v6542
      %7591 = vmatpush1.bf16.msra.mxu0 %v6541
      %7592 = vmatprep.subr.bf16.mxu0 %v6550
      %7593 = vmatpush1.bf16.msra.mxu0 %v6549
      %7594 = vmatprep.subr.bf16.mxu0 %v6558
      %7595 = vmatpush1.bf16.msra.mxu0 %v6557
      %7596 = vmatprep.subr.bf16.mxu0 %v6566
      %7597 = vmatpush1.bf16.msra.mxu0 %v6565
      %7598 = vmatprep.subr.bf16.mxu0 %v6574
      %7599 = vmatpush1.bf16.msra.mxu0 %v6573
      %7600 = vmatprep.subr.bf16.mxu0 %v6582
      %7601 = vmatpush1.bf16.msra.mxu0 %v6581
      %7602 = vmatprep.subr.bf16.mxu0 %v6590
      %7603 = vmatpush1.bf16.msra.mxu0 %v6589
      %7604 = vmatprep.subr.bf16.mxu0 %v6598
      %7605 = vmatpush1.bf16.msra.mxu0 %v6597
      %7606 = vmatprep.subr.bf16.mxu0 %v6606
      %7607 = vmatpush1.bf16.msra.mxu0 %v6605
      %7608 = vmatprep.subr.bf16.mxu0 %v6614
      %7609 = vmatpush1.bf16.msra.mxu0 %v6613
      %7610 = vmatprep.mubr.bf16.mxu0 %v6936
      %7611 = vmatmul.mubr.bf16.gmra.mrb[0].mxu0 %v6935
      %v7612 = vpop.f32.mrb[0].mxu0
      %v7613 = vadd.f32 %v6682, %v7612
      %v7614 = vpop.f32.mrb[0].mxu0
      %v7615 = vadd.f32 %v6682, %v7614
      %v7616 = vpop.f32.mrb[0].mxu0
      %v7617 = vadd.f32 %v6687, %v7616
      %v7618 = vpop.f32.mrb[0].mxu0
      %v7619 = vadd.f32 %v6687, %v7618
      %7620 = vmatprep.mubr.bf16.mxu0 %v6938
      %7621 = vmatmul.mubr.bf16.gmra.mrb[0].mxu0 %v6937
      %v7622 = vpop.f32.mrb[0].mxu0
      %v7623 = vadd.f32 %v6692, %v7622
      %v7624 = vpop.f32.mrb[0].mxu0
      %v7625 = vadd.f32 %v6692, %v7624
      %v7626 = vpop.f32.mrb[0].mxu0
      %v7627 = vadd.f32 %v6697, %v7626
      %v7628 = vpop.f32.mrb[0].mxu0
      %v7629 = vadd.f32 %v6697, %v7628
      %7630 = vmatprep.mubr.bf16.mxu0 %v6940
      %7631 = vmatmul.mubr.bf16.gmra.mrb[0].mxu0 %v6939
      %v7632 = vpop.f32.mrb[0].mxu0
      %v7633 = vadd.f32 %v6702, %v7632
      %v7634 = vpop.f32.mrb[0].mxu0
      %v7635 = vadd.f32 %v6702, %v7634
      %v7636 = vpop.f32.mrb[0].mxu0
      %v7637 = vadd.f32 %v6707, %v7636
      %v7638 = vpop.f32.mrb[0].mxu0
      %v7639 = vadd.f32 %v6707, %v7638
      %7640 = vmatprep.mubr.bf16.mxu0 %v6942
      %7641 = vmatmul.mubr.bf16.gmra.mrb[0].mxu0 %v6941
      %v7642 = vpop.f32.mrb[0].mxu0
      %v7643 = vadd.f32 %v6712, %v7642
      %v7644 = vpop.f32.mrb[0].mxu0
      %v7645 = vadd.f32 %v6712, %v7644
      %v7646 = vpop.f32.mrb[0].mxu0
      %v7647 = vadd.f32 %v6717, %v7646
      %v7648 = vpop.f32.mrb[0].mxu0
      %v7649 = vadd.f32 %v6717, %v7648
      %7650 = vmatprep.mubr.bf16.mxu0 %v6944
      %7651 = vmatmul.mubr.bf16.gmra.mrb[0].mxu0 %v6943
      %v7652 = vpop.f32.mrb[0].mxu0
      %v7653 = vadd.f32 %v6722, %v7652
      %v7654 = vpop.f32.mrb[0].mxu0
      %v7655 = vadd.f32 %v6722, %v7654
      %v7656 = vpop.f32.mrb[0].mxu0
      %v7657 = vadd.f32 %v6727, %v7656
      %v7658 = vpop.f32.mrb[0].mxu0
      %v7659 = vadd.f32 %v6727, %v7658
      %7660 = vmatprep.mubr.bf16.mxu0 %v6946
      %7661 = vmatmul.mubr.bf16.gmra.mrb[0].mxu0 %v6945
      %v7662 = vpop.f32.mrb[0].mxu0
      %v7663 = vadd.f32 %v6732, %v7662
      %v7664 = vpop.f32.mrb[0].mxu0
      %v7665 = vadd.f32 %v6732, %v7664
      %v7666 = vpop.f32.mrb[0].mxu0
      %v7667 = vadd.f32 %v6737, %v7666
      %v7668 = vpop.f32.mrb[0].mxu0
      %v7669 = vadd.f32 %v6737, %v7668
      %7670 = vmatprep.mubr.bf16.mxu0 %v6948
      %7671 = vmatmul.mubr.bf16.gmra.mrb[0].mxu0 %v6947
      %v7672 = vpop.f32.mrb[0].mxu0
      %v7673 = vadd.f32 %v6742, %v7672
      %v7674 = vpop.f32.mrb[0].mxu0
      %v7675 = vadd.f32 %v6742, %v7674
      %v7676 = vpop.f32.mrb[0].mxu0
      %v7677 = vadd.f32 %v6747, %v7676
      %v7678 = vpop.f32.mrb[0].mxu0
      %v7679 = vadd.f32 %v6747, %v7678
      %7680 = vmatprep.mubr.bf16.mxu0 %v6950
      %7681 = vmatmul.mubr.bf16.gmra.mrb[0].mxu0 %v6949
      %v7682 = vpop.f32.mrb[0].mxu0
      %v7683 = vadd.f32 %v6752, %v7682
      %v7684 = vpop.f32.mrb[0].mxu0
      %v7685 = vadd.f32 %v6752, %v7684
      %v7686 = vpop.f32.mrb[0].mxu0
      %v7687 = vadd.f32 %v6757, %v7686
      %v7688 = vpop.f32.mrb[0].mxu0
      %v7689 = vadd.f32 %v6757, %v7688
      %7690 = vmatprep.mubr.bf16.mxu0 %v6952
      %7691 = vmatmul.mubr.bf16.gmra.mrb[0].mxu0 %v6951
      %v7692 = vpop.f32.mrb[0].mxu0
      %v7693 = vadd.f32 %v6762, %v7692
      %v7694 = vpop.f32.mrb[0].mxu0
      %v7695 = vadd.f32 %v6762, %v7694
      %v7696 = vpop.f32.mrb[0].mxu0
      %v7697 = vadd.f32 %v6767, %v7696
      %v7698 = vpop.f32.mrb[0].mxu0
      %v7699 = vadd.f32 %v6767, %v7698
      %7700 = vmatprep.mubr.bf16.mxu0 %v6954
      %7701 = vmatmul.mubr.bf16.gmra.mrb[0].mxu0 %v6953
      %v7702 = vpop.f32.mrb[0].mxu0
      %v7703 = vadd.f32 %v6772, %v7702
      %v7704 = vpop.f32.mrb[0].mxu0
      %v7705 = vadd.f32 %v6772, %v7704
      %v7706 = vpop.f32.mrb[0].mxu0
      %v7707 = vadd.f32 %v6777, %v7706
      %v7708 = vpop.f32.mrb[0].mxu0
      %v7709 = vadd.f32 %v6777, %v7708
      %7710 = vmatprep.mubr.bf16.mxu0 %v6956
      %7711 = vmatmul.mubr.bf16.gmra.mrb[0].mxu0 %v6955
      %v7712 = vpop.f32.mrb[0].mxu0
      %v7713 = vadd.f32 %v6782, %v7712
      %v7714 = vpop.f32.mrb[0].mxu0
      %v7715 = vadd.f32 %v6782, %v7714
      %v7716 = vpop.f32.mrb[0].mxu0
      %v7717 = vadd.f32 %v6787, %v7716
      %v7718 = vpop.f32.mrb[0].mxu0
      %v7719 = vadd.f32 %v6787, %v7718
      %7720 = vmatprep.mubr.bf16.mxu0 %v6958
      %7721 = vmatmul.mubr.bf16.gmra.mrb[0].mxu0 %v6957
      %v7722 = vpop.f32.mrb[0].mxu0
      %v7723 = vadd.f32 %v6792, %v7722
      %v7724 = vpop.f32.mrb[0].mxu0
      %v7725 = vadd.f32 %v6792, %v7724
      %v7726 = vpop.f32.mrb[0].mxu0
      %v7727 = vadd.f32 %v6797, %v7726
      %v7728 = vpop.f32.mrb[0].mxu0
      %v7729 = vadd.f32 %v6797, %v7728
      %7730 = vmatprep.mubr.bf16.mxu0 %v6960
      %7731 = vmatmul.mubr.bf16.gmra.mrb[0].mxu0 %v6959
      %v7732 = vpop.f32.mrb[0].mxu0
      %v7733 = vadd.f32 %v6802, %v7732
      %v7734 = vpop.f32.mrb[0].mxu0
      %v7735 = vadd.f32 %v6802, %v7734
      %v7736 = vpop.f32.mrb[0].mxu0
      %v7737 = vadd.f32 %v6807, %v7736
      %v7738 = vpop.f32.mrb[0].mxu0
      %v7739 = vadd.f32 %v6807, %v7738
      %7740 = vmatprep.mubr.bf16.mxu0 %v6962
      %7741 = vmatmul.mubr.bf16.gmra.mrb[0].mxu0 %v6961
      %v7742 = vpop.f32.mrb[0].mxu0
      %v7743 = vadd.f32 %v6812, %v7742
      %v7744 = vpop.f32.mrb[0].mxu0
      %v7745 = vadd.f32 %v6812, %v7744
      %v7746 = vpop.f32.mrb[0].mxu0
      %v7747 = vadd.f32 %v6817, %v7746
      %v7748 = vpop.f32.mrb[0].mxu0
      %v7749 = vadd.f32 %v6817, %v7748
      %7750 = vmatprep.mubr.bf16.mxu0 %v6964
      %7751 = vmatmul.mubr.bf16.gmra.mrb[0].mxu0 %v6963
      %v7752 = vpop.f32.mrb[0].mxu0
      %v7753 = vadd.f32 %v6822, %v7752
      %v7754 = vpop.f32.mrb[0].mxu0
      %v7755 = vadd.f32 %v6822, %v7754
      %v7756 = vpop.f32.mrb[0].mxu0
      %v7757 = vadd.f32 %v6827, %v7756
      %v7758 = vpop.f32.mrb[0].mxu0
      %v7759 = vadd.f32 %v6827, %v7758
      %7760 = vmatprep.mubr.bf16.mxu0 %v6966
      %7761 = vmatmul.mubr.bf16.gmra.mrb[0].mxu0 %v6965
      %v7762 = vpop.f32.mrb[0].mxu0
      %v7763 = vadd.f32 %v6832, %v7762
      %v7764 = vpop.f32.mrb[0].mxu0
      %v7765 = vadd.f32 %v6832, %v7764
      %v7766 = vpop.f32.mrb[0].mxu0
      %v7767 = vadd.f32 %v6837, %v7766
      %v7768 = vpop.f32.mrb[0].mxu0
      %v7769 = vadd.f32 %v6837, %v7768
      %7770 = vdwg.mxu0
      %v7771 = vmax.f32 %v7034, 0.0
      %v7772 = vmax.f32 %v7036, 0.0
      %v7773 = vmax.f32 %v7227, 0.0
      %v7774 = vmax.f32 %v7229, 0.0
      %v7775 = vmax.f32 %v7420, 0.0
      %v7776 = vmax.f32 %v7422, 0.0
      %v7777 = vmax.f32 %v7613, 0.0
      %v7778 = vmax.f32 %v7615, 0.0
      %v7779 = vmax.f32 %v7038, 0.0
      %v7780 = vmax.f32 %v7040, 0.0
      %v7781 = vmax.f32 %v7231, 0.0
      %v7782 = vmax.f32 %v7233, 0.0
      %v7783 = vmax.f32 %v7424, 0.0
      %v7784 = vmax.f32 %v7426, 0.0
      %v7785 = vmax.f32 %v7617, 0.0
      %v7786 = vmax.f32 %v7619, 0.0
      %v7787 = vmax.f32 %v7044, 0.0
      %v7788 = vmax.f32 %v7046, 0.0
      %v7789 = vmax.f32 %v7237, 0.0
      %v7790 = vmax.f32 %v7239, 0.0
      %v7791 = vmax.f32 %v7430, 0.0
      %v7792 = vmax.f32 %v7432, 0.0
      %v7793 = vmax.f32 %v7623, 0.0
      %v7794 = vmax.f32 %v7625, 0.0
      %v7795 = vmax.f32 %v7048, 0.0
      %v7796 = vmax.f32 %v7050, 0.0
      %v7797 = vmax.f32 %v7241, 0.0
      %v7798 = vmax.f32 %v7243, 0.0
      %v7799 = vmax.f32 %v7434, 0.0
      %v7800 = vmax.f32 %v7436, 0.0
      %v7801 = vmax.f32 %v7627, 0.0
      %v7802 = vmax.f32 %v7629, 0.0
      %v7803 = vmax.f32 %v7054, 0.0
      %v7804 = vmax.f32 %v7056, 0.0
      %v7805 = vmax.f32 %v7247, 0.0
      %v7806 = vmax.f32 %v7249, 0.0
      %v7807 = vmax.f32 %v7440, 0.0
      %v7808 = vmax.f32 %v7442, 0.0
      %v7809 = vmax.f32 %v7633, 0.0
      %v7810 = vmax.f32 %v7635, 0.0
      %v7811 = vmax.f32 %v7058, 0.0
      %v7812 = vmax.f32 %v7060, 0.0
      %v7813 = vmax.f32 %v7251, 0.0
      %v7814 = vmax.f32 %v7253, 0.0
      %v7815 = vmax.f32 %v7444, 0.0
      %v7816 = vmax.f32 %v7446, 0.0
      %v7817 = vmax.f32 %v7637, 0.0
      %v7818 = vmax.f32 %v7639, 0.0
      %v7819 = vmax.f32 %v7064, 0.0
      %v7820 = vmax.f32 %v7066, 0.0
      %v7821 = vmax.f32 %v7257, 0.0
      %v7822 = vmax.f32 %v7259, 0.0
      %v7823 = vmax.f32 %v7450, 0.0
      %v7824 = vmax.f32 %v7452, 0.0
      %v7825 = vmax.f32 %v7643, 0.0
      %v7826 = vmax.f32 %v7645, 0.0
      %v7827 = vmax.f32 %v7068, 0.0
      %v7828 = vmax.f32 %v7070, 0.0
      %v7829 = vmax.f32 %v7261, 0.0
      %v7830 = vmax.f32 %v7263, 0.0
      %v7831 = vmax.f32 %v7454, 0.0
      %v7832 = vmax.f32 %v7456, 0.0
      %v7833 = vmax.f32 %v7647, 0.0
      %v7834 = vmax.f32 %v7649, 0.0
      %v7835 = vmax.f32 %v7074, 0.0
      %v7836 = vmax.f32 %v7076, 0.0
      %v7837 = vmax.f32 %v7267, 0.0
      %v7838 = vmax.f32 %v7269, 0.0
      %v7839 = vmax.f32 %v7460, 0.0
      %v7840 = vmax.f32 %v7462, 0.0
      %v7841 = vmax.f32 %v7653, 0.0
      %v7842 = vmax.f32 %v7655, 0.0
      %v7843 = vmax.f32 %v7078, 0.0
      %v7844 = vmax.f32 %v7080, 0.0
      %v7845 = vmax.f32 %v7271, 0.0
      %v7846 = vmax.f32 %v7273, 0.0
      %v7847 = vmax.f32 %v7464, 0.0
      %v7848 = vmax.f32 %v7466, 0.0
      %v7849 = vmax.f32 %v7657, 0.0
      %v7850 = vmax.f32 %v7659, 0.0
      %v7851 = vmax.f32 %v7084, 0.0
      %v7852 = vmax.f32 %v7086, 0.0
      %v7853 = vmax.f32 %v7277, 0.0
      %v7854 = vmax.f32 %v7279, 0.0
      %v7855 = vmax.f32 %v7470, 0.0
      %v7856 = vmax.f32 %v7472, 0.0
      %v7857 = vmax.f32 %v7663, 0.0
      %v7858 = vmax.f32 %v7665, 0.0
      %v7859 = vmax.f32 %v7088, 0.0
      %v7860 = vmax.f32 %v7090, 0.0
      %v7861 = vmax.f32 %v7281, 0.0
      %v7862 = vmax.f32 %v7283, 0.0
      %v7863 = vmax.f32 %v7474, 0.0
      %v7864 = vmax.f32 %v7476, 0.0
      %v7865 = vmax.f32 %v7667, 0.0
      %v7866 = vmax.f32 %v7669, 0.0
      %v7867 = vmax.f32 %v7094, 0.0
      %v7868 = vmax.f32 %v7096, 0.0
      %v7869 = vmax.f32 %v7287, 0.0
      %v7870 = vmax.f32 %v7289, 0.0
      %v7871 = vmax.f32 %v7480, 0.0
      %v7872 = vmax.f32 %v7482, 0.0
      %v7873 = vmax.f32 %v7673, 0.0
      %v7874 = vmax.f32 %v7675, 0.0
      %v7875 = vmax.f32 %v7098, 0.0
      %v7876 = vmax.f32 %v7100, 0.0
      %v7877 = vmax.f32 %v7291, 0.0
      %v7878 = vmax.f32 %v7293, 0.0
      %v7879 = vmax.f32 %v7484, 0.0
      %v7880 = vmax.f32 %v7486, 0.0
      %v7881 = vmax.f32 %v7677, 0.0
      %v7882 = vmax.f32 %v7679, 0.0
      %v7883 = vmax.f32 %v7104, 0.0
      %v7884 = vmax.f32 %v7106, 0.0
      %v7885 = vmax.f32 %v7297, 0.0
      %v7886 = vmax.f32 %v7299, 0.0
      %v7887 = vmax.f32 %v7490, 0.0
      %v7888 = vmax.f32 %v7492, 0.0
      %v7889 = vmax.f32 %v7683, 0.0
      %v7890 = vmax.f32 %v7685, 0.0
      %v7891 = vmax.f32 %v7108, 0.0
      %v7892 = vmax.f32 %v7110, 0.0
      %v7893 = vmax.f32 %v7301, 0.0
      %v7894 = vmax.f32 %v7303, 0.0
      %v7895 = vmax.f32 %v7494, 0.0
      %v7896 = vmax.f32 %v7496, 0.0
      %v7897 = vmax.f32 %v7687, 0.0
      %v7898 = vmax.f32 %v7689, 0.0
      %v7899 = vmax.f32 %v7114, 0.0
      %v7900 = vmax.f32 %v7116, 0.0
      %v7901 = vmax.f32 %v7307, 0.0
      %v7902 = vmax.f32 %v7309, 0.0
      %v7903 = vmax.f32 %v7500, 0.0
      %v7904 = vmax.f32 %v7502, 0.0
      %v7905 = vmax.f32 %v7693, 0.0
      %v7906 = vmax.f32 %v7695, 0.0
      %v7907 = vmax.f32 %v7118, 0.0
      %v7908 = vmax.f32 %v7120, 0.0
      %v7909 = vmax.f32 %v7311, 0.0
      %v7910 = vmax.f32 %v7313, 0.0
      %v7911 = vmax.f32 %v7504, 0.0
      %v7912 = vmax.f32 %v7506, 0.0
      %v7913 = vmax.f32 %v7697, 0.0
      %v7914 = vmax.f32 %v7699, 0.0
      %v7915 = vmax.f32 %v7124, 0.0
      %v7916 = vmax.f32 %v7126, 0.0
      %v7917 = vmax.f32 %v7317, 0.0
      %v7918 = vmax.f32 %v7319, 0.0
      %v7919 = vmax.f32 %v7510, 0.0
      %v7920 = vmax.f32 %v7512, 0.0
      %v7921 = vmax.f32 %v7703, 0.0
      %v7922 = vmax.f32 %v7705, 0.0
      %v7923 = vmax.f32 %v7128, 0.0
      %v7924 = vmax.f32 %v7130, 0.0
      %v7925 = vmax.f32 %v7321, 0.0
      %v7926 = vmax.f32 %v7323, 0.0
      %v7927 = vmax.f32 %v7514, 0.0
      %v7928 = vmax.f32 %v7516, 0.0
      %v7929 = vmax.f32 %v7707, 0.0
      %v7930 = vmax.f32 %v7709, 0.0
      %v7931 = vmax.f32 %v7134, 0.0
      %v7932 = vmax.f32 %v7136, 0.0
      %v7933 = vmax.f32 %v7327, 0.0
      %v7934 = vmax.f32 %v7329, 0.0
      %v7935 = vmax.f32 %v7520, 0.0
      %v7936 = vmax.f32 %v7522, 0.0
      %v7937 = vmax.f32 %v7713, 0.0
      %v7938 = vmax.f32 %v7715, 0.0
      %v7939 = vmax.f32 %v7138, 0.0
      %v7940 = vmax.f32 %v7140, 0.0
      %v7941 = vmax.f32 %v7331, 0.0
      %v7942 = vmax.f32 %v7333, 0.0
      %v7943 = vmax.f32 %v7524, 0.0
      %v7944 = vmax.f32 %v7526, 0.0
      %v7945 = vmax.f32 %v7717, 0.0
      %v7946 = vmax.f32 %v7719, 0.0
      %v7947 = vmax.f32 %v7144, 0.0
      %v7948 = vmax.f32 %v7146, 0.0
      %v7949 = vmax.f32 %v7337, 0.0
      %v7950 = vmax.f32 %v7339, 0.0
      %v7951 = vmax.f32 %v7530, 0.0
      %v7952 = vmax.f32 %v7532, 0.0
      %v7953 = vmax.f32 %v7723, 0.0
      %v7954 = vmax.f32 %v7725, 0.0
      %v7955 = vmax.f32 %v7148, 0.0
      %v7956 = vmax.f32 %v7150, 0.0
      %v7957 = vmax.f32 %v7341, 0.0
      %v7958 = vmax.f32 %v7343, 0.0
      %v7959 = vmax.f32 %v7534, 0.0
      %v7960 = vmax.f32 %v7536, 0.0
      %v7961 = vmax.f32 %v7727, 0.0
      %v7962 = vmax.f32 %v7729, 0.0
      %v7963 = vmax.f32 %v7154, 0.0
      %v7964 = vmax.f32 %v7156, 0.0
      %v7965 = vmax.f32 %v7347, 0.0
      %v7966 = vmax.f32 %v7349, 0.0
      %v7967 = vmax.f32 %v7540, 0.0
      %v7968 = vmax.f32 %v7542, 0.0
      %v7969 = vmax.f32 %v7733, 0.0
      %v7970 = vmax.f32 %v7735, 0.0
      %v7971 = vmax.f32 %v7158, 0.0
      %v7972 = vmax.f32 %v7160, 0.0
      %v7973 = vmax.f32 %v7351, 0.0
      %v7974 = vmax.f32 %v7353, 0.0
      %v7975 = vmax.f32 %v7544, 0.0
      %v7976 = vmax.f32 %v7546, 0.0
      %v7977 = vmax.f32 %v7737, 0.0
      %v7978 = vmax.f32 %v7739, 0.0
      %v7979 = vmax.f32 %v7164, 0.0
      %v7980 = vmax.f32 %v7166, 0.0
      %v7981 = vmax.f32 %v7357, 0.0
      %v7982 = vmax.f32 %v7359, 0.0
      %v7983 = vmax.f32 %v7550, 0.0
      %v7984 = vmax.f32 %v7552, 0.0
      %v7985 = vmax.f32 %v7743, 0.0
      %v7986 = vmax.f32 %v7745, 0.0
      %v7987 = vmax.f32 %v7168, 0.0
      %v7988 = vmax.f32 %v7170, 0.0
      %v7989 = vmax.f32 %v7361, 0.0
      %v7990 = vmax.f32 %v7363, 0.0
      %v7991 = vmax.f32 %v7554, 0.0
      %v7992 = vmax.f32 %v7556, 0.0
      %v7993 = vmax.f32 %v7747, 0.0
      %v7994 = vmax.f32 %v7749, 0.0
      %v7995 = vmax.f32 %v7174, 0.0
      %v7996 = vmax.f32 %v7176, 0.0
      %v7997 = vmax.f32 %v7367, 0.0
      %v7998 = vmax.f32 %v7369, 0.0
      %v7999 = vmax.f32 %v7560, 0.0
      %v8000 = vmax.f32 %v7562, 0.0
      %v8001 = vmax.f32 %v7753, 0.0
      %v8002 = vmax.f32 %v7755, 0.0
      %v8003 = vmax.f32 %v7178, 0.0
      %v8004 = vmax.f32 %v7180, 0.0
      %v8005 = vmax.f32 %v7371, 0.0
      %v8006 = vmax.f32 %v7373, 0.0
      %v8007 = vmax.f32 %v7564, 0.0
      %v8008 = vmax.f32 %v7566, 0.0
      %v8009 = vmax.f32 %v7757, 0.0
      %v8010 = vmax.f32 %v7759, 0.0
      %v8011 = vmax.f32 %v7184, 0.0
      %v8012 = vmax.f32 %v7186, 0.0
      %v8013 = vmax.f32 %v7377, 0.0
      %v8014 = vmax.f32 %v7379, 0.0
      %v8015 = vmax.f32 %v7570, 0.0
      %v8016 = vmax.f32 %v7572, 0.0
      %v8017 = vmax.f32 %v7763, 0.0
      %v8018 = vmax.f32 %v7765, 0.0
      %v8019 = vmax.f32 %v7188, 0.0
      %v8020 = vmax.f32 %v7190, 0.0
      %v8021 = vmax.f32 %v7381, 0.0
      %v8022 = vmax.f32 %v7383, 0.0
      %v8023 = vmax.f32 %v7574, 0.0
      %v8024 = vmax.f32 %v7576, 0.0
      %v8025 = vmax.f32 %v7767, 0.0
      %v8026 = vmax.f32 %v7769, 0.0
      %v8027 = vpack.c.bf16 %v7779, %v7771
      %v8028 = vpack.c.bf16 %v7780, %v7772
      %v8029 = vpack.c.bf16 %v7781, %v7773
      %v8030 = vpack.c.bf16 %v7782, %v7774
      %v8031 = vpack.c.bf16 %v7783, %v7775
      %v8032 = vpack.c.bf16 %v7784, %v7776
      %v8033 = vpack.c.bf16 %v7785, %v7777
      %v8034 = vpack.c.bf16 %v7786, %v7778
      %v8035 = vpack.c.bf16 %v7795, %v7787
      %v8036 = vpack.c.bf16 %v7796, %v7788
      %v8037 = vpack.c.bf16 %v7797, %v7789
      %v8038 = vpack.c.bf16 %v7798, %v7790
      %v8039 = vpack.c.bf16 %v7799, %v7791
      %v8040 = vpack.c.bf16 %v7800, %v7792
      %v8041 = vpack.c.bf16 %v7801, %v7793
      %v8042 = vpack.c.bf16 %v7802, %v7794
      %v8043 = vpack.c.bf16 %v7811, %v7803
      %v8044 = vpack.c.bf16 %v7812, %v7804
      %v8045 = vpack.c.bf16 %v7813, %v7805
      %v8046 = vpack.c.bf16 %v7814, %v7806
      %v8047 = vpack.c.bf16 %v7815, %v7807
      %v8048 = vpack.c.bf16 %v7816, %v7808
      %v8049 = vpack.c.bf16 %v7817, %v7809
      %v8050 = vpack.c.bf16 %v7818, %v7810
      %v8051 = vpack.c.bf16 %v7827, %v7819
      %v8052 = vpack.c.bf16 %v7828, %v7820
      %v8053 = vpack.c.bf16 %v7829, %v7821
      %v8054 = vpack.c.bf16 %v7830, %v7822
      %v8055 = vpack.c.bf16 %v7831, %v7823
      %v8056 = vpack.c.bf16 %v7832, %v7824
      %v8057 = vpack.c.bf16 %v7833, %v7825
      %v8058 = vpack.c.bf16 %v7834, %v7826
      %v8059 = vpack.c.bf16 %v7843, %v7835
      %v8060 = vpack.c.bf16 %v7844, %v7836
      %v8061 = vpack.c.bf16 %v7845, %v7837
      %v8062 = vpack.c.bf16 %v7846, %v7838
      %v8063 = vpack.c.bf16 %v7847, %v7839
      %v8064 = vpack.c.bf16 %v7848, %v7840
      %v8065 = vpack.c.bf16 %v7849, %v7841
      %v8066 = vpack.c.bf16 %v7850, %v7842
      %v8067 = vpack.c.bf16 %v7859, %v7851
      %v8068 = vpack.c.bf16 %v7860, %v7852
      %v8069 = vpack.c.bf16 %v7861, %v7853
      %v8070 = vpack.c.bf16 %v7862, %v7854
      %v8071 = vpack.c.bf16 %v7863, %v7855
      %v8072 = vpack.c.bf16 %v7864, %v7856
      %v8073 = vpack.c.bf16 %v7865, %v7857
      %v8074 = vpack.c.bf16 %v7866, %v7858
      %v8075 = vpack.c.bf16 %v7875, %v7867
      %v8076 = vpack.c.bf16 %v7876, %v7868
      %v8077 = vpack.c.bf16 %v7877, %v7869
      %v8078 = vpack.c.bf16 %v7878, %v7870
      %v8079 = vpack.c.bf16 %v7879, %v7871
      %v8080 = vpack.c.bf16 %v7880, %v7872
      %v8081 = vpack.c.bf16 %v7881, %v7873
      %v8082 = vpack.c.bf16 %v7882, %v7874
      %v8083 = vpack.c.bf16 %v7891, %v7883
      %v8084 = vpack.c.bf16 %v7892, %v7884
      %v8085 = vpack.c.bf16 %v7893, %v7885
      %v8086 = vpack.c.bf16 %v7894, %v7886
      %v8087 = vpack.c.bf16 %v7895, %v7887
      %v8088 = vpack.c.bf16 %v7896, %v7888
      %v8089 = vpack.c.bf16 %v7897, %v7889
      %v8090 = vpack.c.bf16 %v7898, %v7890
      %v8091 = vpack.c.bf16 %v7907, %v7899
      %v8092 = vpack.c.bf16 %v7908, %v7900
      %v8093 = vpack.c.bf16 %v7909, %v7901
      %v8094 = vpack.c.bf16 %v7910, %v7902
      %v8095 = vpack.c.bf16 %v7911, %v7903
      %v8096 = vpack.c.bf16 %v7912, %v7904
      %v8097 = vpack.c.bf16 %v7913, %v7905
      %v8098 = vpack.c.bf16 %v7914, %v7906
      %v8099 = vpack.c.bf16 %v7923, %v7915
      %v8100 = vpack.c.bf16 %v7924, %v7916
      %v8101 = vpack.c.bf16 %v7925, %v7917
      %v8102 = vpack.c.bf16 %v7926, %v7918
      %v8103 = vpack.c.bf16 %v7927, %v7919
      %v8104 = vpack.c.bf16 %v7928, %v7920
      %v8105 = vpack.c.bf16 %v7929, %v7921
      %v8106 = vpack.c.bf16 %v7930, %v7922
      %v8107 = vpack.c.bf16 %v7939, %v7931
      %v8108 = vpack.c.bf16 %v7940, %v7932
      %v8109 = vpack.c.bf16 %v7941, %v7933
      %v8110 = vpack.c.bf16 %v7942, %v7934
      %v8111 = vpack.c.bf16 %v7943, %v7935
      %v8112 = vpack.c.bf16 %v7944, %v7936
      %v8113 = vpack.c.bf16 %v7945, %v7937
      %v8114 = vpack.c.bf16 %v7946, %v7938
      %v8115 = vpack.c.bf16 %v7955, %v7947
      %v8116 = vpack.c.bf16 %v7956, %v7948
      %v8117 = vpack.c.bf16 %v7957, %v7949
      %v8118 = vpack.c.bf16 %v7958, %v7950
      %v8119 = vpack.c.bf16 %v7959, %v7951
      %v8120 = vpack.c.bf16 %v7960, %v7952
      %v8121 = vpack.c.bf16 %v7961, %v7953
      %v8122 = vpack.c.bf16 %v7962, %v7954
      %v8123 = vpack.c.bf16 %v7971, %v7963
      %v8124 = vpack.c.bf16 %v7972, %v7964
      %v8125 = vpack.c.bf16 %v7973, %v7965
      %v8126 = vpack.c.bf16 %v7974, %v7966
      %v8127 = vpack.c.bf16 %v7975, %v7967
      %v8128 = vpack.c.bf16 %v7976, %v7968
      %v8129 = vpack.c.bf16 %v7977, %v7969
      %v8130 = vpack.c.bf16 %v7978, %v7970
      %v8131 = vpack.c.bf16 %v7987, %v7979
      %v8132 = vpack.c.bf16 %v7988, %v7980
      %v8133 = vpack.c.bf16 %v7989, %v7981
      %v8134 = vpack.c.bf16 %v7990, %v7982
      %v8135 = vpack.c.bf16 %v7991, %v7983
      %v8136 = vpack.c.bf16 %v7992, %v7984
      %v8137 = vpack.c.bf16 %v7993, %v7985
      %v8138 = vpack.c.bf16 %v7994, %v7986
      %v8139 = vpack.c.bf16 %v8003, %v7995
      %v8140 = vpack.c.bf16 %v8004, %v7996
      %v8141 = vpack.c.bf16 %v8005, %v7997
      %v8142 = vpack.c.bf16 %v8006, %v7998
      %v8143 = vpack.c.bf16 %v8007, %v7999
      %v8144 = vpack.c.bf16 %v8008, %v8000
      %v8145 = vpack.c.bf16 %v8009, %v8001
      %v8146 = vpack.c.bf16 %v8010, %v8002
      %v8147 = vpack.c.bf16 %v8019, %v8011
      %v8148 = vpack.c.bf16 %v8020, %v8012
      %v8149 = vpack.c.bf16 %v8021, %v8013
      %v8150 = vpack.c.bf16 %v8022, %v8014
      %v8151 = vpack.c.bf16 %v8023, %v8015
      %v8152 = vpack.c.bf16 %v8024, %v8016
      %v8153 = vpack.c.bf16 %v8025, %v8017
      %v8154 = vpack.c.bf16 %v8026, %v8018
      %v8155 = vld [vmem:[%s11] sm:$0xff]
      %v8156 = vld [vmem:[%s12] sm:$0xff]
      %8158 = vset.pattern.permute.xlu0 0
      %8159 = vperm.xlu0 %8158, %v8156
      %v8160 = vpop.permute.xlu0 %8159
      %v8163 = vunpack.c.l.b16 %v8155
      %v8164 = vunpack.c.h.b16 %v8155
      %v8165 = vpack.c.b16 %v8163, %v8163
      %v8166 = vpack.c.b16 %v8164, %v8164
      %8169 = vmatprep.subr.bf16.mxu0 %v8028
      %8170 = vmatpush1.bf16.msra.mxu0 %v8027
      %8171 = vmatprep.subr.bf16.mxu0 %v8036
      %8172 = vmatpush1.bf16.msra.mxu0 %v8035
      %8173 = vmatprep.subr.bf16.mxu0 %v8044
      %8174 = vmatpush1.bf16.msra.mxu0 %v8043
      %8175 = vmatprep.subr.bf16.mxu0 %v8052
      %8176 = vmatpush1.bf16.msra.mxu0 %v8051
      %8177 = vmatprep.subr.bf16.mxu0 %v8060
      %8178 = vmatpush1.bf16.msra.mxu0 %v8059
      %8179 = vmatprep.subr.bf16.mxu0 %v8068
      %8180 = vmatpush1.bf16.msra.mxu0 %v8067
      %8181 = vmatprep.subr.bf16.mxu0 %v8076
      %8182 = vmatpush1.bf16.msra.mxu0 %v8075
      %8183 = vmatprep.subr.bf16.mxu0 %v8084
      %8184 = vmatpush1.bf16.msra.mxu0 %v8083
      %8185 = vmatprep.subr.bf16.mxu0 %v8092
      %8186 = vmatpush1.bf16.msra.mxu0 %v8091
      %8187 = vmatprep.subr.bf16.mxu0 %v8100
      %8188 = vmatpush1.bf16.msra.mxu0 %v8099
      %8189 = vmatprep.subr.bf16.mxu0 %v8108
      %8190 = vmatpush1.bf16.msra.mxu0 %v8107
      %8191 = vmatprep.subr.bf16.mxu0 %v8116
      %8192 = vmatpush1.bf16.msra.mxu0 %v8115
      %8193 = vmatprep.subr.bf16.mxu0 %v8124
      %8194 = vmatpush1.bf16.msra.mxu0 %v8123
      %8195 = vmatprep.subr.bf16.mxu0 %v8132
      %8196 = vmatpush1.bf16.msra.mxu0 %v8131
      %8197 = vmatprep.subr.bf16.mxu0 %v8140
      %8198 = vmatpush1.bf16.msra.mxu0 %v8139
      %8199 = vmatprep.subr.bf16.mxu0 %v8148
      %8200 = vmatpush1.bf16.msra.mxu0 %v8147
      %8201 = vmatprep.mubr.bf16.mxu0 %v8166
      %8202 = vmatmul.mubr.bf16.gmra.mrb[0].mxu0 %v8165
      %v8203 = vpop.f32.mrb[0].mxu0
      %v8204 = vadd.f32 %v8160, %v8203
      %v8205 = vpop.f32.mrb[0].mxu0
      %v8206 = vadd.f32 %v8160, %v8205
      %v8207 = vpop.f32.mrb[0].mxu0
      %v8208 = vpop.f32.mrb[0].mxu0
      %8209 = vdwg.mxu0
      %8210 = vmatprep.subr.bf16.mxu0 %v8030
      %8211 = vmatpush1.bf16.msra.mxu0 %v8029
      %8212 = vmatprep.subr.bf16.mxu0 %v8038
      %8213 = vmatpush1.bf16.msra.mxu0 %v8037
      %8214 = vmatprep.subr.bf16.mxu0 %v8046
      %8215 = vmatpush1.bf16.msra.mxu0 %v8045
      %8216 = vmatprep.subr.bf16.mxu0 %v8054
      %8217 = vmatpush1.bf16.msra.mxu0 %v8053
      %8218 = vmatprep.subr.bf16.mxu0 %v8062
      %8219 = vmatpush1.bf16.msra.mxu0 %v8061
      %8220 = vmatprep.subr.bf16.mxu0 %v8070
      %8221 = vmatpush1.bf16.msra.mxu0 %v8069
      %8222 = vmatprep.subr.bf16.mxu0 %v8078
      %8223 = vmatpush1.bf16.msra.mxu0 %v8077
      %8224 = vmatprep.subr.bf16.mxu0 %v8086
      %8225 = vmatpush1.bf16.msra.mxu0 %v8085
      %8226 = vmatprep.subr.bf16.mxu0 %v8094
      %8227 = vmatpush1.bf16.msra.mxu0 %v8093
      %8228 = vmatprep.subr.bf16.mxu0 %v8102
      %8229 = vmatpush1.bf16.msra.mxu0 %v8101
      %8230 = vmatprep.subr.bf16.mxu0 %v8110
      %8231 = vmatpush1.bf16.msra.mxu0 %v8109
      %8232 = vmatprep.subr.bf16.mxu0 %v8118
      %8233 = vmatpush1.bf16.msra.mxu0 %v8117
      %8234 = vmatprep.subr.bf16.mxu0 %v8126
      %8235 = vmatpush1.bf16.msra.mxu0 %v8125
      %8236 = vmatprep.subr.bf16.mxu0 %v8134
      %8237 = vmatpush1.bf16.msra.mxu0 %v8133
      %8238 = vmatprep.subr.bf16.mxu0 %v8142
      %8239 = vmatpush1.bf16.msra.mxu0 %v8141
      %8240 = vmatprep.subr.bf16.mxu0 %v8150
      %8241 = vmatpush1.bf16.msra.mxu0 %v8149
      %8242 = vmatprep.mubr.bf16.mxu0 %v8166
      %8243 = vmatmul.mubr.bf16.gmra.mrb[0].mxu0 %v8165
      %v8244 = vpop.f32.mrb[0].mxu0
      %v8245 = vadd.f32 %v8160, %v8244
      %v8246 = vpop.f32.mrb[0].mxu0
      %v8247 = vadd.f32 %v8160, %v8246
      %v8248 = vpop.f32.mrb[0].mxu0
      %v8249 = vpop.f32.mrb[0].mxu0
      %8250 = vdwg.mxu0
      %8251 = vmatprep.subr.bf16.mxu0 %v8032
      %8252 = vmatpush1.bf16.msra.mxu0 %v8031
      %8253 = vmatprep.subr.bf16.mxu0 %v8040
      %8254 = vmatpush1.bf16.msra.mxu0 %v8039
      %8255 = vmatprep.subr.bf16.mxu0 %v8048
      %8256 = vmatpush1.bf16.msra.mxu0 %v8047
      %8257 = vmatprep.subr.bf16.mxu0 %v8056
      %8258 = vmatpush1.bf16.msra.mxu0 %v8055
      %8259 = vmatprep.subr.bf16.mxu0 %v8064
      %8260 = vmatpush1.bf16.msra.mxu0 %v8063
      %8261 = vmatprep.subr.bf16.mxu0 %v8072
      %8262 = vmatpush1.bf16.msra.mxu0 %v8071
      %8263 = vmatprep.subr.bf16.mxu0 %v8080
      %8264 = vmatpush1.bf16.msra.mxu0 %v8079
      %8265 = vmatprep.subr.bf16.mxu0 %v8088
      %8266 = vmatpush1.bf16.msra.mxu0 %v8087
      %8267 = vmatprep.subr.bf16.mxu0 %v8096
      %8268 = vmatpush1.bf16.msra.mxu0 %v8095
      %8269 = vmatprep.subr.bf16.mxu0 %v8104
      %8270 = vmatpush1.bf16.msra.mxu0 %v8103
      %8271 = vmatprep.subr.bf16.mxu0 %v8112
      %8272 = vmatpush1.bf16.msra.mxu0 %v8111
      %8273 = vmatprep.subr.bf16.mxu0 %v8120
      %8274 = vmatpush1.bf16.msra.mxu0 %v8119
      %8275 = vmatprep.subr.bf16.mxu0 %v8128
      %8276 = vmatpush1.bf16.msra.mxu0 %v8127
      %8277 = vmatprep.subr.bf16.mxu0 %v8136
      %8278 = vmatpush1.bf16.msra.mxu0 %v8135
      %8279 = vmatprep.subr.bf16.mxu0 %v8144
      %8280 = vmatpush1.bf16.msra.mxu0 %v8143
      %8281 = vmatprep.subr.bf16.mxu0 %v8152
      %8282 = vmatpush1.bf16.msra.mxu0 %v8151
      %8283 = vmatprep.mubr.bf16.mxu0 %v8166
      %8284 = vmatmul.mubr.bf16.gmra.mrb[0].mxu0 %v8165
      %v8285 = vpop.f32.mrb[0].mxu0
      %v8286 = vadd.f32 %v8160, %v8285
      %v8287 = vpop.f32.mrb[0].mxu0
      %v8288 = vadd.f32 %v8160, %v8287
      %v8289 = vpop.f32.mrb[0].mxu0
      %v8290 = vpop.f32.mrb[0].mxu0
      %8291 = vdwg.mxu0
      %8292 = vmatprep.subr.bf16.mxu0 %v8034
      %8293 = vmatpush1.bf16.msra.mxu0 %v8033
      %8294 = vmatprep.subr.bf16.mxu0 %v8042
      %8295 = vmatpush1.bf16.msra.mxu0 %v8041
      %8296 = vmatprep.subr.bf16.mxu0 %v8050
      %8297 = vmatpush1.bf16.msra.mxu0 %v8049
      %8298 = vmatprep.subr.bf16.mxu0 %v8058
      %8299 = vmatpush1.bf16.msra.mxu0 %v8057
      %8300 = vmatprep.subr.bf16.mxu0 %v8066
      %8301 = vmatpush1.bf16.msra.mxu0 %v8065
      %8302 = vmatprep.subr.bf16.mxu0 %v8074
      %8303 = vmatpush1.bf16.msra.mxu0 %v8073
      %8304 = vmatprep.subr.bf16.mxu0 %v8082
      %8305 = vmatpush1.bf16.msra.mxu0 %v8081
      %8306 = vmatprep.subr.bf16.mxu0 %v8090
      %8307 = vmatpush1.bf16.msra.mxu0 %v8089
      %8308 = vmatprep.subr.bf16.mxu0 %v8098
      %8309 = vmatpush1.bf16.msra.mxu0 %v8097
      %8310 = vmatprep.subr.bf16.mxu0 %v8106
      %8311 = vmatpush1.bf16.msra.mxu0 %v8105
      %8312 = vmatprep.subr.bf16.mxu0 %v8114
      %8313 = vmatpush1.bf16.msra.mxu0 %v8113
      %8314 = vmatprep.subr.bf16.mxu0 %v8122
      %8315 = vmatpush1.bf16.msra.mxu0 %v8121
      %8316 = vmatprep.subr.bf16.mxu0 %v8130
      %8317 = vmatpush1.bf16.msra.mxu0 %v8129
      %8318 = vmatprep.subr.bf16.mxu0 %v8138
      %8319 = vmatpush1.bf16.msra.mxu0 %v8137
      %8320 = vmatprep.subr.bf16.mxu0 %v8146
      %8321 = vmatpush1.bf16.msra.mxu0 %v8145
      %8322 = vmatprep.subr.bf16.mxu0 %v8154
      %8323 = vmatpush1.bf16.msra.mxu0 %v8153
      %8324 = vmatprep.mubr.bf16.mxu0 %v8166
      %8325 = vmatmul.mubr.bf16.gmra.mrb[0].mxu0 %v8165
      %v8326 = vpop.f32.mrb[0].mxu0
      %v8327 = vadd.f32 %v8160, %v8326
      %v8328 = vpop.f32.mrb[0].mxu0
      %v8329 = vadd.f32 %v8160, %v8328
      %v8330 = vpop.f32.mrb[0].mxu0
      %v8331 = vpop.f32.mrb[0].mxu0
      %8332 = vdwg.mxu0
      %8333 = vst [vmem:[%s442] sm:$0xff] %v8204
      %8334 = vst [vmem:[%s442 + $0x8] sm:$0xff] %v8206
      %8335 = vst [vmem:[%s442 + $0x10] sm:$0xff] %v8245
      %8336 = vst [vmem:[%s442 + $0x18] sm:$0xff] %v8247
      %8337 = vst [vmem:[%s442 + $0x20] sm:$0xff] %v8286
      %8338 = vst [vmem:[%s442 + $0x28] sm:$0xff] %v8288
      %8339 = vst [vmem:[%s442 + $0x30] sm:$0xff] %v8327
      %8340 = vst [vmem:[%s442 + $0x38] sm:$0xff] %v8329
      %s8341 = smul.u32 8, %s24
      %p8342 = scmp.lt.s32.totalorder %s8341, 15
      %s8343 = scalar_select %p8342, %s8341, 15
      %s8344 = smul.addr %s8343, 8
      %s8345 = scalar_lea.vmem %s13, %s8344
      // Predicated region
      $region73: #{bfnn_forward.1} parent=71 // pred_check
        %p8346 = pneg %p320
      $region74: #{bfnn_forward.1} parent=71 // pred_check_branch
        %8348 = sbr.rel (%p8346) target = $region76
      $region75: #{bfnn_forward.1} parent=71 // pred_region
        %s8349 = smul.u32 8, %s24
      $region76: #{bfnn_forward.1} parent=71 // pred_fallthru
        _
    $region72: #{bfnn_forward.1} parent=5 // pred_fallthru
      _
    %p8350 = scmp.le.s32.totalorder 2, %s19
    // Predicated region
    $region77: #{bfnn_forward.1} parent=5 // pred_check
      %p8351 = pneg %p8350
    $region78: #{bfnn_forward.1} parent=5 // pred_check_branch
      %8353 = sbr.rel (%p8351) target = $region80
    $region79: #{bfnn_forward.1} parent=5 // pred_region
      %s8354 = ssub.s32 %s19, 2
      // Predicated region
      $region81: #{bfnn_forward.1} parent=79 // pred_check
        %p8355 = pneg %p326
      $region82: #{bfnn_forward.1} parent=79 // pred_check_branch
        %8357 = sbr.rel (%p8355) target = $region84
      $region83: #{bfnn_forward.1} parent=79 // pred_region
        %s8358 = smul.u32 8, %s25
        %p8359 = scmp.lt.s32.totalorder %s8358, 15
        %s8360 = scalar_select %p8359, %s8358, 15
        %s8361 = smul.addr %s8360, 8
        %s8362 = scalar_lea.vmem %s13, %s8361
      $region84: #{bfnn_forward.1} parent=79 // pred_fallthru
        _
    $region80: #{bfnn_forward.1} parent=5 // pred_fallthru
      _
  $region6: #{bfnn_forward.1} parent=0 // loop_footer
    %s23 = sadd.s32 1, %s19
  $region7: #{bfnn_forward.1} parent=0 // loop_footer_branch
    %18 = sbr.rel target = $region3
  $region8: #{bfnn_forward.1} parent=0 // loop_exit
    _

</llo_original>
